<compile_context>
chip_gen: v6e
topology: v6e:2x2x1
jax: 0.10.0
libtpu: 0.0.40
codegen_flags: <defaults>
</compile_context>

<pallas_src>
import numpy as np
import jax
import jax.numpy as jnp
from jax import lax
from jax.experimental import pallas as pl
from jax.experimental.pallas import tpu as pltpu


def _conv3x3_mish_kernel(w_ref, b_ref, x_ref, o_ref):
    """One (batch, H-tile) grid step of a replicate-padded 3x3 conv + Mish.

    w_ref: (Cout*Cin*9,) f32 SMEM   scalar-prefetched OIHW weights, flattened
    b_ref: (Cout,)       f32 SMEM   scalar-prefetched bias
    x_ref: (1, Cin, H+2, Wp) VMEM   replicate-padded image (one batch element),
                                    Wp = lane-aligned padded width (>= W+2)
    o_ref: (1, Cout, TH, W)  VMEM   output H-tile
    """
    cin = x_ref.shape[1]
    cout, th, w = o_ref.shape[1], o_ref.shape[2], o_ref.shape[3]
    sh = 8 if th % 8 == 0 else th           # register-strip height
    n_strips = th // sh
    h_base = pl.program_id(1) * th          # first output row of this H-tile

    # Hoist every SMEM scalar read out of the strip loop (288 sld's per grid
    # step instead of per strip; keeps the scalar slot off the critical path).
    wts = [[[w_ref[(co * cin + ci) * 9 + k] for k in range(9)]
            for ci in range(cin)] for co in range(cout)]
    bias = [b_ref[co] for co in range(cout)]

    def strip(s, carry):
        row0 = h_base + s * sh
        off = s * sh
        if sh % 8 == 0:
            row0 = pl.multiple_of(row0, 8)
            off = pl.multiple_of(off, 8)

        # Register-resident f32 accumulators, initialized with the bias once.
        accs = [jnp.zeros((sh, w), jnp.float32) + bias[co] for co in range(cout)]

        # 3x3 multiply-accumulate on the VPU with W on lanes.  For each input
        # channel, load the padded (sh+2, Wp) window once; the nine taps are
        # static in-register slices of it (no per-tap VMEM traffic).
        for ci in range(cin):
            win = x_ref[0, ci, pl.ds(row0, sh + 2), :].astype(jnp.float32)
            taps = [win[kh:kh + sh, kw:kw + w]
                    for kh in range(3) for kw in range(3)]
            for co in range(cout):
                a = accs[co]
                wk = wts[co][ci]
                for k in range(9):
                    a = a + wk[k] * taps[k]
                accs[co] = a

        # Mish epilogue on the register values, then a single store per
        # (co, strip):  y = a * (e^{2a} + 2e^a) / (e^{2a} + 2e^a + 2).
        # One exp/elem; divide -> EUP approx reciprocal + one Newton step.
        for co in range(cout):
            a = accs[co]
            u = jnp.exp(jnp.minimum(a, 20.0))   # ratio == 1.0 in f32 for a > 20
            num = u * (u + 2.0)
            den = num + 2.0
            r = pl.reciprocal(den, approx=True)
            r = r * (2.0 - den * r)              # Newton step -> ~f32 accuracy
            y = a * (num * r)
            o_ref[0, co, pl.ds(off, sh), :] = y.astype(o_ref.dtype)
        return carry

    lax.fori_loop(0, n_strips, strip, 0, unroll=True)


def _pick_tile_h(H, tile_h=None):
    """H-tile size: divides H, multiple of 8 (or the full extent), capped at 64."""
    if tile_h is not None:
        if H % tile_h != 0 or not (tile_h % 8 == 0 or tile_h == H):
            raise ValueError(f"tile_h={tile_h} must divide H={H} and be a "
                             "multiple of 8 (or equal to H)")
        return tile_h
    if H % 8 != 0:
        return H
    best = 8
    for cand in range(8, min(64, H) + 1, 8):
        if H % cand == 0:
            best = cand
    return best


def convblock_forward(x_nchw, w_oihw, bias, *, tile_h=None):
    """Equivalent of convblock(filt_in, filt_out).forward(x), x in NCHW."""
    N, Cin, H, W = x_nchw.shape
    Cout = w_oihw.shape[0]
    TH = _pick_tile_h(H, tile_h)
    n_ht = H // TH

    # Single wrapper glue op: replicate ("edge") pad.  The right pad also rounds
    # the padded width up to a lane multiple so input rows are lane-dense; the
    # extra replicate columns beyond col W+1 are never read by the kernel.
    Wp = ((W + 2 + 127) // 128) * 128
    x_pad = jnp.pad(x_nchw, ((0, 0), (0, 0), (1, 1), (1, Wp - W - 1)),
                    mode="edge")

    w_flat = jnp.asarray(w_oihw, jnp.float32).reshape(Cout * Cin * 9)
    b_flat = jnp.asarray(bias, jnp.float32).reshape(Cout)

    out_dtype = x_nchw.dtype
    elt = jnp.dtype(out_dtype).itemsize

    # VMEM budget from the actual allocated blocks (input image block and output
    # tile are each double-buffered by the pipeline) + headroom, capped below
    # the physical per-core VMEM of this generation.
    in_block = Cin * (H + 2) * Wp * elt
    out_block = Cout * TH * W * elt
    req = 2 * in_block + 2 * out_block + 4 * 1024 * 1024
    try:
        phys = pltpu.get_tpu_info().vmem_capacity_bytes
    except Exception:
        phys = 64 * 1024 * 1024            # conservative: v7x per-TC VMEM
    vmem_limit = int(max(16 * 1024 * 1024, min(req, (phys * 7) // 8)))

    cost = pl.CostEstimate(
        flops=int(2 * N * H * W * Cin * Cout * 9),
        transcendentals=int(N * Cout * H * W),
        bytes_accessed=int(elt * N * (Cin * (H + 2) * Wp + Cout * H * W)
                           + 4 * (Cout * Cin * 9 + Cout)),
    )

    return pl.pallas_call(
        _conv3x3_mish_kernel,
        out_shape=jax.ShapeDtypeStruct((N, Cout, H, W), out_dtype),
        grid_spec=pltpu.PrefetchScalarGridSpec(
            num_scalar_prefetch=2,          # w_flat, b_flat -> SMEM
            grid=(N, n_ht),
            in_specs=[
                pl.BlockSpec((1, Cin, H + 2, Wp),
                             lambda n, ht, w_sm, b_sm: (n, 0, 0, 0)),
            ],
            out_specs=pl.BlockSpec((1, Cout, TH, W),
                                   lambda n, ht, w_sm, b_sm: (n, 0, ht, 0)),
        ),
        compiler_params=pltpu.CompilerParams(
            dimension_semantics=("parallel", "parallel"),
            vmem_limit_bytes=vmem_limit,
        ),
        cost_estimate=cost,
    )(w_flat, b_flat, x_pad)


def _reference_forward(x_nchw, w_oihw, bias):
    """Pure-JAX reference: replicate-padded 3x3 conv + Mish (NCHW)."""
    x_pad = jnp.pad(x_nchw, ((0, 0), (0, 0), (1, 1), (1, 1)), mode="edge")
    y = lax.conv_general_dilated(
        x_pad.astype(jnp.float32),
        w_oihw.astype(jnp.float32),
        window_strides=(1, 1),
        padding="VALID",
        dimension_numbers=("NCHW", "OIHW", "NCHW"),
    )
    y = y + bias.astype(jnp.float32)[None, :, None, None]
    return y * jnp.tanh(jnp.logaddexp(y, 0.0))


if __name__ == "__main__":
    # Small shapes consistent with the module's forward (NCHW conv input).
    N, Cin, H, W = 2, 4, 16, 16
    Cout = 8  # filt_out

    key = jax.random.PRNGKey(0)
    kx, kw, kb = jax.random.split(key, 3)

    x = jax.random.normal(kx, (N, Cin, H, W), dtype=jnp.float32)

    # Deterministic init mirroring nn.Conv2d's default kaiming-uniform bounds.
    fan_in = Cin * 3 * 3
    bound = 1.0 / np.sqrt(fan_in)
    w = jax.random.uniform(kw, (Cout, Cin, 3, 3), dtype=jnp.float32,
                           minval=-bound, maxval=bound)
    b = jax.random.uniform(kb, (Cout,), dtype=jnp.float32,
                           minval=-bound, maxval=bound)

    ref = _reference_forward(x, w, b)

    # Default tiling: TH=16 -> one H-tile per image, two 8-row register strips.
    out = jax.block_until_ready(convblock_forward(x, w, b))
    np.testing.assert_allclose(np.asarray(out), np.asarray(ref),
                               rtol=1e-4, atol=1e-4)

    # Explicit tile_h=8 -> two H-tiles per image (exercises the ht grid axis).
    out2 = jax.block_until_ready(convblock_forward(x, w, b, tile_h=8))
    np.testing.assert_allclose(np.asarray(out2), np.asarray(ref),
                               rtol=1e-4, atol=1e-4)

    print("KERNEL_OK")
</pallas_src>

<mosaic_0001>
module attributes {stable_mosaic.version = 11 : i64} {
  func.func @_conv3x3_mish_kernel(%arg0: i32, %arg1: i32, %arg2: memref<288xf32, #tpu.memory_space<smem>>, %arg3: memref<8xf32, #tpu.memory_space<smem>>, %arg4: memref<1x4x18x128xf32, #tpu.memory_space<vmem>>, %arg5: memref<1x8x16x16xf32, #tpu.memory_space<vmem>>) attributes {dimension_semantics = [#tpu.dimension_semantics<parallel>, #tpu.dimension_semantics<parallel>], iteration_bounds = array<i64: 2, 1>, scalar_prefetch = 2 : i64, scratch_operands = 0 : i64, tpu.core_type = #tpu.core_type<tc>, window_params = [{transform_indices = @transform_0, window_bounds = array<i64: 1, 4, 18, 128>}, {transform_indices = @transform_1, window_bounds = array<i64: 1, 8, 16, 16>}]} {
    %c16_i32 = arith.constant 16 : i32
    %0 = arith.muli %arg1, %c16_i32 : i32
    %c0 = arith.constant 0 : index
    %1 = memref.load %arg2[%c0] : memref<288xf32, #tpu.memory_space<smem>>
    %c1 = arith.constant 1 : index
    %2 = memref.load %arg2[%c1] : memref<288xf32, #tpu.memory_space<smem>>
    %c2 = arith.constant 2 : index
    %3 = memref.load %arg2[%c2] : memref<288xf32, #tpu.memory_space<smem>>
    %c3 = arith.constant 3 : index
    %4 = memref.load %arg2[%c3] : memref<288xf32, #tpu.memory_space<smem>>
    %c4 = arith.constant 4 : index
    %5 = memref.load %arg2[%c4] : memref<288xf32, #tpu.memory_space<smem>>
    %c5 = arith.constant 5 : index
    %6 = memref.load %arg2[%c5] : memref<288xf32, #tpu.memory_space<smem>>
    %c6 = arith.constant 6 : index
    %7 = memref.load %arg2[%c6] : memref<288xf32, #tpu.memory_space<smem>>
    %c7 = arith.constant 7 : index
    %8 = memref.load %arg2[%c7] : memref<288xf32, #tpu.memory_space<smem>>
    %c8 = arith.constant 8 : index
    %9 = memref.load %arg2[%c8] : memref<288xf32, #tpu.memory_space<smem>>
    %c9 = arith.constant 9 : index
    %10 = memref.load %arg2[%c9] : memref<288xf32, #tpu.memory_space<smem>>
    %c10 = arith.constant 10 : index
    %11 = memref.load %arg2[%c10] : memref<288xf32, #tpu.memory_space<smem>>
    %c11 = arith.constant 11 : index
    %12 = memref.load %arg2[%c11] : memref<288xf32, #tpu.memory_space<smem>>
    %c12 = arith.constant 12 : index
    %13 = memref.load %arg2[%c12] : memref<288xf32, #tpu.memory_space<smem>>
    %c13 = arith.constant 13 : index
    %14 = memref.load %arg2[%c13] : memref<288xf32, #tpu.memory_space<smem>>
    %c14 = arith.constant 14 : index
    %15 = memref.load %arg2[%c14] : memref<288xf32, #tpu.memory_space<smem>>
    %c15 = arith.constant 15 : index
    %16 = memref.load %arg2[%c15] : memref<288xf32, #tpu.memory_space<smem>>
    %c16 = arith.constant 16 : index
    %17 = memref.load %arg2[%c16] : memref<288xf32, #tpu.memory_space<smem>>
    %c17 = arith.constant 17 : index
    %18 = memref.load %arg2[%c17] : memref<288xf32, #tpu.memory_space<smem>>
    %c18 = arith.constant 18 : index
    %19 = memref.load %arg2[%c18] : memref<288xf32, #tpu.memory_space<smem>>
    %c19 = arith.constant 19 : index
    %20 = memref.load %arg2[%c19] : memref<288xf32, #tpu.memory_space<smem>>
    %c20 = arith.constant 20 : index
    %21 = memref.load %arg2[%c20] : memref<288xf32, #tpu.memory_space<smem>>
    %c21 = arith.constant 21 : index
    %22 = memref.load %arg2[%c21] : memref<288xf32, #tpu.memory_space<smem>>
    %c22 = arith.constant 22 : index
    %23 = memref.load %arg2[%c22] : memref<288xf32, #tpu.memory_space<smem>>
    %c23 = arith.constant 23 : index
    %24 = memref.load %arg2[%c23] : memref<288xf32, #tpu.memory_space<smem>>
    %c24 = arith.constant 24 : index
    %25 = memref.load %arg2[%c24] : memref<288xf32, #tpu.memory_space<smem>>
    %c25 = arith.constant 25 : index
    %26 = memref.load %arg2[%c25] : memref<288xf32, #tpu.memory_space<smem>>
    %c26 = arith.constant 26 : index
    %27 = memref.load %arg2[%c26] : memref<288xf32, #tpu.memory_space<smem>>
    %c27 = arith.constant 27 : index
    %28 = memref.load %arg2[%c27] : memref<288xf32, #tpu.memory_space<smem>>
    %c28 = arith.constant 28 : index
    %29 = memref.load %arg2[%c28] : memref<288xf32, #tpu.memory_space<smem>>
    %c29 = arith.constant 29 : index
    %30 = memref.load %arg2[%c29] : memref<288xf32, #tpu.memory_space<smem>>
    %c30 = arith.constant 30 : index
    %31 = memref.load %arg2[%c30] : memref<288xf32, #tpu.memory_space<smem>>
    %c31 = arith.constant 31 : index
    %32 = memref.load %arg2[%c31] : memref<288xf32, #tpu.memory_space<smem>>
    %c32 = arith.constant 32 : index
    %33 = memref.load %arg2[%c32] : memref<288xf32, #tpu.memory_space<smem>>
    %c33 = arith.constant 33 : index
    %34 = memref.load %arg2[%c33] : memref<288xf32, #tpu.memory_space<smem>>
    %c34 = arith.constant 34 : index
    %35 = memref.load %arg2[%c34] : memref<288xf32, #tpu.memory_space<smem>>
    %c35 = arith.constant 35 : index
    %36 = memref.load %arg2[%c35] : memref<288xf32, #tpu.memory_space<smem>>
    %c36 = arith.constant 36 : index
    %37 = memref.load %arg2[%c36] : memref<288xf32, #tpu.memory_space<smem>>
    %c37 = arith.constant 37 : index
    %38 = memref.load %arg2[%c37] : memref<288xf32, #tpu.memory_space<smem>>
    %c38 = arith.constant 38 : index
    %39 = memref.load %arg2[%c38] : memref<288xf32, #tpu.memory_space<smem>>
    %c39 = arith.constant 39 : index
    %40 = memref.load %arg2[%c39] : memref<288xf32, #tpu.memory_space<smem>>
    %c40 = arith.constant 40 : index
    %41 = memref.load %arg2[%c40] : memref<288xf32, #tpu.memory_space<smem>>
    %c41 = arith.constant 41 : index
    %42 = memref.load %arg2[%c41] : memref<288xf32, #tpu.memory_space<smem>>
    %c42 = arith.constant 42 : index
    %43 = memref.load %arg2[%c42] : memref<288xf32, #tpu.memory_space<smem>>
    %c43 = arith.constant 43 : index
    %44 = memref.load %arg2[%c43] : memref<288xf32, #tpu.memory_space<smem>>
    %c44 = arith.constant 44 : index
    %45 = memref.load %arg2[%c44] : memref<288xf32, #tpu.memory_space<smem>>
    %c45 = arith.constant 45 : index
    %46 = memref.load %arg2[%c45] : memref<288xf32, #tpu.memory_space<smem>>
    %c46 = arith.constant 46 : index
    %47 = memref.load %arg2[%c46] : memref<288xf32, #tpu.memory_space<smem>>
    %c47 = arith.constant 47 : index
    %48 = memref.load %arg2[%c47] : memref<288xf32, #tpu.memory_space<smem>>
    %c48 = arith.constant 48 : index
    %49 = memref.load %arg2[%c48] : memref<288xf32, #tpu.memory_space<smem>>
    %c49 = arith.constant 49 : index
    %50 = memref.load %arg2[%c49] : memref<288xf32, #tpu.memory_space<smem>>
    %c50 = arith.constant 50 : index
    %51 = memref.load %arg2[%c50] : memref<288xf32, #tpu.memory_space<smem>>
    %c51 = arith.constant 51 : index
    %52 = memref.load %arg2[%c51] : memref<288xf32, #tpu.memory_space<smem>>
    %c52 = arith.constant 52 : index
    %53 = memref.load %arg2[%c52] : memref<288xf32, #tpu.memory_space<smem>>
    %c53 = arith.constant 53 : index
    %54 = memref.load %arg2[%c53] : memref<288xf32, #tpu.memory_space<smem>>
    %c54 = arith.constant 54 : index
    %55 = memref.load %arg2[%c54] : memref<288xf32, #tpu.memory_space<smem>>
    %c55 = arith.constant 55 : index
    %56 = memref.load %arg2[%c55] : memref<288xf32, #tpu.memory_space<smem>>
    %c56 = arith.constant 56 : index
    %57 = memref.load %arg2[%c56] : memref<288xf32, #tpu.memory_space<smem>>
    %c57 = arith.constant 57 : index
    %58 = memref.load %arg2[%c57] : memref<288xf32, #tpu.memory_space<smem>>
    %c58 = arith.constant 58 : index
    %59 = memref.load %arg2[%c58] : memref<288xf32, #tpu.memory_space<smem>>
    %c59 = arith.constant 59 : index
    %60 = memref.load %arg2[%c59] : memref<288xf32, #tpu.memory_space<smem>>
    %c60 = arith.constant 60 : index
    %61 = memref.load %arg2[%c60] : memref<288xf32, #tpu.memory_space<smem>>
    %c61 = arith.constant 61 : index
    %62 = memref.load %arg2[%c61] : memref<288xf32, #tpu.memory_space<smem>>
    %c62 = arith.constant 62 : index
    %63 = memref.load %arg2[%c62] : memref<288xf32, #tpu.memory_space<smem>>
    %c63 = arith.constant 63 : index
    %64 = memref.load %arg2[%c63] : memref<288xf32, #tpu.memory_space<smem>>
    %c64 = arith.constant 64 : index
    %65 = memref.load %arg2[%c64] : memref<288xf32, #tpu.memory_space<smem>>
    %c65 = arith.constant 65 : index
    %66 = memref.load %arg2[%c65] : memref<288xf32, #tpu.memory_space<smem>>
    %c66 = arith.constant 66 : index
    %67 = memref.load %arg2[%c66] : memref<288xf32, #tpu.memory_space<smem>>
    %c67 = arith.constant 67 : index
    %68 = memref.load %arg2[%c67] : memref<288xf32, #tpu.memory_space<smem>>
    %c68 = arith.constant 68 : index
    %69 = memref.load %arg2[%c68] : memref<288xf32, #tpu.memory_space<smem>>
    %c69 = arith.constant 69 : index
    %70 = memref.load %arg2[%c69] : memref<288xf32, #tpu.memory_space<smem>>
    %c70 = arith.constant 70 : index
    %71 = memref.load %arg2[%c70] : memref<288xf32, #tpu.memory_space<smem>>
    %c71 = arith.constant 71 : index
    %72 = memref.load %arg2[%c71] : memref<288xf32, #tpu.memory_space<smem>>
    %c72 = arith.constant 72 : index
    %73 = memref.load %arg2[%c72] : memref<288xf32, #tpu.memory_space<smem>>
    %c73 = arith.constant 73 : index
    %74 = memref.load %arg2[%c73] : memref<288xf32, #tpu.memory_space<smem>>
    %c74 = arith.constant 74 : index
    %75 = memref.load %arg2[%c74] : memref<288xf32, #tpu.memory_space<smem>>
    %c75 = arith.constant 75 : index
    %76 = memref.load %arg2[%c75] : memref<288xf32, #tpu.memory_space<smem>>
    %c76 = arith.constant 76 : index
    %77 = memref.load %arg2[%c76] : memref<288xf32, #tpu.memory_space<smem>>
    %c77 = arith.constant 77 : index
    %78 = memref.load %arg2[%c77] : memref<288xf32, #tpu.memory_space<smem>>
    %c78 = arith.constant 78 : index
    %79 = memref.load %arg2[%c78] : memref<288xf32, #tpu.memory_space<smem>>
    %c79 = arith.constant 79 : index
    %80 = memref.load %arg2[%c79] : memref<288xf32, #tpu.memory_space<smem>>
    %c80 = arith.constant 80 : index
    %81 = memref.load %arg2[%c80] : memref<288xf32, #tpu.memory_space<smem>>
    %c81 = arith.constant 81 : index
    %82 = memref.load %arg2[%c81] : memref<288xf32, #tpu.memory_space<smem>>
    %c82 = arith.constant 82 : index
    %83 = memref.load %arg2[%c82] : memref<288xf32, #tpu.memory_space<smem>>
    %c83 = arith.constant 83 : index
    %84 = memref.load %arg2[%c83] : memref<288xf32, #tpu.memory_space<smem>>
    %c84 = arith.constant 84 : index
    %85 = memref.load %arg2[%c84] : memref<288xf32, #tpu.memory_space<smem>>
    %c85 = arith.constant 85 : index
    %86 = memref.load %arg2[%c85] : memref<288xf32, #tpu.memory_space<smem>>
    %c86 = arith.constant 86 : index
    %87 = memref.load %arg2[%c86] : memref<288xf32, #tpu.memory_space<smem>>
    %c87 = arith.constant 87 : index
    %88 = memref.load %arg2[%c87] : memref<288xf32, #tpu.memory_space<smem>>
    %c88 = arith.constant 88 : index
    %89 = memref.load %arg2[%c88] : memref<288xf32, #tpu.memory_space<smem>>
    %c89 = arith.constant 89 : index
    %90 = memref.load %arg2[%c89] : memref<288xf32, #tpu.memory_space<smem>>
    %c90 = arith.constant 90 : index
    %91 = memref.load %arg2[%c90] : memref<288xf32, #tpu.memory_space<smem>>
    %c91 = arith.constant 91 : index
    %92 = memref.load %arg2[%c91] : memref<288xf32, #tpu.memory_space<smem>>
    %c92 = arith.constant 92 : index
    %93 = memref.load %arg2[%c92] : memref<288xf32, #tpu.memory_space<smem>>
    %c93 = arith.constant 93 : index
    %94 = memref.load %arg2[%c93] : memref<288xf32, #tpu.memory_space<smem>>
    %c94 = arith.constant 94 : index
    %95 = memref.load %arg2[%c94] : memref<288xf32, #tpu.memory_space<smem>>
    %c95 = arith.constant 95 : index
    %96 = memref.load %arg2[%c95] : memref<288xf32, #tpu.memory_space<smem>>
    %c96 = arith.constant 96 : index
    %97 = memref.load %arg2[%c96] : memref<288xf32, #tpu.memory_space<smem>>
    %c97 = arith.constant 97 : index
    %98 = memref.load %arg2[%c97] : memref<288xf32, #tpu.memory_space<smem>>
    %c98 = arith.constant 98 : index
    %99 = memref.load %arg2[%c98] : memref<288xf32, #tpu.memory_space<smem>>
    %c99 = arith.constant 99 : index
    %100 = memref.load %arg2[%c99] : memref<288xf32, #tpu.memory_space<smem>>
    %c100 = arith.constant 100 : index
    %101 = memref.load %arg2[%c100] : memref<288xf32, #tpu.memory_space<smem>>
    %c101 = arith.constant 101 : index
    %102 = memref.load %arg2[%c101] : memref<288xf32, #tpu.memory_space<smem>>
    %c102 = arith.constant 102 : index
    %103 = memref.load %arg2[%c102] : memref<288xf32, #tpu.memory_space<smem>>
    %c103 = arith.constant 103 : index
    %104 = memref.load %arg2[%c103] : memref<288xf32, #tpu.memory_space<smem>>
    %c104 = arith.constant 104 : index
    %105 = memref.load %arg2[%c104] : memref<288xf32, #tpu.memory_space<smem>>
    %c105 = arith.constant 105 : index
    %106 = memref.load %arg2[%c105] : memref<288xf32, #tpu.memory_space<smem>>
    %c106 = arith.constant 106 : index
    %107 = memref.load %arg2[%c106] : memref<288xf32, #tpu.memory_space<smem>>
    %c107 = arith.constant 107 : index
    %108 = memref.load %arg2[%c107] : memref<288xf32, #tpu.memory_space<smem>>
    %c108 = arith.constant 108 : index
    %109 = memref.load %arg2[%c108] : memref<288xf32, #tpu.memory_space<smem>>
    %c109 = arith.constant 109 : index
    %110 = memref.load %arg2[%c109] : memref<288xf32, #tpu.memory_space<smem>>
    %c110 = arith.constant 110 : index
    %111 = memref.load %arg2[%c110] : memref<288xf32, #tpu.memory_space<smem>>
    %c111 = arith.constant 111 : index
    %112 = memref.load %arg2[%c111] : memref<288xf32, #tpu.memory_space<smem>>
    %c112 = arith.constant 112 : index
    %113 = memref.load %arg2[%c112] : memref<288xf32, #tpu.memory_space<smem>>
    %c113 = arith.constant 113 : index
    %114 = memref.load %arg2[%c113] : memref<288xf32, #tpu.memory_space<smem>>
    %c114 = arith.constant 114 : index
    %115 = memref.load %arg2[%c114] : memref<288xf32, #tpu.memory_space<smem>>
    %c115 = arith.constant 115 : index
    %116 = memref.load %arg2[%c115] : memref<288xf32, #tpu.memory_space<smem>>
    %c116 = arith.constant 116 : index
    %117 = memref.load %arg2[%c116] : memref<288xf32, #tpu.memory_space<smem>>
    %c117 = arith.constant 117 : index
    %118 = memref.load %arg2[%c117] : memref<288xf32, #tpu.memory_space<smem>>
    %c118 = arith.constant 118 : index
    %119 = memref.load %arg2[%c118] : memref<288xf32, #tpu.memory_space<smem>>
    %c119 = arith.constant 119 : index
    %120 = memref.load %arg2[%c119] : memref<288xf32, #tpu.memory_space<smem>>
    %c120 = arith.constant 120 : index
    %121 = memref.load %arg2[%c120] : memref<288xf32, #tpu.memory_space<smem>>
    %c121 = arith.constant 121 : index
    %122 = memref.load %arg2[%c121] : memref<288xf32, #tpu.memory_space<smem>>
    %c122 = arith.constant 122 : index
    %123 = memref.load %arg2[%c122] : memref<288xf32, #tpu.memory_space<smem>>
    %c123 = arith.constant 123 : index
    %124 = memref.load %arg2[%c123] : memref<288xf32, #tpu.memory_space<smem>>
    %c124 = arith.constant 124 : index
    %125 = memref.load %arg2[%c124] : memref<288xf32, #tpu.memory_space<smem>>
    %c125 = arith.constant 125 : index
    %126 = memref.load %arg2[%c125] : memref<288xf32, #tpu.memory_space<smem>>
    %c126 = arith.constant 126 : index
    %127 = memref.load %arg2[%c126] : memref<288xf32, #tpu.memory_space<smem>>
    %c127 = arith.constant 127 : index
    %128 = memref.load %arg2[%c127] : memref<288xf32, #tpu.memory_space<smem>>
    %c128 = arith.constant 128 : index
    %129 = memref.load %arg2[%c128] : memref<288xf32, #tpu.memory_space<smem>>
    %c129 = arith.constant 129 : index
    %130 = memref.load %arg2[%c129] : memref<288xf32, #tpu.memory_space<smem>>
    %c130 = arith.constant 130 : index
    %131 = memref.load %arg2[%c130] : memref<288xf32, #tpu.memory_space<smem>>
    %c131 = arith.constant 131 : index
    %132 = memref.load %arg2[%c131] : memref<288xf32, #tpu.memory_space<smem>>
    %c132 = arith.constant 132 : index
    %133 = memref.load %arg2[%c132] : memref<288xf32, #tpu.memory_space<smem>>
    %c133 = arith.constant 133 : index
    %134 = memref.load %arg2[%c133] : memref<288xf32, #tpu.memory_space<smem>>
    %c134 = arith.constant 134 : index
    %135 = memref.load %arg2[%c134] : memref<288xf32, #tpu.memory_space<smem>>
    %c135 = arith.constant 135 : index
    %136 = memref.load %arg2[%c135] : memref<288xf32, #tpu.memory_space<smem>>
    %c136 = arith.constant 136 : index
    %137 = memref.load %arg2[%c136] : memref<288xf32, #tpu.memory_space<smem>>
    %c137 = arith.constant 137 : index
    %138 = memref.load %arg2[%c137] : memref<288xf32, #tpu.memory_space<smem>>
    %c138 = arith.constant 138 : index
    %139 = memref.load %arg2[%c138] : memref<288xf32, #tpu.memory_space<smem>>
    %c139 = arith.constant 139 : index
    %140 = memref.load %arg2[%c139] : memref<288xf32, #tpu.memory_space<smem>>
    %c140 = arith.constant 140 : index
    %141 = memref.load %arg2[%c140] : memref<288xf32, #tpu.memory_space<smem>>
    %c141 = arith.constant 141 : index
    %142 = memref.load %arg2[%c141] : memref<288xf32, #tpu.memory_space<smem>>
    %c142 = arith.constant 142 : index
    %143 = memref.load %arg2[%c142] : memref<288xf32, #tpu.memory_space<smem>>
    %c143 = arith.constant 143 : index
    %144 = memref.load %arg2[%c143] : memref<288xf32, #tpu.memory_space<smem>>
    %c144 = arith.constant 144 : index
    %145 = memref.load %arg2[%c144] : memref<288xf32, #tpu.memory_space<smem>>
    %c145 = arith.constant 145 : index
    %146 = memref.load %arg2[%c145] : memref<288xf32, #tpu.memory_space<smem>>
    %c146 = arith.constant 146 : index
    %147 = memref.load %arg2[%c146] : memref<288xf32, #tpu.memory_space<smem>>
    %c147 = arith.constant 147 : index
    %148 = memref.load %arg2[%c147] : memref<288xf32, #tpu.memory_space<smem>>
    %c148 = arith.constant 148 : index
    %149 = memref.load %arg2[%c148] : memref<288xf32, #tpu.memory_space<smem>>
    %c149 = arith.constant 149 : index
    %150 = memref.load %arg2[%c149] : memref<288xf32, #tpu.memory_space<smem>>
    %c150 = arith.constant 150 : index
    %151 = memref.load %arg2[%c150] : memref<288xf32, #tpu.memory_space<smem>>
    %c151 = arith.constant 151 : index
    %152 = memref.load %arg2[%c151] : memref<288xf32, #tpu.memory_space<smem>>
    %c152 = arith.constant 152 : index
    %153 = memref.load %arg2[%c152] : memref<288xf32, #tpu.memory_space<smem>>
    %c153 = arith.constant 153 : index
    %154 = memref.load %arg2[%c153] : memref<288xf32, #tpu.memory_space<smem>>
    %c154 = arith.constant 154 : index
    %155 = memref.load %arg2[%c154] : memref<288xf32, #tpu.memory_space<smem>>
    %c155 = arith.constant 155 : index
    %156 = memref.load %arg2[%c155] : memref<288xf32, #tpu.memory_space<smem>>
    %c156 = arith.constant 156 : index
    %157 = memref.load %arg2[%c156] : memref<288xf32, #tpu.memory_space<smem>>
    %c157 = arith.constant 157 : index
    %158 = memref.load %arg2[%c157] : memref<288xf32, #tpu.memory_space<smem>>
    %c158 = arith.constant 158 : index
    %159 = memref.load %arg2[%c158] : memref<288xf32, #tpu.memory_space<smem>>
    %c159 = arith.constant 159 : index
    %160 = memref.load %arg2[%c159] : memref<288xf32, #tpu.memory_space<smem>>
    %c160 = arith.constant 160 : index
    %161 = memref.load %arg2[%c160] : memref<288xf32, #tpu.memory_space<smem>>
    %c161 = arith.constant 161 : index
    %162 = memref.load %arg2[%c161] : memref<288xf32, #tpu.memory_space<smem>>
    %c162 = arith.constant 162 : index
    %163 = memref.load %arg2[%c162] : memref<288xf32, #tpu.memory_space<smem>>
    %c163 = arith.constant 163 : index
    %164 = memref.load %arg2[%c163] : memref<288xf32, #tpu.memory_space<smem>>
    %c164 = arith.constant 164 : index
    %165 = memref.load %arg2[%c164] : memref<288xf32, #tpu.memory_space<smem>>
    %c165 = arith.constant 165 : index
    %166 = memref.load %arg2[%c165] : memref<288xf32, #tpu.memory_space<smem>>
    %c166 = arith.constant 166 : index
    %167 = memref.load %arg2[%c166] : memref<288xf32, #tpu.memory_space<smem>>
    %c167 = arith.constant 167 : index
    %168 = memref.load %arg2[%c167] : memref<288xf32, #tpu.memory_space<smem>>
    %c168 = arith.constant 168 : index
    %169 = memref.load %arg2[%c168] : memref<288xf32, #tpu.memory_space<smem>>
    %c169 = arith.constant 169 : index
    %170 = memref.load %arg2[%c169] : memref<288xf32, #tpu.memory_space<smem>>
    %c170 = arith.constant 170 : index
    %171 = memref.load %arg2[%c170] : memref<288xf32, #tpu.memory_space<smem>>
    %c171 = arith.constant 171 : index
    %172 = memref.load %arg2[%c171] : memref<288xf32, #tpu.memory_space<smem>>
    %c172 = arith.constant 172 : index
    %173 = memref.load %arg2[%c172] : memref<288xf32, #tpu.memory_space<smem>>
    %c173 = arith.constant 173 : index
    %174 = memref.load %arg2[%c173] : memref<288xf32, #tpu.memory_space<smem>>
    %c174 = arith.constant 174 : index
    %175 = memref.load %arg2[%c174] : memref<288xf32, #tpu.memory_space<smem>>
    %c175 = arith.constant 175 : index
    %176 = memref.load %arg2[%c175] : memref<288xf32, #tpu.memory_space<smem>>
    %c176 = arith.constant 176 : index
    %177 = memref.load %arg2[%c176] : memref<288xf32, #tpu.memory_space<smem>>
    %c177 = arith.constant 177 : index
    %178 = memref.load %arg2[%c177] : memref<288xf32, #tpu.memory_space<smem>>
    %c178 = arith.constant 178 : index
    %179 = memref.load %arg2[%c178] : memref<288xf32, #tpu.memory_space<smem>>
    %c179 = arith.constant 179 : index
    %180 = memref.load %arg2[%c179] : memref<288xf32, #tpu.memory_space<smem>>
    %c180 = arith.constant 180 : index
    %181 = memref.load %arg2[%c180] : memref<288xf32, #tpu.memory_space<smem>>
    %c181 = arith.constant 181 : index
    %182 = memref.load %arg2[%c181] : memref<288xf32, #tpu.memory_space<smem>>
    %c182 = arith.constant 182 : index
    %183 = memref.load %arg2[%c182] : memref<288xf32, #tpu.memory_space<smem>>
    %c183 = arith.constant 183 : index
    %184 = memref.load %arg2[%c183] : memref<288xf32, #tpu.memory_space<smem>>
    %c184 = arith.constant 184 : index
    %185 = memref.load %arg2[%c184] : memref<288xf32, #tpu.memory_space<smem>>
    %c185 = arith.constant 185 : index
    %186 = memref.load %arg2[%c185] : memref<288xf32, #tpu.memory_space<smem>>
    %c186 = arith.constant 186 : index
    %187 = memref.load %arg2[%c186] : memref<288xf32, #tpu.memory_space<smem>>
    %c187 = arith.constant 187 : index
    %188 = memref.load %arg2[%c187] : memref<288xf32, #tpu.memory_space<smem>>
    %c188 = arith.constant 188 : index
    %189 = memref.load %arg2[%c188] : memref<288xf32, #tpu.memory_space<smem>>
    %c189 = arith.constant 189 : index
    %190 = memref.load %arg2[%c189] : memref<288xf32, #tpu.memory_space<smem>>
    %c190 = arith.constant 190 : index
    %191 = memref.load %arg2[%c190] : memref<288xf32, #tpu.memory_space<smem>>
    %c191 = arith.constant 191 : index
    %192 = memref.load %arg2[%c191] : memref<288xf32, #tpu.memory_space<smem>>
    %c192 = arith.constant 192 : index
    %193 = memref.load %arg2[%c192] : memref<288xf32, #tpu.memory_space<smem>>
    %c193 = arith.constant 193 : index
    %194 = memref.load %arg2[%c193] : memref<288xf32, #tpu.memory_space<smem>>
    %c194 = arith.constant 194 : index
    %195 = memref.load %arg2[%c194] : memref<288xf32, #tpu.memory_space<smem>>
    %c195 = arith.constant 195 : index
    %196 = memref.load %arg2[%c195] : memref<288xf32, #tpu.memory_space<smem>>
    %c196 = arith.constant 196 : index
    %197 = memref.load %arg2[%c196] : memref<288xf32, #tpu.memory_space<smem>>
    %c197 = arith.constant 197 : index
    %198 = memref.load %arg2[%c197] : memref<288xf32, #tpu.memory_space<smem>>
    %c198 = arith.constant 198 : index
    %199 = memref.load %arg2[%c198] : memref<288xf32, #tpu.memory_space<smem>>
    %c199 = arith.constant 199 : index
    %200 = memref.load %arg2[%c199] : memref<288xf32, #tpu.memory_space<smem>>
    %c200 = arith.constant 200 : index
    %201 = memref.load %arg2[%c200] : memref<288xf32, #tpu.memory_space<smem>>
    %c201 = arith.constant 201 : index
    %202 = memref.load %arg2[%c201] : memref<288xf32, #tpu.memory_space<smem>>
    %c202 = arith.constant 202 : index
    %203 = memref.load %arg2[%c202] : memref<288xf32, #tpu.memory_space<smem>>
    %c203 = arith.constant 203 : index
    %204 = memref.load %arg2[%c203] : memref<288xf32, #tpu.memory_space<smem>>
    %c204 = arith.constant 204 : index
    %205 = memref.load %arg2[%c204] : memref<288xf32, #tpu.memory_space<smem>>
    %c205 = arith.constant 205 : index
    %206 = memref.load %arg2[%c205] : memref<288xf32, #tpu.memory_space<smem>>
    %c206 = arith.constant 206 : index
    %207 = memref.load %arg2[%c206] : memref<288xf32, #tpu.memory_space<smem>>
    %c207 = arith.constant 207 : index
    %208 = memref.load %arg2[%c207] : memref<288xf32, #tpu.memory_space<smem>>
    %c208 = arith.constant 208 : index
    %209 = memref.load %arg2[%c208] : memref<288xf32, #tpu.memory_space<smem>>
    %c209 = arith.constant 209 : index
    %210 = memref.load %arg2[%c209] : memref<288xf32, #tpu.memory_space<smem>>
    %c210 = arith.constant 210 : index
    %211 = memref.load %arg2[%c210] : memref<288xf32, #tpu.memory_space<smem>>
    %c211 = arith.constant 211 : index
    %212 = memref.load %arg2[%c211] : memref<288xf32, #tpu.memory_space<smem>>
    %c212 = arith.constant 212 : index
    %213 = memref.load %arg2[%c212] : memref<288xf32, #tpu.memory_space<smem>>
    %c213 = arith.constant 213 : index
    %214 = memref.load %arg2[%c213] : memref<288xf32, #tpu.memory_space<smem>>
    %c214 = arith.constant 214 : index
    %215 = memref.load %arg2[%c214] : memref<288xf32, #tpu.memory_space<smem>>
    %c215 = arith.constant 215 : index
    %216 = memref.load %arg2[%c215] : memref<288xf32, #tpu.memory_space<smem>>
    %c216 = arith.constant 216 : index
    %217 = memref.load %arg2[%c216] : memref<288xf32, #tpu.memory_space<smem>>
    %c217 = arith.constant 217 : index
    %218 = memref.load %arg2[%c217] : memref<288xf32, #tpu.memory_space<smem>>
    %c218 = arith.constant 218 : index
    %219 = memref.load %arg2[%c218] : memref<288xf32, #tpu.memory_space<smem>>
    %c219 = arith.constant 219 : index
    %220 = memref.load %arg2[%c219] : memref<288xf32, #tpu.memory_space<smem>>
    %c220 = arith.constant 220 : index
    %221 = memref.load %arg2[%c220] : memref<288xf32, #tpu.memory_space<smem>>
    %c221 = arith.constant 221 : index
    %222 = memref.load %arg2[%c221] : memref<288xf32, #tpu.memory_space<smem>>
    %c222 = arith.constant 222 : index
    %223 = memref.load %arg2[%c222] : memref<288xf32, #tpu.memory_space<smem>>
    %c223 = arith.constant 223 : index
    %224 = memref.load %arg2[%c223] : memref<288xf32, #tpu.memory_space<smem>>
    %c224 = arith.constant 224 : index
    %225 = memref.load %arg2[%c224] : memref<288xf32, #tpu.memory_space<smem>>
    %c225 = arith.constant 225 : index
    %226 = memref.load %arg2[%c225] : memref<288xf32, #tpu.memory_space<smem>>
    %c226 = arith.constant 226 : index
    %227 = memref.load %arg2[%c226] : memref<288xf32, #tpu.memory_space<smem>>
    %c227 = arith.constant 227 : index
    %228 = memref.load %arg2[%c227] : memref<288xf32, #tpu.memory_space<smem>>
    %c228 = arith.constant 228 : index
    %229 = memref.load %arg2[%c228] : memref<288xf32, #tpu.memory_space<smem>>
    %c229 = arith.constant 229 : index
    %230 = memref.load %arg2[%c229] : memref<288xf32, #tpu.memory_space<smem>>
    %c230 = arith.constant 230 : index
    %231 = memref.load %arg2[%c230] : memref<288xf32, #tpu.memory_space<smem>>
    %c231 = arith.constant 231 : index
    %232 = memref.load %arg2[%c231] : memref<288xf32, #tpu.memory_space<smem>>
    %c232 = arith.constant 232 : index
    %233 = memref.load %arg2[%c232] : memref<288xf32, #tpu.memory_space<smem>>
    %c233 = arith.constant 233 : index
    %234 = memref.load %arg2[%c233] : memref<288xf32, #tpu.memory_space<smem>>
    %c234 = arith.constant 234 : index
    %235 = memref.load %arg2[%c234] : memref<288xf32, #tpu.memory_space<smem>>
    %c235 = arith.constant 235 : index
    %236 = memref.load %arg2[%c235] : memref<288xf32, #tpu.memory_space<smem>>
    %c236 = arith.constant 236 : index
    %237 = memref.load %arg2[%c236] : memref<288xf32, #tpu.memory_space<smem>>
    %c237 = arith.constant 237 : index
    %238 = memref.load %arg2[%c237] : memref<288xf32, #tpu.memory_space<smem>>
    %c238 = arith.constant 238 : index
    %239 = memref.load %arg2[%c238] : memref<288xf32, #tpu.memory_space<smem>>
    %c239 = arith.constant 239 : index
    %240 = memref.load %arg2[%c239] : memref<288xf32, #tpu.memory_space<smem>>
    %c240 = arith.constant 240 : index
    %241 = memref.load %arg2[%c240] : memref<288xf32, #tpu.memory_space<smem>>
    %c241 = arith.constant 241 : index
    %242 = memref.load %arg2[%c241] : memref<288xf32, #tpu.memory_space<smem>>
    %c242 = arith.constant 242 : index
    %243 = memref.load %arg2[%c242] : memref<288xf32, #tpu.memory_space<smem>>
    %c243 = arith.constant 243 : index
    %244 = memref.load %arg2[%c243] : memref<288xf32, #tpu.memory_space<smem>>
    %c244 = arith.constant 244 : index
    %245 = memref.load %arg2[%c244] : memref<288xf32, #tpu.memory_space<smem>>
    %c245 = arith.constant 245 : index
    %246 = memref.load %arg2[%c245] : memref<288xf32, #tpu.memory_space<smem>>
    %c246 = arith.constant 246 : index
    %247 = memref.load %arg2[%c246] : memref<288xf32, #tpu.memory_space<smem>>
    %c247 = arith.constant 247 : index
    %248 = memref.load %arg2[%c247] : memref<288xf32, #tpu.memory_space<smem>>
    %c248 = arith.constant 248 : index
    %249 = memref.load %arg2[%c248] : memref<288xf32, #tpu.memory_space<smem>>
    %c249 = arith.constant 249 : index
    %250 = memref.load %arg2[%c249] : memref<288xf32, #tpu.memory_space<smem>>
    %c250 = arith.constant 250 : index
    %251 = memref.load %arg2[%c250] : memref<288xf32, #tpu.memory_space<smem>>
    %c251 = arith.constant 251 : index
    %252 = memref.load %arg2[%c251] : memref<288xf32, #tpu.memory_space<smem>>
    %c252 = arith.constant 252 : index
    %253 = memref.load %arg2[%c252] : memref<288xf32, #tpu.memory_space<smem>>
    %c253 = arith.constant 253 : index
    %254 = memref.load %arg2[%c253] : memref<288xf32, #tpu.memory_space<smem>>
    %c254 = arith.constant 254 : index
    %255 = memref.load %arg2[%c254] : memref<288xf32, #tpu.memory_space<smem>>
    %c255 = arith.constant 255 : index
    %256 = memref.load %arg2[%c255] : memref<288xf32, #tpu.memory_space<smem>>
    %c256 = arith.constant 256 : index
    %257 = memref.load %arg2[%c256] : memref<288xf32, #tpu.memory_space<smem>>
    %c257 = arith.constant 257 : index
    %258 = memref.load %arg2[%c257] : memref<288xf32, #tpu.memory_space<smem>>
    %c258 = arith.constant 258 : index
    %259 = memref.load %arg2[%c258] : memref<288xf32, #tpu.memory_space<smem>>
    %c259 = arith.constant 259 : index
    %260 = memref.load %arg2[%c259] : memref<288xf32, #tpu.memory_space<smem>>
    %c260 = arith.constant 260 : index
    %261 = memref.load %arg2[%c260] : memref<288xf32, #tpu.memory_space<smem>>
    %c261 = arith.constant 261 : index
    %262 = memref.load %arg2[%c261] : memref<288xf32, #tpu.memory_space<smem>>
    %c262 = arith.constant 262 : index
    %263 = memref.load %arg2[%c262] : memref<288xf32, #tpu.memory_space<smem>>
    %c263 = arith.constant 263 : index
    %264 = memref.load %arg2[%c263] : memref<288xf32, #tpu.memory_space<smem>>
    %c264 = arith.constant 264 : index
    %265 = memref.load %arg2[%c264] : memref<288xf32, #tpu.memory_space<smem>>
    %c265 = arith.constant 265 : index
    %266 = memref.load %arg2[%c265] : memref<288xf32, #tpu.memory_space<smem>>
    %c266 = arith.constant 266 : index
    %267 = memref.load %arg2[%c266] : memref<288xf32, #tpu.memory_space<smem>>
    %c267 = arith.constant 267 : index
    %268 = memref.load %arg2[%c267] : memref<288xf32, #tpu.memory_space<smem>>
    %c268 = arith.constant 268 : index
    %269 = memref.load %arg2[%c268] : memref<288xf32, #tpu.memory_space<smem>>
    %c269 = arith.constant 269 : index
    %270 = memref.load %arg2[%c269] : memref<288xf32, #tpu.memory_space<smem>>
    %c270 = arith.constant 270 : index
    %271 = memref.load %arg2[%c270] : memref<288xf32, #tpu.memory_space<smem>>
    %c271 = arith.constant 271 : index
    %272 = memref.load %arg2[%c271] : memref<288xf32, #tpu.memory_space<smem>>
    %c272 = arith.constant 272 : index
    %273 = memref.load %arg2[%c272] : memref<288xf32, #tpu.memory_space<smem>>
    %c273 = arith.constant 273 : index
    %274 = memref.load %arg2[%c273] : memref<288xf32, #tpu.memory_space<smem>>
    %c274 = arith.constant 274 : index
    %275 = memref.load %arg2[%c274] : memref<288xf32, #tpu.memory_space<smem>>
    %c275 = arith.constant 275 : index
    %276 = memref.load %arg2[%c275] : memref<288xf32, #tpu.memory_space<smem>>
    %c276 = arith.constant 276 : index
    %277 = memref.load %arg2[%c276] : memref<288xf32, #tpu.memory_space<smem>>
    %c277 = arith.constant 277 : index
    %278 = memref.load %arg2[%c277] : memref<288xf32, #tpu.memory_space<smem>>
    %c278 = arith.constant 278 : index
    %279 = memref.load %arg2[%c278] : memref<288xf32, #tpu.memory_space<smem>>
    %c279 = arith.constant 279 : index
    %280 = memref.load %arg2[%c279] : memref<288xf32, #tpu.memory_space<smem>>
    %c280 = arith.constant 280 : index
    %281 = memref.load %arg2[%c280] : memref<288xf32, #tpu.memory_space<smem>>
    %c281 = arith.constant 281 : index
    %282 = memref.load %arg2[%c281] : memref<288xf32, #tpu.memory_space<smem>>
    %c282 = arith.constant 282 : index
    %283 = memref.load %arg2[%c282] : memref<288xf32, #tpu.memory_space<smem>>
    %c283 = arith.constant 283 : index
    %284 = memref.load %arg2[%c283] : memref<288xf32, #tpu.memory_space<smem>>
    %c284 = arith.constant 284 : index
    %285 = memref.load %arg2[%c284] : memref<288xf32, #tpu.memory_space<smem>>
    %c285 = arith.constant 285 : index
    %286 = memref.load %arg2[%c285] : memref<288xf32, #tpu.memory_space<smem>>
    %c286 = arith.constant 286 : index
    %287 = memref.load %arg2[%c286] : memref<288xf32, #tpu.memory_space<smem>>
    %c287 = arith.constant 287 : index
    %288 = memref.load %arg2[%c287] : memref<288xf32, #tpu.memory_space<smem>>
    %c0_0 = arith.constant 0 : index
    %289 = memref.load %arg3[%c0_0] : memref<8xf32, #tpu.memory_space<smem>>
    %c1_1 = arith.constant 1 : index
    %290 = memref.load %arg3[%c1_1] : memref<8xf32, #tpu.memory_space<smem>>
    %c2_2 = arith.constant 2 : index
    %291 = memref.load %arg3[%c2_2] : memref<8xf32, #tpu.memory_space<smem>>
    %c3_3 = arith.constant 3 : index
    %292 = memref.load %arg3[%c3_3] : memref<8xf32, #tpu.memory_space<smem>>
    %c4_4 = arith.constant 4 : index
    %293 = memref.load %arg3[%c4_4] : memref<8xf32, #tpu.memory_space<smem>>
    %c5_5 = arith.constant 5 : index
    %294 = memref.load %arg3[%c5_5] : memref<8xf32, #tpu.memory_space<smem>>
    %c6_6 = arith.constant 6 : index
    %295 = memref.load %arg3[%c6_6] : memref<8xf32, #tpu.memory_space<smem>>
    %c7_7 = arith.constant 7 : index
    %296 = memref.load %arg3[%c7_7] : memref<8xf32, #tpu.memory_space<smem>>
    %c0_i32 = arith.constant 0 : i32
    %c8_i32 = arith.constant 8 : i32
    %297 = arith.muli %c0_i32, %c8_i32 : i32
    %298 = arith.addi %0, %297 : i32
    %c8_i32_8 = arith.constant 8 : i32
    %299 = arith.muli %c0_i32, %c8_i32_8 : i32
    %300 = tpu.assume_multiple %298, 8 : i32
    %301 = tpu.assume_multiple %299, 8 : i32
    %cst = arith.constant 0.000000e+00 : f32
    %302 = vector.broadcast %cst : f32 to vector<8x16xf32>
    %303 = vector.broadcast %289 : f32 to vector<8x16xf32>
    %304 = arith.addf %302, %303 : vector<8x16xf32>
    %cst_9 = arith.constant 0.000000e+00 : f32
    %305 = vector.broadcast %cst_9 : f32 to vector<8x16xf32>
    %306 = vector.broadcast %290 : f32 to vector<8x16xf32>
    %307 = arith.addf %305, %306 : vector<8x16xf32>
    %cst_10 = arith.constant 0.000000e+00 : f32
    %308 = vector.broadcast %cst_10 : f32 to vector<8x16xf32>
    %309 = vector.broadcast %291 : f32 to vector<8x16xf32>
    %310 = arith.addf %308, %309 : vector<8x16xf32>
    %cst_11 = arith.constant 0.000000e+00 : f32
    %311 = vector.broadcast %cst_11 : f32 to vector<8x16xf32>
    %312 = vector.broadcast %292 : f32 to vector<8x16xf32>
    %313 = arith.addf %311, %312 : vector<8x16xf32>
    %cst_12 = arith.constant 0.000000e+00 : f32
    %314 = vector.broadcast %cst_12 : f32 to vector<8x16xf32>
    %315 = vector.broadcast %293 : f32 to vector<8x16xf32>
    %316 = arith.addf %314, %315 : vector<8x16xf32>
    %cst_13 = arith.constant 0.000000e+00 : f32
    %317 = vector.broadcast %cst_13 : f32 to vector<8x16xf32>
    %318 = vector.broadcast %294 : f32 to vector<8x16xf32>
    %319 = arith.addf %317, %318 : vector<8x16xf32>
    %cst_14 = arith.constant 0.000000e+00 : f32
    %320 = vector.broadcast %cst_14 : f32 to vector<8x16xf32>
    %321 = vector.broadcast %295 : f32 to vector<8x16xf32>
    %322 = arith.addf %320, %321 : vector<8x16xf32>
    %cst_15 = arith.constant 0.000000e+00 : f32
    %323 = vector.broadcast %cst_15 : f32 to vector<8x16xf32>
    %324 = vector.broadcast %296 : f32 to vector<8x16xf32>
    %325 = arith.addf %323, %324 : vector<8x16xf32>
    %c0_16 = arith.constant 0 : index
    %c0_17 = arith.constant 0 : index
    %326 = arith.index_cast %300 : i32 to index
    %c0_18 = arith.constant 0 : index
    %327 = vector.load %arg4[%c0_16, %c0_17, %326, %c0_18] : memref<1x4x18x128xf32, #tpu.memory_space<vmem>>, vector<1x1x10x128xf32>
    %328 = vector.shape_cast %327 : vector<1x1x10x128xf32> to vector<10x128xf32>
    %329 = vector.extract_strided_slice %328 {offsets = [0, 0], sizes = [8, 16], strides = [1, 1]} : vector<10x128xf32> to vector<8x16xf32>
    %330 = vector.extract_strided_slice %328 {offsets = [0, 1], sizes = [8, 16], strides = [1, 1]} : vector<10x128xf32> to vector<8x16xf32>
    %331 = vector.extract_strided_slice %328 {offsets = [0, 2], sizes = [8, 16], strides = [1, 1]} : vector<10x128xf32> to vector<8x16xf32>
    %332 = vector.extract_strided_slice %328 {offsets = [1, 0], sizes = [8, 16], strides = [1, 1]} : vector<10x128xf32> to vector<8x16xf32>
    %333 = vector.extract_strided_slice %328 {offsets = [1, 1], sizes = [8, 16], strides = [1, 1]} : vector<10x128xf32> to vector<8x16xf32>
    %334 = vector.extract_strided_slice %328 {offsets = [1, 2], sizes = [8, 16], strides = [1, 1]} : vector<10x128xf32> to vector<8x16xf32>
    %335 = vector.extract_strided_slice %328 {offsets = [2, 0], sizes = [8, 16], strides = [1, 1]} : vector<10x128xf32> to vector<8x16xf32>
    %336 = vector.extract_strided_slice %328 {offsets = [2, 1], sizes = [8, 16], strides = [1, 1]} : vector<10x128xf32> to vector<8x16xf32>
    %337 = vector.extract_strided_slice %328 {offsets = [2, 2], sizes = [8, 16], strides = [1, 1]} : vector<10x128xf32> to vector<8x16xf32>
    %338 = vector.broadcast %1 : f32 to vector<8x16xf32>
    %339 = arith.mulf %338, %329 : vector<8x16xf32>
    %340 = arith.addf %304, %339 : vector<8x16xf32>
    %341 = vector.broadcast %2 : f32 to vector<8x16xf32>
    %342 = arith.mulf %341, %330 : vector<8x16xf32>
    %343 = arith.addf %340, %342 : vector<8x16xf32>
    %344 = vector.broadcast %3 : f32 to vector<8x16xf32>
    %345 = arith.mulf %344, %331 : vector<8x16xf32>
    %346 = arith.addf %343, %345 : vector<8x16xf32>
    %347 = vector.broadcast %4 : f32 to vector<8x16xf32>
    %348 = arith.mulf %347, %332 : vector<8x16xf32>
    %349 = arith.addf %346, %348 : vector<8x16xf32>
    %350 = vector.broadcast %5 : f32 to vector<8x16xf32>
    %351 = arith.mulf %350, %333 : vector<8x16xf32>
    %352 = arith.addf %349, %351 : vector<8x16xf32>
    %353 = vector.broadcast %6 : f32 to vector<8x16xf32>
    %354 = arith.mulf %353, %334 : vector<8x16xf32>
    %355 = arith.addf %352, %354 : vector<8x16xf32>
    %356 = vector.broadcast %7 : f32 to vector<8x16xf32>
    %357 = arith.mulf %356, %335 : vector<8x16xf32>
    %358 = arith.addf %355, %357 : vector<8x16xf32>
    %359 = vector.broadcast %8 : f32 to vector<8x16xf32>
    %360 = arith.mulf %359, %336 : vector<8x16xf32>
    %361 = arith.addf %358, %360 : vector<8x16xf32>
    %362 = vector.broadcast %9 : f32 to vector<8x16xf32>
    %363 = arith.mulf %362, %337 : vector<8x16xf32>
    %364 = arith.addf %361, %363 : vector<8x16xf32>
    %365 = vector.broadcast %37 : f32 to vector<8x16xf32>
    %366 = arith.mulf %365, %329 : vector<8x16xf32>
    %367 = arith.addf %307, %366 : vector<8x16xf32>
    %368 = vector.broadcast %38 : f32 to vector<8x16xf32>
    %369 = arith.mulf %368, %330 : vector<8x16xf32>
    %370 = arith.addf %367, %369 : vector<8x16xf32>
    %371 = vector.broadcast %39 : f32 to vector<8x16xf32>
    %372 = arith.mulf %371, %331 : vector<8x16xf32>
    %373 = arith.addf %370, %372 : vector<8x16xf32>
    %374 = vector.broadcast %40 : f32 to vector<8x16xf32>
    %375 = arith.mulf %374, %332 : vector<8x16xf32>
    %376 = arith.addf %373, %375 : vector<8x16xf32>
    %377 = vector.broadcast %41 : f32 to vector<8x16xf32>
    %378 = arith.mulf %377, %333 : vector<8x16xf32>
    %379 = arith.addf %376, %378 : vector<8x16xf32>
    %380 = vector.broadcast %42 : f32 to vector<8x16xf32>
    %381 = arith.mulf %380, %334 : vector<8x16xf32>
    %382 = arith.addf %379, %381 : vector<8x16xf32>
    %383 = vector.broadcast %43 : f32 to vector<8x16xf32>
    %384 = arith.mulf %383, %335 : vector<8x16xf32>
    %385 = arith.addf %382, %384 : vector<8x16xf32>
    %386 = vector.broadcast %44 : f32 to vector<8x16xf32>
    %387 = arith.mulf %386, %336 : vector<8x16xf32>
    %388 = arith.addf %385, %387 : vector<8x16xf32>
    %389 = vector.broadcast %45 : f32 to vector<8x16xf32>
    %390 = arith.mulf %389, %337 : vector<8x16xf32>
    %391 = arith.addf %388, %390 : vector<8x16xf32>
    %392 = vector.broadcast %73 : f32 to vector<8x16xf32>
    %393 = arith.mulf %392, %329 : vector<8x16xf32>
    %394 = arith.addf %310, %393 : vector<8x16xf32>
    %395 = vector.broadcast %74 : f32 to vector<8x16xf32>
    %396 = arith.mulf %395, %330 : vector<8x16xf32>
    %397 = arith.addf %394, %396 : vector<8x16xf32>
    %398 = vector.broadcast %75 : f32 to vector<8x16xf32>
    %399 = arith.mulf %398, %331 : vector<8x16xf32>
    %400 = arith.addf %397, %399 : vector<8x16xf32>
    %401 = vector.broadcast %76 : f32 to vector<8x16xf32>
    %402 = arith.mulf %401, %332 : vector<8x16xf32>
    %403 = arith.addf %400, %402 : vector<8x16xf32>
    %404 = vector.broadcast %77 : f32 to vector<8x16xf32>
    %405 = arith.mulf %404, %333 : vector<8x16xf32>
    %406 = arith.addf %403, %405 : vector<8x16xf32>
    %407 = vector.broadcast %78 : f32 to vector<8x16xf32>
    %408 = arith.mulf %407, %334 : vector<8x16xf32>
    %409 = arith.addf %406, %408 : vector<8x16xf32>
    %410 = vector.broadcast %79 : f32 to vector<8x16xf32>
    %411 = arith.mulf %410, %335 : vector<8x16xf32>
    %412 = arith.addf %409, %411 : vector<8x16xf32>
    %413 = vector.broadcast %80 : f32 to vector<8x16xf32>
    %414 = arith.mulf %413, %336 : vector<8x16xf32>
    %415 = arith.addf %412, %414 : vector<8x16xf32>
    %416 = vector.broadcast %81 : f32 to vector<8x16xf32>
    %417 = arith.mulf %416, %337 : vector<8x16xf32>
    %418 = arith.addf %415, %417 : vector<8x16xf32>
    %419 = vector.broadcast %109 : f32 to vector<8x16xf32>
    %420 = arith.mulf %419, %329 : vector<8x16xf32>
    %421 = arith.addf %313, %420 : vector<8x16xf32>
    %422 = vector.broadcast %110 : f32 to vector<8x16xf32>
    %423 = arith.mulf %422, %330 : vector<8x16xf32>
    %424 = arith.addf %421, %423 : vector<8x16xf32>
    %425 = vector.broadcast %111 : f32 to vector<8x16xf32>
    %426 = arith.mulf %425, %331 : vector<8x16xf32>
    %427 = arith.addf %424, %426 : vector<8x16xf32>
    %428 = vector.broadcast %112 : f32 to vector<8x16xf32>
    %429 = arith.mulf %428, %332 : vector<8x16xf32>
    %430 = arith.addf %427, %429 : vector<8x16xf32>
    %431 = vector.broadcast %113 : f32 to vector<8x16xf32>
    %432 = arith.mulf %431, %333 : vector<8x16xf32>
    %433 = arith.addf %430, %432 : vector<8x16xf32>
    %434 = vector.broadcast %114 : f32 to vector<8x16xf32>
    %435 = arith.mulf %434, %334 : vector<8x16xf32>
    %436 = arith.addf %433, %435 : vector<8x16xf32>
    %437 = vector.broadcast %115 : f32 to vector<8x16xf32>
    %438 = arith.mulf %437, %335 : vector<8x16xf32>
    %439 = arith.addf %436, %438 : vector<8x16xf32>
    %440 = vector.broadcast %116 : f32 to vector<8x16xf32>
    %441 = arith.mulf %440, %336 : vector<8x16xf32>
    %442 = arith.addf %439, %441 : vector<8x16xf32>
    %443 = vector.broadcast %117 : f32 to vector<8x16xf32>
    %444 = arith.mulf %443, %337 : vector<8x16xf32>
    %445 = arith.addf %442, %444 : vector<8x16xf32>
    %446 = vector.broadcast %145 : f32 to vector<8x16xf32>
    %447 = arith.mulf %446, %329 : vector<8x16xf32>
    %448 = arith.addf %316, %447 : vector<8x16xf32>
    %449 = vector.broadcast %146 : f32 to vector<8x16xf32>
    %450 = arith.mulf %449, %330 : vector<8x16xf32>
    %451 = arith.addf %448, %450 : vector<8x16xf32>
    %452 = vector.broadcast %147 : f32 to vector<8x16xf32>
    %453 = arith.mulf %452, %331 : vector<8x16xf32>
    %454 = arith.addf %451, %453 : vector<8x16xf32>
    %455 = vector.broadcast %148 : f32 to vector<8x16xf32>
    %456 = arith.mulf %455, %332 : vector<8x16xf32>
    %457 = arith.addf %454, %456 : vector<8x16xf32>
    %458 = vector.broadcast %149 : f32 to vector<8x16xf32>
    %459 = arith.mulf %458, %333 : vector<8x16xf32>
    %460 = arith.addf %457, %459 : vector<8x16xf32>
    %461 = vector.broadcast %150 : f32 to vector<8x16xf32>
    %462 = arith.mulf %461, %334 : vector<8x16xf32>
    %463 = arith.addf %460, %462 : vector<8x16xf32>
    %464 = vector.broadcast %151 : f32 to vector<8x16xf32>
    %465 = arith.mulf %464, %335 : vector<8x16xf32>
    %466 = arith.addf %463, %465 : vector<8x16xf32>
    %467 = vector.broadcast %152 : f32 to vector<8x16xf32>
    %468 = arith.mulf %467, %336 : vector<8x16xf32>
    %469 = arith.addf %466, %468 : vector<8x16xf32>
    %470 = vector.broadcast %153 : f32 to vector<8x16xf32>
    %471 = arith.mulf %470, %337 : vector<8x16xf32>
    %472 = arith.addf %469, %471 : vector<8x16xf32>
    %473 = vector.broadcast %181 : f32 to vector<8x16xf32>
    %474 = arith.mulf %473, %329 : vector<8x16xf32>
    %475 = arith.addf %319, %474 : vector<8x16xf32>
    %476 = vector.broadcast %182 : f32 to vector<8x16xf32>
    %477 = arith.mulf %476, %330 : vector<8x16xf32>
    %478 = arith.addf %475, %477 : vector<8x16xf32>
    %479 = vector.broadcast %183 : f32 to vector<8x16xf32>
    %480 = arith.mulf %479, %331 : vector<8x16xf32>
    %481 = arith.addf %478, %480 : vector<8x16xf32>
    %482 = vector.broadcast %184 : f32 to vector<8x16xf32>
    %483 = arith.mulf %482, %332 : vector<8x16xf32>
    %484 = arith.addf %481, %483 : vector<8x16xf32>
    %485 = vector.broadcast %185 : f32 to vector<8x16xf32>
    %486 = arith.mulf %485, %333 : vector<8x16xf32>
    %487 = arith.addf %484, %486 : vector<8x16xf32>
    %488 = vector.broadcast %186 : f32 to vector<8x16xf32>
    %489 = arith.mulf %488, %334 : vector<8x16xf32>
    %490 = arith.addf %487, %489 : vector<8x16xf32>
    %491 = vector.broadcast %187 : f32 to vector<8x16xf32>
    %492 = arith.mulf %491, %335 : vector<8x16xf32>
    %493 = arith.addf %490, %492 : vector<8x16xf32>
    %494 = vector.broadcast %188 : f32 to vector<8x16xf32>
    %495 = arith.mulf %494, %336 : vector<8x16xf32>
    %496 = arith.addf %493, %495 : vector<8x16xf32>
    %497 = vector.broadcast %189 : f32 to vector<8x16xf32>
    %498 = arith.mulf %497, %337 : vector<8x16xf32>
    %499 = arith.addf %496, %498 : vector<8x16xf32>
    %500 = vector.broadcast %217 : f32 to vector<8x16xf32>
    %501 = arith.mulf %500, %329 : vector<8x16xf32>
    %502 = arith.addf %322, %501 : vector<8x16xf32>
    %503 = vector.broadcast %218 : f32 to vector<8x16xf32>
    %504 = arith.mulf %503, %330 : vector<8x16xf32>
    %505 = arith.addf %502, %504 : vector<8x16xf32>
    %506 = vector.broadcast %219 : f32 to vector<8x16xf32>
    %507 = arith.mulf %506, %331 : vector<8x16xf32>
    %508 = arith.addf %505, %507 : vector<8x16xf32>
    %509 = vector.broadcast %220 : f32 to vector<8x16xf32>
    %510 = arith.mulf %509, %332 : vector<8x16xf32>
    %511 = arith.addf %508, %510 : vector<8x16xf32>
    %512 = vector.broadcast %221 : f32 to vector<8x16xf32>
    %513 = arith.mulf %512, %333 : vector<8x16xf32>
    %514 = arith.addf %511, %513 : vector<8x16xf32>
    %515 = vector.broadcast %222 : f32 to vector<8x16xf32>
    %516 = arith.mulf %515, %334 : vector<8x16xf32>
    %517 = arith.addf %514, %516 : vector<8x16xf32>
    %518 = vector.broadcast %223 : f32 to vector<8x16xf32>
    %519 = arith.mulf %518, %335 : vector<8x16xf32>
    %520 = arith.addf %517, %519 : vector<8x16xf32>
    %521 = vector.broadcast %224 : f32 to vector<8x16xf32>
    %522 = arith.mulf %521, %336 : vector<8x16xf32>
    %523 = arith.addf %520, %522 : vector<8x16xf32>
    %524 = vector.broadcast %225 : f32 to vector<8x16xf32>
    %525 = arith.mulf %524, %337 : vector<8x16xf32>
    %526 = arith.addf %523, %525 : vector<8x16xf32>
    %527 = vector.broadcast %253 : f32 to vector<8x16xf32>
    %528 = arith.mulf %527, %329 : vector<8x16xf32>
    %529 = arith.addf %325, %528 : vector<8x16xf32>
    %530 = vector.broadcast %254 : f32 to vector<8x16xf32>
    %531 = arith.mulf %530, %330 : vector<8x16xf32>
    %532 = arith.addf %529, %531 : vector<8x16xf32>
    %533 = vector.broadcast %255 : f32 to vector<8x16xf32>
    %534 = arith.mulf %533, %331 : vector<8x16xf32>
    %535 = arith.addf %532, %534 : vector<8x16xf32>
    %536 = vector.broadcast %256 : f32 to vector<8x16xf32>
    %537 = arith.mulf %536, %332 : vector<8x16xf32>
    %538 = arith.addf %535, %537 : vector<8x16xf32>
    %539 = vector.broadcast %257 : f32 to vector<8x16xf32>
    %540 = arith.mulf %539, %333 : vector<8x16xf32>
    %541 = arith.addf %538, %540 : vector<8x16xf32>
    %542 = vector.broadcast %258 : f32 to vector<8x16xf32>
    %543 = arith.mulf %542, %334 : vector<8x16xf32>
    %544 = arith.addf %541, %543 : vector<8x16xf32>
    %545 = vector.broadcast %259 : f32 to vector<8x16xf32>
    %546 = arith.mulf %545, %335 : vector<8x16xf32>
    %547 = arith.addf %544, %546 : vector<8x16xf32>
    %548 = vector.broadcast %260 : f32 to vector<8x16xf32>
    %549 = arith.mulf %548, %336 : vector<8x16xf32>
    %550 = arith.addf %547, %549 : vector<8x16xf32>
    %551 = vector.broadcast %261 : f32 to vector<8x16xf32>
    %552 = arith.mulf %551, %337 : vector<8x16xf32>
    %553 = arith.addf %550, %552 : vector<8x16xf32>
    %c0_19 = arith.constant 0 : index
    %c1_20 = arith.constant 1 : index
    %554 = arith.index_cast %300 : i32 to index
    %c0_21 = arith.constant 0 : index
    %555 = vector.load %arg4[%c0_19, %c1_20, %554, %c0_21] : memref<1x4x18x128xf32, #tpu.memory_space<vmem>>, vector<1x1x10x128xf32>
    %556 = vector.shape_cast %555 : vector<1x1x10x128xf32> to vector<10x128xf32>
    %557 = vector.extract_strided_slice %556 {offsets = [0, 0], sizes = [8, 16], strides = [1, 1]} : vector<10x128xf32> to vector<8x16xf32>
    %558 = vector.extract_strided_slice %556 {offsets = [0, 1], sizes = [8, 16], strides = [1, 1]} : vector<10x128xf32> to vector<8x16xf32>
    %559 = vector.extract_strided_slice %556 {offsets = [0, 2], sizes = [8, 16], strides = [1, 1]} : vector<10x128xf32> to vector<8x16xf32>
    %560 = vector.extract_strided_slice %556 {offsets = [1, 0], sizes = [8, 16], strides = [1, 1]} : vector<10x128xf32> to vector<8x16xf32>
    %561 = vector.extract_strided_slice %556 {offsets = [1, 1], sizes = [8, 16], strides = [1, 1]} : vector<10x128xf32> to vector<8x16xf32>
    %562 = vector.extract_strided_slice %556 {offsets = [1, 2], sizes = [8, 16], strides = [1, 1]} : vector<10x128xf32> to vector<8x16xf32>
    %563 = vector.extract_strided_slice %556 {offsets = [2, 0], sizes = [8, 16], strides = [1, 1]} : vector<10x128xf32> to vector<8x16xf32>
    %564 = vector.extract_strided_slice %556 {offsets = [2, 1], sizes = [8, 16], strides = [1, 1]} : vector<10x128xf32> to vector<8x16xf32>
    %565 = vector.extract_strided_slice %556 {offsets = [2, 2], sizes = [8, 16], strides = [1, 1]} : vector<10x128xf32> to vector<8x16xf32>
    %566 = vector.broadcast %10 : f32 to vector<8x16xf32>
    %567 = arith.mulf %566, %557 : vector<8x16xf32>
    %568 = arith.addf %364, %567 : vector<8x16xf32>
    %569 = vector.broadcast %11 : f32 to vector<8x16xf32>
    %570 = arith.mulf %569, %558 : vector<8x16xf32>
    %571 = arith.addf %568, %570 : vector<8x16xf32>
    %572 = vector.broadcast %12 : f32 to vector<8x16xf32>
    %573 = arith.mulf %572, %559 : vector<8x16xf32>
    %574 = arith.addf %571, %573 : vector<8x16xf32>
    %575 = vector.broadcast %13 : f32 to vector<8x16xf32>
    %576 = arith.mulf %575, %560 : vector<8x16xf32>
    %577 = arith.addf %574, %576 : vector<8x16xf32>
    %578 = vector.broadcast %14 : f32 to vector<8x16xf32>
    %579 = arith.mulf %578, %561 : vector<8x16xf32>
    %580 = arith.addf %577, %579 : vector<8x16xf32>
    %581 = vector.broadcast %15 : f32 to vector<8x16xf32>
    %582 = arith.mulf %581, %562 : vector<8x16xf32>
    %583 = arith.addf %580, %582 : vector<8x16xf32>
    %584 = vector.broadcast %16 : f32 to vector<8x16xf32>
    %585 = arith.mulf %584, %563 : vector<8x16xf32>
    %586 = arith.addf %583, %585 : vector<8x16xf32>
    %587 = vector.broadcast %17 : f32 to vector<8x16xf32>
    %588 = arith.mulf %587, %564 : vector<8x16xf32>
    %589 = arith.addf %586, %588 : vector<8x16xf32>
    %590 = vector.broadcast %18 : f32 to vector<8x16xf32>
    %591 = arith.mulf %590, %565 : vector<8x16xf32>
    %592 = arith.addf %589, %591 : vector<8x16xf32>
    %593 = vector.broadcast %46 : f32 to vector<8x16xf32>
    %594 = arith.mulf %593, %557 : vector<8x16xf32>
    %595 = arith.addf %391, %594 : vector<8x16xf32>
    %596 = vector.broadcast %47 : f32 to vector<8x16xf32>
    %597 = arith.mulf %596, %558 : vector<8x16xf32>
    %598 = arith.addf %595, %597 : vector<8x16xf32>
    %599 = vector.broadcast %48 : f32 to vector<8x16xf32>
    %600 = arith.mulf %599, %559 : vector<8x16xf32>
    %601 = arith.addf %598, %600 : vector<8x16xf32>
    %602 = vector.broadcast %49 : f32 to vector<8x16xf32>
    %603 = arith.mulf %602, %560 : vector<8x16xf32>
    %604 = arith.addf %601, %603 : vector<8x16xf32>
    %605 = vector.broadcast %50 : f32 to vector<8x16xf32>
    %606 = arith.mulf %605, %561 : vector<8x16xf32>
    %607 = arith.addf %604, %606 : vector<8x16xf32>
    %608 = vector.broadcast %51 : f32 to vector<8x16xf32>
    %609 = arith.mulf %608, %562 : vector<8x16xf32>
    %610 = arith.addf %607, %609 : vector<8x16xf32>
    %611 = vector.broadcast %52 : f32 to vector<8x16xf32>
    %612 = arith.mulf %611, %563 : vector<8x16xf32>
    %613 = arith.addf %610, %612 : vector<8x16xf32>
    %614 = vector.broadcast %53 : f32 to vector<8x16xf32>
    %615 = arith.mulf %614, %564 : vector<8x16xf32>
    %616 = arith.addf %613, %615 : vector<8x16xf32>
    %617 = vector.broadcast %54 : f32 to vector<8x16xf32>
    %618 = arith.mulf %617, %565 : vector<8x16xf32>
    %619 = arith.addf %616, %618 : vector<8x16xf32>
    %620 = vector.broadcast %82 : f32 to vector<8x16xf32>
    %621 = arith.mulf %620, %557 : vector<8x16xf32>
    %622 = arith.addf %418, %621 : vector<8x16xf32>
    %623 = vector.broadcast %83 : f32 to vector<8x16xf32>
    %624 = arith.mulf %623, %558 : vector<8x16xf32>
    %625 = arith.addf %622, %624 : vector<8x16xf32>
    %626 = vector.broadcast %84 : f32 to vector<8x16xf32>
    %627 = arith.mulf %626, %559 : vector<8x16xf32>
    %628 = arith.addf %625, %627 : vector<8x16xf32>
    %629 = vector.broadcast %85 : f32 to vector<8x16xf32>
    %630 = arith.mulf %629, %560 : vector<8x16xf32>
    %631 = arith.addf %628, %630 : vector<8x16xf32>
    %632 = vector.broadcast %86 : f32 to vector<8x16xf32>
    %633 = arith.mulf %632, %561 : vector<8x16xf32>
    %634 = arith.addf %631, %633 : vector<8x16xf32>
    %635 = vector.broadcast %87 : f32 to vector<8x16xf32>
    %636 = arith.mulf %635, %562 : vector<8x16xf32>
    %637 = arith.addf %634, %636 : vector<8x16xf32>
    %638 = vector.broadcast %88 : f32 to vector<8x16xf32>
    %639 = arith.mulf %638, %563 : vector<8x16xf32>
    %640 = arith.addf %637, %639 : vector<8x16xf32>
    %641 = vector.broadcast %89 : f32 to vector<8x16xf32>
    %642 = arith.mulf %641, %564 : vector<8x16xf32>
    %643 = arith.addf %640, %642 : vector<8x16xf32>
    %644 = vector.broadcast %90 : f32 to vector<8x16xf32>
    %645 = arith.mulf %644, %565 : vector<8x16xf32>
    %646 = arith.addf %643, %645 : vector<8x16xf32>
    %647 = vector.broadcast %118 : f32 to vector<8x16xf32>
    %648 = arith.mulf %647, %557 : vector<8x16xf32>
    %649 = arith.addf %445, %648 : vector<8x16xf32>
    %650 = vector.broadcast %119 : f32 to vector<8x16xf32>
    %651 = arith.mulf %650, %558 : vector<8x16xf32>
    %652 = arith.addf %649, %651 : vector<8x16xf32>
    %653 = vector.broadcast %120 : f32 to vector<8x16xf32>
    %654 = arith.mulf %653, %559 : vector<8x16xf32>
    %655 = arith.addf %652, %654 : vector<8x16xf32>
    %656 = vector.broadcast %121 : f32 to vector<8x16xf32>
    %657 = arith.mulf %656, %560 : vector<8x16xf32>
    %658 = arith.addf %655, %657 : vector<8x16xf32>
    %659 = vector.broadcast %122 : f32 to vector<8x16xf32>
    %660 = arith.mulf %659, %561 : vector<8x16xf32>
    %661 = arith.addf %658, %660 : vector<8x16xf32>
    %662 = vector.broadcast %123 : f32 to vector<8x16xf32>
    %663 = arith.mulf %662, %562 : vector<8x16xf32>
    %664 = arith.addf %661, %663 : vector<8x16xf32>
    %665 = vector.broadcast %124 : f32 to vector<8x16xf32>
    %666 = arith.mulf %665, %563 : vector<8x16xf32>
    %667 = arith.addf %664, %666 : vector<8x16xf32>
    %668 = vector.broadcast %125 : f32 to vector<8x16xf32>
    %669 = arith.mulf %668, %564 : vector<8x16xf32>
    %670 = arith.addf %667, %669 : vector<8x16xf32>
    %671 = vector.broadcast %126 : f32 to vector<8x16xf32>
    %672 = arith.mulf %671, %565 : vector<8x16xf32>
    %673 = arith.addf %670, %672 : vector<8x16xf32>
    %674 = vector.broadcast %154 : f32 to vector<8x16xf32>
    %675 = arith.mulf %674, %557 : vector<8x16xf32>
    %676 = arith.addf %472, %675 : vector<8x16xf32>
    %677 = vector.broadcast %155 : f32 to vector<8x16xf32>
    %678 = arith.mulf %677, %558 : vector<8x16xf32>
    %679 = arith.addf %676, %678 : vector<8x16xf32>
    %680 = vector.broadcast %156 : f32 to vector<8x16xf32>
    %681 = arith.mulf %680, %559 : vector<8x16xf32>
    %682 = arith.addf %679, %681 : vector<8x16xf32>
    %683 = vector.broadcast %157 : f32 to vector<8x16xf32>
    %684 = arith.mulf %683, %560 : vector<8x16xf32>
    %685 = arith.addf %682, %684 : vector<8x16xf32>
    %686 = vector.broadcast %158 : f32 to vector<8x16xf32>
    %687 = arith.mulf %686, %561 : vector<8x16xf32>
    %688 = arith.addf %685, %687 : vector<8x16xf32>
    %689 = vector.broadcast %159 : f32 to vector<8x16xf32>
    %690 = arith.mulf %689, %562 : vector<8x16xf32>
    %691 = arith.addf %688, %690 : vector<8x16xf32>
    %692 = vector.broadcast %160 : f32 to vector<8x16xf32>
    %693 = arith.mulf %692, %563 : vector<8x16xf32>
    %694 = arith.addf %691, %693 : vector<8x16xf32>
    %695 = vector.broadcast %161 : f32 to vector<8x16xf32>
    %696 = arith.mulf %695, %564 : vector<8x16xf32>
    %697 = arith.addf %694, %696 : vector<8x16xf32>
    %698 = vector.broadcast %162 : f32 to vector<8x16xf32>
    %699 = arith.mulf %698, %565 : vector<8x16xf32>
    %700 = arith.addf %697, %699 : vector<8x16xf32>
    %701 = vector.broadcast %190 : f32 to vector<8x16xf32>
    %702 = arith.mulf %701, %557 : vector<8x16xf32>
    %703 = arith.addf %499, %702 : vector<8x16xf32>
    %704 = vector.broadcast %191 : f32 to vector<8x16xf32>
    %705 = arith.mulf %704, %558 : vector<8x16xf32>
    %706 = arith.addf %703, %705 : vector<8x16xf32>
    %707 = vector.broadcast %192 : f32 to vector<8x16xf32>
    %708 = arith.mulf %707, %559 : vector<8x16xf32>
    %709 = arith.addf %706, %708 : vector<8x16xf32>
    %710 = vector.broadcast %193 : f32 to vector<8x16xf32>
    %711 = arith.mulf %710, %560 : vector<8x16xf32>
    %712 = arith.addf %709, %711 : vector<8x16xf32>
    %713 = vector.broadcast %194 : f32 to vector<8x16xf32>
    %714 = arith.mulf %713, %561 : vector<8x16xf32>
    %715 = arith.addf %712, %714 : vector<8x16xf32>
    %716 = vector.broadcast %195 : f32 to vector<8x16xf32>
    %717 = arith.mulf %716, %562 : vector<8x16xf32>
    %718 = arith.addf %715, %717 : vector<8x16xf32>
    %719 = vector.broadcast %196 : f32 to vector<8x16xf32>
    %720 = arith.mulf %719, %563 : vector<8x16xf32>
    %721 = arith.addf %718, %720 : vector<8x16xf32>
    %722 = vector.broadcast %197 : f32 to vector<8x16xf32>
    %723 = arith.mulf %722, %564 : vector<8x16xf32>
    %724 = arith.addf %721, %723 : vector<8x16xf32>
    %725 = vector.broadcast %198 : f32 to vector<8x16xf32>
    %726 = arith.mulf %725, %565 : vector<8x16xf32>
    %727 = arith.addf %724, %726 : vector<8x16xf32>
    %728 = vector.broadcast %226 : f32 to vector<8x16xf32>
    %729 = arith.mulf %728, %557 : vector<8x16xf32>
    %730 = arith.addf %526, %729 : vector<8x16xf32>
    %731 = vector.broadcast %227 : f32 to vector<8x16xf32>
    %732 = arith.mulf %731, %558 : vector<8x16xf32>
    %733 = arith.addf %730, %732 : vector<8x16xf32>
    %734 = vector.broadcast %228 : f32 to vector<8x16xf32>
    %735 = arith.mulf %734, %559 : vector<8x16xf32>
    %736 = arith.addf %733, %735 : vector<8x16xf32>
    %737 = vector.broadcast %229 : f32 to vector<8x16xf32>
    %738 = arith.mulf %737, %560 : vector<8x16xf32>
    %739 = arith.addf %736, %738 : vector<8x16xf32>
    %740 = vector.broadcast %230 : f32 to vector<8x16xf32>
    %741 = arith.mulf %740, %561 : vector<8x16xf32>
    %742 = arith.addf %739, %741 : vector<8x16xf32>
    %743 = vector.broadcast %231 : f32 to vector<8x16xf32>
    %744 = arith.mulf %743, %562 : vector<8x16xf32>
    %745 = arith.addf %742, %744 : vector<8x16xf32>
    %746 = vector.broadcast %232 : f32 to vector<8x16xf32>
    %747 = arith.mulf %746, %563 : vector<8x16xf32>
    %748 = arith.addf %745, %747 : vector<8x16xf32>
    %749 = vector.broadcast %233 : f32 to vector<8x16xf32>
    %750 = arith.mulf %749, %564 : vector<8x16xf32>
    %751 = arith.addf %748, %750 : vector<8x16xf32>
    %752 = vector.broadcast %234 : f32 to vector<8x16xf32>
    %753 = arith.mulf %752, %565 : vector<8x16xf32>
    %754 = arith.addf %751, %753 : vector<8x16xf32>
    %755 = vector.broadcast %262 : f32 to vector<8x16xf32>
    %756 = arith.mulf %755, %557 : vector<8x16xf32>
    %757 = arith.addf %553, %756 : vector<8x16xf32>
    %758 = vector.broadcast %263 : f32 to vector<8x16xf32>
    %759 = arith.mulf %758, %558 : vector<8x16xf32>
    %760 = arith.addf %757, %759 : vector<8x16xf32>
    %761 = vector.broadcast %264 : f32 to vector<8x16xf32>
    %762 = arith.mulf %761, %559 : vector<8x16xf32>
    %763 = arith.addf %760, %762 : vector<8x16xf32>
    %764 = vector.broadcast %265 : f32 to vector<8x16xf32>
    %765 = arith.mulf %764, %560 : vector<8x16xf32>
    %766 = arith.addf %763, %765 : vector<8x16xf32>
    %767 = vector.broadcast %266 : f32 to vector<8x16xf32>
    %768 = arith.mulf %767, %561 : vector<8x16xf32>
    %769 = arith.addf %766, %768 : vector<8x16xf32>
    %770 = vector.broadcast %267 : f32 to vector<8x16xf32>
    %771 = arith.mulf %770, %562 : vector<8x16xf32>
    %772 = arith.addf %769, %771 : vector<8x16xf32>
    %773 = vector.broadcast %268 : f32 to vector<8x16xf32>
    %774 = arith.mulf %773, %563 : vector<8x16xf32>
    %775 = arith.addf %772, %774 : vector<8x16xf32>
    %776 = vector.broadcast %269 : f32 to vector<8x16xf32>
    %777 = arith.mulf %776, %564 : vector<8x16xf32>
    %778 = arith.addf %775, %777 : vector<8x16xf32>
    %779 = vector.broadcast %270 : f32 to vector<8x16xf32>
    %780 = arith.mulf %779, %565 : vector<8x16xf32>
    %781 = arith.addf %778, %780 : vector<8x16xf32>
    %c0_22 = arith.constant 0 : index
    %c2_23 = arith.constant 2 : index
    %782 = arith.index_cast %300 : i32 to index
    %c0_24 = arith.constant 0 : index
    %783 = vector.load %arg4[%c0_22, %c2_23, %782, %c0_24] : memref<1x4x18x128xf32, #tpu.memory_space<vmem>>, vector<1x1x10x128xf32>
    %784 = vector.shape_cast %783 : vector<1x1x10x128xf32> to vector<10x128xf32>
    %785 = vector.extract_strided_slice %784 {offsets = [0, 0], sizes = [8, 16], strides = [1, 1]} : vector<10x128xf32> to vector<8x16xf32>
    %786 = vector.extract_strided_slice %784 {offsets = [0, 1], sizes = [8, 16], strides = [1, 1]} : vector<10x128xf32> to vector<8x16xf32>
    %787 = vector.extract_strided_slice %784 {offsets = [0, 2], sizes = [8, 16], strides = [1, 1]} : vector<10x128xf32> to vector<8x16xf32>
    %788 = vector.extract_strided_slice %784 {offsets = [1, 0], sizes = [8, 16], strides = [1, 1]} : vector<10x128xf32> to vector<8x16xf32>
    %789 = vector.extract_strided_slice %784 {offsets = [1, 1], sizes = [8, 16], strides = [1, 1]} : vector<10x128xf32> to vector<8x16xf32>
    %790 = vector.extract_strided_slice %784 {offsets = [1, 2], sizes = [8, 16], strides = [1, 1]} : vector<10x128xf32> to vector<8x16xf32>
    %791 = vector.extract_strided_slice %784 {offsets = [2, 0], sizes = [8, 16], strides = [1, 1]} : vector<10x128xf32> to vector<8x16xf32>
    %792 = vector.extract_strided_slice %784 {offsets = [2, 1], sizes = [8, 16], strides = [1, 1]} : vector<10x128xf32> to vector<8x16xf32>
    %793 = vector.extract_strided_slice %784 {offsets = [2, 2], sizes = [8, 16], strides = [1, 1]} : vector<10x128xf32> to vector<8x16xf32>
    %794 = vector.broadcast %19 : f32 to vector<8x16xf32>
    %795 = arith.mulf %794, %785 : vector<8x16xf32>
    %796 = arith.addf %592, %795 : vector<8x16xf32>
    %797 = vector.broadcast %20 : f32 to vector<8x16xf32>
    %798 = arith.mulf %797, %786 : vector<8x16xf32>
    %799 = arith.addf %796, %798 : vector<8x16xf32>
    %800 = vector.broadcast %21 : f32 to vector<8x16xf32>
    %801 = arith.mulf %800, %787 : vector<8x16xf32>
    %802 = arith.addf %799, %801 : vector<8x16xf32>
    %803 = vector.broadcast %22 : f32 to vector<8x16xf32>
    %804 = arith.mulf %803, %788 : vector<8x16xf32>
    %805 = arith.addf %802, %804 : vector<8x16xf32>
    %806 = vector.broadcast %23 : f32 to vector<8x16xf32>
    %807 = arith.mulf %806, %789 : vector<8x16xf32>
    %808 = arith.addf %805, %807 : vector<8x16xf32>
    %809 = vector.broadcast %24 : f32 to vector<8x16xf32>
    %810 = arith.mulf %809, %790 : vector<8x16xf32>
    %811 = arith.addf %808, %810 : vector<8x16xf32>
    %812 = vector.broadcast %25 : f32 to vector<8x16xf32>
    %813 = arith.mulf %812, %791 : vector<8x16xf32>
    %814 = arith.addf %811, %813 : vector<8x16xf32>
    %815 = vector.broadcast %26 : f32 to vector<8x16xf32>
    %816 = arith.mulf %815, %792 : vector<8x16xf32>
    %817 = arith.addf %814, %816 : vector<8x16xf32>
    %818 = vector.broadcast %27 : f32 to vector<8x16xf32>
    %819 = arith.mulf %818, %793 : vector<8x16xf32>
    %820 = arith.addf %817, %819 : vector<8x16xf32>
    %821 = vector.broadcast %55 : f32 to vector<8x16xf32>
    %822 = arith.mulf %821, %785 : vector<8x16xf32>
    %823 = arith.addf %619, %822 : vector<8x16xf32>
    %824 = vector.broadcast %56 : f32 to vector<8x16xf32>
    %825 = arith.mulf %824, %786 : vector<8x16xf32>
    %826 = arith.addf %823, %825 : vector<8x16xf32>
    %827 = vector.broadcast %57 : f32 to vector<8x16xf32>
    %828 = arith.mulf %827, %787 : vector<8x16xf32>
    %829 = arith.addf %826, %828 : vector<8x16xf32>
    %830 = vector.broadcast %58 : f32 to vector<8x16xf32>
    %831 = arith.mulf %830, %788 : vector<8x16xf32>
    %832 = arith.addf %829, %831 : vector<8x16xf32>
    %833 = vector.broadcast %59 : f32 to vector<8x16xf32>
    %834 = arith.mulf %833, %789 : vector<8x16xf32>
    %835 = arith.addf %832, %834 : vector<8x16xf32>
    %836 = vector.broadcast %60 : f32 to vector<8x16xf32>
    %837 = arith.mulf %836, %790 : vector<8x16xf32>
    %838 = arith.addf %835, %837 : vector<8x16xf32>
    %839 = vector.broadcast %61 : f32 to vector<8x16xf32>
    %840 = arith.mulf %839, %791 : vector<8x16xf32>
    %841 = arith.addf %838, %840 : vector<8x16xf32>
    %842 = vector.broadcast %62 : f32 to vector<8x16xf32>
    %843 = arith.mulf %842, %792 : vector<8x16xf32>
    %844 = arith.addf %841, %843 : vector<8x16xf32>
    %845 = vector.broadcast %63 : f32 to vector<8x16xf32>
    %846 = arith.mulf %845, %793 : vector<8x16xf32>
    %847 = arith.addf %844, %846 : vector<8x16xf32>
    %848 = vector.broadcast %91 : f32 to vector<8x16xf32>
    %849 = arith.mulf %848, %785 : vector<8x16xf32>
    %850 = arith.addf %646, %849 : vector<8x16xf32>
    %851 = vector.broadcast %92 : f32 to vector<8x16xf32>
    %852 = arith.mulf %851, %786 : vector<8x16xf32>
    %853 = arith.addf %850, %852 : vector<8x16xf32>
    %854 = vector.broadcast %93 : f32 to vector<8x16xf32>
    %855 = arith.mulf %854, %787 : vector<8x16xf32>
    %856 = arith.addf %853, %855 : vector<8x16xf32>
    %857 = vector.broadcast %94 : f32 to vector<8x16xf32>
    %858 = arith.mulf %857, %788 : vector<8x16xf32>
    %859 = arith.addf %856, %858 : vector<8x16xf32>
    %860 = vector.broadcast %95 : f32 to vector<8x16xf32>
    %861 = arith.mulf %860, %789 : vector<8x16xf32>
    %862 = arith.addf %859, %861 : vector<8x16xf32>
    %863 = vector.broadcast %96 : f32 to vector<8x16xf32>
    %864 = arith.mulf %863, %790 : vector<8x16xf32>
    %865 = arith.addf %862, %864 : vector<8x16xf32>
    %866 = vector.broadcast %97 : f32 to vector<8x16xf32>
    %867 = arith.mulf %866, %791 : vector<8x16xf32>
    %868 = arith.addf %865, %867 : vector<8x16xf32>
    %869 = vector.broadcast %98 : f32 to vector<8x16xf32>
    %870 = arith.mulf %869, %792 : vector<8x16xf32>
    %871 = arith.addf %868, %870 : vector<8x16xf32>
    %872 = vector.broadcast %99 : f32 to vector<8x16xf32>
    %873 = arith.mulf %872, %793 : vector<8x16xf32>
    %874 = arith.addf %871, %873 : vector<8x16xf32>
    %875 = vector.broadcast %127 : f32 to vector<8x16xf32>
    %876 = arith.mulf %875, %785 : vector<8x16xf32>
    %877 = arith.addf %673, %876 : vector<8x16xf32>
    %878 = vector.broadcast %128 : f32 to vector<8x16xf32>
    %879 = arith.mulf %878, %786 : vector<8x16xf32>
    %880 = arith.addf %877, %879 : vector<8x16xf32>
    %881 = vector.broadcast %129 : f32 to vector<8x16xf32>
    %882 = arith.mulf %881, %787 : vector<8x16xf32>
    %883 = arith.addf %880, %882 : vector<8x16xf32>
    %884 = vector.broadcast %130 : f32 to vector<8x16xf32>
    %885 = arith.mulf %884, %788 : vector<8x16xf32>
    %886 = arith.addf %883, %885 : vector<8x16xf32>
    %887 = vector.broadcast %131 : f32 to vector<8x16xf32>
    %888 = arith.mulf %887, %789 : vector<8x16xf32>
    %889 = arith.addf %886, %888 : vector<8x16xf32>
    %890 = vector.broadcast %132 : f32 to vector<8x16xf32>
    %891 = arith.mulf %890, %790 : vector<8x16xf32>
    %892 = arith.addf %889, %891 : vector<8x16xf32>
    %893 = vector.broadcast %133 : f32 to vector<8x16xf32>
    %894 = arith.mulf %893, %791 : vector<8x16xf32>
    %895 = arith.addf %892, %894 : vector<8x16xf32>
    %896 = vector.broadcast %134 : f32 to vector<8x16xf32>
    %897 = arith.mulf %896, %792 : vector<8x16xf32>
    %898 = arith.addf %895, %897 : vector<8x16xf32>
    %899 = vector.broadcast %135 : f32 to vector<8x16xf32>
    %900 = arith.mulf %899, %793 : vector<8x16xf32>
    %901 = arith.addf %898, %900 : vector<8x16xf32>
    %902 = vector.broadcast %163 : f32 to vector<8x16xf32>
    %903 = arith.mulf %902, %785 : vector<8x16xf32>
    %904 = arith.addf %700, %903 : vector<8x16xf32>
    %905 = vector.broadcast %164 : f32 to vector<8x16xf32>
    %906 = arith.mulf %905, %786 : vector<8x16xf32>
    %907 = arith.addf %904, %906 : vector<8x16xf32>
    %908 = vector.broadcast %165 : f32 to vector<8x16xf32>
    %909 = arith.mulf %908, %787 : vector<8x16xf32>
    %910 = arith.addf %907, %909 : vector<8x16xf32>
    %911 = vector.broadcast %166 : f32 to vector<8x16xf32>
    %912 = arith.mulf %911, %788 : vector<8x16xf32>
    %913 = arith.addf %910, %912 : vector<8x16xf32>
    %914 = vector.broadcast %167 : f32 to vector<8x16xf32>
    %915 = arith.mulf %914, %789 : vector<8x16xf32>
    %916 = arith.addf %913, %915 : vector<8x16xf32>
    %917 = vector.broadcast %168 : f32 to vector<8x16xf32>
    %918 = arith.mulf %917, %790 : vector<8x16xf32>
    %919 = arith.addf %916, %918 : vector<8x16xf32>
    %920 = vector.broadcast %169 : f32 to vector<8x16xf32>
    %921 = arith.mulf %920, %791 : vector<8x16xf32>
    %922 = arith.addf %919, %921 : vector<8x16xf32>
    %923 = vector.broadcast %170 : f32 to vector<8x16xf32>
    %924 = arith.mulf %923, %792 : vector<8x16xf32>
    %925 = arith.addf %922, %924 : vector<8x16xf32>
    %926 = vector.broadcast %171 : f32 to vector<8x16xf32>
    %927 = arith.mulf %926, %793 : vector<8x16xf32>
    %928 = arith.addf %925, %927 : vector<8x16xf32>
    %929 = vector.broadcast %199 : f32 to vector<8x16xf32>
    %930 = arith.mulf %929, %785 : vector<8x16xf32>
    %931 = arith.addf %727, %930 : vector<8x16xf32>
    %932 = vector.broadcast %200 : f32 to vector<8x16xf32>
    %933 = arith.mulf %932, %786 : vector<8x16xf32>
    %934 = arith.addf %931, %933 : vector<8x16xf32>
    %935 = vector.broadcast %201 : f32 to vector<8x16xf32>
    %936 = arith.mulf %935, %787 : vector<8x16xf32>
    %937 = arith.addf %934, %936 : vector<8x16xf32>
    %938 = vector.broadcast %202 : f32 to vector<8x16xf32>
    %939 = arith.mulf %938, %788 : vector<8x16xf32>
    %940 = arith.addf %937, %939 : vector<8x16xf32>
    %941 = vector.broadcast %203 : f32 to vector<8x16xf32>
    %942 = arith.mulf %941, %789 : vector<8x16xf32>
    %943 = arith.addf %940, %942 : vector<8x16xf32>
    %944 = vector.broadcast %204 : f32 to vector<8x16xf32>
    %945 = arith.mulf %944, %790 : vector<8x16xf32>
    %946 = arith.addf %943, %945 : vector<8x16xf32>
    %947 = vector.broadcast %205 : f32 to vector<8x16xf32>
    %948 = arith.mulf %947, %791 : vector<8x16xf32>
    %949 = arith.addf %946, %948 : vector<8x16xf32>
    %950 = vector.broadcast %206 : f32 to vector<8x16xf32>
    %951 = arith.mulf %950, %792 : vector<8x16xf32>
    %952 = arith.addf %949, %951 : vector<8x16xf32>
    %953 = vector.broadcast %207 : f32 to vector<8x16xf32>
    %954 = arith.mulf %953, %793 : vector<8x16xf32>
    %955 = arith.addf %952, %954 : vector<8x16xf32>
    %956 = vector.broadcast %235 : f32 to vector<8x16xf32>
    %957 = arith.mulf %956, %785 : vector<8x16xf32>
    %958 = arith.addf %754, %957 : vector<8x16xf32>
    %959 = vector.broadcast %236 : f32 to vector<8x16xf32>
    %960 = arith.mulf %959, %786 : vector<8x16xf32>
    %961 = arith.addf %958, %960 : vector<8x16xf32>
    %962 = vector.broadcast %237 : f32 to vector<8x16xf32>
    %963 = arith.mulf %962, %787 : vector<8x16xf32>
    %964 = arith.addf %961, %963 : vector<8x16xf32>
    %965 = vector.broadcast %238 : f32 to vector<8x16xf32>
    %966 = arith.mulf %965, %788 : vector<8x16xf32>
    %967 = arith.addf %964, %966 : vector<8x16xf32>
    %968 = vector.broadcast %239 : f32 to vector<8x16xf32>
    %969 = arith.mulf %968, %789 : vector<8x16xf32>
    %970 = arith.addf %967, %969 : vector<8x16xf32>
    %971 = vector.broadcast %240 : f32 to vector<8x16xf32>
    %972 = arith.mulf %971, %790 : vector<8x16xf32>
    %973 = arith.addf %970, %972 : vector<8x16xf32>
    %974 = vector.broadcast %241 : f32 to vector<8x16xf32>
    %975 = arith.mulf %974, %791 : vector<8x16xf32>
    %976 = arith.addf %973, %975 : vector<8x16xf32>
    %977 = vector.broadcast %242 : f32 to vector<8x16xf32>
    %978 = arith.mulf %977, %792 : vector<8x16xf32>
    %979 = arith.addf %976, %978 : vector<8x16xf32>
    %980 = vector.broadcast %243 : f32 to vector<8x16xf32>
    %981 = arith.mulf %980, %793 : vector<8x16xf32>
    %982 = arith.addf %979, %981 : vector<8x16xf32>
    %983 = vector.broadcast %271 : f32 to vector<8x16xf32>
    %984 = arith.mulf %983, %785 : vector<8x16xf32>
    %985 = arith.addf %781, %984 : vector<8x16xf32>
    %986 = vector.broadcast %272 : f32 to vector<8x16xf32>
    %987 = arith.mulf %986, %786 : vector<8x16xf32>
    %988 = arith.addf %985, %987 : vector<8x16xf32>
    %989 = vector.broadcast %273 : f32 to vector<8x16xf32>
    %990 = arith.mulf %989, %787 : vector<8x16xf32>
    %991 = arith.addf %988, %990 : vector<8x16xf32>
    %992 = vector.broadcast %274 : f32 to vector<8x16xf32>
    %993 = arith.mulf %992, %788 : vector<8x16xf32>
    %994 = arith.addf %991, %993 : vector<8x16xf32>
    %995 = vector.broadcast %275 : f32 to vector<8x16xf32>
    %996 = arith.mulf %995, %789 : vector<8x16xf32>
    %997 = arith.addf %994, %996 : vector<8x16xf32>
    %998 = vector.broadcast %276 : f32 to vector<8x16xf32>
    %999 = arith.mulf %998, %790 : vector<8x16xf32>
    %1000 = arith.addf %997, %999 : vector<8x16xf32>
    %1001 = vector.broadcast %277 : f32 to vector<8x16xf32>
    %1002 = arith.mulf %1001, %791 : vector<8x16xf32>
    %1003 = arith.addf %1000, %1002 : vector<8x16xf32>
    %1004 = vector.broadcast %278 : f32 to vector<8x16xf32>
    %1005 = arith.mulf %1004, %792 : vector<8x16xf32>
    %1006 = arith.addf %1003, %1005 : vector<8x16xf32>
    %1007 = vector.broadcast %279 : f32 to vector<8x16xf32>
    %1008 = arith.mulf %1007, %793 : vector<8x16xf32>
    %1009 = arith.addf %1006, %1008 : vector<8x16xf32>
    %c0_25 = arith.constant 0 : index
    %c3_26 = arith.constant 3 : index
    %1010 = arith.index_cast %300 : i32 to index
    %c0_27 = arith.constant 0 : index
    %1011 = vector.load %arg4[%c0_25, %c3_26, %1010, %c0_27] : memref<1x4x18x128xf32, #tpu.memory_space<vmem>>, vector<1x1x10x128xf32>
    %1012 = vector.shape_cast %1011 : vector<1x1x10x128xf32> to vector<10x128xf32>
    %1013 = vector.extract_strided_slice %1012 {offsets = [0, 0], sizes = [8, 16], strides = [1, 1]} : vector<10x128xf32> to vector<8x16xf32>
    %1014 = vector.extract_strided_slice %1012 {offsets = [0, 1], sizes = [8, 16], strides = [1, 1]} : vector<10x128xf32> to vector<8x16xf32>
    %1015 = vector.extract_strided_slice %1012 {offsets = [0, 2], sizes = [8, 16], strides = [1, 1]} : vector<10x128xf32> to vector<8x16xf32>
    %1016 = vector.extract_strided_slice %1012 {offsets = [1, 0], sizes = [8, 16], strides = [1, 1]} : vector<10x128xf32> to vector<8x16xf32>
    %1017 = vector.extract_strided_slice %1012 {offsets = [1, 1], sizes = [8, 16], strides = [1, 1]} : vector<10x128xf32> to vector<8x16xf32>
    %1018 = vector.extract_strided_slice %1012 {offsets = [1, 2], sizes = [8, 16], strides = [1, 1]} : vector<10x128xf32> to vector<8x16xf32>
    %1019 = vector.extract_strided_slice %1012 {offsets = [2, 0], sizes = [8, 16], strides = [1, 1]} : vector<10x128xf32> to vector<8x16xf32>
    %1020 = vector.extract_strided_slice %1012 {offsets = [2, 1], sizes = [8, 16], strides = [1, 1]} : vector<10x128xf32> to vector<8x16xf32>
    %1021 = vector.extract_strided_slice %1012 {offsets = [2, 2], sizes = [8, 16], strides = [1, 1]} : vector<10x128xf32> to vector<8x16xf32>
    %1022 = vector.broadcast %28 : f32 to vector<8x16xf32>
    %1023 = arith.mulf %1022, %1013 : vector<8x16xf32>
    %1024 = arith.addf %820, %1023 : vector<8x16xf32>
    %1025 = vector.broadcast %29 : f32 to vector<8x16xf32>
    %1026 = arith.mulf %1025, %1014 : vector<8x16xf32>
    %1027 = arith.addf %1024, %1026 : vector<8x16xf32>
    %1028 = vector.broadcast %30 : f32 to vector<8x16xf32>
    %1029 = arith.mulf %1028, %1015 : vector<8x16xf32>
    %1030 = arith.addf %1027, %1029 : vector<8x16xf32>
    %1031 = vector.broadcast %31 : f32 to vector<8x16xf32>
    %1032 = arith.mulf %1031, %1016 : vector<8x16xf32>
    %1033 = arith.addf %1030, %1032 : vector<8x16xf32>
    %1034 = vector.broadcast %32 : f32 to vector<8x16xf32>
    %1035 = arith.mulf %1034, %1017 : vector<8x16xf32>
    %1036 = arith.addf %1033, %1035 : vector<8x16xf32>
    %1037 = vector.broadcast %33 : f32 to vector<8x16xf32>
    %1038 = arith.mulf %1037, %1018 : vector<8x16xf32>
    %1039 = arith.addf %1036, %1038 : vector<8x16xf32>
    %1040 = vector.broadcast %34 : f32 to vector<8x16xf32>
    %1041 = arith.mulf %1040, %1019 : vector<8x16xf32>
    %1042 = arith.addf %1039, %1041 : vector<8x16xf32>
    %1043 = vector.broadcast %35 : f32 to vector<8x16xf32>
    %1044 = arith.mulf %1043, %1020 : vector<8x16xf32>
    %1045 = arith.addf %1042, %1044 : vector<8x16xf32>
    %1046 = vector.broadcast %36 : f32 to vector<8x16xf32>
    %1047 = arith.mulf %1046, %1021 : vector<8x16xf32>
    %1048 = arith.addf %1045, %1047 : vector<8x16xf32>
    %1049 = vector.broadcast %64 : f32 to vector<8x16xf32>
    %1050 = arith.mulf %1049, %1013 : vector<8x16xf32>
    %1051 = arith.addf %847, %1050 : vector<8x16xf32>
    %1052 = vector.broadcast %65 : f32 to vector<8x16xf32>
    %1053 = arith.mulf %1052, %1014 : vector<8x16xf32>
    %1054 = arith.addf %1051, %1053 : vector<8x16xf32>
    %1055 = vector.broadcast %66 : f32 to vector<8x16xf32>
    %1056 = arith.mulf %1055, %1015 : vector<8x16xf32>
    %1057 = arith.addf %1054, %1056 : vector<8x16xf32>
    %1058 = vector.broadcast %67 : f32 to vector<8x16xf32>
    %1059 = arith.mulf %1058, %1016 : vector<8x16xf32>
    %1060 = arith.addf %1057, %1059 : vector<8x16xf32>
    %1061 = vector.broadcast %68 : f32 to vector<8x16xf32>
    %1062 = arith.mulf %1061, %1017 : vector<8x16xf32>
    %1063 = arith.addf %1060, %1062 : vector<8x16xf32>
    %1064 = vector.broadcast %69 : f32 to vector<8x16xf32>
    %1065 = arith.mulf %1064, %1018 : vector<8x16xf32>
    %1066 = arith.addf %1063, %1065 : vector<8x16xf32>
    %1067 = vector.broadcast %70 : f32 to vector<8x16xf32>
    %1068 = arith.mulf %1067, %1019 : vector<8x16xf32>
    %1069 = arith.addf %1066, %1068 : vector<8x16xf32>
    %1070 = vector.broadcast %71 : f32 to vector<8x16xf32>
    %1071 = arith.mulf %1070, %1020 : vector<8x16xf32>
    %1072 = arith.addf %1069, %1071 : vector<8x16xf32>
    %1073 = vector.broadcast %72 : f32 to vector<8x16xf32>
    %1074 = arith.mulf %1073, %1021 : vector<8x16xf32>
    %1075 = arith.addf %1072, %1074 : vector<8x16xf32>
    %1076 = vector.broadcast %100 : f32 to vector<8x16xf32>
    %1077 = arith.mulf %1076, %1013 : vector<8x16xf32>
    %1078 = arith.addf %874, %1077 : vector<8x16xf32>
    %1079 = vector.broadcast %101 : f32 to vector<8x16xf32>
    %1080 = arith.mulf %1079, %1014 : vector<8x16xf32>
    %1081 = arith.addf %1078, %1080 : vector<8x16xf32>
    %1082 = vector.broadcast %102 : f32 to vector<8x16xf32>
    %1083 = arith.mulf %1082, %1015 : vector<8x16xf32>
    %1084 = arith.addf %1081, %1083 : vector<8x16xf32>
    %1085 = vector.broadcast %103 : f32 to vector<8x16xf32>
    %1086 = arith.mulf %1085, %1016 : vector<8x16xf32>
    %1087 = arith.addf %1084, %1086 : vector<8x16xf32>
    %1088 = vector.broadcast %104 : f32 to vector<8x16xf32>
    %1089 = arith.mulf %1088, %1017 : vector<8x16xf32>
    %1090 = arith.addf %1087, %1089 : vector<8x16xf32>
    %1091 = vector.broadcast %105 : f32 to vector<8x16xf32>
    %1092 = arith.mulf %1091, %1018 : vector<8x16xf32>
    %1093 = arith.addf %1090, %1092 : vector<8x16xf32>
    %1094 = vector.broadcast %106 : f32 to vector<8x16xf32>
    %1095 = arith.mulf %1094, %1019 : vector<8x16xf32>
    %1096 = arith.addf %1093, %1095 : vector<8x16xf32>
    %1097 = vector.broadcast %107 : f32 to vector<8x16xf32>
    %1098 = arith.mulf %1097, %1020 : vector<8x16xf32>
    %1099 = arith.addf %1096, %1098 : vector<8x16xf32>
    %1100 = vector.broadcast %108 : f32 to vector<8x16xf32>
    %1101 = arith.mulf %1100, %1021 : vector<8x16xf32>
    %1102 = arith.addf %1099, %1101 : vector<8x16xf32>
    %1103 = vector.broadcast %136 : f32 to vector<8x16xf32>
    %1104 = arith.mulf %1103, %1013 : vector<8x16xf32>
    %1105 = arith.addf %901, %1104 : vector<8x16xf32>
    %1106 = vector.broadcast %137 : f32 to vector<8x16xf32>
    %1107 = arith.mulf %1106, %1014 : vector<8x16xf32>
    %1108 = arith.addf %1105, %1107 : vector<8x16xf32>
    %1109 = vector.broadcast %138 : f32 to vector<8x16xf32>
    %1110 = arith.mulf %1109, %1015 : vector<8x16xf32>
    %1111 = arith.addf %1108, %1110 : vector<8x16xf32>
    %1112 = vector.broadcast %139 : f32 to vector<8x16xf32>
    %1113 = arith.mulf %1112, %1016 : vector<8x16xf32>
    %1114 = arith.addf %1111, %1113 : vector<8x16xf32>
    %1115 = vector.broadcast %140 : f32 to vector<8x16xf32>
    %1116 = arith.mulf %1115, %1017 : vector<8x16xf32>
    %1117 = arith.addf %1114, %1116 : vector<8x16xf32>
    %1118 = vector.broadcast %141 : f32 to vector<8x16xf32>
    %1119 = arith.mulf %1118, %1018 : vector<8x16xf32>
    %1120 = arith.addf %1117, %1119 : vector<8x16xf32>
    %1121 = vector.broadcast %142 : f32 to vector<8x16xf32>
    %1122 = arith.mulf %1121, %1019 : vector<8x16xf32>
    %1123 = arith.addf %1120, %1122 : vector<8x16xf32>
    %1124 = vector.broadcast %143 : f32 to vector<8x16xf32>
    %1125 = arith.mulf %1124, %1020 : vector<8x16xf32>
    %1126 = arith.addf %1123, %1125 : vector<8x16xf32>
    %1127 = vector.broadcast %144 : f32 to vector<8x16xf32>
    %1128 = arith.mulf %1127, %1021 : vector<8x16xf32>
    %1129 = arith.addf %1126, %1128 : vector<8x16xf32>
    %1130 = vector.broadcast %172 : f32 to vector<8x16xf32>
    %1131 = arith.mulf %1130, %1013 : vector<8x16xf32>
    %1132 = arith.addf %928, %1131 : vector<8x16xf32>
    %1133 = vector.broadcast %173 : f32 to vector<8x16xf32>
    %1134 = arith.mulf %1133, %1014 : vector<8x16xf32>
    %1135 = arith.addf %1132, %1134 : vector<8x16xf32>
    %1136 = vector.broadcast %174 : f32 to vector<8x16xf32>
    %1137 = arith.mulf %1136, %1015 : vector<8x16xf32>
    %1138 = arith.addf %1135, %1137 : vector<8x16xf32>
    %1139 = vector.broadcast %175 : f32 to vector<8x16xf32>
    %1140 = arith.mulf %1139, %1016 : vector<8x16xf32>
    %1141 = arith.addf %1138, %1140 : vector<8x16xf32>
    %1142 = vector.broadcast %176 : f32 to vector<8x16xf32>
    %1143 = arith.mulf %1142, %1017 : vector<8x16xf32>
    %1144 = arith.addf %1141, %1143 : vector<8x16xf32>
    %1145 = vector.broadcast %177 : f32 to vector<8x16xf32>
    %1146 = arith.mulf %1145, %1018 : vector<8x16xf32>
    %1147 = arith.addf %1144, %1146 : vector<8x16xf32>
    %1148 = vector.broadcast %178 : f32 to vector<8x16xf32>
    %1149 = arith.mulf %1148, %1019 : vector<8x16xf32>
    %1150 = arith.addf %1147, %1149 : vector<8x16xf32>
    %1151 = vector.broadcast %179 : f32 to vector<8x16xf32>
    %1152 = arith.mulf %1151, %1020 : vector<8x16xf32>
    %1153 = arith.addf %1150, %1152 : vector<8x16xf32>
    %1154 = vector.broadcast %180 : f32 to vector<8x16xf32>
    %1155 = arith.mulf %1154, %1021 : vector<8x16xf32>
    %1156 = arith.addf %1153, %1155 : vector<8x16xf32>
    %1157 = vector.broadcast %208 : f32 to vector<8x16xf32>
    %1158 = arith.mulf %1157, %1013 : vector<8x16xf32>
    %1159 = arith.addf %955, %1158 : vector<8x16xf32>
    %1160 = vector.broadcast %209 : f32 to vector<8x16xf32>
    %1161 = arith.mulf %1160, %1014 : vector<8x16xf32>
    %1162 = arith.addf %1159, %1161 : vector<8x16xf32>
    %1163 = vector.broadcast %210 : f32 to vector<8x16xf32>
    %1164 = arith.mulf %1163, %1015 : vector<8x16xf32>
    %1165 = arith.addf %1162, %1164 : vector<8x16xf32>
    %1166 = vector.broadcast %211 : f32 to vector<8x16xf32>
    %1167 = arith.mulf %1166, %1016 : vector<8x16xf32>
    %1168 = arith.addf %1165, %1167 : vector<8x16xf32>
    %1169 = vector.broadcast %212 : f32 to vector<8x16xf32>
    %1170 = arith.mulf %1169, %1017 : vector<8x16xf32>
    %1171 = arith.addf %1168, %1170 : vector<8x16xf32>
    %1172 = vector.broadcast %213 : f32 to vector<8x16xf32>
    %1173 = arith.mulf %1172, %1018 : vector<8x16xf32>
    %1174 = arith.addf %1171, %1173 : vector<8x16xf32>
    %1175 = vector.broadcast %214 : f32 to vector<8x16xf32>
    %1176 = arith.mulf %1175, %1019 : vector<8x16xf32>
    %1177 = arith.addf %1174, %1176 : vector<8x16xf32>
    %1178 = vector.broadcast %215 : f32 to vector<8x16xf32>
    %1179 = arith.mulf %1178, %1020 : vector<8x16xf32>
    %1180 = arith.addf %1177, %1179 : vector<8x16xf32>
    %1181 = vector.broadcast %216 : f32 to vector<8x16xf32>
    %1182 = arith.mulf %1181, %1021 : vector<8x16xf32>
    %1183 = arith.addf %1180, %1182 : vector<8x16xf32>
    %1184 = vector.broadcast %244 : f32 to vector<8x16xf32>
    %1185 = arith.mulf %1184, %1013 : vector<8x16xf32>
    %1186 = arith.addf %982, %1185 : vector<8x16xf32>
    %1187 = vector.broadcast %245 : f32 to vector<8x16xf32>
    %1188 = arith.mulf %1187, %1014 : vector<8x16xf32>
    %1189 = arith.addf %1186, %1188 : vector<8x16xf32>
    %1190 = vector.broadcast %246 : f32 to vector<8x16xf32>
    %1191 = arith.mulf %1190, %1015 : vector<8x16xf32>
    %1192 = arith.addf %1189, %1191 : vector<8x16xf32>
    %1193 = vector.broadcast %247 : f32 to vector<8x16xf32>
    %1194 = arith.mulf %1193, %1016 : vector<8x16xf32>
    %1195 = arith.addf %1192, %1194 : vector<8x16xf32>
    %1196 = vector.broadcast %248 : f32 to vector<8x16xf32>
    %1197 = arith.mulf %1196, %1017 : vector<8x16xf32>
    %1198 = arith.addf %1195, %1197 : vector<8x16xf32>
    %1199 = vector.broadcast %249 : f32 to vector<8x16xf32>
    %1200 = arith.mulf %1199, %1018 : vector<8x16xf32>
    %1201 = arith.addf %1198, %1200 : vector<8x16xf32>
    %1202 = vector.broadcast %250 : f32 to vector<8x16xf32>
    %1203 = arith.mulf %1202, %1019 : vector<8x16xf32>
    %1204 = arith.addf %1201, %1203 : vector<8x16xf32>
    %1205 = vector.broadcast %251 : f32 to vector<8x16xf32>
    %1206 = arith.mulf %1205, %1020 : vector<8x16xf32>
    %1207 = arith.addf %1204, %1206 : vector<8x16xf32>
    %1208 = vector.broadcast %252 : f32 to vector<8x16xf32>
    %1209 = arith.mulf %1208, %1021 : vector<8x16xf32>
    %1210 = arith.addf %1207, %1209 : vector<8x16xf32>
    %1211 = vector.broadcast %280 : f32 to vector<8x16xf32>
    %1212 = arith.mulf %1211, %1013 : vector<8x16xf32>
    %1213 = arith.addf %1009, %1212 : vector<8x16xf32>
    %1214 = vector.broadcast %281 : f32 to vector<8x16xf32>
    %1215 = arith.mulf %1214, %1014 : vector<8x16xf32>
    %1216 = arith.addf %1213, %1215 : vector<8x16xf32>
    %1217 = vector.broadcast %282 : f32 to vector<8x16xf32>
    %1218 = arith.mulf %1217, %1015 : vector<8x16xf32>
    %1219 = arith.addf %1216, %1218 : vector<8x16xf32>
    %1220 = vector.broadcast %283 : f32 to vector<8x16xf32>
    %1221 = arith.mulf %1220, %1016 : vector<8x16xf32>
    %1222 = arith.addf %1219, %1221 : vector<8x16xf32>
    %1223 = vector.broadcast %284 : f32 to vector<8x16xf32>
    %1224 = arith.mulf %1223, %1017 : vector<8x16xf32>
    %1225 = arith.addf %1222, %1224 : vector<8x16xf32>
    %1226 = vector.broadcast %285 : f32 to vector<8x16xf32>
    %1227 = arith.mulf %1226, %1018 : vector<8x16xf32>
    %1228 = arith.addf %1225, %1227 : vector<8x16xf32>
    %1229 = vector.broadcast %286 : f32 to vector<8x16xf32>
    %1230 = arith.mulf %1229, %1019 : vector<8x16xf32>
    %1231 = arith.addf %1228, %1230 : vector<8x16xf32>
    %1232 = vector.broadcast %287 : f32 to vector<8x16xf32>
    %1233 = arith.mulf %1232, %1020 : vector<8x16xf32>
    %1234 = arith.addf %1231, %1233 : vector<8x16xf32>
    %1235 = vector.broadcast %288 : f32 to vector<8x16xf32>
    %1236 = arith.mulf %1235, %1021 : vector<8x16xf32>
    %1237 = arith.addf %1234, %1236 : vector<8x16xf32>
    %cst_28 = arith.constant 2.000000e+01 : f32
    %1238 = vector.broadcast %cst_28 : f32 to vector<8x16xf32>
    %1239 = arith.minimumf %1048, %1238 : vector<8x16xf32>
    %1240 = math.exp %1239 : vector<8x16xf32>
    %cst_29 = arith.constant 2.000000e+00 : f32
    %1241 = vector.broadcast %cst_29 : f32 to vector<8x16xf32>
    %1242 = arith.addf %1240, %1241 : vector<8x16xf32>
    %1243 = arith.mulf %1240, %1242 : vector<8x16xf32>
    %cst_30 = arith.constant 2.000000e+00 : f32
    %1244 = vector.broadcast %cst_30 : f32 to vector<8x16xf32>
    %1245 = arith.addf %1243, %1244 : vector<8x16xf32>
    %1246 = tpu.reciprocal %1245 {approx = true} : vector<8x16xf32> -> vector<8x16xf32>
    %1247 = arith.mulf %1245, %1246 : vector<8x16xf32>
    %cst_31 = arith.constant 2.000000e+00 : f32
    %1248 = vector.broadcast %cst_31 : f32 to vector<8x16xf32>
    %1249 = arith.subf %1248, %1247 : vector<8x16xf32>
    %1250 = arith.mulf %1246, %1249 : vector<8x16xf32>
    %1251 = arith.mulf %1243, %1250 : vector<8x16xf32>
    %1252 = arith.mulf %1048, %1251 : vector<8x16xf32>
    %c0_32 = arith.constant 0 : index
    %c0_33 = arith.constant 0 : index
    %1253 = arith.index_cast %301 : i32 to index
    %c0_34 = arith.constant 0 : index
    %1254 = vector.load %arg5[%c0_32, %c0_33, %1253, %c0_34] : memref<1x8x16x16xf32, #tpu.memory_space<vmem>>, vector<1x1x8x16xf32>
    %1255 = vector.shape_cast %1254 : vector<1x1x8x16xf32> to vector<8x16xf32>
    %1256 = vector.shape_cast %1252 : vector<8x16xf32> to vector<1x1x8x16xf32>
    tpu.vector_store %arg5[%c0_32, %c0_33, %1253, %c0_34], %1256 {strides = array<i32>} : memref<1x8x16x16xf32, #tpu.memory_space<vmem>>, vector<1x1x8x16xf32>,
    %cst_35 = arith.constant 2.000000e+01 : f32
    %1257 = vector.broadcast %cst_35 : f32 to vector<8x16xf32>
    %1258 = arith.minimumf %1075, %1257 : vector<8x16xf32>
    %1259 = math.exp %1258 : vector<8x16xf32>
    %cst_36 = arith.constant 2.000000e+00 : f32
    %1260 = vector.broadcast %cst_36 : f32 to vector<8x16xf32>
    %1261 = arith.addf %1259, %1260 : vector<8x16xf32>
    %1262 = arith.mulf %1259, %1261 : vector<8x16xf32>
    %cst_37 = arith.constant 2.000000e+00 : f32
    %1263 = vector.broadcast %cst_37 : f32 to vector<8x16xf32>
    %1264 = arith.addf %1262, %1263 : vector<8x16xf32>
    %1265 = tpu.reciprocal %1264 {approx = true} : vector<8x16xf32> -> vector<8x16xf32>
    %1266 = arith.mulf %1264, %1265 : vector<8x16xf32>
    %cst_38 = arith.constant 2.000000e+00 : f32
    %1267 = vector.broadcast %cst_38 : f32 to vector<8x16xf32>
    %1268 = arith.subf %1267, %1266 : vector<8x16xf32>
    %1269 = arith.mulf %1265, %1268 : vector<8x16xf32>
    %1270 = arith.mulf %1262, %1269 : vector<8x16xf32>
    %1271 = arith.mulf %1075, %1270 : vector<8x16xf32>
    %c0_39 = arith.constant 0 : index
    %c1_40 = arith.constant 1 : index
    %1272 = arith.index_cast %301 : i32 to index
    %c0_41 = arith.constant 0 : index
    %1273 = vector.load %arg5[%c0_39, %c1_40, %1272, %c0_41] : memref<1x8x16x16xf32, #tpu.memory_space<vmem>>, vector<1x1x8x16xf32>
    %1274 = vector.shape_cast %1273 : vector<1x1x8x16xf32> to vector<8x16xf32>
    %1275 = vector.shape_cast %1271 : vector<8x16xf32> to vector<1x1x8x16xf32>
    tpu.vector_store %arg5[%c0_39, %c1_40, %1272, %c0_41], %1275 {strides = array<i32>} : memref<1x8x16x16xf32, #tpu.memory_space<vmem>>, vector<1x1x8x16xf32>,
    %cst_42 = arith.constant 2.000000e+01 : f32
    %1276 = vector.broadcast %cst_42 : f32 to vector<8x16xf32>
    %1277 = arith.minimumf %1102, %1276 : vector<8x16xf32>
    %1278 = math.exp %1277 : vector<8x16xf32>
    %cst_43 = arith.constant 2.000000e+00 : f32
    %1279 = vector.broadcast %cst_43 : f32 to vector<8x16xf32>
    %1280 = arith.addf %1278, %1279 : vector<8x16xf32>
    %1281 = arith.mulf %1278, %1280 : vector<8x16xf32>
    %cst_44 = arith.constant 2.000000e+00 : f32
    %1282 = vector.broadcast %cst_44 : f32 to vector<8x16xf32>
    %1283 = arith.addf %1281, %1282 : vector<8x16xf32>
    %1284 = tpu.reciprocal %1283 {approx = true} : vector<8x16xf32> -> vector<8x16xf32>
    %1285 = arith.mulf %1283, %1284 : vector<8x16xf32>
    %cst_45 = arith.constant 2.000000e+00 : f32
    %1286 = vector.broadcast %cst_45 : f32 to vector<8x16xf32>
    %1287 = arith.subf %1286, %1285 : vector<8x16xf32>
    %1288 = arith.mulf %1284, %1287 : vector<8x16xf32>
    %1289 = arith.mulf %1281, %1288 : vector<8x16xf32>
    %1290 = arith.mulf %1102, %1289 : vector<8x16xf32>
    %c0_46 = arith.constant 0 : index
    %c2_47 = arith.constant 2 : index
    %1291 = arith.index_cast %301 : i32 to index
    %c0_48 = arith.constant 0 : index
    %1292 = vector.load %arg5[%c0_46, %c2_47, %1291, %c0_48] : memref<1x8x16x16xf32, #tpu.memory_space<vmem>>, vector<1x1x8x16xf32>
    %1293 = vector.shape_cast %1292 : vector<1x1x8x16xf32> to vector<8x16xf32>
    %1294 = vector.shape_cast %1290 : vector<8x16xf32> to vector<1x1x8x16xf32>
    tpu.vector_store %arg5[%c0_46, %c2_47, %1291, %c0_48], %1294 {strides = array<i32>} : memref<1x8x16x16xf32, #tpu.memory_space<vmem>>, vector<1x1x8x16xf32>,
    %cst_49 = arith.constant 2.000000e+01 : f32
    %1295 = vector.broadcast %cst_49 : f32 to vector<8x16xf32>
    %1296 = arith.minimumf %1129, %1295 : vector<8x16xf32>
    %1297 = math.exp %1296 : vector<8x16xf32>
    %cst_50 = arith.constant 2.000000e+00 : f32
    %1298 = vector.broadcast %cst_50 : f32 to vector<8x16xf32>
    %1299 = arith.addf %1297, %1298 : vector<8x16xf32>
    %1300 = arith.mulf %1297, %1299 : vector<8x16xf32>
    %cst_51 = arith.constant 2.000000e+00 : f32
    %1301 = vector.broadcast %cst_51 : f32 to vector<8x16xf32>
    %1302 = arith.addf %1300, %1301 : vector<8x16xf32>
    %1303 = tpu.reciprocal %1302 {approx = true} : vector<8x16xf32> -> vector<8x16xf32>
    %1304 = arith.mulf %1302, %1303 : vector<8x16xf32>
    %cst_52 = arith.constant 2.000000e+00 : f32
    %1305 = vector.broadcast %cst_52 : f32 to vector<8x16xf32>
    %1306 = arith.subf %1305, %1304 : vector<8x16xf32>
    %1307 = arith.mulf %1303, %1306 : vector<8x16xf32>
    %1308 = arith.mulf %1300, %1307 : vector<8x16xf32>
    %1309 = arith.mulf %1129, %1308 : vector<8x16xf32>
    %c0_53 = arith.constant 0 : index
    %c3_54 = arith.constant 3 : index
    %1310 = arith.index_cast %301 : i32 to index
    %c0_55 = arith.constant 0 : index
    %1311 = vector.load %arg5[%c0_53, %c3_54, %1310, %c0_55] : memref<1x8x16x16xf32, #tpu.memory_space<vmem>>, vector<1x1x8x16xf32>
    %1312 = vector.shape_cast %1311 : vector<1x1x8x16xf32> to vector<8x16xf32>
    %1313 = vector.shape_cast %1309 : vector<8x16xf32> to vector<1x1x8x16xf32>
    tpu.vector_store %arg5[%c0_53, %c3_54, %1310, %c0_55], %1313 {strides = array<i32>} : memref<1x8x16x16xf32, #tpu.memory_space<vmem>>, vector<1x1x8x16xf32>,
    %cst_56 = arith.constant 2.000000e+01 : f32
    %1314 = vector.broadcast %cst_56 : f32 to vector<8x16xf32>
    %1315 = arith.minimumf %1156, %1314 : vector<8x16xf32>
    %1316 = math.exp %1315 : vector<8x16xf32>
    %cst_57 = arith.constant 2.000000e+00 : f32
    %1317 = vector.broadcast %cst_57 : f32 to vector<8x16xf32>
    %1318 = arith.addf %1316, %1317 : vector<8x16xf32>
    %1319 = arith.mulf %1316, %1318 : vector<8x16xf32>
    %cst_58 = arith.constant 2.000000e+00 : f32
    %1320 = vector.broadcast %cst_58 : f32 to vector<8x16xf32>
    %1321 = arith.addf %1319, %1320 : vector<8x16xf32>
    %1322 = tpu.reciprocal %1321 {approx = true} : vector<8x16xf32> -> vector<8x16xf32>
    %1323 = arith.mulf %1321, %1322 : vector<8x16xf32>
    %cst_59 = arith.constant 2.000000e+00 : f32
    %1324 = vector.broadcast %cst_59 : f32 to vector<8x16xf32>
    %1325 = arith.subf %1324, %1323 : vector<8x16xf32>
    %1326 = arith.mulf %1322, %1325 : vector<8x16xf32>
    %1327 = arith.mulf %1319, %1326 : vector<8x16xf32>
    %1328 = arith.mulf %1156, %1327 : vector<8x16xf32>
    %c0_60 = arith.constant 0 : index
    %c4_61 = arith.constant 4 : index
    %1329 = arith.index_cast %301 : i32 to index
    %c0_62 = arith.constant 0 : index
    %1330 = vector.load %arg5[%c0_60, %c4_61, %1329, %c0_62] : memref<1x8x16x16xf32, #tpu.memory_space<vmem>>, vector<1x1x8x16xf32>
    %1331 = vector.shape_cast %1330 : vector<1x1x8x16xf32> to vector<8x16xf32>
    %1332 = vector.shape_cast %1328 : vector<8x16xf32> to vector<1x1x8x16xf32>
    tpu.vector_store %arg5[%c0_60, %c4_61, %1329, %c0_62], %1332 {strides = array<i32>} : memref<1x8x16x16xf32, #tpu.memory_space<vmem>>, vector<1x1x8x16xf32>,
    %cst_63 = arith.constant 2.000000e+01 : f32
    %1333 = vector.broadcast %cst_63 : f32 to vector<8x16xf32>
    %1334 = arith.minimumf %1183, %1333 : vector<8x16xf32>
    %1335 = math.exp %1334 : vector<8x16xf32>
    %cst_64 = arith.constant 2.000000e+00 : f32
    %1336 = vector.broadcast %cst_64 : f32 to vector<8x16xf32>
    %1337 = arith.addf %1335, %1336 : vector<8x16xf32>
    %1338 = arith.mulf %1335, %1337 : vector<8x16xf32>
    %cst_65 = arith.constant 2.000000e+00 : f32
    %1339 = vector.broadcast %cst_65 : f32 to vector<8x16xf32>
    %1340 = arith.addf %1338, %1339 : vector<8x16xf32>
    %1341 = tpu.reciprocal %1340 {approx = true} : vector<8x16xf32> -> vector<8x16xf32>
    %1342 = arith.mulf %1340, %1341 : vector<8x16xf32>
    %cst_66 = arith.constant 2.000000e+00 : f32
    %1343 = vector.broadcast %cst_66 : f32 to vector<8x16xf32>
    %1344 = arith.subf %1343, %1342 : vector<8x16xf32>
    %1345 = arith.mulf %1341, %1344 : vector<8x16xf32>
    %1346 = arith.mulf %1338, %1345 : vector<8x16xf32>
    %1347 = arith.mulf %1183, %1346 : vector<8x16xf32>
    %c0_67 = arith.constant 0 : index
    %c5_68 = arith.constant 5 : index
    %1348 = arith.index_cast %301 : i32 to index
    %c0_69 = arith.constant 0 : index
    %1349 = vector.load %arg5[%c0_67, %c5_68, %1348, %c0_69] : memref<1x8x16x16xf32, #tpu.memory_space<vmem>>, vector<1x1x8x16xf32>
    %1350 = vector.shape_cast %1349 : vector<1x1x8x16xf32> to vector<8x16xf32>
    %1351 = vector.shape_cast %1347 : vector<8x16xf32> to vector<1x1x8x16xf32>
    tpu.vector_store %arg5[%c0_67, %c5_68, %1348, %c0_69], %1351 {strides = array<i32>} : memref<1x8x16x16xf32, #tpu.memory_space<vmem>>, vector<1x1x8x16xf32>,
    %cst_70 = arith.constant 2.000000e+01 : f32
    %1352 = vector.broadcast %cst_70 : f32 to vector<8x16xf32>
    %1353 = arith.minimumf %1210, %1352 : vector<8x16xf32>
    %1354 = math.exp %1353 : vector<8x16xf32>
    %cst_71 = arith.constant 2.000000e+00 : f32
    %1355 = vector.broadcast %cst_71 : f32 to vector<8x16xf32>
    %1356 = arith.addf %1354, %1355 : vector<8x16xf32>
    %1357 = arith.mulf %1354, %1356 : vector<8x16xf32>
    %cst_72 = arith.constant 2.000000e+00 : f32
    %1358 = vector.broadcast %cst_72 : f32 to vector<8x16xf32>
    %1359 = arith.addf %1357, %1358 : vector<8x16xf32>
    %1360 = tpu.reciprocal %1359 {approx = true} : vector<8x16xf32> -> vector<8x16xf32>
    %1361 = arith.mulf %1359, %1360 : vector<8x16xf32>
    %cst_73 = arith.constant 2.000000e+00 : f32
    %1362 = vector.broadcast %cst_73 : f32 to vector<8x16xf32>
    %1363 = arith.subf %1362, %1361 : vector<8x16xf32>
    %1364 = arith.mulf %1360, %1363 : vector<8x16xf32>
    %1365 = arith.mulf %1357, %1364 : vector<8x16xf32>
    %1366 = arith.mulf %1210, %1365 : vector<8x16xf32>
    %c0_74 = arith.constant 0 : index
    %c6_75 = arith.constant 6 : index
    %1367 = arith.index_cast %301 : i32 to index
    %c0_76 = arith.constant 0 : index
    %1368 = vector.load %arg5[%c0_74, %c6_75, %1367, %c0_76] : memref<1x8x16x16xf32, #tpu.memory_space<vmem>>, vector<1x1x8x16xf32>
    %1369 = vector.shape_cast %1368 : vector<1x1x8x16xf32> to vector<8x16xf32>
    %1370 = vector.shape_cast %1366 : vector<8x16xf32> to vector<1x1x8x16xf32>
    tpu.vector_store %arg5[%c0_74, %c6_75, %1367, %c0_76], %1370 {strides = array<i32>} : memref<1x8x16x16xf32, #tpu.memory_space<vmem>>, vector<1x1x8x16xf32>,
    %cst_77 = arith.constant 2.000000e+01 : f32
    %1371 = vector.broadcast %cst_77 : f32 to vector<8x16xf32>
    %1372 = arith.minimumf %1237, %1371 : vector<8x16xf32>
    %1373 = math.exp %1372 : vector<8x16xf32>
    %cst_78 = arith.constant 2.000000e+00 : f32
    %1374 = vector.broadcast %cst_78 : f32 to vector<8x16xf32>
    %1375 = arith.addf %1373, %1374 : vector<8x16xf32>
    %1376 = arith.mulf %1373, %1375 : vector<8x16xf32>
    %cst_79 = arith.constant 2.000000e+00 : f32
    %1377 = vector.broadcast %cst_79 : f32 to vector<8x16xf32>
    %1378 = arith.addf %1376, %1377 : vector<8x16xf32>
    %1379 = tpu.reciprocal %1378 {approx = true} : vector<8x16xf32> -> vector<8x16xf32>
    %1380 = arith.mulf %1378, %1379 : vector<8x16xf32>
    %cst_80 = arith.constant 2.000000e+00 : f32
    %1381 = vector.broadcast %cst_80 : f32 to vector<8x16xf32>
    %1382 = arith.subf %1381, %1380 : vector<8x16xf32>
    %1383 = arith.mulf %1379, %1382 : vector<8x16xf32>
    %1384 = arith.mulf %1376, %1383 : vector<8x16xf32>
    %1385 = arith.mulf %1237, %1384 : vector<8x16xf32>
    %c0_81 = arith.constant 0 : index
    %c7_82 = arith.constant 7 : index
    %1386 = arith.index_cast %301 : i32 to index
    %c0_83 = arith.constant 0 : index
    %1387 = vector.load %arg5[%c0_81, %c7_82, %1386, %c0_83] : memref<1x8x16x16xf32, #tpu.memory_space<vmem>>, vector<1x1x8x16xf32>
    %1388 = vector.shape_cast %1387 : vector<1x1x8x16xf32> to vector<8x16xf32>
    %1389 = vector.shape_cast %1385 : vector<8x16xf32> to vector<1x1x8x16xf32>
    tpu.vector_store %arg5[%c0_81, %c7_82, %1386, %c0_83], %1389 {strides = array<i32>} : memref<1x8x16x16xf32, #tpu.memory_space<vmem>>, vector<1x1x8x16xf32>,
    %c1_i32 = arith.constant 1 : i32
    %c8_i32_84 = arith.constant 8 : i32
    %1390 = arith.muli %c1_i32, %c8_i32_84 : i32
    %1391 = arith.addi %0, %1390 : i32
    %c8_i32_85 = arith.constant 8 : i32
    %1392 = arith.muli %c1_i32, %c8_i32_85 : i32
    %1393 = tpu.assume_multiple %1391, 8 : i32
    %1394 = tpu.assume_multiple %1392, 8 : i32
    %cst_86 = arith.constant 0.000000e+00 : f32
    %1395 = vector.broadcast %cst_86 : f32 to vector<8x16xf32>
    %1396 = vector.broadcast %289 : f32 to vector<8x16xf32>
    %1397 = arith.addf %1395, %1396 : vector<8x16xf32>
    %cst_87 = arith.constant 0.000000e+00 : f32
    %1398 = vector.broadcast %cst_87 : f32 to vector<8x16xf32>
    %1399 = vector.broadcast %290 : f32 to vector<8x16xf32>
    %1400 = arith.addf %1398, %1399 : vector<8x16xf32>
    %cst_88 = arith.constant 0.000000e+00 : f32
    %1401 = vector.broadcast %cst_88 : f32 to vector<8x16xf32>
    %1402 = vector.broadcast %291 : f32 to vector<8x16xf32>
    %1403 = arith.addf %1401, %1402 : vector<8x16xf32>
    %cst_89 = arith.constant 0.000000e+00 : f32
    %1404 = vector.broadcast %cst_89 : f32 to vector<8x16xf32>
    %1405 = vector.broadcast %292 : f32 to vector<8x16xf32>
    %1406 = arith.addf %1404, %1405 : vector<8x16xf32>
    %cst_90 = arith.constant 0.000000e+00 : f32
    %1407 = vector.broadcast %cst_90 : f32 to vector<8x16xf32>
    %1408 = vector.broadcast %293 : f32 to vector<8x16xf32>
    %1409 = arith.addf %1407, %1408 : vector<8x16xf32>
    %cst_91 = arith.constant 0.000000e+00 : f32
    %1410 = vector.broadcast %cst_91 : f32 to vector<8x16xf32>
    %1411 = vector.broadcast %294 : f32 to vector<8x16xf32>
    %1412 = arith.addf %1410, %1411 : vector<8x16xf32>
    %cst_92 = arith.constant 0.000000e+00 : f32
    %1413 = vector.broadcast %cst_92 : f32 to vector<8x16xf32>
    %1414 = vector.broadcast %295 : f32 to vector<8x16xf32>
    %1415 = arith.addf %1413, %1414 : vector<8x16xf32>
    %cst_93 = arith.constant 0.000000e+00 : f32
    %1416 = vector.broadcast %cst_93 : f32 to vector<8x16xf32>
    %1417 = vector.broadcast %296 : f32 to vector<8x16xf32>
    %1418 = arith.addf %1416, %1417 : vector<8x16xf32>
    %c0_94 = arith.constant 0 : index
    %c0_95 = arith.constant 0 : index
    %1419 = arith.index_cast %1393 : i32 to index
    %c0_96 = arith.constant 0 : index
    %1420 = vector.load %arg4[%c0_94, %c0_95, %1419, %c0_96] : memref<1x4x18x128xf32, #tpu.memory_space<vmem>>, vector<1x1x10x128xf32>
    %1421 = vector.shape_cast %1420 : vector<1x1x10x128xf32> to vector<10x128xf32>
    %1422 = vector.extract_strided_slice %1421 {offsets = [0, 0], sizes = [8, 16], strides = [1, 1]} : vector<10x128xf32> to vector<8x16xf32>
    %1423 = vector.extract_strided_slice %1421 {offsets = [0, 1], sizes = [8, 16], strides = [1, 1]} : vector<10x128xf32> to vector<8x16xf32>
    %1424 = vector.extract_strided_slice %1421 {offsets = [0, 2], sizes = [8, 16], strides = [1, 1]} : vector<10x128xf32> to vector<8x16xf32>
    %1425 = vector.extract_strided_slice %1421 {offsets = [1, 0], sizes = [8, 16], strides = [1, 1]} : vector<10x128xf32> to vector<8x16xf32>
    %1426 = vector.extract_strided_slice %1421 {offsets = [1, 1], sizes = [8, 16], strides = [1, 1]} : vector<10x128xf32> to vector<8x16xf32>
    %1427 = vector.extract_strided_slice %1421 {offsets = [1, 2], sizes = [8, 16], strides = [1, 1]} : vector<10x128xf32> to vector<8x16xf32>
    %1428 = vector.extract_strided_slice %1421 {offsets = [2, 0], sizes = [8, 16], strides = [1, 1]} : vector<10x128xf32> to vector<8x16xf32>
    %1429 = vector.extract_strided_slice %1421 {offsets = [2, 1], sizes = [8, 16], strides = [1, 1]} : vector<10x128xf32> to vector<8x16xf32>
    %1430 = vector.extract_strided_slice %1421 {offsets = [2, 2], sizes = [8, 16], strides = [1, 1]} : vector<10x128xf32> to vector<8x16xf32>
    %1431 = vector.broadcast %1 : f32 to vector<8x16xf32>
    %1432 = arith.mulf %1431, %1422 : vector<8x16xf32>
    %1433 = arith.addf %1397, %1432 : vector<8x16xf32>
    %1434 = vector.broadcast %2 : f32 to vector<8x16xf32>
    %1435 = arith.mulf %1434, %1423 : vector<8x16xf32>
    %1436 = arith.addf %1433, %1435 : vector<8x16xf32>
    %1437 = vector.broadcast %3 : f32 to vector<8x16xf32>
    %1438 = arith.mulf %1437, %1424 : vector<8x16xf32>
    %1439 = arith.addf %1436, %1438 : vector<8x16xf32>
    %1440 = vector.broadcast %4 : f32 to vector<8x16xf32>
    %1441 = arith.mulf %1440, %1425 : vector<8x16xf32>
    %1442 = arith.addf %1439, %1441 : vector<8x16xf32>
    %1443 = vector.broadcast %5 : f32 to vector<8x16xf32>
    %1444 = arith.mulf %1443, %1426 : vector<8x16xf32>
    %1445 = arith.addf %1442, %1444 : vector<8x16xf32>
    %1446 = vector.broadcast %6 : f32 to vector<8x16xf32>
    %1447 = arith.mulf %1446, %1427 : vector<8x16xf32>
    %1448 = arith.addf %1445, %1447 : vector<8x16xf32>
    %1449 = vector.broadcast %7 : f32 to vector<8x16xf32>
    %1450 = arith.mulf %1449, %1428 : vector<8x16xf32>
    %1451 = arith.addf %1448, %1450 : vector<8x16xf32>
    %1452 = vector.broadcast %8 : f32 to vector<8x16xf32>
    %1453 = arith.mulf %1452, %1429 : vector<8x16xf32>
    %1454 = arith.addf %1451, %1453 : vector<8x16xf32>
    %1455 = vector.broadcast %9 : f32 to vector<8x16xf32>
    %1456 = arith.mulf %1455, %1430 : vector<8x16xf32>
    %1457 = arith.addf %1454, %1456 : vector<8x16xf32>
    %1458 = vector.broadcast %37 : f32 to vector<8x16xf32>
    %1459 = arith.mulf %1458, %1422 : vector<8x16xf32>
    %1460 = arith.addf %1400, %1459 : vector<8x16xf32>
    %1461 = vector.broadcast %38 : f32 to vector<8x16xf32>
    %1462 = arith.mulf %1461, %1423 : vector<8x16xf32>
    %1463 = arith.addf %1460, %1462 : vector<8x16xf32>
    %1464 = vector.broadcast %39 : f32 to vector<8x16xf32>
    %1465 = arith.mulf %1464, %1424 : vector<8x16xf32>
    %1466 = arith.addf %1463, %1465 : vector<8x16xf32>
    %1467 = vector.broadcast %40 : f32 to vector<8x16xf32>
    %1468 = arith.mulf %1467, %1425 : vector<8x16xf32>
    %1469 = arith.addf %1466, %1468 : vector<8x16xf32>
    %1470 = vector.broadcast %41 : f32 to vector<8x16xf32>
    %1471 = arith.mulf %1470, %1426 : vector<8x16xf32>
    %1472 = arith.addf %1469, %1471 : vector<8x16xf32>
    %1473 = vector.broadcast %42 : f32 to vector<8x16xf32>
    %1474 = arith.mulf %1473, %1427 : vector<8x16xf32>
    %1475 = arith.addf %1472, %1474 : vector<8x16xf32>
    %1476 = vector.broadcast %43 : f32 to vector<8x16xf32>
    %1477 = arith.mulf %1476, %1428 : vector<8x16xf32>
    %1478 = arith.addf %1475, %1477 : vector<8x16xf32>
    %1479 = vector.broadcast %44 : f32 to vector<8x16xf32>
    %1480 = arith.mulf %1479, %1429 : vector<8x16xf32>
    %1481 = arith.addf %1478, %1480 : vector<8x16xf32>
    %1482 = vector.broadcast %45 : f32 to vector<8x16xf32>
    %1483 = arith.mulf %1482, %1430 : vector<8x16xf32>
    %1484 = arith.addf %1481, %1483 : vector<8x16xf32>
    %1485 = vector.broadcast %73 : f32 to vector<8x16xf32>
    %1486 = arith.mulf %1485, %1422 : vector<8x16xf32>
    %1487 = arith.addf %1403, %1486 : vector<8x16xf32>
    %1488 = vector.broadcast %74 : f32 to vector<8x16xf32>
    %1489 = arith.mulf %1488, %1423 : vector<8x16xf32>
    %1490 = arith.addf %1487, %1489 : vector<8x16xf32>
    %1491 = vector.broadcast %75 : f32 to vector<8x16xf32>
    %1492 = arith.mulf %1491, %1424 : vector<8x16xf32>
    %1493 = arith.addf %1490, %1492 : vector<8x16xf32>
    %1494 = vector.broadcast %76 : f32 to vector<8x16xf32>
    %1495 = arith.mulf %1494, %1425 : vector<8x16xf32>
    %1496 = arith.addf %1493, %1495 : vector<8x16xf32>
    %1497 = vector.broadcast %77 : f32 to vector<8x16xf32>
    %1498 = arith.mulf %1497, %1426 : vector<8x16xf32>
    %1499 = arith.addf %1496, %1498 : vector<8x16xf32>
    %1500 = vector.broadcast %78 : f32 to vector<8x16xf32>
    %1501 = arith.mulf %1500, %1427 : vector<8x16xf32>
    %1502 = arith.addf %1499, %1501 : vector<8x16xf32>
    %1503 = vector.broadcast %79 : f32 to vector<8x16xf32>
    %1504 = arith.mulf %1503, %1428 : vector<8x16xf32>
    %1505 = arith.addf %1502, %1504 : vector<8x16xf32>
    %1506 = vector.broadcast %80 : f32 to vector<8x16xf32>
    %1507 = arith.mulf %1506, %1429 : vector<8x16xf32>
    %1508 = arith.addf %1505, %1507 : vector<8x16xf32>
    %1509 = vector.broadcast %81 : f32 to vector<8x16xf32>
    %1510 = arith.mulf %1509, %1430 : vector<8x16xf32>
    %1511 = arith.addf %1508, %1510 : vector<8x16xf32>
    %1512 = vector.broadcast %109 : f32 to vector<8x16xf32>
    %1513 = arith.mulf %1512, %1422 : vector<8x16xf32>
    %1514 = arith.addf %1406, %1513 : vector<8x16xf32>
    %1515 = vector.broadcast %110 : f32 to vector<8x16xf32>
    %1516 = arith.mulf %1515, %1423 : vector<8x16xf32>
    %1517 = arith.addf %1514, %1516 : vector<8x16xf32>
    %1518 = vector.broadcast %111 : f32 to vector<8x16xf32>
    %1519 = arith.mulf %1518, %1424 : vector<8x16xf32>
    %1520 = arith.addf %1517, %1519 : vector<8x16xf32>
    %1521 = vector.broadcast %112 : f32 to vector<8x16xf32>
    %1522 = arith.mulf %1521, %1425 : vector<8x16xf32>
    %1523 = arith.addf %1520, %1522 : vector<8x16xf32>
    %1524 = vector.broadcast %113 : f32 to vector<8x16xf32>
    %1525 = arith.mulf %1524, %1426 : vector<8x16xf32>
    %1526 = arith.addf %1523, %1525 : vector<8x16xf32>
    %1527 = vector.broadcast %114 : f32 to vector<8x16xf32>
    %1528 = arith.mulf %1527, %1427 : vector<8x16xf32>
    %1529 = arith.addf %1526, %1528 : vector<8x16xf32>
    %1530 = vector.broadcast %115 : f32 to vector<8x16xf32>
    %1531 = arith.mulf %1530, %1428 : vector<8x16xf32>
    %1532 = arith.addf %1529, %1531 : vector<8x16xf32>
    %1533 = vector.broadcast %116 : f32 to vector<8x16xf32>
    %1534 = arith.mulf %1533, %1429 : vector<8x16xf32>
    %1535 = arith.addf %1532, %1534 : vector<8x16xf32>
    %1536 = vector.broadcast %117 : f32 to vector<8x16xf32>
    %1537 = arith.mulf %1536, %1430 : vector<8x16xf32>
    %1538 = arith.addf %1535, %1537 : vector<8x16xf32>
    %1539 = vector.broadcast %145 : f32 to vector<8x16xf32>
    %1540 = arith.mulf %1539, %1422 : vector<8x16xf32>
    %1541 = arith.addf %1409, %1540 : vector<8x16xf32>
    %1542 = vector.broadcast %146 : f32 to vector<8x16xf32>
    %1543 = arith.mulf %1542, %1423 : vector<8x16xf32>
    %1544 = arith.addf %1541, %1543 : vector<8x16xf32>
    %1545 = vector.broadcast %147 : f32 to vector<8x16xf32>
    %1546 = arith.mulf %1545, %1424 : vector<8x16xf32>
    %1547 = arith.addf %1544, %1546 : vector<8x16xf32>
    %1548 = vector.broadcast %148 : f32 to vector<8x16xf32>
    %1549 = arith.mulf %1548, %1425 : vector<8x16xf32>
    %1550 = arith.addf %1547, %1549 : vector<8x16xf32>
    %1551 = vector.broadcast %149 : f32 to vector<8x16xf32>
    %1552 = arith.mulf %1551, %1426 : vector<8x16xf32>
    %1553 = arith.addf %1550, %1552 : vector<8x16xf32>
    %1554 = vector.broadcast %150 : f32 to vector<8x16xf32>
    %1555 = arith.mulf %1554, %1427 : vector<8x16xf32>
    %1556 = arith.addf %1553, %1555 : vector<8x16xf32>
    %1557 = vector.broadcast %151 : f32 to vector<8x16xf32>
    %1558 = arith.mulf %1557, %1428 : vector<8x16xf32>
    %1559 = arith.addf %1556, %1558 : vector<8x16xf32>
    %1560 = vector.broadcast %152 : f32 to vector<8x16xf32>
    %1561 = arith.mulf %1560, %1429 : vector<8x16xf32>
    %1562 = arith.addf %1559, %1561 : vector<8x16xf32>
    %1563 = vector.broadcast %153 : f32 to vector<8x16xf32>
    %1564 = arith.mulf %1563, %1430 : vector<8x16xf32>
    %1565 = arith.addf %1562, %1564 : vector<8x16xf32>
    %1566 = vector.broadcast %181 : f32 to vector<8x16xf32>
    %1567 = arith.mulf %1566, %1422 : vector<8x16xf32>
    %1568 = arith.addf %1412, %1567 : vector<8x16xf32>
    %1569 = vector.broadcast %182 : f32 to vector<8x16xf32>
    %1570 = arith.mulf %1569, %1423 : vector<8x16xf32>
    %1571 = arith.addf %1568, %1570 : vector<8x16xf32>
    %1572 = vector.broadcast %183 : f32 to vector<8x16xf32>
    %1573 = arith.mulf %1572, %1424 : vector<8x16xf32>
    %1574 = arith.addf %1571, %1573 : vector<8x16xf32>
    %1575 = vector.broadcast %184 : f32 to vector<8x16xf32>
    %1576 = arith.mulf %1575, %1425 : vector<8x16xf32>
    %1577 = arith.addf %1574, %1576 : vector<8x16xf32>
    %1578 = vector.broadcast %185 : f32 to vector<8x16xf32>
    %1579 = arith.mulf %1578, %1426 : vector<8x16xf32>
    %1580 = arith.addf %1577, %1579 : vector<8x16xf32>
    %1581 = vector.broadcast %186 : f32 to vector<8x16xf32>
    %1582 = arith.mulf %1581, %1427 : vector<8x16xf32>
    %1583 = arith.addf %1580, %1582 : vector<8x16xf32>
    %1584 = vector.broadcast %187 : f32 to vector<8x16xf32>
    %1585 = arith.mulf %1584, %1428 : vector<8x16xf32>
    %1586 = arith.addf %1583, %1585 : vector<8x16xf32>
    %1587 = vector.broadcast %188 : f32 to vector<8x16xf32>
    %1588 = arith.mulf %1587, %1429 : vector<8x16xf32>
    %1589 = arith.addf %1586, %1588 : vector<8x16xf32>
    %1590 = vector.broadcast %189 : f32 to vector<8x16xf32>
    %1591 = arith.mulf %1590, %1430 : vector<8x16xf32>
    %1592 = arith.addf %1589, %1591 : vector<8x16xf32>
    %1593 = vector.broadcast %217 : f32 to vector<8x16xf32>
    %1594 = arith.mulf %1593, %1422 : vector<8x16xf32>
    %1595 = arith.addf %1415, %1594 : vector<8x16xf32>
    %1596 = vector.broadcast %218 : f32 to vector<8x16xf32>
    %1597 = arith.mulf %1596, %1423 : vector<8x16xf32>
    %1598 = arith.addf %1595, %1597 : vector<8x16xf32>
    %1599 = vector.broadcast %219 : f32 to vector<8x16xf32>
    %1600 = arith.mulf %1599, %1424 : vector<8x16xf32>
    %1601 = arith.addf %1598, %1600 : vector<8x16xf32>
    %1602 = vector.broadcast %220 : f32 to vector<8x16xf32>
    %1603 = arith.mulf %1602, %1425 : vector<8x16xf32>
    %1604 = arith.addf %1601, %1603 : vector<8x16xf32>
    %1605 = vector.broadcast %221 : f32 to vector<8x16xf32>
    %1606 = arith.mulf %1605, %1426 : vector<8x16xf32>
    %1607 = arith.addf %1604, %1606 : vector<8x16xf32>
    %1608 = vector.broadcast %222 : f32 to vector<8x16xf32>
    %1609 = arith.mulf %1608, %1427 : vector<8x16xf32>
    %1610 = arith.addf %1607, %1609 : vector<8x16xf32>
    %1611 = vector.broadcast %223 : f32 to vector<8x16xf32>
    %1612 = arith.mulf %1611, %1428 : vector<8x16xf32>
    %1613 = arith.addf %1610, %1612 : vector<8x16xf32>
    %1614 = vector.broadcast %224 : f32 to vector<8x16xf32>
    %1615 = arith.mulf %1614, %1429 : vector<8x16xf32>
    %1616 = arith.addf %1613, %1615 : vector<8x16xf32>
    %1617 = vector.broadcast %225 : f32 to vector<8x16xf32>
    %1618 = arith.mulf %1617, %1430 : vector<8x16xf32>
    %1619 = arith.addf %1616, %1618 : vector<8x16xf32>
    %1620 = vector.broadcast %253 : f32 to vector<8x16xf32>
    %1621 = arith.mulf %1620, %1422 : vector<8x16xf32>
    %1622 = arith.addf %1418, %1621 : vector<8x16xf32>
    %1623 = vector.broadcast %254 : f32 to vector<8x16xf32>
    %1624 = arith.mulf %1623, %1423 : vector<8x16xf32>
    %1625 = arith.addf %1622, %1624 : vector<8x16xf32>
    %1626 = vector.broadcast %255 : f32 to vector<8x16xf32>
    %1627 = arith.mulf %1626, %1424 : vector<8x16xf32>
    %1628 = arith.addf %1625, %1627 : vector<8x16xf32>
    %1629 = vector.broadcast %256 : f32 to vector<8x16xf32>
    %1630 = arith.mulf %1629, %1425 : vector<8x16xf32>
    %1631 = arith.addf %1628, %1630 : vector<8x16xf32>
    %1632 = vector.broadcast %257 : f32 to vector<8x16xf32>
    %1633 = arith.mulf %1632, %1426 : vector<8x16xf32>
    %1634 = arith.addf %1631, %1633 : vector<8x16xf32>
    %1635 = vector.broadcast %258 : f32 to vector<8x16xf32>
    %1636 = arith.mulf %1635, %1427 : vector<8x16xf32>
    %1637 = arith.addf %1634, %1636 : vector<8x16xf32>
    %1638 = vector.broadcast %259 : f32 to vector<8x16xf32>
    %1639 = arith.mulf %1638, %1428 : vector<8x16xf32>
    %1640 = arith.addf %1637, %1639 : vector<8x16xf32>
    %1641 = vector.broadcast %260 : f32 to vector<8x16xf32>
    %1642 = arith.mulf %1641, %1429 : vector<8x16xf32>
    %1643 = arith.addf %1640, %1642 : vector<8x16xf32>
    %1644 = vector.broadcast %261 : f32 to vector<8x16xf32>
    %1645 = arith.mulf %1644, %1430 : vector<8x16xf32>
    %1646 = arith.addf %1643, %1645 : vector<8x16xf32>
    %c0_97 = arith.constant 0 : index
    %c1_98 = arith.constant 1 : index
    %1647 = arith.index_cast %1393 : i32 to index
    %c0_99 = arith.constant 0 : index
    %1648 = vector.load %arg4[%c0_97, %c1_98, %1647, %c0_99] : memref<1x4x18x128xf32, #tpu.memory_space<vmem>>, vector<1x1x10x128xf32>
    %1649 = vector.shape_cast %1648 : vector<1x1x10x128xf32> to vector<10x128xf32>
    %1650 = vector.extract_strided_slice %1649 {offsets = [0, 0], sizes = [8, 16], strides = [1, 1]} : vector<10x128xf32> to vector<8x16xf32>
    %1651 = vector.extract_strided_slice %1649 {offsets = [0, 1], sizes = [8, 16], strides = [1, 1]} : vector<10x128xf32> to vector<8x16xf32>
    %1652 = vector.extract_strided_slice %1649 {offsets = [0, 2], sizes = [8, 16], strides = [1, 1]} : vector<10x128xf32> to vector<8x16xf32>
    %1653 = vector.extract_strided_slice %1649 {offsets = [1, 0], sizes = [8, 16], strides = [1, 1]} : vector<10x128xf32> to vector<8x16xf32>
    %1654 = vector.extract_strided_slice %1649 {offsets = [1, 1], sizes = [8, 16], strides = [1, 1]} : vector<10x128xf32> to vector<8x16xf32>
    %1655 = vector.extract_strided_slice %1649 {offsets = [1, 2], sizes = [8, 16], strides = [1, 1]} : vector<10x128xf32> to vector<8x16xf32>
    %1656 = vector.extract_strided_slice %1649 {offsets = [2, 0], sizes = [8, 16], strides = [1, 1]} : vector<10x128xf32> to vector<8x16xf32>
    %1657 = vector.extract_strided_slice %1649 {offsets = [2, 1], sizes = [8, 16], strides = [1, 1]} : vector<10x128xf32> to vector<8x16xf32>
    %1658 = vector.extract_strided_slice %1649 {offsets = [2, 2], sizes = [8, 16], strides = [1, 1]} : vector<10x128xf32> to vector<8x16xf32>
    %1659 = vector.broadcast %10 : f32 to vector<8x16xf32>
    %1660 = arith.mulf %1659, %1650 : vector<8x16xf32>
    %1661 = arith.addf %1457, %1660 : vector<8x16xf32>
    %1662 = vector.broadcast %11 : f32 to vector<8x16xf32>
    %1663 = arith.mulf %1662, %1651 : vector<8x16xf32>
    %1664 = arith.addf %1661, %1663 : vector<8x16xf32>
    %1665 = vector.broadcast %12 : f32 to vector<8x16xf32>
    %1666 = arith.mulf %1665, %1652 : vector<8x16xf32>
    %1667 = arith.addf %1664, %1666 : vector<8x16xf32>
    %1668 = vector.broadcast %13 : f32 to vector<8x16xf32>
    %1669 = arith.mulf %1668, %1653 : vector<8x16xf32>
    %1670 = arith.addf %1667, %1669 : vector<8x16xf32>
    %1671 = vector.broadcast %14 : f32 to vector<8x16xf32>
    %1672 = arith.mulf %1671, %1654 : vector<8x16xf32>
    %1673 = arith.addf %1670, %1672 : vector<8x16xf32>
    %1674 = vector.broadcast %15 : f32 to vector<8x16xf32>
    %1675 = arith.mulf %1674, %1655 : vector<8x16xf32>
    %1676 = arith.addf %1673, %1675 : vector<8x16xf32>
    %1677 = vector.broadcast %16 : f32 to vector<8x16xf32>
    %1678 = arith.mulf %1677, %1656 : vector<8x16xf32>
    %1679 = arith.addf %1676, %1678 : vector<8x16xf32>
    %1680 = vector.broadcast %17 : f32 to vector<8x16xf32>
    %1681 = arith.mulf %1680, %1657 : vector<8x16xf32>
    %1682 = arith.addf %1679, %1681 : vector<8x16xf32>
    %1683 = vector.broadcast %18 : f32 to vector<8x16xf32>
    %1684 = arith.mulf %1683, %1658 : vector<8x16xf32>
    %1685 = arith.addf %1682, %1684 : vector<8x16xf32>
    %1686 = vector.broadcast %46 : f32 to vector<8x16xf32>
    %1687 = arith.mulf %1686, %1650 : vector<8x16xf32>
    %1688 = arith.addf %1484, %1687 : vector<8x16xf32>
    %1689 = vector.broadcast %47 : f32 to vector<8x16xf32>
    %1690 = arith.mulf %1689, %1651 : vector<8x16xf32>
    %1691 = arith.addf %1688, %1690 : vector<8x16xf32>
    %1692 = vector.broadcast %48 : f32 to vector<8x16xf32>
    %1693 = arith.mulf %1692, %1652 : vector<8x16xf32>
    %1694 = arith.addf %1691, %1693 : vector<8x16xf32>
    %1695 = vector.broadcast %49 : f32 to vector<8x16xf32>
    %1696 = arith.mulf %1695, %1653 : vector<8x16xf32>
    %1697 = arith.addf %1694, %1696 : vector<8x16xf32>
    %1698 = vector.broadcast %50 : f32 to vector<8x16xf32>
    %1699 = arith.mulf %1698, %1654 : vector<8x16xf32>
    %1700 = arith.addf %1697, %1699 : vector<8x16xf32>
    %1701 = vector.broadcast %51 : f32 to vector<8x16xf32>
    %1702 = arith.mulf %1701, %1655 : vector<8x16xf32>
    %1703 = arith.addf %1700, %1702 : vector<8x16xf32>
    %1704 = vector.broadcast %52 : f32 to vector<8x16xf32>
    %1705 = arith.mulf %1704, %1656 : vector<8x16xf32>
    %1706 = arith.addf %1703, %1705 : vector<8x16xf32>
    %1707 = vector.broadcast %53 : f32 to vector<8x16xf32>
    %1708 = arith.mulf %1707, %1657 : vector<8x16xf32>
    %1709 = arith.addf %1706, %1708 : vector<8x16xf32>
    %1710 = vector.broadcast %54 : f32 to vector<8x16xf32>
    %1711 = arith.mulf %1710, %1658 : vector<8x16xf32>
    %1712 = arith.addf %1709, %1711 : vector<8x16xf32>
    %1713 = vector.broadcast %82 : f32 to vector<8x16xf32>
    %1714 = arith.mulf %1713, %1650 : vector<8x16xf32>
    %1715 = arith.addf %1511, %1714 : vector<8x16xf32>
    %1716 = vector.broadcast %83 : f32 to vector<8x16xf32>
    %1717 = arith.mulf %1716, %1651 : vector<8x16xf32>
    %1718 = arith.addf %1715, %1717 : vector<8x16xf32>
    %1719 = vector.broadcast %84 : f32 to vector<8x16xf32>
    %1720 = arith.mulf %1719, %1652 : vector<8x16xf32>
    %1721 = arith.addf %1718, %1720 : vector<8x16xf32>
    %1722 = vector.broadcast %85 : f32 to vector<8x16xf32>
    %1723 = arith.mulf %1722, %1653 : vector<8x16xf32>
    %1724 = arith.addf %1721, %1723 : vector<8x16xf32>
    %1725 = vector.broadcast %86 : f32 to vector<8x16xf32>
    %1726 = arith.mulf %1725, %1654 : vector<8x16xf32>
    %1727 = arith.addf %1724, %1726 : vector<8x16xf32>
    %1728 = vector.broadcast %87 : f32 to vector<8x16xf32>
    %1729 = arith.mulf %1728, %1655 : vector<8x16xf32>
    %1730 = arith.addf %1727, %1729 : vector<8x16xf32>
    %1731 = vector.broadcast %88 : f32 to vector<8x16xf32>
    %1732 = arith.mulf %1731, %1656 : vector<8x16xf32>
    %1733 = arith.addf %1730, %1732 : vector<8x16xf32>
    %1734 = vector.broadcast %89 : f32 to vector<8x16xf32>
    %1735 = arith.mulf %1734, %1657 : vector<8x16xf32>
    %1736 = arith.addf %1733, %1735 : vector<8x16xf32>
    %1737 = vector.broadcast %90 : f32 to vector<8x16xf32>
    %1738 = arith.mulf %1737, %1658 : vector<8x16xf32>
    %1739 = arith.addf %1736, %1738 : vector<8x16xf32>
    %1740 = vector.broadcast %118 : f32 to vector<8x16xf32>
    %1741 = arith.mulf %1740, %1650 : vector<8x16xf32>
    %1742 = arith.addf %1538, %1741 : vector<8x16xf32>
    %1743 = vector.broadcast %119 : f32 to vector<8x16xf32>
    %1744 = arith.mulf %1743, %1651 : vector<8x16xf32>
    %1745 = arith.addf %1742, %1744 : vector<8x16xf32>
    %1746 = vector.broadcast %120 : f32 to vector<8x16xf32>
    %1747 = arith.mulf %1746, %1652 : vector<8x16xf32>
    %1748 = arith.addf %1745, %1747 : vector<8x16xf32>
    %1749 = vector.broadcast %121 : f32 to vector<8x16xf32>
    %1750 = arith.mulf %1749, %1653 : vector<8x16xf32>
    %1751 = arith.addf %1748, %1750 : vector<8x16xf32>
    %1752 = vector.broadcast %122 : f32 to vector<8x16xf32>
    %1753 = arith.mulf %1752, %1654 : vector<8x16xf32>
    %1754 = arith.addf %1751, %1753 : vector<8x16xf32>
    %1755 = vector.broadcast %123 : f32 to vector<8x16xf32>
    %1756 = arith.mulf %1755, %1655 : vector<8x16xf32>
    %1757 = arith.addf %1754, %1756 : vector<8x16xf32>
    %1758 = vector.broadcast %124 : f32 to vector<8x16xf32>
    %1759 = arith.mulf %1758, %1656 : vector<8x16xf32>
    %1760 = arith.addf %1757, %1759 : vector<8x16xf32>
    %1761 = vector.broadcast %125 : f32 to vector<8x16xf32>
    %1762 = arith.mulf %1761, %1657 : vector<8x16xf32>
    %1763 = arith.addf %1760, %1762 : vector<8x16xf32>
    %1764 = vector.broadcast %126 : f32 to vector<8x16xf32>
    %1765 = arith.mulf %1764, %1658 : vector<8x16xf32>
    %1766 = arith.addf %1763, %1765 : vector<8x16xf32>
    %1767 = vector.broadcast %154 : f32 to vector<8x16xf32>
    %1768 = arith.mulf %1767, %1650 : vector<8x16xf32>
    %1769 = arith.addf %1565, %1768 : vector<8x16xf32>
    %1770 = vector.broadcast %155 : f32 to vector<8x16xf32>
    %1771 = arith.mulf %1770, %1651 : vector<8x16xf32>
    %1772 = arith.addf %1769, %1771 : vector<8x16xf32>
    %1773 = vector.broadcast %156 : f32 to vector<8x16xf32>
    %1774 = arith.mulf %1773, %1652 : vector<8x16xf32>
    %1775 = arith.addf %1772, %1774 : vector<8x16xf32>
    %1776 = vector.broadcast %157 : f32 to vector<8x16xf32>
    %1777 = arith.mulf %1776, %1653 : vector<8x16xf32>
    %1778 = arith.addf %1775, %1777 : vector<8x16xf32>
    %1779 = vector.broadcast %158 : f32 to vector<8x16xf32>
    %1780 = arith.mulf %1779, %1654 : vector<8x16xf32>
    %1781 = arith.addf %1778, %1780 : vector<8x16xf32>
    %1782 = vector.broadcast %159 : f32 to vector<8x16xf32>
    %1783 = arith.mulf %1782, %1655 : vector<8x16xf32>
    %1784 = arith.addf %1781, %1783 : vector<8x16xf32>
    %1785 = vector.broadcast %160 : f32 to vector<8x16xf32>
    %1786 = arith.mulf %1785, %1656 : vector<8x16xf32>
    %1787 = arith.addf %1784, %1786 : vector<8x16xf32>
    %1788 = vector.broadcast %161 : f32 to vector<8x16xf32>
    %1789 = arith.mulf %1788, %1657 : vector<8x16xf32>
    %1790 = arith.addf %1787, %1789 : vector<8x16xf32>
    %1791 = vector.broadcast %162 : f32 to vector<8x16xf32>
    %1792 = arith.mulf %1791, %1658 : vector<8x16xf32>
    %1793 = arith.addf %1790, %1792 : vector<8x16xf32>
    %1794 = vector.broadcast %190 : f32 to vector<8x16xf32>
    %1795 = arith.mulf %1794, %1650 : vector<8x16xf32>
    %1796 = arith.addf %1592, %1795 : vector<8x16xf32>
    %1797 = vector.broadcast %191 : f32 to vector<8x16xf32>
    %1798 = arith.mulf %1797, %1651 : vector<8x16xf32>
    %1799 = arith.addf %1796, %1798 : vector<8x16xf32>
    %1800 = vector.broadcast %192 : f32 to vector<8x16xf32>
    %1801 = arith.mulf %1800, %1652 : vector<8x16xf32>
    %1802 = arith.addf %1799, %1801 : vector<8x16xf32>
    %1803 = vector.broadcast %193 : f32 to vector<8x16xf32>
    %1804 = arith.mulf %1803, %1653 : vector<8x16xf32>
    %1805 = arith.addf %1802, %1804 : vector<8x16xf32>
    %1806 = vector.broadcast %194 : f32 to vector<8x16xf32>
    %1807 = arith.mulf %1806, %1654 : vector<8x16xf32>
    %1808 = arith.addf %1805, %1807 : vector<8x16xf32>
    %1809 = vector.broadcast %195 : f32 to vector<8x16xf32>
    %1810 = arith.mulf %1809, %1655 : vector<8x16xf32>
    %1811 = arith.addf %1808, %1810 : vector<8x16xf32>
    %1812 = vector.broadcast %196 : f32 to vector<8x16xf32>
    %1813 = arith.mulf %1812, %1656 : vector<8x16xf32>
    %1814 = arith.addf %1811, %1813 : vector<8x16xf32>
    %1815 = vector.broadcast %197 : f32 to vector<8x16xf32>
    %1816 = arith.mulf %1815, %1657 : vector<8x16xf32>
    %1817 = arith.addf %1814, %1816 : vector<8x16xf32>
    %1818 = vector.broadcast %198 : f32 to vector<8x16xf32>
    %1819 = arith.mulf %1818, %1658 : vector<8x16xf32>
    %1820 = arith.addf %1817, %1819 : vector<8x16xf32>
    %1821 = vector.broadcast %226 : f32 to vector<8x16xf32>
    %1822 = arith.mulf %1821, %1650 : vector<8x16xf32>
    %1823 = arith.addf %1619, %1822 : vector<8x16xf32>
    %1824 = vector.broadcast %227 : f32 to vector<8x16xf32>
    %1825 = arith.mulf %1824, %1651 : vector<8x16xf32>
    %1826 = arith.addf %1823, %1825 : vector<8x16xf32>
    %1827 = vector.broadcast %228 : f32 to vector<8x16xf32>
    %1828 = arith.mulf %1827, %1652 : vector<8x16xf32>
    %1829 = arith.addf %1826, %1828 : vector<8x16xf32>
    %1830 = vector.broadcast %229 : f32 to vector<8x16xf32>
    %1831 = arith.mulf %1830, %1653 : vector<8x16xf32>
    %1832 = arith.addf %1829, %1831 : vector<8x16xf32>
    %1833 = vector.broadcast %230 : f32 to vector<8x16xf32>
    %1834 = arith.mulf %1833, %1654 : vector<8x16xf32>
    %1835 = arith.addf %1832, %1834 : vector<8x16xf32>
    %1836 = vector.broadcast %231 : f32 to vector<8x16xf32>
    %1837 = arith.mulf %1836, %1655 : vector<8x16xf32>
    %1838 = arith.addf %1835, %1837 : vector<8x16xf32>
    %1839 = vector.broadcast %232 : f32 to vector<8x16xf32>
    %1840 = arith.mulf %1839, %1656 : vector<8x16xf32>
    %1841 = arith.addf %1838, %1840 : vector<8x16xf32>
    %1842 = vector.broadcast %233 : f32 to vector<8x16xf32>
    %1843 = arith.mulf %1842, %1657 : vector<8x16xf32>
    %1844 = arith.addf %1841, %1843 : vector<8x16xf32>
    %1845 = vector.broadcast %234 : f32 to vector<8x16xf32>
    %1846 = arith.mulf %1845, %1658 : vector<8x16xf32>
    %1847 = arith.addf %1844, %1846 : vector<8x16xf32>
    %1848 = vector.broadcast %262 : f32 to vector<8x16xf32>
    %1849 = arith.mulf %1848, %1650 : vector<8x16xf32>
    %1850 = arith.addf %1646, %1849 : vector<8x16xf32>
    %1851 = vector.broadcast %263 : f32 to vector<8x16xf32>
    %1852 = arith.mulf %1851, %1651 : vector<8x16xf32>
    %1853 = arith.addf %1850, %1852 : vector<8x16xf32>
    %1854 = vector.broadcast %264 : f32 to vector<8x16xf32>
    %1855 = arith.mulf %1854, %1652 : vector<8x16xf32>
    %1856 = arith.addf %1853, %1855 : vector<8x16xf32>
    %1857 = vector.broadcast %265 : f32 to vector<8x16xf32>
    %1858 = arith.mulf %1857, %1653 : vector<8x16xf32>
    %1859 = arith.addf %1856, %1858 : vector<8x16xf32>
    %1860 = vector.broadcast %266 : f32 to vector<8x16xf32>
    %1861 = arith.mulf %1860, %1654 : vector<8x16xf32>
    %1862 = arith.addf %1859, %1861 : vector<8x16xf32>
    %1863 = vector.broadcast %267 : f32 to vector<8x16xf32>
    %1864 = arith.mulf %1863, %1655 : vector<8x16xf32>
    %1865 = arith.addf %1862, %1864 : vector<8x16xf32>
    %1866 = vector.broadcast %268 : f32 to vector<8x16xf32>
    %1867 = arith.mulf %1866, %1656 : vector<8x16xf32>
    %1868 = arith.addf %1865, %1867 : vector<8x16xf32>
    %1869 = vector.broadcast %269 : f32 to vector<8x16xf32>
    %1870 = arith.mulf %1869, %1657 : vector<8x16xf32>
    %1871 = arith.addf %1868, %1870 : vector<8x16xf32>
    %1872 = vector.broadcast %270 : f32 to vector<8x16xf32>
    %1873 = arith.mulf %1872, %1658 : vector<8x16xf32>
    %1874 = arith.addf %1871, %1873 : vector<8x16xf32>
    %c0_100 = arith.constant 0 : index
    %c2_101 = arith.constant 2 : index
    %1875 = arith.index_cast %1393 : i32 to index
    %c0_102 = arith.constant 0 : index
    %1876 = vector.load %arg4[%c0_100, %c2_101, %1875, %c0_102] : memref<1x4x18x128xf32, #tpu.memory_space<vmem>>, vector<1x1x10x128xf32>
    %1877 = vector.shape_cast %1876 : vector<1x1x10x128xf32> to vector<10x128xf32>
    %1878 = vector.extract_strided_slice %1877 {offsets = [0, 0], sizes = [8, 16], strides = [1, 1]} : vector<10x128xf32> to vector<8x16xf32>
    %1879 = vector.extract_strided_slice %1877 {offsets = [0, 1], sizes = [8, 16], strides = [1, 1]} : vector<10x128xf32> to vector<8x16xf32>
    %1880 = vector.extract_strided_slice %1877 {offsets = [0, 2], sizes = [8, 16], strides = [1, 1]} : vector<10x128xf32> to vector<8x16xf32>
    %1881 = vector.extract_strided_slice %1877 {offsets = [1, 0], sizes = [8, 16], strides = [1, 1]} : vector<10x128xf32> to vector<8x16xf32>
    %1882 = vector.extract_strided_slice %1877 {offsets = [1, 1], sizes = [8, 16], strides = [1, 1]} : vector<10x128xf32> to vector<8x16xf32>
    %1883 = vector.extract_strided_slice %1877 {offsets = [1, 2], sizes = [8, 16], strides = [1, 1]} : vector<10x128xf32> to vector<8x16xf32>
    %1884 = vector.extract_strided_slice %1877 {offsets = [2, 0], sizes = [8, 16], strides = [1, 1]} : vector<10x128xf32> to vector<8x16xf32>
    %1885 = vector.extract_strided_slice %1877 {offsets = [2, 1], sizes = [8, 16], strides = [1, 1]} : vector<10x128xf32> to vector<8x16xf32>
    %1886 = vector.extract_strided_slice %1877 {offsets = [2, 2], sizes = [8, 16], strides = [1, 1]} : vector<10x128xf32> to vector<8x16xf32>
    %1887 = vector.broadcast %19 : f32 to vector<8x16xf32>
    %1888 = arith.mulf %1887, %1878 : vector<8x16xf32>
    %1889 = arith.addf %1685, %1888 : vector<8x16xf32>
    %1890 = vector.broadcast %20 : f32 to vector<8x16xf32>
    %1891 = arith.mulf %1890, %1879 : vector<8x16xf32>
    %1892 = arith.addf %1889, %1891 : vector<8x16xf32>
    %1893 = vector.broadcast %21 : f32 to vector<8x16xf32>
    %1894 = arith.mulf %1893, %1880 : vector<8x16xf32>
    %1895 = arith.addf %1892, %1894 : vector<8x16xf32>
    %1896 = vector.broadcast %22 : f32 to vector<8x16xf32>
    %1897 = arith.mulf %1896, %1881 : vector<8x16xf32>
    %1898 = arith.addf %1895, %1897 : vector<8x16xf32>
    %1899 = vector.broadcast %23 : f32 to vector<8x16xf32>
    %1900 = arith.mulf %1899, %1882 : vector<8x16xf32>
    %1901 = arith.addf %1898, %1900 : vector<8x16xf32>
    %1902 = vector.broadcast %24 : f32 to vector<8x16xf32>
    %1903 = arith.mulf %1902, %1883 : vector<8x16xf32>
    %1904 = arith.addf %1901, %1903 : vector<8x16xf32>
    %1905 = vector.broadcast %25 : f32 to vector<8x16xf32>
    %1906 = arith.mulf %1905, %1884 : vector<8x16xf32>
    %1907 = arith.addf %1904, %1906 : vector<8x16xf32>
    %1908 = vector.broadcast %26 : f32 to vector<8x16xf32>
    %1909 = arith.mulf %1908, %1885 : vector<8x16xf32>
    %1910 = arith.addf %1907, %1909 : vector<8x16xf32>
    %1911 = vector.broadcast %27 : f32 to vector<8x16xf32>
    %1912 = arith.mulf %1911, %1886 : vector<8x16xf32>
    %1913 = arith.addf %1910, %1912 : vector<8x16xf32>
    %1914 = vector.broadcast %55 : f32 to vector<8x16xf32>
    %1915 = arith.mulf %1914, %1878 : vector<8x16xf32>
    %1916 = arith.addf %1712, %1915 : vector<8x16xf32>
    %1917 = vector.broadcast %56 : f32 to vector<8x16xf32>
    %1918 = arith.mulf %1917, %1879 : vector<8x16xf32>
    %1919 = arith.addf %1916, %1918 : vector<8x16xf32>
    %1920 = vector.broadcast %57 : f32 to vector<8x16xf32>
    %1921 = arith.mulf %1920, %1880 : vector<8x16xf32>
    %1922 = arith.addf %1919, %1921 : vector<8x16xf32>
    %1923 = vector.broadcast %58 : f32 to vector<8x16xf32>
    %1924 = arith.mulf %1923, %1881 : vector<8x16xf32>
    %1925 = arith.addf %1922, %1924 : vector<8x16xf32>
    %1926 = vector.broadcast %59 : f32 to vector<8x16xf32>
    %1927 = arith.mulf %1926, %1882 : vector<8x16xf32>
    %1928 = arith.addf %1925, %1927 : vector<8x16xf32>
    %1929 = vector.broadcast %60 : f32 to vector<8x16xf32>
    %1930 = arith.mulf %1929, %1883 : vector<8x16xf32>
    %1931 = arith.addf %1928, %1930 : vector<8x16xf32>
    %1932 = vector.broadcast %61 : f32 to vector<8x16xf32>
    %1933 = arith.mulf %1932, %1884 : vector<8x16xf32>
    %1934 = arith.addf %1931, %1933 : vector<8x16xf32>
    %1935 = vector.broadcast %62 : f32 to vector<8x16xf32>
    %1936 = arith.mulf %1935, %1885 : vector<8x16xf32>
    %1937 = arith.addf %1934, %1936 : vector<8x16xf32>
    %1938 = vector.broadcast %63 : f32 to vector<8x16xf32>
    %1939 = arith.mulf %1938, %1886 : vector<8x16xf32>
    %1940 = arith.addf %1937, %1939 : vector<8x16xf32>
    %1941 = vector.broadcast %91 : f32 to vector<8x16xf32>
    %1942 = arith.mulf %1941, %1878 : vector<8x16xf32>
    %1943 = arith.addf %1739, %1942 : vector<8x16xf32>
    %1944 = vector.broadcast %92 : f32 to vector<8x16xf32>
    %1945 = arith.mulf %1944, %1879 : vector<8x16xf32>
    %1946 = arith.addf %1943, %1945 : vector<8x16xf32>
    %1947 = vector.broadcast %93 : f32 to vector<8x16xf32>
    %1948 = arith.mulf %1947, %1880 : vector<8x16xf32>
    %1949 = arith.addf %1946, %1948 : vector<8x16xf32>
    %1950 = vector.broadcast %94 : f32 to vector<8x16xf32>
    %1951 = arith.mulf %1950, %1881 : vector<8x16xf32>
    %1952 = arith.addf %1949, %1951 : vector<8x16xf32>
    %1953 = vector.broadcast %95 : f32 to vector<8x16xf32>
    %1954 = arith.mulf %1953, %1882 : vector<8x16xf32>
    %1955 = arith.addf %1952, %1954 : vector<8x16xf32>
    %1956 = vector.broadcast %96 : f32 to vector<8x16xf32>
    %1957 = arith.mulf %1956, %1883 : vector<8x16xf32>
    %1958 = arith.addf %1955, %1957 : vector<8x16xf32>
    %1959 = vector.broadcast %97 : f32 to vector<8x16xf32>
    %1960 = arith.mulf %1959, %1884 : vector<8x16xf32>
    %1961 = arith.addf %1958, %1960 : vector<8x16xf32>
    %1962 = vector.broadcast %98 : f32 to vector<8x16xf32>
    %1963 = arith.mulf %1962, %1885 : vector<8x16xf32>
    %1964 = arith.addf %1961, %1963 : vector<8x16xf32>
    %1965 = vector.broadcast %99 : f32 to vector<8x16xf32>
    %1966 = arith.mulf %1965, %1886 : vector<8x16xf32>
    %1967 = arith.addf %1964, %1966 : vector<8x16xf32>
    %1968 = vector.broadcast %127 : f32 to vector<8x16xf32>
    %1969 = arith.mulf %1968, %1878 : vector<8x16xf32>
    %1970 = arith.addf %1766, %1969 : vector<8x16xf32>
    %1971 = vector.broadcast %128 : f32 to vector<8x16xf32>
    %1972 = arith.mulf %1971, %1879 : vector<8x16xf32>
    %1973 = arith.addf %1970, %1972 : vector<8x16xf32>
    %1974 = vector.broadcast %129 : f32 to vector<8x16xf32>
    %1975 = arith.mulf %1974, %1880 : vector<8x16xf32>
    %1976 = arith.addf %1973, %1975 : vector<8x16xf32>
    %1977 = vector.broadcast %130 : f32 to vector<8x16xf32>
    %1978 = arith.mulf %1977, %1881 : vector<8x16xf32>
    %1979 = arith.addf %1976, %1978 : vector<8x16xf32>
    %1980 = vector.broadcast %131 : f32 to vector<8x16xf32>
    %1981 = arith.mulf %1980, %1882 : vector<8x16xf32>
    %1982 = arith.addf %1979, %1981 : vector<8x16xf32>
    %1983 = vector.broadcast %132 : f32 to vector<8x16xf32>
    %1984 = arith.mulf %1983, %1883 : vector<8x16xf32>
    %1985 = arith.addf %1982, %1984 : vector<8x16xf32>
    %1986 = vector.broadcast %133 : f32 to vector<8x16xf32>
    %1987 = arith.mulf %1986, %1884 : vector<8x16xf32>
    %1988 = arith.addf %1985, %1987 : vector<8x16xf32>
    %1989 = vector.broadcast %134 : f32 to vector<8x16xf32>
    %1990 = arith.mulf %1989, %1885 : vector<8x16xf32>
    %1991 = arith.addf %1988, %1990 : vector<8x16xf32>
    %1992 = vector.broadcast %135 : f32 to vector<8x16xf32>
    %1993 = arith.mulf %1992, %1886 : vector<8x16xf32>
    %1994 = arith.addf %1991, %1993 : vector<8x16xf32>
    %1995 = vector.broadcast %163 : f32 to vector<8x16xf32>
    %1996 = arith.mulf %1995, %1878 : vector<8x16xf32>
    %1997 = arith.addf %1793, %1996 : vector<8x16xf32>
    %1998 = vector.broadcast %164 : f32 to vector<8x16xf32>
    %1999 = arith.mulf %1998, %1879 : vector<8x16xf32>
    %2000 = arith.addf %1997, %1999 : vector<8x16xf32>
    %2001 = vector.broadcast %165 : f32 to vector<8x16xf32>
    %2002 = arith.mulf %2001, %1880 : vector<8x16xf32>
    %2003 = arith.addf %2000, %2002 : vector<8x16xf32>
    %2004 = vector.broadcast %166 : f32 to vector<8x16xf32>
    %2005 = arith.mulf %2004, %1881 : vector<8x16xf32>
    %2006 = arith.addf %2003, %2005 : vector<8x16xf32>
    %2007 = vector.broadcast %167 : f32 to vector<8x16xf32>
    %2008 = arith.mulf %2007, %1882 : vector<8x16xf32>
    %2009 = arith.addf %2006, %2008 : vector<8x16xf32>
    %2010 = vector.broadcast %168 : f32 to vector<8x16xf32>
    %2011 = arith.mulf %2010, %1883 : vector<8x16xf32>
    %2012 = arith.addf %2009, %2011 : vector<8x16xf32>
    %2013 = vector.broadcast %169 : f32 to vector<8x16xf32>
    %2014 = arith.mulf %2013, %1884 : vector<8x16xf32>
    %2015 = arith.addf %2012, %2014 : vector<8x16xf32>
    %2016 = vector.broadcast %170 : f32 to vector<8x16xf32>
    %2017 = arith.mulf %2016, %1885 : vector<8x16xf32>
    %2018 = arith.addf %2015, %2017 : vector<8x16xf32>
    %2019 = vector.broadcast %171 : f32 to vector<8x16xf32>
    %2020 = arith.mulf %2019, %1886 : vector<8x16xf32>
    %2021 = arith.addf %2018, %2020 : vector<8x16xf32>
    %2022 = vector.broadcast %199 : f32 to vector<8x16xf32>
    %2023 = arith.mulf %2022, %1878 : vector<8x16xf32>
    %2024 = arith.addf %1820, %2023 : vector<8x16xf32>
    %2025 = vector.broadcast %200 : f32 to vector<8x16xf32>
    %2026 = arith.mulf %2025, %1879 : vector<8x16xf32>
    %2027 = arith.addf %2024, %2026 : vector<8x16xf32>
    %2028 = vector.broadcast %201 : f32 to vector<8x16xf32>
    %2029 = arith.mulf %2028, %1880 : vector<8x16xf32>
    %2030 = arith.addf %2027, %2029 : vector<8x16xf32>
    %2031 = vector.broadcast %202 : f32 to vector<8x16xf32>
    %2032 = arith.mulf %2031, %1881 : vector<8x16xf32>
    %2033 = arith.addf %2030, %2032 : vector<8x16xf32>
    %2034 = vector.broadcast %203 : f32 to vector<8x16xf32>
    %2035 = arith.mulf %2034, %1882 : vector<8x16xf32>
    %2036 = arith.addf %2033, %2035 : vector<8x16xf32>
    %2037 = vector.broadcast %204 : f32 to vector<8x16xf32>
    %2038 = arith.mulf %2037, %1883 : vector<8x16xf32>
    %2039 = arith.addf %2036, %2038 : vector<8x16xf32>
    %2040 = vector.broadcast %205 : f32 to vector<8x16xf32>
    %2041 = arith.mulf %2040, %1884 : vector<8x16xf32>
    %2042 = arith.addf %2039, %2041 : vector<8x16xf32>
    %2043 = vector.broadcast %206 : f32 to vector<8x16xf32>
    %2044 = arith.mulf %2043, %1885 : vector<8x16xf32>
    %2045 = arith.addf %2042, %2044 : vector<8x16xf32>
    %2046 = vector.broadcast %207 : f32 to vector<8x16xf32>
    %2047 = arith.mulf %2046, %1886 : vector<8x16xf32>
    %2048 = arith.addf %2045, %2047 : vector<8x16xf32>
    %2049 = vector.broadcast %235 : f32 to vector<8x16xf32>
    %2050 = arith.mulf %2049, %1878 : vector<8x16xf32>
    %2051 = arith.addf %1847, %2050 : vector<8x16xf32>
    %2052 = vector.broadcast %236 : f32 to vector<8x16xf32>
    %2053 = arith.mulf %2052, %1879 : vector<8x16xf32>
    %2054 = arith.addf %2051, %2053 : vector<8x16xf32>
    %2055 = vector.broadcast %237 : f32 to vector<8x16xf32>
    %2056 = arith.mulf %2055, %1880 : vector<8x16xf32>
    %2057 = arith.addf %2054, %2056 : vector<8x16xf32>
    %2058 = vector.broadcast %238 : f32 to vector<8x16xf32>
    %2059 = arith.mulf %2058, %1881 : vector<8x16xf32>
    %2060 = arith.addf %2057, %2059 : vector<8x16xf32>
    %2061 = vector.broadcast %239 : f32 to vector<8x16xf32>
    %2062 = arith.mulf %2061, %1882 : vector<8x16xf32>
    %2063 = arith.addf %2060, %2062 : vector<8x16xf32>
    %2064 = vector.broadcast %240 : f32 to vector<8x16xf32>
    %2065 = arith.mulf %2064, %1883 : vector<8x16xf32>
    %2066 = arith.addf %2063, %2065 : vector<8x16xf32>
    %2067 = vector.broadcast %241 : f32 to vector<8x16xf32>
    %2068 = arith.mulf %2067, %1884 : vector<8x16xf32>
    %2069 = arith.addf %2066, %2068 : vector<8x16xf32>
    %2070 = vector.broadcast %242 : f32 to vector<8x16xf32>
    %2071 = arith.mulf %2070, %1885 : vector<8x16xf32>
    %2072 = arith.addf %2069, %2071 : vector<8x16xf32>
    %2073 = vector.broadcast %243 : f32 to vector<8x16xf32>
    %2074 = arith.mulf %2073, %1886 : vector<8x16xf32>
    %2075 = arith.addf %2072, %2074 : vector<8x16xf32>
    %2076 = vector.broadcast %271 : f32 to vector<8x16xf32>
    %2077 = arith.mulf %2076, %1878 : vector<8x16xf32>
    %2078 = arith.addf %1874, %2077 : vector<8x16xf32>
    %2079 = vector.broadcast %272 : f32 to vector<8x16xf32>
    %2080 = arith.mulf %2079, %1879 : vector<8x16xf32>
    %2081 = arith.addf %2078, %2080 : vector<8x16xf32>
    %2082 = vector.broadcast %273 : f32 to vector<8x16xf32>
    %2083 = arith.mulf %2082, %1880 : vector<8x16xf32>
    %2084 = arith.addf %2081, %2083 : vector<8x16xf32>
    %2085 = vector.broadcast %274 : f32 to vector<8x16xf32>
    %2086 = arith.mulf %2085, %1881 : vector<8x16xf32>
    %2087 = arith.addf %2084, %2086 : vector<8x16xf32>
    %2088 = vector.broadcast %275 : f32 to vector<8x16xf32>
    %2089 = arith.mulf %2088, %1882 : vector<8x16xf32>
    %2090 = arith.addf %2087, %2089 : vector<8x16xf32>
    %2091 = vector.broadcast %276 : f32 to vector<8x16xf32>
    %2092 = arith.mulf %2091, %1883 : vector<8x16xf32>
    %2093 = arith.addf %2090, %2092 : vector<8x16xf32>
    %2094 = vector.broadcast %277 : f32 to vector<8x16xf32>
    %2095 = arith.mulf %2094, %1884 : vector<8x16xf32>
    %2096 = arith.addf %2093, %2095 : vector<8x16xf32>
    %2097 = vector.broadcast %278 : f32 to vector<8x16xf32>
    %2098 = arith.mulf %2097, %1885 : vector<8x16xf32>
    %2099 = arith.addf %2096, %2098 : vector<8x16xf32>
    %2100 = vector.broadcast %279 : f32 to vector<8x16xf32>
    %2101 = arith.mulf %2100, %1886 : vector<8x16xf32>
    %2102 = arith.addf %2099, %2101 : vector<8x16xf32>
    %c0_103 = arith.constant 0 : index
    %c3_104 = arith.constant 3 : index
    %2103 = arith.index_cast %1393 : i32 to index
    %c0_105 = arith.constant 0 : index
    %2104 = vector.load %arg4[%c0_103, %c3_104, %2103, %c0_105] : memref<1x4x18x128xf32, #tpu.memory_space<vmem>>, vector<1x1x10x128xf32>
    %2105 = vector.shape_cast %2104 : vector<1x1x10x128xf32> to vector<10x128xf32>
    %2106 = vector.extract_strided_slice %2105 {offsets = [0, 0], sizes = [8, 16], strides = [1, 1]} : vector<10x128xf32> to vector<8x16xf32>
    %2107 = vector.extract_strided_slice %2105 {offsets = [0, 1], sizes = [8, 16], strides = [1, 1]} : vector<10x128xf32> to vector<8x16xf32>
    %2108 = vector.extract_strided_slice %2105 {offsets = [0, 2], sizes = [8, 16], strides = [1, 1]} : vector<10x128xf32> to vector<8x16xf32>
    %2109 = vector.extract_strided_slice %2105 {offsets = [1, 0], sizes = [8, 16], strides = [1, 1]} : vector<10x128xf32> to vector<8x16xf32>
    %2110 = vector.extract_strided_slice %2105 {offsets = [1, 1], sizes = [8, 16], strides = [1, 1]} : vector<10x128xf32> to vector<8x16xf32>
    %2111 = vector.extract_strided_slice %2105 {offsets = [1, 2], sizes = [8, 16], strides = [1, 1]} : vector<10x128xf32> to vector<8x16xf32>
    %2112 = vector.extract_strided_slice %2105 {offsets = [2, 0], sizes = [8, 16], strides = [1, 1]} : vector<10x128xf32> to vector<8x16xf32>
    %2113 = vector.extract_strided_slice %2105 {offsets = [2, 1], sizes = [8, 16], strides = [1, 1]} : vector<10x128xf32> to vector<8x16xf32>
    %2114 = vector.extract_strided_slice %2105 {offsets = [2, 2], sizes = [8, 16], strides = [1, 1]} : vector<10x128xf32> to vector<8x16xf32>
    %2115 = vector.broadcast %28 : f32 to vector<8x16xf32>
    %2116 = arith.mulf %2115, %2106 : vector<8x16xf32>
    %2117 = arith.addf %1913, %2116 : vector<8x16xf32>
    %2118 = vector.broadcast %29 : f32 to vector<8x16xf32>
    %2119 = arith.mulf %2118, %2107 : vector<8x16xf32>
    %2120 = arith.addf %2117, %2119 : vector<8x16xf32>
    %2121 = vector.broadcast %30 : f32 to vector<8x16xf32>
    %2122 = arith.mulf %2121, %2108 : vector<8x16xf32>
    %2123 = arith.addf %2120, %2122 : vector<8x16xf32>
    %2124 = vector.broadcast %31 : f32 to vector<8x16xf32>
    %2125 = arith.mulf %2124, %2109 : vector<8x16xf32>
    %2126 = arith.addf %2123, %2125 : vector<8x16xf32>
    %2127 = vector.broadcast %32 : f32 to vector<8x16xf32>
    %2128 = arith.mulf %2127, %2110 : vector<8x16xf32>
    %2129 = arith.addf %2126, %2128 : vector<8x16xf32>
    %2130 = vector.broadcast %33 : f32 to vector<8x16xf32>
    %2131 = arith.mulf %2130, %2111 : vector<8x16xf32>
    %2132 = arith.addf %2129, %2131 : vector<8x16xf32>
    %2133 = vector.broadcast %34 : f32 to vector<8x16xf32>
    %2134 = arith.mulf %2133, %2112 : vector<8x16xf32>
    %2135 = arith.addf %2132, %2134 : vector<8x16xf32>
    %2136 = vector.broadcast %35 : f32 to vector<8x16xf32>
    %2137 = arith.mulf %2136, %2113 : vector<8x16xf32>
    %2138 = arith.addf %2135, %2137 : vector<8x16xf32>
    %2139 = vector.broadcast %36 : f32 to vector<8x16xf32>
    %2140 = arith.mulf %2139, %2114 : vector<8x16xf32>
    %2141 = arith.addf %2138, %2140 : vector<8x16xf32>
    %2142 = vector.broadcast %64 : f32 to vector<8x16xf32>
    %2143 = arith.mulf %2142, %2106 : vector<8x16xf32>
    %2144 = arith.addf %1940, %2143 : vector<8x16xf32>
    %2145 = vector.broadcast %65 : f32 to vector<8x16xf32>
    %2146 = arith.mulf %2145, %2107 : vector<8x16xf32>
    %2147 = arith.addf %2144, %2146 : vector<8x16xf32>
    %2148 = vector.broadcast %66 : f32 to vector<8x16xf32>
    %2149 = arith.mulf %2148, %2108 : vector<8x16xf32>
    %2150 = arith.addf %2147, %2149 : vector<8x16xf32>
    %2151 = vector.broadcast %67 : f32 to vector<8x16xf32>
    %2152 = arith.mulf %2151, %2109 : vector<8x16xf32>
    %2153 = arith.addf %2150, %2152 : vector<8x16xf32>
    %2154 = vector.broadcast %68 : f32 to vector<8x16xf32>
    %2155 = arith.mulf %2154, %2110 : vector<8x16xf32>
    %2156 = arith.addf %2153, %2155 : vector<8x16xf32>
    %2157 = vector.broadcast %69 : f32 to vector<8x16xf32>
    %2158 = arith.mulf %2157, %2111 : vector<8x16xf32>
    %2159 = arith.addf %2156, %2158 : vector<8x16xf32>
    %2160 = vector.broadcast %70 : f32 to vector<8x16xf32>
    %2161 = arith.mulf %2160, %2112 : vector<8x16xf32>
    %2162 = arith.addf %2159, %2161 : vector<8x16xf32>
    %2163 = vector.broadcast %71 : f32 to vector<8x16xf32>
    %2164 = arith.mulf %2163, %2113 : vector<8x16xf32>
    %2165 = arith.addf %2162, %2164 : vector<8x16xf32>
    %2166 = vector.broadcast %72 : f32 to vector<8x16xf32>
    %2167 = arith.mulf %2166, %2114 : vector<8x16xf32>
    %2168 = arith.addf %2165, %2167 : vector<8x16xf32>
    %2169 = vector.broadcast %100 : f32 to vector<8x16xf32>
    %2170 = arith.mulf %2169, %2106 : vector<8x16xf32>
    %2171 = arith.addf %1967, %2170 : vector<8x16xf32>
    %2172 = vector.broadcast %101 : f32 to vector<8x16xf32>
    %2173 = arith.mulf %2172, %2107 : vector<8x16xf32>
    %2174 = arith.addf %2171, %2173 : vector<8x16xf32>
    %2175 = vector.broadcast %102 : f32 to vector<8x16xf32>
    %2176 = arith.mulf %2175, %2108 : vector<8x16xf32>
    %2177 = arith.addf %2174, %2176 : vector<8x16xf32>
    %2178 = vector.broadcast %103 : f32 to vector<8x16xf32>
    %2179 = arith.mulf %2178, %2109 : vector<8x16xf32>
    %2180 = arith.addf %2177, %2179 : vector<8x16xf32>
    %2181 = vector.broadcast %104 : f32 to vector<8x16xf32>
    %2182 = arith.mulf %2181, %2110 : vector<8x16xf32>
    %2183 = arith.addf %2180, %2182 : vector<8x16xf32>
    %2184 = vector.broadcast %105 : f32 to vector<8x16xf32>
    %2185 = arith.mulf %2184, %2111 : vector<8x16xf32>
    %2186 = arith.addf %2183, %2185 : vector<8x16xf32>
    %2187 = vector.broadcast %106 : f32 to vector<8x16xf32>
    %2188 = arith.mulf %2187, %2112 : vector<8x16xf32>
    %2189 = arith.addf %2186, %2188 : vector<8x16xf32>
    %2190 = vector.broadcast %107 : f32 to vector<8x16xf32>
    %2191 = arith.mulf %2190, %2113 : vector<8x16xf32>
    %2192 = arith.addf %2189, %2191 : vector<8x16xf32>
    %2193 = vector.broadcast %108 : f32 to vector<8x16xf32>
    %2194 = arith.mulf %2193, %2114 : vector<8x16xf32>
    %2195 = arith.addf %2192, %2194 : vector<8x16xf32>
    %2196 = vector.broadcast %136 : f32 to vector<8x16xf32>
    %2197 = arith.mulf %2196, %2106 : vector<8x16xf32>
    %2198 = arith.addf %1994, %2197 : vector<8x16xf32>
    %2199 = vector.broadcast %137 : f32 to vector<8x16xf32>
    %2200 = arith.mulf %2199, %2107 : vector<8x16xf32>
    %2201 = arith.addf %2198, %2200 : vector<8x16xf32>
    %2202 = vector.broadcast %138 : f32 to vector<8x16xf32>
    %2203 = arith.mulf %2202, %2108 : vector<8x16xf32>
    %2204 = arith.addf %2201, %2203 : vector<8x16xf32>
    %2205 = vector.broadcast %139 : f32 to vector<8x16xf32>
    %2206 = arith.mulf %2205, %2109 : vector<8x16xf32>
    %2207 = arith.addf %2204, %2206 : vector<8x16xf32>
    %2208 = vector.broadcast %140 : f32 to vector<8x16xf32>
    %2209 = arith.mulf %2208, %2110 : vector<8x16xf32>
    %2210 = arith.addf %2207, %2209 : vector<8x16xf32>
    %2211 = vector.broadcast %141 : f32 to vector<8x16xf32>
    %2212 = arith.mulf %2211, %2111 : vector<8x16xf32>
    %2213 = arith.addf %2210, %2212 : vector<8x16xf32>
    %2214 = vector.broadcast %142 : f32 to vector<8x16xf32>
    %2215 = arith.mulf %2214, %2112 : vector<8x16xf32>
    %2216 = arith.addf %2213, %2215 : vector<8x16xf32>
    %2217 = vector.broadcast %143 : f32 to vector<8x16xf32>
    %2218 = arith.mulf %2217, %2113 : vector<8x16xf32>
    %2219 = arith.addf %2216, %2218 : vector<8x16xf32>
    %2220 = vector.broadcast %144 : f32 to vector<8x16xf32>
    %2221 = arith.mulf %2220, %2114 : vector<8x16xf32>
    %2222 = arith.addf %2219, %2221 : vector<8x16xf32>
    %2223 = vector.broadcast %172 : f32 to vector<8x16xf32>
    %2224 = arith.mulf %2223, %2106 : vector<8x16xf32>
    %2225 = arith.addf %2021, %2224 : vector<8x16xf32>
    %2226 = vector.broadcast %173 : f32 to vector<8x16xf32>
    %2227 = arith.mulf %2226, %2107 : vector<8x16xf32>
    %2228 = arith.addf %2225, %2227 : vector<8x16xf32>
    %2229 = vector.broadcast %174 : f32 to vector<8x16xf32>
    %2230 = arith.mulf %2229, %2108 : vector<8x16xf32>
    %2231 = arith.addf %2228, %2230 : vector<8x16xf32>
    %2232 = vector.broadcast %175 : f32 to vector<8x16xf32>
    %2233 = arith.mulf %2232, %2109 : vector<8x16xf32>
    %2234 = arith.addf %2231, %2233 : vector<8x16xf32>
    %2235 = vector.broadcast %176 : f32 to vector<8x16xf32>
    %2236 = arith.mulf %2235, %2110 : vector<8x16xf32>
    %2237 = arith.addf %2234, %2236 : vector<8x16xf32>
    %2238 = vector.broadcast %177 : f32 to vector<8x16xf32>
    %2239 = arith.mulf %2238, %2111 : vector<8x16xf32>
    %2240 = arith.addf %2237, %2239 : vector<8x16xf32>
    %2241 = vector.broadcast %178 : f32 to vector<8x16xf32>
    %2242 = arith.mulf %2241, %2112 : vector<8x16xf32>
    %2243 = arith.addf %2240, %2242 : vector<8x16xf32>
    %2244 = vector.broadcast %179 : f32 to vector<8x16xf32>
    %2245 = arith.mulf %2244, %2113 : vector<8x16xf32>
    %2246 = arith.addf %2243, %2245 : vector<8x16xf32>
    %2247 = vector.broadcast %180 : f32 to vector<8x16xf32>
    %2248 = arith.mulf %2247, %2114 : vector<8x16xf32>
    %2249 = arith.addf %2246, %2248 : vector<8x16xf32>
    %2250 = vector.broadcast %208 : f32 to vector<8x16xf32>
    %2251 = arith.mulf %2250, %2106 : vector<8x16xf32>
    %2252 = arith.addf %2048, %2251 : vector<8x16xf32>
    %2253 = vector.broadcast %209 : f32 to vector<8x16xf32>
    %2254 = arith.mulf %2253, %2107 : vector<8x16xf32>
    %2255 = arith.addf %2252, %2254 : vector<8x16xf32>
    %2256 = vector.broadcast %210 : f32 to vector<8x16xf32>
    %2257 = arith.mulf %2256, %2108 : vector<8x16xf32>
    %2258 = arith.addf %2255, %2257 : vector<8x16xf32>
    %2259 = vector.broadcast %211 : f32 to vector<8x16xf32>
    %2260 = arith.mulf %2259, %2109 : vector<8x16xf32>
    %2261 = arith.addf %2258, %2260 : vector<8x16xf32>
    %2262 = vector.broadcast %212 : f32 to vector<8x16xf32>
    %2263 = arith.mulf %2262, %2110 : vector<8x16xf32>
    %2264 = arith.addf %2261, %2263 : vector<8x16xf32>
    %2265 = vector.broadcast %213 : f32 to vector<8x16xf32>
    %2266 = arith.mulf %2265, %2111 : vector<8x16xf32>
    %2267 = arith.addf %2264, %2266 : vector<8x16xf32>
    %2268 = vector.broadcast %214 : f32 to vector<8x16xf32>
    %2269 = arith.mulf %2268, %2112 : vector<8x16xf32>
    %2270 = arith.addf %2267, %2269 : vector<8x16xf32>
    %2271 = vector.broadcast %215 : f32 to vector<8x16xf32>
    %2272 = arith.mulf %2271, %2113 : vector<8x16xf32>
    %2273 = arith.addf %2270, %2272 : vector<8x16xf32>
    %2274 = vector.broadcast %216 : f32 to vector<8x16xf32>
    %2275 = arith.mulf %2274, %2114 : vector<8x16xf32>
    %2276 = arith.addf %2273, %2275 : vector<8x16xf32>
    %2277 = vector.broadcast %244 : f32 to vector<8x16xf32>
    %2278 = arith.mulf %2277, %2106 : vector<8x16xf32>
    %2279 = arith.addf %2075, %2278 : vector<8x16xf32>
    %2280 = vector.broadcast %245 : f32 to vector<8x16xf32>
    %2281 = arith.mulf %2280, %2107 : vector<8x16xf32>
    %2282 = arith.addf %2279, %2281 : vector<8x16xf32>
    %2283 = vector.broadcast %246 : f32 to vector<8x16xf32>
    %2284 = arith.mulf %2283, %2108 : vector<8x16xf32>
    %2285 = arith.addf %2282, %2284 : vector<8x16xf32>
    %2286 = vector.broadcast %247 : f32 to vector<8x16xf32>
    %2287 = arith.mulf %2286, %2109 : vector<8x16xf32>
    %2288 = arith.addf %2285, %2287 : vector<8x16xf32>
    %2289 = vector.broadcast %248 : f32 to vector<8x16xf32>
    %2290 = arith.mulf %2289, %2110 : vector<8x16xf32>
    %2291 = arith.addf %2288, %2290 : vector<8x16xf32>
    %2292 = vector.broadcast %249 : f32 to vector<8x16xf32>
    %2293 = arith.mulf %2292, %2111 : vector<8x16xf32>
    %2294 = arith.addf %2291, %2293 : vector<8x16xf32>
    %2295 = vector.broadcast %250 : f32 to vector<8x16xf32>
    %2296 = arith.mulf %2295, %2112 : vector<8x16xf32>
    %2297 = arith.addf %2294, %2296 : vector<8x16xf32>
    %2298 = vector.broadcast %251 : f32 to vector<8x16xf32>
    %2299 = arith.mulf %2298, %2113 : vector<8x16xf32>
    %2300 = arith.addf %2297, %2299 : vector<8x16xf32>
    %2301 = vector.broadcast %252 : f32 to vector<8x16xf32>
    %2302 = arith.mulf %2301, %2114 : vector<8x16xf32>
    %2303 = arith.addf %2300, %2302 : vector<8x16xf32>
    %2304 = vector.broadcast %280 : f32 to vector<8x16xf32>
    %2305 = arith.mulf %2304, %2106 : vector<8x16xf32>
    %2306 = arith.addf %2102, %2305 : vector<8x16xf32>
    %2307 = vector.broadcast %281 : f32 to vector<8x16xf32>
    %2308 = arith.mulf %2307, %2107 : vector<8x16xf32>
    %2309 = arith.addf %2306, %2308 : vector<8x16xf32>
    %2310 = vector.broadcast %282 : f32 to vector<8x16xf32>
    %2311 = arith.mulf %2310, %2108 : vector<8x16xf32>
    %2312 = arith.addf %2309, %2311 : vector<8x16xf32>
    %2313 = vector.broadcast %283 : f32 to vector<8x16xf32>
    %2314 = arith.mulf %2313, %2109 : vector<8x16xf32>
    %2315 = arith.addf %2312, %2314 : vector<8x16xf32>
    %2316 = vector.broadcast %284 : f32 to vector<8x16xf32>
    %2317 = arith.mulf %2316, %2110 : vector<8x16xf32>
    %2318 = arith.addf %2315, %2317 : vector<8x16xf32>
    %2319 = vector.broadcast %285 : f32 to vector<8x16xf32>
    %2320 = arith.mulf %2319, %2111 : vector<8x16xf32>
    %2321 = arith.addf %2318, %2320 : vector<8x16xf32>
    %2322 = vector.broadcast %286 : f32 to vector<8x16xf32>
    %2323 = arith.mulf %2322, %2112 : vector<8x16xf32>
    %2324 = arith.addf %2321, %2323 : vector<8x16xf32>
    %2325 = vector.broadcast %287 : f32 to vector<8x16xf32>
    %2326 = arith.mulf %2325, %2113 : vector<8x16xf32>
    %2327 = arith.addf %2324, %2326 : vector<8x16xf32>
    %2328 = vector.broadcast %288 : f32 to vector<8x16xf32>
    %2329 = arith.mulf %2328, %2114 : vector<8x16xf32>
    %2330 = arith.addf %2327, %2329 : vector<8x16xf32>
    %cst_106 = arith.constant 2.000000e+01 : f32
    %2331 = vector.broadcast %cst_106 : f32 to vector<8x16xf32>
    %2332 = arith.minimumf %2141, %2331 : vector<8x16xf32>
    %2333 = math.exp %2332 : vector<8x16xf32>
    %cst_107 = arith.constant 2.000000e+00 : f32
    %2334 = vector.broadcast %cst_107 : f32 to vector<8x16xf32>
    %2335 = arith.addf %2333, %2334 : vector<8x16xf32>
    %2336 = arith.mulf %2333, %2335 : vector<8x16xf32>
    %cst_108 = arith.constant 2.000000e+00 : f32
    %2337 = vector.broadcast %cst_108 : f32 to vector<8x16xf32>
    %2338 = arith.addf %2336, %2337 : vector<8x16xf32>
    %2339 = tpu.reciprocal %2338 {approx = true} : vector<8x16xf32> -> vector<8x16xf32>
    %2340 = arith.mulf %2338, %2339 : vector<8x16xf32>
    %cst_109 = arith.constant 2.000000e+00 : f32
    %2341 = vector.broadcast %cst_109 : f32 to vector<8x16xf32>
    %2342 = arith.subf %2341, %2340 : vector<8x16xf32>
    %2343 = arith.mulf %2339, %2342 : vector<8x16xf32>
    %2344 = arith.mulf %2336, %2343 : vector<8x16xf32>
    %2345 = arith.mulf %2141, %2344 : vector<8x16xf32>
    %c0_110 = arith.constant 0 : index
    %c0_111 = arith.constant 0 : index
    %2346 = arith.index_cast %1394 : i32 to index
    %c0_112 = arith.constant 0 : index
    %2347 = vector.load %arg5[%c0_110, %c0_111, %2346, %c0_112] : memref<1x8x16x16xf32, #tpu.memory_space<vmem>>, vector<1x1x8x16xf32>
    %2348 = vector.shape_cast %2347 : vector<1x1x8x16xf32> to vector<8x16xf32>
    %2349 = vector.shape_cast %2345 : vector<8x16xf32> to vector<1x1x8x16xf32>
    tpu.vector_store %arg5[%c0_110, %c0_111, %2346, %c0_112], %2349 {strides = array<i32>} : memref<1x8x16x16xf32, #tpu.memory_space<vmem>>, vector<1x1x8x16xf32>,
    %cst_113 = arith.constant 2.000000e+01 : f32
    %2350 = vector.broadcast %cst_113 : f32 to vector<8x16xf32>
    %2351 = arith.minimumf %2168, %2350 : vector<8x16xf32>
    %2352 = math.exp %2351 : vector<8x16xf32>
    %cst_114 = arith.constant 2.000000e+00 : f32
    %2353 = vector.broadcast %cst_114 : f32 to vector<8x16xf32>
    %2354 = arith.addf %2352, %2353 : vector<8x16xf32>
    %2355 = arith.mulf %2352, %2354 : vector<8x16xf32>
    %cst_115 = arith.constant 2.000000e+00 : f32
    %2356 = vector.broadcast %cst_115 : f32 to vector<8x16xf32>
    %2357 = arith.addf %2355, %2356 : vector<8x16xf32>
    %2358 = tpu.reciprocal %2357 {approx = true} : vector<8x16xf32> -> vector<8x16xf32>
    %2359 = arith.mulf %2357, %2358 : vector<8x16xf32>
    %cst_116 = arith.constant 2.000000e+00 : f32
    %2360 = vector.broadcast %cst_116 : f32 to vector<8x16xf32>
    %2361 = arith.subf %2360, %2359 : vector<8x16xf32>
    %2362 = arith.mulf %2358, %2361 : vector<8x16xf32>
    %2363 = arith.mulf %2355, %2362 : vector<8x16xf32>
    %2364 = arith.mulf %2168, %2363 : vector<8x16xf32>
    %c0_117 = arith.constant 0 : index
    %c1_118 = arith.constant 1 : index
    %2365 = arith.index_cast %1394 : i32 to index
    %c0_119 = arith.constant 0 : index
    %2366 = vector.load %arg5[%c0_117, %c1_118, %2365, %c0_119] : memref<1x8x16x16xf32, #tpu.memory_space<vmem>>, vector<1x1x8x16xf32>
    %2367 = vector.shape_cast %2366 : vector<1x1x8x16xf32> to vector<8x16xf32>
    %2368 = vector.shape_cast %2364 : vector<8x16xf32> to vector<1x1x8x16xf32>
    tpu.vector_store %arg5[%c0_117, %c1_118, %2365, %c0_119], %2368 {strides = array<i32>} : memref<1x8x16x16xf32, #tpu.memory_space<vmem>>, vector<1x1x8x16xf32>,
    %cst_120 = arith.constant 2.000000e+01 : f32
    %2369 = vector.broadcast %cst_120 : f32 to vector<8x16xf32>
    %2370 = arith.minimumf %2195, %2369 : vector<8x16xf32>
    %2371 = math.exp %2370 : vector<8x16xf32>
    %cst_121 = arith.constant 2.000000e+00 : f32
    %2372 = vector.broadcast %cst_121 : f32 to vector<8x16xf32>
    %2373 = arith.addf %2371, %2372 : vector<8x16xf32>
    %2374 = arith.mulf %2371, %2373 : vector<8x16xf32>
    %cst_122 = arith.constant 2.000000e+00 : f32
    %2375 = vector.broadcast %cst_122 : f32 to vector<8x16xf32>
    %2376 = arith.addf %2374, %2375 : vector<8x16xf32>
    %2377 = tpu.reciprocal %2376 {approx = true} : vector<8x16xf32> -> vector<8x16xf32>
    %2378 = arith.mulf %2376, %2377 : vector<8x16xf32>
    %cst_123 = arith.constant 2.000000e+00 : f32
    %2379 = vector.broadcast %cst_123 : f32 to vector<8x16xf32>
    %2380 = arith.subf %2379, %2378 : vector<8x16xf32>
    %2381 = arith.mulf %2377, %2380 : vector<8x16xf32>
    %2382 = arith.mulf %2374, %2381 : vector<8x16xf32>
    %2383 = arith.mulf %2195, %2382 : vector<8x16xf32>
    %c0_124 = arith.constant 0 : index
    %c2_125 = arith.constant 2 : index
    %2384 = arith.index_cast %1394 : i32 to index
    %c0_126 = arith.constant 0 : index
    %2385 = vector.load %arg5[%c0_124, %c2_125, %2384, %c0_126] : memref<1x8x16x16xf32, #tpu.memory_space<vmem>>, vector<1x1x8x16xf32>
    %2386 = vector.shape_cast %2385 : vector<1x1x8x16xf32> to vector<8x16xf32>
    %2387 = vector.shape_cast %2383 : vector<8x16xf32> to vector<1x1x8x16xf32>
    tpu.vector_store %arg5[%c0_124, %c2_125, %2384, %c0_126], %2387 {strides = array<i32>} : memref<1x8x16x16xf32, #tpu.memory_space<vmem>>, vector<1x1x8x16xf32>,
    %cst_127 = arith.constant 2.000000e+01 : f32
    %2388 = vector.broadcast %cst_127 : f32 to vector<8x16xf32>
    %2389 = arith.minimumf %2222, %2388 : vector<8x16xf32>
    %2390 = math.exp %2389 : vector<8x16xf32>
    %cst_128 = arith.constant 2.000000e+00 : f32
    %2391 = vector.broadcast %cst_128 : f32 to vector<8x16xf32>
    %2392 = arith.addf %2390, %2391 : vector<8x16xf32>
    %2393 = arith.mulf %2390, %2392 : vector<8x16xf32>
    %cst_129 = arith.constant 2.000000e+00 : f32
    %2394 = vector.broadcast %cst_129 : f32 to vector<8x16xf32>
    %2395 = arith.addf %2393, %2394 : vector<8x16xf32>
    %2396 = tpu.reciprocal %2395 {approx = true} : vector<8x16xf32> -> vector<8x16xf32>
    %2397 = arith.mulf %2395, %2396 : vector<8x16xf32>
    %cst_130 = arith.constant 2.000000e+00 : f32
    %2398 = vector.broadcast %cst_130 : f32 to vector<8x16xf32>
    %2399 = arith.subf %2398, %2397 : vector<8x16xf32>
    %2400 = arith.mulf %2396, %2399 : vector<8x16xf32>
    %2401 = arith.mulf %2393, %2400 : vector<8x16xf32>
    %2402 = arith.mulf %2222, %2401 : vector<8x16xf32>
    %c0_131 = arith.constant 0 : index
    %c3_132 = arith.constant 3 : index
    %2403 = arith.index_cast %1394 : i32 to index
    %c0_133 = arith.constant 0 : index
    %2404 = vector.load %arg5[%c0_131, %c3_132, %2403, %c0_133] : memref<1x8x16x16xf32, #tpu.memory_space<vmem>>, vector<1x1x8x16xf32>
    %2405 = vector.shape_cast %2404 : vector<1x1x8x16xf32> to vector<8x16xf32>
    %2406 = vector.shape_cast %2402 : vector<8x16xf32> to vector<1x1x8x16xf32>
    tpu.vector_store %arg5[%c0_131, %c3_132, %2403, %c0_133], %2406 {strides = array<i32>} : memref<1x8x16x16xf32, #tpu.memory_space<vmem>>, vector<1x1x8x16xf32>,
    %cst_134 = arith.constant 2.000000e+01 : f32
    %2407 = vector.broadcast %cst_134 : f32 to vector<8x16xf32>
    %2408 = arith.minimumf %2249, %2407 : vector<8x16xf32>
    %2409 = math.exp %2408 : vector<8x16xf32>
    %cst_135 = arith.constant 2.000000e+00 : f32
    %2410 = vector.broadcast %cst_135 : f32 to vector<8x16xf32>
    %2411 = arith.addf %2409, %2410 : vector<8x16xf32>
    %2412 = arith.mulf %2409, %2411 : vector<8x16xf32>
    %cst_136 = arith.constant 2.000000e+00 : f32
    %2413 = vector.broadcast %cst_136 : f32 to vector<8x16xf32>
    %2414 = arith.addf %2412, %2413 : vector<8x16xf32>
    %2415 = tpu.reciprocal %2414 {approx = true} : vector<8x16xf32> -> vector<8x16xf32>
    %2416 = arith.mulf %2414, %2415 : vector<8x16xf32>
    %cst_137 = arith.constant 2.000000e+00 : f32
    %2417 = vector.broadcast %cst_137 : f32 to vector<8x16xf32>
    %2418 = arith.subf %2417, %2416 : vector<8x16xf32>
    %2419 = arith.mulf %2415, %2418 : vector<8x16xf32>
    %2420 = arith.mulf %2412, %2419 : vector<8x16xf32>
    %2421 = arith.mulf %2249, %2420 : vector<8x16xf32>
    %c0_138 = arith.constant 0 : index
    %c4_139 = arith.constant 4 : index
    %2422 = arith.index_cast %1394 : i32 to index
    %c0_140 = arith.constant 0 : index
    %2423 = vector.load %arg5[%c0_138, %c4_139, %2422, %c0_140] : memref<1x8x16x16xf32, #tpu.memory_space<vmem>>, vector<1x1x8x16xf32>
    %2424 = vector.shape_cast %2423 : vector<1x1x8x16xf32> to vector<8x16xf32>
    %2425 = vector.shape_cast %2421 : vector<8x16xf32> to vector<1x1x8x16xf32>
    tpu.vector_store %arg5[%c0_138, %c4_139, %2422, %c0_140], %2425 {strides = array<i32>} : memref<1x8x16x16xf32, #tpu.memory_space<vmem>>, vector<1x1x8x16xf32>,
    %cst_141 = arith.constant 2.000000e+01 : f32
    %2426 = vector.broadcast %cst_141 : f32 to vector<8x16xf32>
    %2427 = arith.minimumf %2276, %2426 : vector<8x16xf32>
    %2428 = math.exp %2427 : vector<8x16xf32>
    %cst_142 = arith.constant 2.000000e+00 : f32
    %2429 = vector.broadcast %cst_142 : f32 to vector<8x16xf32>
    %2430 = arith.addf %2428, %2429 : vector<8x16xf32>
    %2431 = arith.mulf %2428, %2430 : vector<8x16xf32>
    %cst_143 = arith.constant 2.000000e+00 : f32
    %2432 = vector.broadcast %cst_143 : f32 to vector<8x16xf32>
    %2433 = arith.addf %2431, %2432 : vector<8x16xf32>
    %2434 = tpu.reciprocal %2433 {approx = true} : vector<8x16xf32> -> vector<8x16xf32>
    %2435 = arith.mulf %2433, %2434 : vector<8x16xf32>
    %cst_144 = arith.constant 2.000000e+00 : f32
    %2436 = vector.broadcast %cst_144 : f32 to vector<8x16xf32>
    %2437 = arith.subf %2436, %2435 : vector<8x16xf32>
    %2438 = arith.mulf %2434, %2437 : vector<8x16xf32>
    %2439 = arith.mulf %2431, %2438 : vector<8x16xf32>
    %2440 = arith.mulf %2276, %2439 : vector<8x16xf32>
    %c0_145 = arith.constant 0 : index
    %c5_146 = arith.constant 5 : index
    %2441 = arith.index_cast %1394 : i32 to index
    %c0_147 = arith.constant 0 : index
    %2442 = vector.load %arg5[%c0_145, %c5_146, %2441, %c0_147] : memref<1x8x16x16xf32, #tpu.memory_space<vmem>>, vector<1x1x8x16xf32>
    %2443 = vector.shape_cast %2442 : vector<1x1x8x16xf32> to vector<8x16xf32>
    %2444 = vector.shape_cast %2440 : vector<8x16xf32> to vector<1x1x8x16xf32>
    tpu.vector_store %arg5[%c0_145, %c5_146, %2441, %c0_147], %2444 {strides = array<i32>} : memref<1x8x16x16xf32, #tpu.memory_space<vmem>>, vector<1x1x8x16xf32>,
    %cst_148 = arith.constant 2.000000e+01 : f32
    %2445 = vector.broadcast %cst_148 : f32 to vector<8x16xf32>
    %2446 = arith.minimumf %2303, %2445 : vector<8x16xf32>
    %2447 = math.exp %2446 : vector<8x16xf32>
    %cst_149 = arith.constant 2.000000e+00 : f32
    %2448 = vector.broadcast %cst_149 : f32 to vector<8x16xf32>
    %2449 = arith.addf %2447, %2448 : vector<8x16xf32>
    %2450 = arith.mulf %2447, %2449 : vector<8x16xf32>
    %cst_150 = arith.constant 2.000000e+00 : f32
    %2451 = vector.broadcast %cst_150 : f32 to vector<8x16xf32>
    %2452 = arith.addf %2450, %2451 : vector<8x16xf32>
    %2453 = tpu.reciprocal %2452 {approx = true} : vector<8x16xf32> -> vector<8x16xf32>
    %2454 = arith.mulf %2452, %2453 : vector<8x16xf32>
    %cst_151 = arith.constant 2.000000e+00 : f32
    %2455 = vector.broadcast %cst_151 : f32 to vector<8x16xf32>
    %2456 = arith.subf %2455, %2454 : vector<8x16xf32>
    %2457 = arith.mulf %2453, %2456 : vector<8x16xf32>
    %2458 = arith.mulf %2450, %2457 : vector<8x16xf32>
    %2459 = arith.mulf %2303, %2458 : vector<8x16xf32>
    %c0_152 = arith.constant 0 : index
    %c6_153 = arith.constant 6 : index
    %2460 = arith.index_cast %1394 : i32 to index
    %c0_154 = arith.constant 0 : index
    %2461 = vector.load %arg5[%c0_152, %c6_153, %2460, %c0_154] : memref<1x8x16x16xf32, #tpu.memory_space<vmem>>, vector<1x1x8x16xf32>
    %2462 = vector.shape_cast %2461 : vector<1x1x8x16xf32> to vector<8x16xf32>
    %2463 = vector.shape_cast %2459 : vector<8x16xf32> to vector<1x1x8x16xf32>
    tpu.vector_store %arg5[%c0_152, %c6_153, %2460, %c0_154], %2463 {strides = array<i32>} : memref<1x8x16x16xf32, #tpu.memory_space<vmem>>, vector<1x1x8x16xf32>,
    %cst_155 = arith.constant 2.000000e+01 : f32
    %2464 = vector.broadcast %cst_155 : f32 to vector<8x16xf32>
    %2465 = arith.minimumf %2330, %2464 : vector<8x16xf32>
    %2466 = math.exp %2465 : vector<8x16xf32>
    %cst_156 = arith.constant 2.000000e+00 : f32
    %2467 = vector.broadcast %cst_156 : f32 to vector<8x16xf32>
    %2468 = arith.addf %2466, %2467 : vector<8x16xf32>
    %2469 = arith.mulf %2466, %2468 : vector<8x16xf32>
    %cst_157 = arith.constant 2.000000e+00 : f32
    %2470 = vector.broadcast %cst_157 : f32 to vector<8x16xf32>
    %2471 = arith.addf %2469, %2470 : vector<8x16xf32>
    %2472 = tpu.reciprocal %2471 {approx = true} : vector<8x16xf32> -> vector<8x16xf32>
    %2473 = arith.mulf %2471, %2472 : vector<8x16xf32>
    %cst_158 = arith.constant 2.000000e+00 : f32
    %2474 = vector.broadcast %cst_158 : f32 to vector<8x16xf32>
    %2475 = arith.subf %2474, %2473 : vector<8x16xf32>
    %2476 = arith.mulf %2472, %2475 : vector<8x16xf32>
    %2477 = arith.mulf %2469, %2476 : vector<8x16xf32>
    %2478 = arith.mulf %2330, %2477 : vector<8x16xf32>
    %c0_159 = arith.constant 0 : index
    %c7_160 = arith.constant 7 : index
    %2479 = arith.index_cast %1394 : i32 to index
    %c0_161 = arith.constant 0 : index
    %2480 = vector.load %arg5[%c0_159, %c7_160, %2479, %c0_161] : memref<1x8x16x16xf32, #tpu.memory_space<vmem>>, vector<1x1x8x16xf32>
    %2481 = vector.shape_cast %2480 : vector<1x1x8x16xf32> to vector<8x16xf32>
    %2482 = vector.shape_cast %2478 : vector<8x16xf32> to vector<1x1x8x16xf32>
    tpu.vector_store %arg5[%c0_159, %c7_160, %2479, %c0_161], %2482 {strides = array<i32>} : memref<1x8x16x16xf32, #tpu.memory_space<vmem>>, vector<1x1x8x16xf32>,
    %c2_i32 = arith.constant 2 : i32
    return
  }
  func.func @transform_0(%arg0: i32, %arg1: i32, %arg2: memref<288xf32, #tpu.memory_space<smem>>, %arg3: memref<8xf32, #tpu.memory_space<smem>>) -> (i32, i32, i32, i32) {
    %c0_i32 = arith.constant 0 : i32
    %c0_i32_0 = arith.constant 0 : i32
    %c0_i32_1 = arith.constant 0 : i32
    %c0_i32_2 = arith.constant 0 : i32
    return %arg0, %c0_i32, %c0_i32_0, %c0_i32_1 : i32, i32, i32, i32
  }
  func.func @transform_1(%arg0: i32, %arg1: i32, %arg2: memref<288xf32, #tpu.memory_space<smem>>, %arg3: memref<8xf32, #tpu.memory_space<smem>>) -> (i32, i32, i32, i32) {
    %c0_i32 = arith.constant 0 : i32
    %c0_i32_0 = arith.constant 0 : i32
    %c0_i32_1 = arith.constant 0 : i32
    return %arg0, %c0_i32, %arg1, %c0_i32_0 : i32, i32, i32, i32
  }
}

</mosaic_0001>

<llo_original>
// kernel: tpu_custom_call.1
$region0: #{tpu_custom_call.1}
  #allocation0 [shape = 'u32[]', space=smem, size = 0x4, offset = 0x4, fixed_abs, tag = 'smem constant byte address 0x4 - core index']
  #allocation1 [shape = 'u32[144,128]{1,0:T(1,128)}', space=vmem, size = 0x12000, scoped, tag = 'internal scratch']
  #allocation2 [shape = 's32[1]{0}', space=sflag, size = 0x4, scoped, tag = 'scoped memory for tpu_custom_call.1']
  #allocation3 [shape = 'u8[1536]{0}', space=smem, size = 0x600, scoped, tag = 'prefetched SMEM operand 0']
  #allocation4 [shape = 'u8[512]{0}', space=smem, size = 0x200, scoped, tag = 'prefetched SMEM operand 1']
  %s0 = inlined_call_operand.vmem [shape: f32[288], index: 0, kind: input, shape index: {}]
  %s1 = inlined_call_operand.vmem [shape: f32[8], index: 1, kind: input, shape index: {}]
  %s2 = inlined_call_operand.vmem [shape: f32[2,4,18,128], index: 2, kind: input, shape index: {}]
  %s3 = inlined_call_operand.hbm [shape: f32[2,8,16,16], index: 3, kind: output, shape index: {}]
  %s4 = sld [smem:[#allocation0]]
  $region37: #{tpu_custom_call.1} parent=0
    _
  %s6 = ssub.s32 1, %s4
  %s7 = scalar_select 0, %s6, %s4
  %s8 = sshll.u32 %s0, 4
  %s9 = int_to_ptr.vmem [resolvable:$true] %s8
  %11 = dma.vmem_to_smem %s9, 48, [#allocation3], [#allocation2]
  %s12 = sshll.u32 %s1, 4
  %s13 = int_to_ptr.vmem [resolvable:$true] %s12
  %15 = dma.vmem_to_smem %s13, 16, [#allocation4], [#allocation2]
  %16 = dma.done [#allocation2], 64
  %17 = sfence
  $region1: #{tpu_custom_call.1} parent=0
    #allocation5 [shape = 'u8[131072]{0}', space=vmem, size = 0x20000, scoped, tag = 'output window, operand 0']
    #allocation6 [shape = 's32[2]{0}', space=sflag, size = 0x8, scoped, tag = 'scoped memory for tpu_custom_call.1']
    %18 = vsyncpa [#allocation6], 0
    %s19 = scalar_lea.sflag [#allocation6], 1
    %20 = vsyncpa %s19, 0
    loop: start=0, step=1, limit=4
    $region2: #{tpu_custom_call.1} parent=1 // loop_pre_header
      _
    $region3: #{tpu_custom_call.1} parent=1 // loop_header
      %s22 = sphi 0, %s26
      %p23 = scmp.ge.s32.totalorder %s22, 4
      %s29 = sphi 0, %s41
      %s30 = sphi 0, %s37
      %s31 = sphi 0, %s29
      %s32 = sphi 0, %s30
      %s33 = sphi 0, %s31
      %s34 = sphi 0, %s32
      %s44 = sphi 0, %s46
      %s47 = sphi 0, %s44
      %s48 = sphi 0, %s47
      %s64 = sphi 0, %s48
      %s72 = sphi 0, %s74
      %s75 = sphi 0, %s72
      %s76 = sphi 0, %s75
      %s92 = sphi 0, %s76
    $region4: #{tpu_custom_call.1} parent=1 // loop_header_branch
      %25 = sbr.rel (%p23) target = $region8
    $region5: #{tpu_custom_call.1} parent=1 // loop_body
      %s27 = ssub.s32 %s22, 1
      %s28 = ssub.s32 %s22, 2
      %s35 = sadd.s32 1, %s30
      %p36 = scmp.ge.s32.totalorder %s35, 1
      %s37 = scalar_select %p36, 0, %s35
      %s38 = sadd.s32 1, %s29
      %s39 = scalar_select %p36, %s38, %s29
      %p40 = scmp.ge.s32.totalorder %s39, 2
      %s41 = scalar_select %p40, 0, %s39
      %s42 = ssub.s32 %s29, %s41
      %p43 = scmp.eq.s32.totalorder %s42, 0
      %s45 = sadd.s32 %s44, 1
      %s46 = scalar_select %p43, %s44, %s45
      %p49 = pneg %p43
      %p50 = scmp.eq.s32.totalorder %s22, 1
      %p51 = por %p49, %p50
      %p52 = scmp.ne.s32.totalorder %s44, %s47
      %p53 = scmp.eq.s32.totalorder %s22, 0
      %p54 = por %p52, %p53
      %p55 = scmp.ne.s32.totalorder %s44, %s47
      %p56 = scmp.eq.s32.totalorder %s27, 1
      %p57 = por %p55, %p56
      %p58 = scmp.ne.s32.totalorder %s47, %s48
      %p59 = scmp.eq.s32.totalorder %s27, 0
      %p60 = por %p58, %p59
      %p61 = scmp.ne.s32.totalorder %s47, %s48
      %p62 = scmp.eq.s32.totalorder %s28, 1
      %p63 = por %p61, %p62
      %p65 = scmp.ne.s32.totalorder %s48, %s64
      %p66 = scmp.eq.s32.totalorder %s28, 0
      %p67 = por %p65, %p66
      %s68 = ssub.s32 %s29, %s41
      %s69 = ssub.s32 %s30, %s37
      %s70 = sor.u32 %s68, %s69
      %p71 = scmp.eq.s32.totalorder %s70, 0
      %s73 = sadd.s32 %s72, 1
      %s74 = scalar_select %p71, %s72, %s73
      %p77 = pneg %p71
      %p78 = scmp.eq.s32.totalorder %s22, 1
      %p79 = por %p77, %p78
      %p80 = scmp.ne.s32.totalorder %s72, %s75
      %p81 = scmp.eq.s32.totalorder %s22, 0
      %p82 = por %p80, %p81
      %p83 = scmp.ne.s32.totalorder %s72, %s75
      %p84 = scmp.eq.s32.totalorder %s27, 1
      %p85 = por %p83, %p84
      %p86 = scmp.ne.s32.totalorder %s75, %s76
      %p87 = scmp.eq.s32.totalorder %s27, 0
      %p88 = por %p86, %p87
      %p89 = scmp.ne.s32.totalorder %s75, %s76
      %p90 = scmp.eq.s32.totalorder %s28, 1
      %p91 = por %p89, %p90
      %p93 = scmp.ne.s32.totalorder %s76, %s92
      %p94 = scmp.eq.s32.totalorder %s28, 0
      %p95 = por %p93, %p94
      %p96 = scmp.le.s32.totalorder 1, %s22
      %p97 = scmp.lt.s32.totalorder %s22, 3
      %p98 = pnand %p96, %p97
      %p99 = pneg %p98
      // Predicated region
      $region9: #{tpu_custom_call.1} parent=5 // pred_check
        _
      $region10: #{tpu_custom_call.1} parent=5 // pred_check_branch
        %101 = sbr.rel (%p98) target = $region12
      $region11: #{tpu_custom_call.1} parent=5 // pred_region
        %s102 = ssub.s32 %s22, 1
      $region12: #{tpu_custom_call.1} parent=5 // pred_fallthru
        _
      %p103 = scmp.lt.s32.totalorder %s22, 2
      // Predicated region
      $region13: #{tpu_custom_call.1} parent=5 // pred_check
        %p104 = pneg %p103
      $region14: #{tpu_custom_call.1} parent=5 // pred_check_branch
        %106 = sbr.rel (%p104) target = $region16
      $region15: #{tpu_custom_call.1} parent=5 // pred_region
        // Predicated region
        $region17: #{tpu_custom_call.1} parent=15 // pred_check
          %p107 = pneg %p54
        $region18: #{tpu_custom_call.1} parent=15 // pred_check_branch
          %109 = sbr.rel (%p107) target = $region20
        $region19: #{tpu_custom_call.1} parent=15 // pred_region
          %p110 = scmp.lt.s32.totalorder %s29, 1
          %s111 = scalar_select %p110, %s29, 1
          %s112 = smul.addr %s111, 12
          %s113 = smul.addr %s112, 8
          %s114 = scalar_lea.vmem %s2, %s113
        $region20: #{tpu_custom_call.1} parent=15 // pred_fallthru
          _
      $region16: #{tpu_custom_call.1} parent=5 // pred_fallthru
        _
      %p115 = scmp.le.s32.totalorder 1, %s22
      %p116 = scmp.lt.s32.totalorder %s22, 3
      %p117 = pnand %p115, %p116
      %p118 = pneg %p117
      // Predicated region
      $region21: #{tpu_custom_call.1} parent=5 // pred_check
        _
      $region22: #{tpu_custom_call.1} parent=5 // pred_check_branch
        %120 = sbr.rel (%p117) target = $region24
      $region23: #{tpu_custom_call.1} parent=5 // pred_region
        %s121 = ssub.s32 %s22, 1
        %p122 = scmp.lt.s32.totalorder %s31, 1
        %s123 = scalar_select %p122, %s31, 1
        %s124 = smul.addr %s123, 12
        %s125 = smul.addr %s124, 8
        %s126 = scalar_lea.vmem %s2, %s125
        %p127 = pneg %p60
        %p128 = pneg %p57
        %p129 = pneg %p88
        %p130 = pneg %p85
        %s131 = sand.u32 %s75, 1
        %s132 = scalar_lea.sflag [#allocation6], %s131
        %s133 = sand.u32 %s75, 1
        %s134 = smul.addr %s133, 128
        %s135 = scalar_lea.vmem [#allocation5], %s134
        %p136 = scmp.lt.s32.totalorder %s31, 1
        %s137 = scalar_select %p136, %s31, 1
        %s138 = smul.addr %s137, 12
        %s139 = smul.addr %s138, 8
        %s140 = scalar_lea.vmem %s2, %s139
        %s141 = smul.u32 2, %s32
        %s142 = smul.u32 %s32, 16
        %s143 = sld [smem:[#allocation3]]
        %s144 = sld [smem:[#allocation3 + $0x1]]
        %s145 = sld [smem:[#allocation3 + $0x2]]
        %s146 = sld [smem:[#allocation3 + $0x3]]
        %s147 = sld [smem:[#allocation3 + $0x4]]
        %s148 = sld [smem:[#allocation3 + $0x5]]
        %s149 = sld [smem:[#allocation3 + $0x6]]
        %s150 = sld [smem:[#allocation3 + $0x7]]
        %s151 = sld [smem:[#allocation3 + $0x8]]
        %s152 = sld [smem:[#allocation3 + $0x9]]
        %s153 = sld [smem:[#allocation3 + $0xa]]
        %s154 = sld [smem:[#allocation3 + $0xb]]
        %s155 = sld [smem:[#allocation3 + $0xc]]
        %s156 = sld [smem:[#allocation3 + $0xd]]
        %s157 = sld [smem:[#allocation3 + $0xe]]
        %s158 = sld [smem:[#allocation3 + $0xf]]
        %s159 = sld [smem:[#allocation3 + $0x10]]
        %s160 = sld [smem:[#allocation3 + $0x11]]
        %s161 = sld [smem:[#allocation3 + $0x12]]
        %s162 = sld [smem:[#allocation3 + $0x13]]
        %s163 = sld [smem:[#allocation3 + $0x14]]
        %s164 = sld [smem:[#allocation3 + $0x15]]
        %s165 = sld [smem:[#allocation3 + $0x16]]
        %s166 = sld [smem:[#allocation3 + $0x17]]
        %s167 = sld [smem:[#allocation3 + $0x18]]
        %s168 = sld [smem:[#allocation3 + $0x19]]
        %s169 = sld [smem:[#allocation3 + $0x1a]]
        %s170 = sld [smem:[#allocation3 + $0x1b]]
        %s171 = sld [smem:[#allocation3 + $0x1c]]
        %s172 = sld [smem:[#allocation3 + $0x1d]]
        %s173 = sld [smem:[#allocation3 + $0x1e]]
        %s174 = sld [smem:[#allocation3 + $0x1f]]
        %s175 = sld [smem:[#allocation3 + $0x20]]
        %s176 = sld [smem:[#allocation3 + $0x21]]
        %s177 = sld [smem:[#allocation3 + $0x22]]
        %s178 = sld [smem:[#allocation3 + $0x23]]
        %s179 = sld [smem:[#allocation3 + $0x24]]
        %s180 = sld [smem:[#allocation3 + $0x25]]
        %s181 = sld [smem:[#allocation3 + $0x26]]
        %s182 = sld [smem:[#allocation3 + $0x27]]
        %s183 = sld [smem:[#allocation3 + $0x28]]
        %s184 = sld [smem:[#allocation3 + $0x29]]
        %s185 = sld [smem:[#allocation3 + $0x2a]]
        %s186 = sld [smem:[#allocation3 + $0x2b]]
        %s187 = sld [smem:[#allocation3 + $0x2c]]
        %s188 = sld [smem:[#allocation3 + $0x2d]]
        %s189 = sld [smem:[#allocation3 + $0x2e]]
        %s190 = sld [smem:[#allocation3 + $0x2f]]
        %s191 = sld [smem:[#allocation3 + $0x30]]
        %s192 = sld [smem:[#allocation3 + $0x31]]
        %s193 = sld [smem:[#allocation3 + $0x32]]
        %s194 = sld [smem:[#allocation3 + $0x33]]
        %s195 = sld [smem:[#allocation3 + $0x34]]
        %s196 = sld [smem:[#allocation3 + $0x35]]
        %s197 = sld [smem:[#allocation3 + $0x36]]
        %s198 = sld [smem:[#allocation3 + $0x37]]
        %s199 = sld [smem:[#allocation3 + $0x38]]
        %s200 = sld [smem:[#allocation3 + $0x39]]
        %s201 = sld [smem:[#allocation3 + $0x3a]]
        %s202 = sld [smem:[#allocation3 + $0x3b]]
        %s203 = sld [smem:[#allocation3 + $0x3c]]
        %s204 = sld [smem:[#allocation3 + $0x3d]]
        %s205 = sld [smem:[#allocation3 + $0x3e]]
        %s206 = sld [smem:[#allocation3 + $0x3f]]
        %s207 = sld [smem:[#allocation3 + $0x40]]
        %s208 = sld [smem:[#allocation3 + $0x41]]
        %s209 = sld [smem:[#allocation3 + $0x42]]
        %s210 = sld [smem:[#allocation3 + $0x43]]
        %s211 = sld [smem:[#allocation3 + $0x44]]
        %s212 = sld [smem:[#allocation3 + $0x45]]
        %s213 = sld [smem:[#allocation3 + $0x46]]
        %s214 = sld [smem:[#allocation3 + $0x47]]
        %s215 = sld [smem:[#allocation3 + $0x48]]
        %s216 = sld [smem:[#allocation3 + $0x49]]
        %s217 = sld [smem:[#allocation3 + $0x4a]]
        %s218 = sld [smem:[#allocation3 + $0x4b]]
        %s219 = sld [smem:[#allocation3 + $0x4c]]
        %s220 = sld [smem:[#allocation3 + $0x4d]]
        %s221 = sld [smem:[#allocation3 + $0x4e]]
        %s222 = sld [smem:[#allocation3 + $0x4f]]
        %s223 = sld [smem:[#allocation3 + $0x50]]
        %s224 = sld [smem:[#allocation3 + $0x51]]
        %s225 = sld [smem:[#allocation3 + $0x52]]
        %s226 = sld [smem:[#allocation3 + $0x53]]
        %s227 = sld [smem:[#allocation3 + $0x54]]
        %s228 = sld [smem:[#allocation3 + $0x55]]
        %s229 = sld [smem:[#allocation3 + $0x56]]
        %s230 = sld [smem:[#allocation3 + $0x57]]
        %s231 = sld [smem:[#allocation3 + $0x58]]
        %s232 = sld [smem:[#allocation3 + $0x59]]
        %s233 = sld [smem:[#allocation3 + $0x5a]]
        %s234 = sld [smem:[#allocation3 + $0x5b]]
        %s235 = sld [smem:[#allocation3 + $0x5c]]
        %s236 = sld [smem:[#allocation3 + $0x5d]]
        %s237 = sld [smem:[#allocation3 + $0x5e]]
        %s238 = sld [smem:[#allocation3 + $0x5f]]
        %s239 = sld [smem:[#allocation3 + $0x60]]
        %s240 = sld [smem:[#allocation3 + $0x61]]
        %s241 = sld [smem:[#allocation3 + $0x62]]
        %s242 = sld [smem:[#allocation3 + $0x63]]
        %s243 = sld [smem:[#allocation3 + $0x64]]
        %s244 = sld [smem:[#allocation3 + $0x65]]
        %s245 = sld [smem:[#allocation3 + $0x66]]
        %s246 = sld [smem:[#allocation3 + $0x67]]
        %s247 = sld [smem:[#allocation3 + $0x68]]
        %s248 = sld [smem:[#allocation3 + $0x69]]
        %s249 = sld [smem:[#allocation3 + $0x6a]]
        %s250 = sld [smem:[#allocation3 + $0x6b]]
        %s251 = sld [smem:[#allocation3 + $0x6c]]
        %s252 = sld [smem:[#allocation3 + $0x6d]]
        %s253 = sld [smem:[#allocation3 + $0x6e]]
        %s254 = sld [smem:[#allocation3 + $0x6f]]
        %s255 = sld [smem:[#allocation3 + $0x70]]
        %s256 = sld [smem:[#allocation3 + $0x71]]
        %s257 = sld [smem:[#allocation3 + $0x72]]
        %s258 = sld [smem:[#allocation3 + $0x73]]
        %s259 = sld [smem:[#allocation3 + $0x74]]
        %s260 = sld [smem:[#allocation3 + $0x75]]
        %s261 = sld [smem:[#allocation3 + $0x76]]
        %s262 = sld [smem:[#allocation3 + $0x77]]
        %s263 = sld [smem:[#allocation3 + $0x78]]
        %s264 = sld [smem:[#allocation3 + $0x79]]
        %s265 = sld [smem:[#allocation3 + $0x7a]]
        %s266 = sld [smem:[#allocation3 + $0x7b]]
        %s267 = sld [smem:[#allocation3 + $0x7c]]
        %s268 = sld [smem:[#allocation3 + $0x7d]]
        %s269 = sld [smem:[#allocation3 + $0x7e]]
        %s270 = sld [smem:[#allocation3 + $0x7f]]
        %s271 = sld [smem:[#allocation3 + $0x80]]
        %s272 = sld [smem:[#allocation3 + $0x81]]
        %s273 = sld [smem:[#allocation3 + $0x82]]
        %s274 = sld [smem:[#allocation3 + $0x83]]
        %s275 = sld [smem:[#allocation3 + $0x84]]
        %s276 = sld [smem:[#allocation3 + $0x85]]
        %s277 = sld [smem:[#allocation3 + $0x86]]
        %s278 = sld [smem:[#allocation3 + $0x87]]
        %s279 = sld [smem:[#allocation3 + $0x88]]
        %s280 = sld [smem:[#allocation3 + $0x89]]
        %s281 = sld [smem:[#allocation3 + $0x8a]]
        %s282 = sld [smem:[#allocation3 + $0x8b]]
        %s283 = sld [smem:[#allocation3 + $0x8c]]
        %s284 = sld [smem:[#allocation3 + $0x8d]]
        %s285 = sld [smem:[#allocation3 + $0x8e]]
        %s286 = sld [smem:[#allocation3 + $0x8f]]
        %s287 = sld [smem:[#allocation3 + $0x90]]
        %s288 = sld [smem:[#allocation3 + $0x91]]
        %s289 = sld [smem:[#allocation3 + $0x92]]
        %s290 = sld [smem:[#allocation3 + $0x93]]
        %s291 = sld [smem:[#allocation3 + $0x94]]
        %s292 = sld [smem:[#allocation3 + $0x95]]
        %s293 = sld [smem:[#allocation3 + $0x96]]
        %s294 = sld [smem:[#allocation3 + $0x97]]
        %s295 = sld [smem:[#allocation3 + $0x98]]
        %s296 = sld [smem:[#allocation3 + $0x99]]
        %s297 = sld [smem:[#allocation3 + $0x9a]]
        %s298 = sld [smem:[#allocation3 + $0x9b]]
        %s299 = sld [smem:[#allocation3 + $0x9c]]
        %s300 = sld [smem:[#allocation3 + $0x9d]]
        %s301 = sld [smem:[#allocation3 + $0x9e]]
        %s302 = sld [smem:[#allocation3 + $0x9f]]
        %s303 = sld [smem:[#allocation3 + $0xa0]]
        %s304 = sld [smem:[#allocation3 + $0xa1]]
        %s305 = sld [smem:[#allocation3 + $0xa2]]
        %s306 = sld [smem:[#allocation3 + $0xa3]]
        %s307 = sld [smem:[#allocation3 + $0xa4]]
        %s308 = sld [smem:[#allocation3 + $0xa5]]
        %s309 = sld [smem:[#allocation3 + $0xa6]]
        %s310 = sld [smem:[#allocation3 + $0xa7]]
        %s311 = sld [smem:[#allocation3 + $0xa8]]
        %s312 = sld [smem:[#allocation3 + $0xa9]]
        %s313 = sld [smem:[#allocation3 + $0xaa]]
        %s314 = sld [smem:[#allocation3 + $0xab]]
        %s315 = sld [smem:[#allocation3 + $0xac]]
        %s316 = sld [smem:[#allocation3 + $0xad]]
        %s317 = sld [smem:[#allocation3 + $0xae]]
        %s318 = sld [smem:[#allocation3 + $0xaf]]
        %s319 = sld [smem:[#allocation3 + $0xb0]]
        %s320 = sld [smem:[#allocation3 + $0xb1]]
        %s321 = sld [smem:[#allocation3 + $0xb2]]
        %s322 = sld [smem:[#allocation3 + $0xb3]]
        %s323 = sld [smem:[#allocation3 + $0xb4]]
        %s324 = sld [smem:[#allocation3 + $0xb5]]
        %s325 = sld [smem:[#allocation3 + $0xb6]]
        %s326 = sld [smem:[#allocation3 + $0xb7]]
        %s327 = sld [smem:[#allocation3 + $0xb8]]
        %s328 = sld [smem:[#allocation3 + $0xb9]]
        %s329 = sld [smem:[#allocation3 + $0xba]]
        %s330 = sld [smem:[#allocation3 + $0xbb]]
        %s331 = sld [smem:[#allocation3 + $0xbc]]
        %s332 = sld [smem:[#allocation3 + $0xbd]]
        %s333 = sld [smem:[#allocation3 + $0xbe]]
        %s334 = sld [smem:[#allocation3 + $0xbf]]
        %s335 = sld [smem:[#allocation3 + $0xc0]]
        %s336 = sld [smem:[#allocation3 + $0xc1]]
        %s337 = sld [smem:[#allocation3 + $0xc2]]
        %s338 = sld [smem:[#allocation3 + $0xc3]]
        %s339 = sld [smem:[#allocation3 + $0xc4]]
        %s340 = sld [smem:[#allocation3 + $0xc5]]
        %s341 = sld [smem:[#allocation3 + $0xc6]]
        %s342 = sld [smem:[#allocation3 + $0xc7]]
        %s343 = sld [smem:[#allocation3 + $0xc8]]
        %s344 = sld [smem:[#allocation3 + $0xc9]]
        %s345 = sld [smem:[#allocation3 + $0xca]]
        %s346 = sld [smem:[#allocation3 + $0xcb]]
        %s347 = sld [smem:[#allocation3 + $0xcc]]
        %s348 = sld [smem:[#allocation3 + $0xcd]]
        %s349 = sld [smem:[#allocation3 + $0xce]]
        %s350 = sld [smem:[#allocation3 + $0xcf]]
        %s351 = sld [smem:[#allocation3 + $0xd0]]
        %s352 = sld [smem:[#allocation3 + $0xd1]]
        %s353 = sld [smem:[#allocation3 + $0xd2]]
        %s354 = sld [smem:[#allocation3 + $0xd3]]
        %s355 = sld [smem:[#allocation3 + $0xd4]]
        %s356 = sld [smem:[#allocation3 + $0xd5]]
        %s357 = sld [smem:[#allocation3 + $0xd6]]
        %s358 = sld [smem:[#allocation3 + $0xd7]]
        %s359 = sld [smem:[#allocation3 + $0xd8]]
        %s360 = sld [smem:[#allocation3 + $0xd9]]
        %s361 = sld [smem:[#allocation3 + $0xda]]
        %s362 = sld [smem:[#allocation3 + $0xdb]]
        %s363 = sld [smem:[#allocation3 + $0xdc]]
        %s364 = sld [smem:[#allocation3 + $0xdd]]
        %s365 = sld [smem:[#allocation3 + $0xde]]
        %s366 = sld [smem:[#allocation3 + $0xdf]]
        %s367 = sld [smem:[#allocation3 + $0xe0]]
        %s368 = sld [smem:[#allocation3 + $0xe1]]
        %s369 = sld [smem:[#allocation3 + $0xe2]]
        %s370 = sld [smem:[#allocation3 + $0xe3]]
        %s371 = sld [smem:[#allocation3 + $0xe4]]
        %s372 = sld [smem:[#allocation3 + $0xe5]]
        %s373 = sld [smem:[#allocation3 + $0xe6]]
        %s374 = sld [smem:[#allocation3 + $0xe7]]
        %s375 = sld [smem:[#allocation3 + $0xe8]]
        %s376 = sld [smem:[#allocation3 + $0xe9]]
        %s377 = sld [smem:[#allocation3 + $0xea]]
        %s378 = sld [smem:[#allocation3 + $0xeb]]
        %s379 = sld [smem:[#allocation3 + $0xec]]
        %s380 = sld [smem:[#allocation3 + $0xed]]
        %s381 = sld [smem:[#allocation3 + $0xee]]
        %s382 = sld [smem:[#allocation3 + $0xef]]
        %s383 = sld [smem:[#allocation3 + $0xf0]]
        %s384 = sld [smem:[#allocation3 + $0xf1]]
        %s385 = sld [smem:[#allocation3 + $0xf2]]
        %s386 = sld [smem:[#allocation3 + $0xf3]]
        %s387 = sld [smem:[#allocation3 + $0xf4]]
        %s388 = sld [smem:[#allocation3 + $0xf5]]
        %s389 = sld [smem:[#allocation3 + $0xf6]]
        %s390 = sld [smem:[#allocation3 + $0xf7]]
        %s391 = sld [smem:[#allocation3 + $0xf8]]
        %s392 = sld [smem:[#allocation3 + $0xf9]]
        %s393 = sld [smem:[#allocation3 + $0xfa]]
        %s394 = sld [smem:[#allocation3 + $0xfb]]
        %s395 = sld [smem:[#allocation3 + $0xfc]]
        %s396 = sld [smem:[#allocation3 + $0xfd]]
        %s397 = sld [smem:[#allocation3 + $0xfe]]
        %s398 = sld [smem:[#allocation3 + $0xff]]
        %s399 = sld [smem:[#allocation3 + $0x100]]
        %s400 = sld [smem:[#allocation3 + $0x101]]
        %s401 = sld [smem:[#allocation3 + $0x102]]
        %s402 = sld [smem:[#allocation3 + $0x103]]
        %s403 = sld [smem:[#allocation3 + $0x104]]
        %s404 = sld [smem:[#allocation3 + $0x105]]
        %s405 = sld [smem:[#allocation3 + $0x106]]
        %s406 = sld [smem:[#allocation3 + $0x107]]
        %s407 = sld [smem:[#allocation3 + $0x108]]
        %s408 = sld [smem:[#allocation3 + $0x109]]
        %s409 = sld [smem:[#allocation3 + $0x10a]]
        %s410 = sld [smem:[#allocation3 + $0x10b]]
        %s411 = sld [smem:[#allocation3 + $0x10c]]
        %s412 = sld [smem:[#allocation3 + $0x10d]]
        %s413 = sld [smem:[#allocation3 + $0x10e]]
        %s414 = sld [smem:[#allocation3 + $0x10f]]
        %s415 = sld [smem:[#allocation3 + $0x110]]
        %s416 = sld [smem:[#allocation3 + $0x111]]
        %s417 = sld [smem:[#allocation3 + $0x112]]
        %s418 = sld [smem:[#allocation3 + $0x113]]
        %s419 = sld [smem:[#allocation3 + $0x114]]
        %s420 = sld [smem:[#allocation3 + $0x115]]
        %s421 = sld [smem:[#allocation3 + $0x116]]
        %s422 = sld [smem:[#allocation3 + $0x117]]
        %s423 = sld [smem:[#allocation3 + $0x118]]
        %s424 = sld [smem:[#allocation3 + $0x119]]
        %s425 = sld [smem:[#allocation3 + $0x11a]]
        %s426 = sld [smem:[#allocation3 + $0x11b]]
        %s427 = sld [smem:[#allocation3 + $0x11c]]
        %s428 = sld [smem:[#allocation3 + $0x11d]]
        %s429 = sld [smem:[#allocation3 + $0x11e]]
        %s430 = sld [smem:[#allocation3 + $0x11f]]
        %s431 = sld [smem:[#allocation4]]
        %s432 = sld [smem:[#allocation4 + $0x1]]
        %s433 = sld [smem:[#allocation4 + $0x2]]
        %s434 = sld [smem:[#allocation4 + $0x3]]
        %s435 = sld [smem:[#allocation4 + $0x4]]
        %s436 = sld [smem:[#allocation4 + $0x5]]
        %s437 = sld [smem:[#allocation4 + $0x6]]
        %s438 = sld [smem:[#allocation4 + $0x7]]
        %v439 = vstv %s431
        %v440 = vadd.f32 %v439, 0.0
        %v441 = vstv %s432
        %v442 = vadd.f32 %v441, 0.0
        %v443 = vstv %s433
        %v444 = vadd.f32 %v443, 0.0
        %v445 = vstv %s434
        %v446 = vadd.f32 %v445, 0.0
        %v447 = vstv %s435
        %v448 = vadd.f32 %v447, 0.0
        %v449 = vstv %s436
        %v450 = vadd.f32 %v449, 0.0
        %v451 = vstv %s437
        %v452 = vadd.f32 %v451, 0.0
        %v453 = vstv %s438
        %v454 = vadd.f32 %v453, 0.0
        %s455 = scalar_lea.vmem %s140, %s142
        %v456 = vld [vmem:[%s455] sm:$0xff]
        %v457 = vld [vmem:[%s455 + $0x8] sm:$0x3]
        %v458 = vstv %s143
        %v459 = vmul.f32 %v458, %v456
        %v460 = vadd.f32 %v440, %v459
        %v461 = vstv %s144
        %v462 = vmul.f32 %v461, %v456
        %464 = vrot.lane.b32.xlu0 %v462, 127
        %v465 = vpop.permute.xlu0 %464
        %v467 = vadd.f32 %v460, %v465
        %v468 = vstv %s145
        %v469 = vmul.f32 %v468, %v456
        %471 = vrot.lane.b32.xlu0 %v469, 126
        %v472 = vpop.permute.xlu0 %471
        %v474 = vadd.f32 %v467, %v472
        %v475 = vstv %s146
        %v476 = vmul.f32 %v475, %v456
        %v477 = vmul.f32 %v475, %v457
        %vm480 = vcmask 1046528
        %v481 = vrot.slane %v476, 1
        %v482 = vrot.slane %v477, 1
        %v483 = vsel %vm480, %v481, %v482
        %v485 = vadd.f32 %v474, %v483
        %v486 = vstv %s147
        %v487 = vmul.f32 %v486, %v456
        %v488 = vmul.f32 %v486, %v457
        %v491 = vrot.slane %v487, 1
        %v492 = vrot.slane %v488, 1
        %v493 = vsel %vm480, %v491, %v492
        %494 = vrot.lane.b32.xlu0 %v493, 127
        %v495 = vpop.permute.xlu0 %494
        %v497 = vadd.f32 %v485, %v495
        %v498 = vstv %s148
        %v499 = vmul.f32 %v498, %v456
        %v500 = vmul.f32 %v498, %v457
        %v503 = vrot.slane %v499, 1
        %v504 = vrot.slane %v500, 1
        %v505 = vsel %vm480, %v503, %v504
        %506 = vrot.lane.b32.xlu0 %v505, 126
        %v507 = vpop.permute.xlu0 %506
        %v509 = vadd.f32 %v497, %v507
        %v510 = vstv %s149
        %v511 = vmul.f32 %v510, %v456
        %v512 = vmul.f32 %v510, %v457
        %vm515 = vcmask 1045504
        %v516 = vrot.slane %v511, 2
        %v517 = vrot.slane %v512, 2
        %v518 = vsel %vm515, %v516, %v517
        %v520 = vadd.f32 %v509, %v518
        %v521 = vstv %s150
        %v522 = vmul.f32 %v521, %v456
        %v523 = vmul.f32 %v521, %v457
        %v526 = vrot.slane %v522, 2
        %v527 = vrot.slane %v523, 2
        %v528 = vsel %vm515, %v526, %v527
        %529 = vrot.lane.b32.xlu0 %v528, 127
        %v530 = vpop.permute.xlu0 %529
        %v532 = vadd.f32 %v520, %v530
        %v533 = vstv %s151
        %v534 = vmul.f32 %v533, %v456
        %v535 = vmul.f32 %v533, %v457
        %v538 = vrot.slane %v534, 2
        %v539 = vrot.slane %v535, 2
        %v540 = vsel %vm515, %v538, %v539
        %541 = vrot.lane.b32.xlu0 %v540, 126
        %v542 = vpop.permute.xlu0 %541
        %v544 = vadd.f32 %v532, %v542
        %v545 = vstv %s179
        %v546 = vmul.f32 %v545, %v456
        %v547 = vadd.f32 %v442, %v546
        %v548 = vstv %s180
        %v549 = vmul.f32 %v548, %v456
        %551 = vrot.lane.b32.xlu0 %v549, 127
        %v552 = vpop.permute.xlu0 %551
        %v554 = vadd.f32 %v547, %v552
        %v555 = vstv %s181
        %v556 = vmul.f32 %v555, %v456
        %558 = vrot.lane.b32.xlu0 %v556, 126
        %v559 = vpop.permute.xlu0 %558
        %v561 = vadd.f32 %v554, %v559
        %v562 = vstv %s182
        %v563 = vmul.f32 %v562, %v456
        %v564 = vmul.f32 %v562, %v457
        %v567 = vrot.slane %v563, 1
        %v568 = vrot.slane %v564, 1
        %v569 = vsel %vm480, %v567, %v568
        %v571 = vadd.f32 %v561, %v569
        %v572 = vstv %s183
        %v573 = vmul.f32 %v572, %v456
        %v574 = vmul.f32 %v572, %v457
        %v577 = vrot.slane %v573, 1
        %v578 = vrot.slane %v574, 1
        %v579 = vsel %vm480, %v577, %v578
        %580 = vrot.lane.b32.xlu0 %v579, 127
        %v581 = vpop.permute.xlu0 %580
        %v583 = vadd.f32 %v571, %v581
        %v584 = vstv %s184
        %v585 = vmul.f32 %v584, %v456
        %v586 = vmul.f32 %v584, %v457
        %v589 = vrot.slane %v585, 1
        %v590 = vrot.slane %v586, 1
        %v591 = vsel %vm480, %v589, %v590
        %592 = vrot.lane.b32.xlu0 %v591, 126
        %v593 = vpop.permute.xlu0 %592
        %v595 = vadd.f32 %v583, %v593
        %v596 = vstv %s185
        %v597 = vmul.f32 %v596, %v456
        %v598 = vmul.f32 %v596, %v457
        %v601 = vrot.slane %v597, 2
        %v602 = vrot.slane %v598, 2
        %v603 = vsel %vm515, %v601, %v602
        %v605 = vadd.f32 %v595, %v603
        %v606 = vstv %s186
        %v607 = vmul.f32 %v606, %v456
        %v608 = vmul.f32 %v606, %v457
        %v611 = vrot.slane %v607, 2
        %v612 = vrot.slane %v608, 2
        %v613 = vsel %vm515, %v611, %v612
        %614 = vrot.lane.b32.xlu0 %v613, 127
        %v615 = vpop.permute.xlu0 %614
        %v617 = vadd.f32 %v605, %v615
        %v618 = vstv %s187
        %v619 = vmul.f32 %v618, %v456
        %v620 = vmul.f32 %v618, %v457
        %v623 = vrot.slane %v619, 2
        %v624 = vrot.slane %v620, 2
        %v625 = vsel %vm515, %v623, %v624
        %626 = vrot.lane.b32.xlu0 %v625, 126
        %v627 = vpop.permute.xlu0 %626
        %v629 = vadd.f32 %v617, %v627
        %v630 = vstv %s215
        %v631 = vmul.f32 %v630, %v456
        %v632 = vadd.f32 %v444, %v631
        %v633 = vstv %s216
        %v634 = vmul.f32 %v633, %v456
        %636 = vrot.lane.b32.xlu0 %v634, 127
        %v637 = vpop.permute.xlu0 %636
        %v639 = vadd.f32 %v632, %v637
        %v640 = vstv %s217
        %v641 = vmul.f32 %v640, %v456
        %643 = vrot.lane.b32.xlu0 %v641, 126
        %v644 = vpop.permute.xlu0 %643
        %v646 = vadd.f32 %v639, %v644
        %v647 = vstv %s218
        %v648 = vmul.f32 %v647, %v456
        %v649 = vmul.f32 %v647, %v457
        %v652 = vrot.slane %v648, 1
        %v653 = vrot.slane %v649, 1
        %v654 = vsel %vm480, %v652, %v653
        %v656 = vadd.f32 %v646, %v654
        %v657 = vstv %s219
        %v658 = vmul.f32 %v657, %v456
        %v659 = vmul.f32 %v657, %v457
        %v662 = vrot.slane %v658, 1
        %v663 = vrot.slane %v659, 1
        %v664 = vsel %vm480, %v662, %v663
        %665 = vrot.lane.b32.xlu0 %v664, 127
        %v666 = vpop.permute.xlu0 %665
        %v668 = vadd.f32 %v656, %v666
        %v669 = vstv %s220
        %v670 = vmul.f32 %v669, %v456
        %v671 = vmul.f32 %v669, %v457
        %v674 = vrot.slane %v670, 1
        %v675 = vrot.slane %v671, 1
        %v676 = vsel %vm480, %v674, %v675
        %677 = vrot.lane.b32.xlu0 %v676, 126
        %v678 = vpop.permute.xlu0 %677
        %v680 = vadd.f32 %v668, %v678
        %v681 = vstv %s221
        %v682 = vmul.f32 %v681, %v456
        %v683 = vmul.f32 %v681, %v457
        %v686 = vrot.slane %v682, 2
        %v687 = vrot.slane %v683, 2
        %v688 = vsel %vm515, %v686, %v687
        %v690 = vadd.f32 %v680, %v688
        %v691 = vstv %s222
        %v692 = vmul.f32 %v691, %v456
        %v693 = vmul.f32 %v691, %v457
        %v696 = vrot.slane %v692, 2
        %v697 = vrot.slane %v693, 2
        %v698 = vsel %vm515, %v696, %v697
        %699 = vrot.lane.b32.xlu0 %v698, 127
        %v700 = vpop.permute.xlu0 %699
        %v702 = vadd.f32 %v690, %v700
        %v703 = vstv %s223
        %v704 = vmul.f32 %v703, %v456
        %v705 = vmul.f32 %v703, %v457
        %v708 = vrot.slane %v704, 2
        %v709 = vrot.slane %v705, 2
        %v710 = vsel %vm515, %v708, %v709
        %711 = vrot.lane.b32.xlu0 %v710, 126
        %v712 = vpop.permute.xlu0 %711
        %v714 = vadd.f32 %v702, %v712
        %v715 = vstv %s251
        %v716 = vmul.f32 %v715, %v456
        %v717 = vadd.f32 %v446, %v716
        %v718 = vstv %s252
        %v719 = vmul.f32 %v718, %v456
        %721 = vrot.lane.b32.xlu0 %v719, 127
        %v722 = vpop.permute.xlu0 %721
        %v724 = vadd.f32 %v717, %v722
        %v725 = vstv %s253
        %v726 = vmul.f32 %v725, %v456
        %728 = vrot.lane.b32.xlu0 %v726, 126
        %v729 = vpop.permute.xlu0 %728
        %v731 = vadd.f32 %v724, %v729
        %v732 = vstv %s254
        %v733 = vmul.f32 %v732, %v456
        %v734 = vmul.f32 %v732, %v457
        %v737 = vrot.slane %v733, 1
        %v738 = vrot.slane %v734, 1
        %v739 = vsel %vm480, %v737, %v738
        %v741 = vadd.f32 %v731, %v739
        %v742 = vstv %s255
        %v743 = vmul.f32 %v742, %v456
        %v744 = vmul.f32 %v742, %v457
        %v747 = vrot.slane %v743, 1
        %v748 = vrot.slane %v744, 1
        %v749 = vsel %vm480, %v747, %v748
        %750 = vrot.lane.b32.xlu0 %v749, 127
        %v751 = vpop.permute.xlu0 %750
        %v753 = vadd.f32 %v741, %v751
        %v754 = vstv %s256
        %v755 = vmul.f32 %v754, %v456
        %v756 = vmul.f32 %v754, %v457
        %v759 = vrot.slane %v755, 1
        %v760 = vrot.slane %v756, 1
        %v761 = vsel %vm480, %v759, %v760
        %762 = vrot.lane.b32.xlu0 %v761, 126
        %v763 = vpop.permute.xlu0 %762
        %v765 = vadd.f32 %v753, %v763
        %v766 = vstv %s257
        %v767 = vmul.f32 %v766, %v456
        %v768 = vmul.f32 %v766, %v457
        %v771 = vrot.slane %v767, 2
        %v772 = vrot.slane %v768, 2
        %v773 = vsel %vm515, %v771, %v772
        %v775 = vadd.f32 %v765, %v773
        %v776 = vstv %s258
        %v777 = vmul.f32 %v776, %v456
        %v778 = vmul.f32 %v776, %v457
        %v781 = vrot.slane %v777, 2
        %v782 = vrot.slane %v778, 2
        %v783 = vsel %vm515, %v781, %v782
        %784 = vrot.lane.b32.xlu0 %v783, 127
        %v785 = vpop.permute.xlu0 %784
        %v787 = vadd.f32 %v775, %v785
        %v788 = vstv %s259
        %v789 = vmul.f32 %v788, %v456
        %v790 = vmul.f32 %v788, %v457
        %v793 = vrot.slane %v789, 2
        %v794 = vrot.slane %v790, 2
        %v795 = vsel %vm515, %v793, %v794
        %796 = vrot.lane.b32.xlu0 %v795, 126
        %v797 = vpop.permute.xlu0 %796
        %v799 = vadd.f32 %v787, %v797
        %v800 = vstv %s287
        %v801 = vmul.f32 %v800, %v456
        %v802 = vadd.f32 %v448, %v801
        %v803 = vstv %s288
        %v804 = vmul.f32 %v803, %v456
        %806 = vrot.lane.b32.xlu0 %v804, 127
        %v807 = vpop.permute.xlu0 %806
        %v809 = vadd.f32 %v802, %v807
        %v810 = vstv %s289
        %v811 = vmul.f32 %v810, %v456
        %813 = vrot.lane.b32.xlu0 %v811, 126
        %v814 = vpop.permute.xlu0 %813
        %v816 = vadd.f32 %v809, %v814
        %v817 = vstv %s290
        %v818 = vmul.f32 %v817, %v456
        %v819 = vmul.f32 %v817, %v457
        %v822 = vrot.slane %v818, 1
        %v823 = vrot.slane %v819, 1
        %v824 = vsel %vm480, %v822, %v823
        %v826 = vadd.f32 %v816, %v824
        %v827 = vstv %s291
        %v828 = vmul.f32 %v827, %v456
        %v829 = vmul.f32 %v827, %v457
        %v832 = vrot.slane %v828, 1
        %v833 = vrot.slane %v829, 1
        %v834 = vsel %vm480, %v832, %v833
        %835 = vrot.lane.b32.xlu0 %v834, 127
        %v836 = vpop.permute.xlu0 %835
        %v838 = vadd.f32 %v826, %v836
        %v839 = vstv %s292
        %v840 = vmul.f32 %v839, %v456
        %v841 = vmul.f32 %v839, %v457
        %v844 = vrot.slane %v840, 1
        %v845 = vrot.slane %v841, 1
        %v846 = vsel %vm480, %v844, %v845
        %847 = vrot.lane.b32.xlu0 %v846, 126
        %v848 = vpop.permute.xlu0 %847
        %v850 = vadd.f32 %v838, %v848
        %v851 = vstv %s293
        %v852 = vmul.f32 %v851, %v456
        %v853 = vmul.f32 %v851, %v457
        %v856 = vrot.slane %v852, 2
        %v857 = vrot.slane %v853, 2
        %v858 = vsel %vm515, %v856, %v857
        %v860 = vadd.f32 %v850, %v858
        %v861 = vstv %s294
        %v862 = vmul.f32 %v861, %v456
        %v863 = vmul.f32 %v861, %v457
        %v866 = vrot.slane %v862, 2
        %v867 = vrot.slane %v863, 2
        %v868 = vsel %vm515, %v866, %v867
        %869 = vrot.lane.b32.xlu0 %v868, 127
        %v870 = vpop.permute.xlu0 %869
        %v872 = vadd.f32 %v860, %v870
        %v873 = vstv %s295
        %v874 = vmul.f32 %v873, %v456
        %v875 = vmul.f32 %v873, %v457
        %v878 = vrot.slane %v874, 2
        %v879 = vrot.slane %v875, 2
        %v880 = vsel %vm515, %v878, %v879
        %881 = vrot.lane.b32.xlu0 %v880, 126
        %v882 = vpop.permute.xlu0 %881
        %v884 = vadd.f32 %v872, %v882
        %v885 = vstv %s323
        %v886 = vmul.f32 %v885, %v456
        %v887 = vadd.f32 %v450, %v886
        %v888 = vstv %s324
        %v889 = vmul.f32 %v888, %v456
        %891 = vrot.lane.b32.xlu0 %v889, 127
        %v892 = vpop.permute.xlu0 %891
        %v894 = vadd.f32 %v887, %v892
        %v895 = vstv %s325
        %v896 = vmul.f32 %v895, %v456
        %898 = vrot.lane.b32.xlu0 %v896, 126
        %v899 = vpop.permute.xlu0 %898
        %v901 = vadd.f32 %v894, %v899
        %v902 = vstv %s326
        %v903 = vmul.f32 %v902, %v456
        %v904 = vmul.f32 %v902, %v457
        %v907 = vrot.slane %v903, 1
        %v908 = vrot.slane %v904, 1
        %v909 = vsel %vm480, %v907, %v908
        %v911 = vadd.f32 %v901, %v909
        %v912 = vstv %s327
        %v913 = vmul.f32 %v912, %v456
        %v914 = vmul.f32 %v912, %v457
        %v917 = vrot.slane %v913, 1
        %v918 = vrot.slane %v914, 1
        %v919 = vsel %vm480, %v917, %v918
        %920 = vrot.lane.b32.xlu0 %v919, 127
        %v921 = vpop.permute.xlu0 %920
        %v923 = vadd.f32 %v911, %v921
        %v924 = vstv %s328
        %v925 = vmul.f32 %v924, %v456
        %v926 = vmul.f32 %v924, %v457
        %v929 = vrot.slane %v925, 1
        %v930 = vrot.slane %v926, 1
        %v931 = vsel %vm480, %v929, %v930
        %932 = vrot.lane.b32.xlu0 %v931, 126
        %v933 = vpop.permute.xlu0 %932
        %v935 = vadd.f32 %v923, %v933
        %v936 = vstv %s329
        %v937 = vmul.f32 %v936, %v456
        %v938 = vmul.f32 %v936, %v457
        %v941 = vrot.slane %v937, 2
        %v942 = vrot.slane %v938, 2
        %v943 = vsel %vm515, %v941, %v942
        %v945 = vadd.f32 %v935, %v943
        %v946 = vstv %s330
        %v947 = vmul.f32 %v946, %v456
        %v948 = vmul.f32 %v946, %v457
        %v951 = vrot.slane %v947, 2
        %v952 = vrot.slane %v948, 2
        %v953 = vsel %vm515, %v951, %v952
        %954 = vrot.lane.b32.xlu0 %v953, 127
        %v955 = vpop.permute.xlu0 %954
        %v957 = vadd.f32 %v945, %v955
        %v958 = vstv %s331
        %v959 = vmul.f32 %v958, %v456
        %v960 = vmul.f32 %v958, %v457
        %v963 = vrot.slane %v959, 2
        %v964 = vrot.slane %v960, 2
        %v965 = vsel %vm515, %v963, %v964
        %966 = vrot.lane.b32.xlu0 %v965, 126
        %v967 = vpop.permute.xlu0 %966
        %v969 = vadd.f32 %v957, %v967
        %v970 = vstv %s359
        %v971 = vmul.f32 %v970, %v456
        %v972 = vadd.f32 %v452, %v971
        %v973 = vstv %s360
        %v974 = vmul.f32 %v973, %v456
        %976 = vrot.lane.b32.xlu0 %v974, 127
        %v977 = vpop.permute.xlu0 %976
        %v979 = vadd.f32 %v972, %v977
        %v980 = vstv %s361
        %v981 = vmul.f32 %v980, %v456
        %983 = vrot.lane.b32.xlu0 %v981, 126
        %v984 = vpop.permute.xlu0 %983
        %v986 = vadd.f32 %v979, %v984
        %v987 = vstv %s362
        %v988 = vmul.f32 %v987, %v456
        %v989 = vmul.f32 %v987, %v457
        %v992 = vrot.slane %v988, 1
        %v993 = vrot.slane %v989, 1
        %v994 = vsel %vm480, %v992, %v993
        %v996 = vadd.f32 %v986, %v994
        %v997 = vstv %s363
        %v998 = vmul.f32 %v997, %v456
        %v999 = vmul.f32 %v997, %v457
        %v1002 = vrot.slane %v998, 1
        %v1003 = vrot.slane %v999, 1
        %v1004 = vsel %vm480, %v1002, %v1003
        %1005 = vrot.lane.b32.xlu0 %v1004, 127
        %v1006 = vpop.permute.xlu0 %1005
        %v1008 = vadd.f32 %v996, %v1006
        %v1009 = vstv %s364
        %v1010 = vmul.f32 %v1009, %v456
        %v1011 = vmul.f32 %v1009, %v457
        %v1014 = vrot.slane %v1010, 1
        %v1015 = vrot.slane %v1011, 1
        %v1016 = vsel %vm480, %v1014, %v1015
        %1017 = vrot.lane.b32.xlu0 %v1016, 126
        %v1018 = vpop.permute.xlu0 %1017
        %v1020 = vadd.f32 %v1008, %v1018
        %v1021 = vstv %s365
        %v1022 = vmul.f32 %v1021, %v456
        %v1023 = vmul.f32 %v1021, %v457
        %v1026 = vrot.slane %v1022, 2
        %v1027 = vrot.slane %v1023, 2
        %v1028 = vsel %vm515, %v1026, %v1027
        %v1030 = vadd.f32 %v1020, %v1028
        %v1031 = vstv %s366
        %v1032 = vmul.f32 %v1031, %v456
        %v1033 = vmul.f32 %v1031, %v457
        %v1036 = vrot.slane %v1032, 2
        %v1037 = vrot.slane %v1033, 2
        %v1038 = vsel %vm515, %v1036, %v1037
        %1039 = vrot.lane.b32.xlu0 %v1038, 127
        %v1040 = vpop.permute.xlu0 %1039
        %v1042 = vadd.f32 %v1030, %v1040
        %v1043 = vstv %s367
        %v1044 = vmul.f32 %v1043, %v456
        %v1045 = vmul.f32 %v1043, %v457
        %v1048 = vrot.slane %v1044, 2
        %v1049 = vrot.slane %v1045, 2
        %v1050 = vsel %vm515, %v1048, %v1049
        %1051 = vrot.lane.b32.xlu0 %v1050, 126
        %v1052 = vpop.permute.xlu0 %1051
        %v1054 = vadd.f32 %v1042, %v1052
        %v1055 = vstv %s395
        %v1056 = vmul.f32 %v1055, %v456
        %v1057 = vadd.f32 %v454, %v1056
        %v1058 = vstv %s396
        %v1059 = vmul.f32 %v1058, %v456
        %1061 = vrot.lane.b32.xlu0 %v1059, 127
        %v1062 = vpop.permute.xlu0 %1061
        %v1064 = vadd.f32 %v1057, %v1062
        %v1065 = vstv %s397
        %v1066 = vmul.f32 %v1065, %v456
        %1068 = vrot.lane.b32.xlu0 %v1066, 126
        %v1069 = vpop.permute.xlu0 %1068
        %v1071 = vadd.f32 %v1064, %v1069
        %v1072 = vstv %s398
        %v1073 = vmul.f32 %v1072, %v456
        %v1074 = vmul.f32 %v1072, %v457
        %v1077 = vrot.slane %v1073, 1
        %v1078 = vrot.slane %v1074, 1
        %v1079 = vsel %vm480, %v1077, %v1078
        %v1081 = vadd.f32 %v1071, %v1079
        %v1082 = vstv %s399
        %v1083 = vmul.f32 %v1082, %v456
        %v1084 = vmul.f32 %v1082, %v457
        %v1087 = vrot.slane %v1083, 1
        %v1088 = vrot.slane %v1084, 1
        %v1089 = vsel %vm480, %v1087, %v1088
        %1090 = vrot.lane.b32.xlu0 %v1089, 127
        %v1091 = vpop.permute.xlu0 %1090
        %v1093 = vadd.f32 %v1081, %v1091
        %v1094 = vstv %s400
        %v1095 = vmul.f32 %v1094, %v456
        %v1096 = vmul.f32 %v1094, %v457
        %v1099 = vrot.slane %v1095, 1
        %v1100 = vrot.slane %v1096, 1
        %v1101 = vsel %vm480, %v1099, %v1100
        %1102 = vrot.lane.b32.xlu0 %v1101, 126
        %v1103 = vpop.permute.xlu0 %1102
        %v1105 = vadd.f32 %v1093, %v1103
        %v1106 = vstv %s401
        %v1107 = vmul.f32 %v1106, %v456
        %v1108 = vmul.f32 %v1106, %v457
        %v1111 = vrot.slane %v1107, 2
        %v1112 = vrot.slane %v1108, 2
        %v1113 = vsel %vm515, %v1111, %v1112
        %v1115 = vadd.f32 %v1105, %v1113
        %v1116 = vstv %s402
        %v1117 = vmul.f32 %v1116, %v456
        %v1118 = vmul.f32 %v1116, %v457
        %v1121 = vrot.slane %v1117, 2
        %v1122 = vrot.slane %v1118, 2
        %v1123 = vsel %vm515, %v1121, %v1122
        %1124 = vrot.lane.b32.xlu0 %v1123, 127
        %v1125 = vpop.permute.xlu0 %1124
        %v1127 = vadd.f32 %v1115, %v1125
        %v1128 = vstv %s403
        %v1129 = vmul.f32 %v1128, %v456
        %v1130 = vmul.f32 %v1128, %v457
        %v1133 = vrot.slane %v1129, 2
        %v1134 = vrot.slane %v1130, 2
        %v1135 = vsel %vm515, %v1133, %v1134
        %1136 = vrot.lane.b32.xlu0 %v1135, 126
        %v1137 = vpop.permute.xlu0 %1136
        %v1139 = vadd.f32 %v1127, %v1137
        %s1140 = sadd.s32 %s142, 24
        %s1141 = scalar_lea.vmem %s140, %s1140
        %v1142 = vld [vmem:[%s1141] sm:$0xff]
        %v1143 = vld [vmem:[%s1141 + $0x8] sm:$0x3]
        %v1144 = vstv %s152
        %v1145 = vmul.f32 %v1144, %v1142
        %v1146 = vadd.f32 %v544, %v1145
        %v1147 = vstv %s153
        %v1148 = vmul.f32 %v1147, %v1142
        %1150 = vrot.lane.b32.xlu0 %v1148, 127
        %v1151 = vpop.permute.xlu0 %1150
        %v1153 = vadd.f32 %v1146, %v1151
        %v1154 = vstv %s154
        %v1155 = vmul.f32 %v1154, %v1142
        %1157 = vrot.lane.b32.xlu0 %v1155, 126
        %v1158 = vpop.permute.xlu0 %1157
        %v1160 = vadd.f32 %v1153, %v1158
        %v1161 = vstv %s155
        %v1162 = vmul.f32 %v1161, %v1142
        %v1163 = vmul.f32 %v1161, %v1143
        %v1166 = vrot.slane %v1162, 1
        %v1167 = vrot.slane %v1163, 1
        %v1168 = vsel %vm480, %v1166, %v1167
        %v1170 = vadd.f32 %v1160, %v1168
        %v1171 = vstv %s156
        %v1172 = vmul.f32 %v1171, %v1142
        %v1173 = vmul.f32 %v1171, %v1143
        %v1176 = vrot.slane %v1172, 1
        %v1177 = vrot.slane %v1173, 1
        %v1178 = vsel %vm480, %v1176, %v1177
        %1179 = vrot.lane.b32.xlu0 %v1178, 127
        %v1180 = vpop.permute.xlu0 %1179
        %v1182 = vadd.f32 %v1170, %v1180
        %v1183 = vstv %s157
        %v1184 = vmul.f32 %v1183, %v1142
        %v1185 = vmul.f32 %v1183, %v1143
        %v1188 = vrot.slane %v1184, 1
        %v1189 = vrot.slane %v1185, 1
        %v1190 = vsel %vm480, %v1188, %v1189
        %1191 = vrot.lane.b32.xlu0 %v1190, 126
        %v1192 = vpop.permute.xlu0 %1191
        %v1194 = vadd.f32 %v1182, %v1192
        %v1195 = vstv %s158
        %v1196 = vmul.f32 %v1195, %v1142
        %v1197 = vmul.f32 %v1195, %v1143
        %v1200 = vrot.slane %v1196, 2
        %v1201 = vrot.slane %v1197, 2
        %v1202 = vsel %vm515, %v1200, %v1201
        %v1204 = vadd.f32 %v1194, %v1202
        %v1205 = vstv %s159
        %v1206 = vmul.f32 %v1205, %v1142
        %v1207 = vmul.f32 %v1205, %v1143
        %v1210 = vrot.slane %v1206, 2
        %v1211 = vrot.slane %v1207, 2
        %v1212 = vsel %vm515, %v1210, %v1211
        %1213 = vrot.lane.b32.xlu0 %v1212, 127
        %v1214 = vpop.permute.xlu0 %1213
        %v1216 = vadd.f32 %v1204, %v1214
        %v1217 = vstv %s160
        %v1218 = vmul.f32 %v1217, %v1142
        %v1219 = vmul.f32 %v1217, %v1143
        %v1222 = vrot.slane %v1218, 2
        %v1223 = vrot.slane %v1219, 2
        %v1224 = vsel %vm515, %v1222, %v1223
        %1225 = vrot.lane.b32.xlu0 %v1224, 126
        %v1226 = vpop.permute.xlu0 %1225
        %v1228 = vadd.f32 %v1216, %v1226
        %v1229 = vstv %s188
        %v1230 = vmul.f32 %v1229, %v1142
        %v1231 = vadd.f32 %v629, %v1230
        %v1232 = vstv %s189
        %v1233 = vmul.f32 %v1232, %v1142
        %1235 = vrot.lane.b32.xlu0 %v1233, 127
        %v1236 = vpop.permute.xlu0 %1235
        %v1238 = vadd.f32 %v1231, %v1236
        %v1239 = vstv %s190
        %v1240 = vmul.f32 %v1239, %v1142
        %1242 = vrot.lane.b32.xlu0 %v1240, 126
        %v1243 = vpop.permute.xlu0 %1242
        %v1245 = vadd.f32 %v1238, %v1243
        %v1246 = vstv %s191
        %v1247 = vmul.f32 %v1246, %v1142
        %v1248 = vmul.f32 %v1246, %v1143
        %v1251 = vrot.slane %v1247, 1
        %v1252 = vrot.slane %v1248, 1
        %v1253 = vsel %vm480, %v1251, %v1252
        %v1255 = vadd.f32 %v1245, %v1253
        %v1256 = vstv %s192
        %v1257 = vmul.f32 %v1256, %v1142
        %v1258 = vmul.f32 %v1256, %v1143
        %v1261 = vrot.slane %v1257, 1
        %v1262 = vrot.slane %v1258, 1
        %v1263 = vsel %vm480, %v1261, %v1262
        %1264 = vrot.lane.b32.xlu0 %v1263, 127
        %v1265 = vpop.permute.xlu0 %1264
        %v1267 = vadd.f32 %v1255, %v1265
        %v1268 = vstv %s193
        %v1269 = vmul.f32 %v1268, %v1142
        %v1270 = vmul.f32 %v1268, %v1143
        %v1273 = vrot.slane %v1269, 1
        %v1274 = vrot.slane %v1270, 1
        %v1275 = vsel %vm480, %v1273, %v1274
        %1276 = vrot.lane.b32.xlu0 %v1275, 126
        %v1277 = vpop.permute.xlu0 %1276
        %v1279 = vadd.f32 %v1267, %v1277
        %v1280 = vstv %s194
        %v1281 = vmul.f32 %v1280, %v1142
        %v1282 = vmul.f32 %v1280, %v1143
        %v1285 = vrot.slane %v1281, 2
        %v1286 = vrot.slane %v1282, 2
        %v1287 = vsel %vm515, %v1285, %v1286
        %v1289 = vadd.f32 %v1279, %v1287
        %v1290 = vstv %s195
        %v1291 = vmul.f32 %v1290, %v1142
        %v1292 = vmul.f32 %v1290, %v1143
        %v1295 = vrot.slane %v1291, 2
        %v1296 = vrot.slane %v1292, 2
        %v1297 = vsel %vm515, %v1295, %v1296
        %1298 = vrot.lane.b32.xlu0 %v1297, 127
        %v1299 = vpop.permute.xlu0 %1298
        %v1301 = vadd.f32 %v1289, %v1299
        %v1302 = vstv %s196
        %v1303 = vmul.f32 %v1302, %v1142
        %v1304 = vmul.f32 %v1302, %v1143
        %v1307 = vrot.slane %v1303, 2
        %v1308 = vrot.slane %v1304, 2
        %v1309 = vsel %vm515, %v1307, %v1308
        %1310 = vrot.lane.b32.xlu0 %v1309, 126
        %v1311 = vpop.permute.xlu0 %1310
        %v1313 = vadd.f32 %v1301, %v1311
        %v1314 = vstv %s224
        %v1315 = vmul.f32 %v1314, %v1142
        %v1316 = vadd.f32 %v714, %v1315
        %v1317 = vstv %s225
        %v1318 = vmul.f32 %v1317, %v1142
        %1320 = vrot.lane.b32.xlu0 %v1318, 127
        %v1321 = vpop.permute.xlu0 %1320
        %v1323 = vadd.f32 %v1316, %v1321
        %v1324 = vstv %s226
        %v1325 = vmul.f32 %v1324, %v1142
        %1327 = vrot.lane.b32.xlu0 %v1325, 126
        %v1328 = vpop.permute.xlu0 %1327
        %v1330 = vadd.f32 %v1323, %v1328
        %v1331 = vstv %s227
        %v1332 = vmul.f32 %v1331, %v1142
        %v1333 = vmul.f32 %v1331, %v1143
        %v1336 = vrot.slane %v1332, 1
        %v1337 = vrot.slane %v1333, 1
        %v1338 = vsel %vm480, %v1336, %v1337
        %v1340 = vadd.f32 %v1330, %v1338
        %v1341 = vstv %s228
        %v1342 = vmul.f32 %v1341, %v1142
        %v1343 = vmul.f32 %v1341, %v1143
        %v1346 = vrot.slane %v1342, 1
        %v1347 = vrot.slane %v1343, 1
        %v1348 = vsel %vm480, %v1346, %v1347
        %1349 = vrot.lane.b32.xlu0 %v1348, 127
        %v1350 = vpop.permute.xlu0 %1349
        %v1352 = vadd.f32 %v1340, %v1350
        %v1353 = vstv %s229
        %v1354 = vmul.f32 %v1353, %v1142
        %v1355 = vmul.f32 %v1353, %v1143
        %v1358 = vrot.slane %v1354, 1
        %v1359 = vrot.slane %v1355, 1
        %v1360 = vsel %vm480, %v1358, %v1359
        %1361 = vrot.lane.b32.xlu0 %v1360, 126
        %v1362 = vpop.permute.xlu0 %1361
        %v1364 = vadd.f32 %v1352, %v1362
        %v1365 = vstv %s230
        %v1366 = vmul.f32 %v1365, %v1142
        %v1367 = vmul.f32 %v1365, %v1143
        %v1370 = vrot.slane %v1366, 2
        %v1371 = vrot.slane %v1367, 2
        %v1372 = vsel %vm515, %v1370, %v1371
        %v1374 = vadd.f32 %v1364, %v1372
        %v1375 = vstv %s231
        %v1376 = vmul.f32 %v1375, %v1142
        %v1377 = vmul.f32 %v1375, %v1143
        %v1380 = vrot.slane %v1376, 2
        %v1381 = vrot.slane %v1377, 2
        %v1382 = vsel %vm515, %v1380, %v1381
        %1383 = vrot.lane.b32.xlu0 %v1382, 127
        %v1384 = vpop.permute.xlu0 %1383
        %v1386 = vadd.f32 %v1374, %v1384
        %v1387 = vstv %s232
        %v1388 = vmul.f32 %v1387, %v1142
        %v1389 = vmul.f32 %v1387, %v1143
        %v1392 = vrot.slane %v1388, 2
        %v1393 = vrot.slane %v1389, 2
        %v1394 = vsel %vm515, %v1392, %v1393
        %1395 = vrot.lane.b32.xlu0 %v1394, 126
        %v1396 = vpop.permute.xlu0 %1395
        %v1398 = vadd.f32 %v1386, %v1396
        %v1399 = vstv %s260
        %v1400 = vmul.f32 %v1399, %v1142
        %v1401 = vadd.f32 %v799, %v1400
        %v1402 = vstv %s261
        %v1403 = vmul.f32 %v1402, %v1142
        %1405 = vrot.lane.b32.xlu0 %v1403, 127
        %v1406 = vpop.permute.xlu0 %1405
        %v1408 = vadd.f32 %v1401, %v1406
        %v1409 = vstv %s262
        %v1410 = vmul.f32 %v1409, %v1142
        %1412 = vrot.lane.b32.xlu0 %v1410, 126
        %v1413 = vpop.permute.xlu0 %1412
        %v1415 = vadd.f32 %v1408, %v1413
        %v1416 = vstv %s263
        %v1417 = vmul.f32 %v1416, %v1142
        %v1418 = vmul.f32 %v1416, %v1143
        %v1421 = vrot.slane %v1417, 1
        %v1422 = vrot.slane %v1418, 1
        %v1423 = vsel %vm480, %v1421, %v1422
        %v1425 = vadd.f32 %v1415, %v1423
        %v1426 = vstv %s264
        %v1427 = vmul.f32 %v1426, %v1142
        %v1428 = vmul.f32 %v1426, %v1143
        %v1431 = vrot.slane %v1427, 1
        %v1432 = vrot.slane %v1428, 1
        %v1433 = vsel %vm480, %v1431, %v1432
        %1434 = vrot.lane.b32.xlu0 %v1433, 127
        %v1435 = vpop.permute.xlu0 %1434
        %v1437 = vadd.f32 %v1425, %v1435
        %v1438 = vstv %s265
        %v1439 = vmul.f32 %v1438, %v1142
        %v1440 = vmul.f32 %v1438, %v1143
        %v1443 = vrot.slane %v1439, 1
        %v1444 = vrot.slane %v1440, 1
        %v1445 = vsel %vm480, %v1443, %v1444
        %1446 = vrot.lane.b32.xlu0 %v1445, 126
        %v1447 = vpop.permute.xlu0 %1446
        %v1449 = vadd.f32 %v1437, %v1447
        %v1450 = vstv %s266
        %v1451 = vmul.f32 %v1450, %v1142
        %v1452 = vmul.f32 %v1450, %v1143
        %v1455 = vrot.slane %v1451, 2
        %v1456 = vrot.slane %v1452, 2
        %v1457 = vsel %vm515, %v1455, %v1456
        %v1459 = vadd.f32 %v1449, %v1457
        %v1460 = vstv %s267
        %v1461 = vmul.f32 %v1460, %v1142
        %v1462 = vmul.f32 %v1460, %v1143
        %v1465 = vrot.slane %v1461, 2
        %v1466 = vrot.slane %v1462, 2
        %v1467 = vsel %vm515, %v1465, %v1466
        %1468 = vrot.lane.b32.xlu0 %v1467, 127
        %v1469 = vpop.permute.xlu0 %1468
        %v1471 = vadd.f32 %v1459, %v1469
        %v1472 = vstv %s268
        %v1473 = vmul.f32 %v1472, %v1142
        %v1474 = vmul.f32 %v1472, %v1143
        %v1477 = vrot.slane %v1473, 2
        %v1478 = vrot.slane %v1474, 2
        %v1479 = vsel %vm515, %v1477, %v1478
        %1480 = vrot.lane.b32.xlu0 %v1479, 126
        %v1481 = vpop.permute.xlu0 %1480
        %v1483 = vadd.f32 %v1471, %v1481
        %v1484 = vstv %s296
        %v1485 = vmul.f32 %v1484, %v1142
        %v1486 = vadd.f32 %v884, %v1485
        %v1487 = vstv %s297
        %v1488 = vmul.f32 %v1487, %v1142
        %1490 = vrot.lane.b32.xlu0 %v1488, 127
        %v1491 = vpop.permute.xlu0 %1490
        %v1493 = vadd.f32 %v1486, %v1491
        %v1494 = vstv %s298
        %v1495 = vmul.f32 %v1494, %v1142
        %1497 = vrot.lane.b32.xlu0 %v1495, 126
        %v1498 = vpop.permute.xlu0 %1497
        %v1500 = vadd.f32 %v1493, %v1498
        %v1501 = vstv %s299
        %v1502 = vmul.f32 %v1501, %v1142
        %v1503 = vmul.f32 %v1501, %v1143
        %v1506 = vrot.slane %v1502, 1
        %v1507 = vrot.slane %v1503, 1
        %v1508 = vsel %vm480, %v1506, %v1507
        %v1510 = vadd.f32 %v1500, %v1508
        %v1511 = vstv %s300
        %v1512 = vmul.f32 %v1511, %v1142
        %v1513 = vmul.f32 %v1511, %v1143
        %v1516 = vrot.slane %v1512, 1
        %v1517 = vrot.slane %v1513, 1
        %v1518 = vsel %vm480, %v1516, %v1517
        %1519 = vrot.lane.b32.xlu0 %v1518, 127
        %v1520 = vpop.permute.xlu0 %1519
        %v1522 = vadd.f32 %v1510, %v1520
        %v1523 = vstv %s301
        %v1524 = vmul.f32 %v1523, %v1142
        %v1525 = vmul.f32 %v1523, %v1143
        %v1528 = vrot.slane %v1524, 1
        %v1529 = vrot.slane %v1525, 1
        %v1530 = vsel %vm480, %v1528, %v1529
        %1531 = vrot.lane.b32.xlu0 %v1530, 126
        %v1532 = vpop.permute.xlu0 %1531
        %v1534 = vadd.f32 %v1522, %v1532
        %v1535 = vstv %s302
        %v1536 = vmul.f32 %v1535, %v1142
        %v1537 = vmul.f32 %v1535, %v1143
        %v1540 = vrot.slane %v1536, 2
        %v1541 = vrot.slane %v1537, 2
        %v1542 = vsel %vm515, %v1540, %v1541
        %v1544 = vadd.f32 %v1534, %v1542
        %v1545 = vstv %s303
        %v1546 = vmul.f32 %v1545, %v1142
        %v1547 = vmul.f32 %v1545, %v1143
        %v1550 = vrot.slane %v1546, 2
        %v1551 = vrot.slane %v1547, 2
        %v1552 = vsel %vm515, %v1550, %v1551
        %1553 = vrot.lane.b32.xlu0 %v1552, 127
        %v1554 = vpop.permute.xlu0 %1553
        %v1556 = vadd.f32 %v1544, %v1554
        %v1557 = vstv %s304
        %v1558 = vmul.f32 %v1557, %v1142
        %v1559 = vmul.f32 %v1557, %v1143
        %v1562 = vrot.slane %v1558, 2
        %v1563 = vrot.slane %v1559, 2
        %v1564 = vsel %vm515, %v1562, %v1563
        %1565 = vrot.lane.b32.xlu0 %v1564, 126
        %v1566 = vpop.permute.xlu0 %1565
        %v1568 = vadd.f32 %v1556, %v1566
        %v1569 = vstv %s332
        %v1570 = vmul.f32 %v1569, %v1142
        %v1571 = vadd.f32 %v969, %v1570
        %v1572 = vstv %s333
        %v1573 = vmul.f32 %v1572, %v1142
        %1575 = vrot.lane.b32.xlu0 %v1573, 127
        %v1576 = vpop.permute.xlu0 %1575
        %v1578 = vadd.f32 %v1571, %v1576
        %v1579 = vstv %s334
        %v1580 = vmul.f32 %v1579, %v1142
        %1582 = vrot.lane.b32.xlu0 %v1580, 126
        %v1583 = vpop.permute.xlu0 %1582
        %v1585 = vadd.f32 %v1578, %v1583
        %v1586 = vstv %s335
        %v1587 = vmul.f32 %v1586, %v1142
        %v1588 = vmul.f32 %v1586, %v1143
        %v1591 = vrot.slane %v1587, 1
        %v1592 = vrot.slane %v1588, 1
        %v1593 = vsel %vm480, %v1591, %v1592
        %v1595 = vadd.f32 %v1585, %v1593
        %v1596 = vstv %s336
        %v1597 = vmul.f32 %v1596, %v1142
        %v1598 = vmul.f32 %v1596, %v1143
        %v1601 = vrot.slane %v1597, 1
        %v1602 = vrot.slane %v1598, 1
        %v1603 = vsel %vm480, %v1601, %v1602
        %1604 = vrot.lane.b32.xlu0 %v1603, 127
        %v1605 = vpop.permute.xlu0 %1604
        %v1607 = vadd.f32 %v1595, %v1605
        %v1608 = vstv %s337
        %v1609 = vmul.f32 %v1608, %v1142
        %v1610 = vmul.f32 %v1608, %v1143
        %v1613 = vrot.slane %v1609, 1
        %v1614 = vrot.slane %v1610, 1
        %v1615 = vsel %vm480, %v1613, %v1614
        %1616 = vrot.lane.b32.xlu0 %v1615, 126
        %v1617 = vpop.permute.xlu0 %1616
        %v1619 = vadd.f32 %v1607, %v1617
        %v1620 = vstv %s338
        %v1621 = vmul.f32 %v1620, %v1142
        %v1622 = vmul.f32 %v1620, %v1143
        %v1625 = vrot.slane %v1621, 2
        %v1626 = vrot.slane %v1622, 2
        %v1627 = vsel %vm515, %v1625, %v1626
        %v1629 = vadd.f32 %v1619, %v1627
        %v1630 = vstv %s339
        %v1631 = vmul.f32 %v1630, %v1142
        %v1632 = vmul.f32 %v1630, %v1143
        %v1635 = vrot.slane %v1631, 2
        %v1636 = vrot.slane %v1632, 2
        %v1637 = vsel %vm515, %v1635, %v1636
        %1638 = vrot.lane.b32.xlu0 %v1637, 127
        %v1639 = vpop.permute.xlu0 %1638
        %v1641 = vadd.f32 %v1629, %v1639
        %v1642 = vstv %s340
        %v1643 = vmul.f32 %v1642, %v1142
        %v1644 = vmul.f32 %v1642, %v1143
        %v1647 = vrot.slane %v1643, 2
        %v1648 = vrot.slane %v1644, 2
        %v1649 = vsel %vm515, %v1647, %v1648
        %1650 = vrot.lane.b32.xlu0 %v1649, 126
        %v1651 = vpop.permute.xlu0 %1650
        %v1653 = vadd.f32 %v1641, %v1651
        %v1654 = vstv %s368
        %v1655 = vmul.f32 %v1654, %v1142
        %v1656 = vadd.f32 %v1054, %v1655
        %v1657 = vstv %s369
        %v1658 = vmul.f32 %v1657, %v1142
        %1660 = vrot.lane.b32.xlu0 %v1658, 127
        %v1661 = vpop.permute.xlu0 %1660
        %v1663 = vadd.f32 %v1656, %v1661
        %v1664 = vstv %s370
        %v1665 = vmul.f32 %v1664, %v1142
        %1667 = vrot.lane.b32.xlu0 %v1665, 126
        %v1668 = vpop.permute.xlu0 %1667
        %v1670 = vadd.f32 %v1663, %v1668
        %v1671 = vstv %s371
        %v1672 = vmul.f32 %v1671, %v1142
        %v1673 = vmul.f32 %v1671, %v1143
        %v1676 = vrot.slane %v1672, 1
        %v1677 = vrot.slane %v1673, 1
        %v1678 = vsel %vm480, %v1676, %v1677
        %v1680 = vadd.f32 %v1670, %v1678
        %v1681 = vstv %s372
        %v1682 = vmul.f32 %v1681, %v1142
        %v1683 = vmul.f32 %v1681, %v1143
        %v1686 = vrot.slane %v1682, 1
        %v1687 = vrot.slane %v1683, 1
        %v1688 = vsel %vm480, %v1686, %v1687
        %1689 = vrot.lane.b32.xlu0 %v1688, 127
        %v1690 = vpop.permute.xlu0 %1689
        %v1692 = vadd.f32 %v1680, %v1690
        %v1693 = vstv %s373
        %v1694 = vmul.f32 %v1693, %v1142
        %v1695 = vmul.f32 %v1693, %v1143
        %v1698 = vrot.slane %v1694, 1
        %v1699 = vrot.slane %v1695, 1
        %v1700 = vsel %vm480, %v1698, %v1699
        %1701 = vrot.lane.b32.xlu0 %v1700, 126
        %v1702 = vpop.permute.xlu0 %1701
        %v1704 = vadd.f32 %v1692, %v1702
        %v1705 = vstv %s374
        %v1706 = vmul.f32 %v1705, %v1142
        %v1707 = vmul.f32 %v1705, %v1143
        %v1710 = vrot.slane %v1706, 2
        %v1711 = vrot.slane %v1707, 2
        %v1712 = vsel %vm515, %v1710, %v1711
        %v1714 = vadd.f32 %v1704, %v1712
        %v1715 = vstv %s375
        %v1716 = vmul.f32 %v1715, %v1142
        %v1717 = vmul.f32 %v1715, %v1143
        %v1720 = vrot.slane %v1716, 2
        %v1721 = vrot.slane %v1717, 2
        %v1722 = vsel %vm515, %v1720, %v1721
        %1723 = vrot.lane.b32.xlu0 %v1722, 127
        %v1724 = vpop.permute.xlu0 %1723
        %v1726 = vadd.f32 %v1714, %v1724
        %v1727 = vstv %s376
        %v1728 = vmul.f32 %v1727, %v1142
        %v1729 = vmul.f32 %v1727, %v1143
        %v1732 = vrot.slane %v1728, 2
        %v1733 = vrot.slane %v1729, 2
        %v1734 = vsel %vm515, %v1732, %v1733
        %1735 = vrot.lane.b32.xlu0 %v1734, 126
        %v1736 = vpop.permute.xlu0 %1735
        %v1738 = vadd.f32 %v1726, %v1736
        %v1739 = vstv %s404
        %v1740 = vmul.f32 %v1739, %v1142
        %v1741 = vadd.f32 %v1139, %v1740
        %v1742 = vstv %s405
        %v1743 = vmul.f32 %v1742, %v1142
        %1745 = vrot.lane.b32.xlu0 %v1743, 127
        %v1746 = vpop.permute.xlu0 %1745
        %v1748 = vadd.f32 %v1741, %v1746
        %v1749 = vstv %s406
        %v1750 = vmul.f32 %v1749, %v1142
        %1752 = vrot.lane.b32.xlu0 %v1750, 126
        %v1753 = vpop.permute.xlu0 %1752
        %v1755 = vadd.f32 %v1748, %v1753
        %v1756 = vstv %s407
        %v1757 = vmul.f32 %v1756, %v1142
        %v1758 = vmul.f32 %v1756, %v1143
        %v1761 = vrot.slane %v1757, 1
        %v1762 = vrot.slane %v1758, 1
        %v1763 = vsel %vm480, %v1761, %v1762
        %v1765 = vadd.f32 %v1755, %v1763
        %v1766 = vstv %s408
        %v1767 = vmul.f32 %v1766, %v1142
        %v1768 = vmul.f32 %v1766, %v1143
        %v1771 = vrot.slane %v1767, 1
        %v1772 = vrot.slane %v1768, 1
        %v1773 = vsel %vm480, %v1771, %v1772
        %1774 = vrot.lane.b32.xlu0 %v1773, 127
        %v1775 = vpop.permute.xlu0 %1774
        %v1777 = vadd.f32 %v1765, %v1775
        %v1778 = vstv %s409
        %v1779 = vmul.f32 %v1778, %v1142
        %v1780 = vmul.f32 %v1778, %v1143
        %v1783 = vrot.slane %v1779, 1
        %v1784 = vrot.slane %v1780, 1
        %v1785 = vsel %vm480, %v1783, %v1784
        %1786 = vrot.lane.b32.xlu0 %v1785, 126
        %v1787 = vpop.permute.xlu0 %1786
        %v1789 = vadd.f32 %v1777, %v1787
        %v1790 = vstv %s410
        %v1791 = vmul.f32 %v1790, %v1142
        %v1792 = vmul.f32 %v1790, %v1143
        %v1795 = vrot.slane %v1791, 2
        %v1796 = vrot.slane %v1792, 2
        %v1797 = vsel %vm515, %v1795, %v1796
        %v1799 = vadd.f32 %v1789, %v1797
        %v1800 = vstv %s411
        %v1801 = vmul.f32 %v1800, %v1142
        %v1802 = vmul.f32 %v1800, %v1143
        %v1805 = vrot.slane %v1801, 2
        %v1806 = vrot.slane %v1802, 2
        %v1807 = vsel %vm515, %v1805, %v1806
        %1808 = vrot.lane.b32.xlu0 %v1807, 127
        %v1809 = vpop.permute.xlu0 %1808
        %v1811 = vadd.f32 %v1799, %v1809
        %v1812 = vstv %s412
        %v1813 = vmul.f32 %v1812, %v1142
        %v1814 = vmul.f32 %v1812, %v1143
        %v1817 = vrot.slane %v1813, 2
        %v1818 = vrot.slane %v1814, 2
        %v1819 = vsel %vm515, %v1817, %v1818
        %1820 = vrot.lane.b32.xlu0 %v1819, 126
        %v1821 = vpop.permute.xlu0 %1820
        %v1823 = vadd.f32 %v1811, %v1821
        %s1824 = sadd.s32 %s142, 48
        %s1825 = scalar_lea.vmem %s140, %s1824
        %v1826 = vld [vmem:[%s1825] sm:$0xff]
        %v1827 = vld [vmem:[%s1825 + $0x8] sm:$0x3]
        %v1828 = vstv %s161
        %v1829 = vmul.f32 %v1828, %v1826
        %v1830 = vadd.f32 %v1228, %v1829
        %v1831 = vstv %s162
        %v1832 = vmul.f32 %v1831, %v1826
        %1834 = vrot.lane.b32.xlu0 %v1832, 127
        %v1835 = vpop.permute.xlu0 %1834
        %v1837 = vadd.f32 %v1830, %v1835
        %v1838 = vstv %s163
        %v1839 = vmul.f32 %v1838, %v1826
        %1841 = vrot.lane.b32.xlu0 %v1839, 126
        %v1842 = vpop.permute.xlu0 %1841
        %v1844 = vadd.f32 %v1837, %v1842
        %v1845 = vstv %s164
        %v1846 = vmul.f32 %v1845, %v1826
        %v1847 = vmul.f32 %v1845, %v1827
        %v1850 = vrot.slane %v1846, 1
        %v1851 = vrot.slane %v1847, 1
        %v1852 = vsel %vm480, %v1850, %v1851
        %v1854 = vadd.f32 %v1844, %v1852
        %v1855 = vstv %s165
        %v1856 = vmul.f32 %v1855, %v1826
        %v1857 = vmul.f32 %v1855, %v1827
        %v1860 = vrot.slane %v1856, 1
        %v1861 = vrot.slane %v1857, 1
        %v1862 = vsel %vm480, %v1860, %v1861
        %1863 = vrot.lane.b32.xlu0 %v1862, 127
        %v1864 = vpop.permute.xlu0 %1863
        %v1866 = vadd.f32 %v1854, %v1864
        %v1867 = vstv %s166
        %v1868 = vmul.f32 %v1867, %v1826
        %v1869 = vmul.f32 %v1867, %v1827
        %v1872 = vrot.slane %v1868, 1
        %v1873 = vrot.slane %v1869, 1
        %v1874 = vsel %vm480, %v1872, %v1873
        %1875 = vrot.lane.b32.xlu0 %v1874, 126
        %v1876 = vpop.permute.xlu0 %1875
        %v1878 = vadd.f32 %v1866, %v1876
        %v1879 = vstv %s167
        %v1880 = vmul.f32 %v1879, %v1826
        %v1881 = vmul.f32 %v1879, %v1827
        %v1884 = vrot.slane %v1880, 2
        %v1885 = vrot.slane %v1881, 2
        %v1886 = vsel %vm515, %v1884, %v1885
        %v1888 = vadd.f32 %v1878, %v1886
        %v1889 = vstv %s168
        %v1890 = vmul.f32 %v1889, %v1826
        %v1891 = vmul.f32 %v1889, %v1827
        %v1894 = vrot.slane %v1890, 2
        %v1895 = vrot.slane %v1891, 2
        %v1896 = vsel %vm515, %v1894, %v1895
        %1897 = vrot.lane.b32.xlu0 %v1896, 127
        %v1898 = vpop.permute.xlu0 %1897
        %v1900 = vadd.f32 %v1888, %v1898
        %v1901 = vstv %s169
        %v1902 = vmul.f32 %v1901, %v1826
        %v1903 = vmul.f32 %v1901, %v1827
        %v1906 = vrot.slane %v1902, 2
        %v1907 = vrot.slane %v1903, 2
        %v1908 = vsel %vm515, %v1906, %v1907
        %1909 = vrot.lane.b32.xlu0 %v1908, 126
        %v1910 = vpop.permute.xlu0 %1909
        %v1912 = vadd.f32 %v1900, %v1910
        %v1913 = vstv %s197
        %v1914 = vmul.f32 %v1913, %v1826
        %v1915 = vadd.f32 %v1313, %v1914
        %v1916 = vstv %s198
        %v1917 = vmul.f32 %v1916, %v1826
        %1919 = vrot.lane.b32.xlu0 %v1917, 127
        %v1920 = vpop.permute.xlu0 %1919
        %v1922 = vadd.f32 %v1915, %v1920
        %v1923 = vstv %s199
        %v1924 = vmul.f32 %v1923, %v1826
        %1926 = vrot.lane.b32.xlu0 %v1924, 126
        %v1927 = vpop.permute.xlu0 %1926
        %v1929 = vadd.f32 %v1922, %v1927
        %v1930 = vstv %s200
        %v1931 = vmul.f32 %v1930, %v1826
        %v1932 = vmul.f32 %v1930, %v1827
        %v1935 = vrot.slane %v1931, 1
        %v1936 = vrot.slane %v1932, 1
        %v1937 = vsel %vm480, %v1935, %v1936
        %v1939 = vadd.f32 %v1929, %v1937
        %v1940 = vstv %s201
        %v1941 = vmul.f32 %v1940, %v1826
        %v1942 = vmul.f32 %v1940, %v1827
        %v1945 = vrot.slane %v1941, 1
        %v1946 = vrot.slane %v1942, 1
        %v1947 = vsel %vm480, %v1945, %v1946
        %1948 = vrot.lane.b32.xlu0 %v1947, 127
        %v1949 = vpop.permute.xlu0 %1948
        %v1951 = vadd.f32 %v1939, %v1949
        %v1952 = vstv %s202
        %v1953 = vmul.f32 %v1952, %v1826
        %v1954 = vmul.f32 %v1952, %v1827
        %v1957 = vrot.slane %v1953, 1
        %v1958 = vrot.slane %v1954, 1
        %v1959 = vsel %vm480, %v1957, %v1958
        %1960 = vrot.lane.b32.xlu0 %v1959, 126
        %v1961 = vpop.permute.xlu0 %1960
        %v1963 = vadd.f32 %v1951, %v1961
        %v1964 = vstv %s203
        %v1965 = vmul.f32 %v1964, %v1826
        %v1966 = vmul.f32 %v1964, %v1827
        %v1969 = vrot.slane %v1965, 2
        %v1970 = vrot.slane %v1966, 2
        %v1971 = vsel %vm515, %v1969, %v1970
        %v1973 = vadd.f32 %v1963, %v1971
        %v1974 = vstv %s204
        %v1975 = vmul.f32 %v1974, %v1826
        %v1976 = vmul.f32 %v1974, %v1827
        %v1979 = vrot.slane %v1975, 2
        %v1980 = vrot.slane %v1976, 2
        %v1981 = vsel %vm515, %v1979, %v1980
        %1982 = vrot.lane.b32.xlu0 %v1981, 127
        %v1983 = vpop.permute.xlu0 %1982
        %v1985 = vadd.f32 %v1973, %v1983
        %v1986 = vstv %s205
        %v1987 = vmul.f32 %v1986, %v1826
        %v1988 = vmul.f32 %v1986, %v1827
        %v1991 = vrot.slane %v1987, 2
        %v1992 = vrot.slane %v1988, 2
        %v1993 = vsel %vm515, %v1991, %v1992
        %1994 = vrot.lane.b32.xlu0 %v1993, 126
        %v1995 = vpop.permute.xlu0 %1994
        %v1997 = vadd.f32 %v1985, %v1995
        %v1998 = vstv %s233
        %v1999 = vmul.f32 %v1998, %v1826
        %v2000 = vadd.f32 %v1398, %v1999
        %v2001 = vstv %s234
        %v2002 = vmul.f32 %v2001, %v1826
        %2004 = vrot.lane.b32.xlu0 %v2002, 127
        %v2005 = vpop.permute.xlu0 %2004
        %v2007 = vadd.f32 %v2000, %v2005
        %v2008 = vstv %s235
        %v2009 = vmul.f32 %v2008, %v1826
        %2011 = vrot.lane.b32.xlu0 %v2009, 126
        %v2012 = vpop.permute.xlu0 %2011
        %v2014 = vadd.f32 %v2007, %v2012
        %v2015 = vstv %s236
        %v2016 = vmul.f32 %v2015, %v1826
        %v2017 = vmul.f32 %v2015, %v1827
        %v2020 = vrot.slane %v2016, 1
        %v2021 = vrot.slane %v2017, 1
        %v2022 = vsel %vm480, %v2020, %v2021
        %v2024 = vadd.f32 %v2014, %v2022
        %v2025 = vstv %s237
        %v2026 = vmul.f32 %v2025, %v1826
        %v2027 = vmul.f32 %v2025, %v1827
        %v2030 = vrot.slane %v2026, 1
        %v2031 = vrot.slane %v2027, 1
        %v2032 = vsel %vm480, %v2030, %v2031
        %2033 = vrot.lane.b32.xlu0 %v2032, 127
        %v2034 = vpop.permute.xlu0 %2033
        %v2036 = vadd.f32 %v2024, %v2034
        %v2037 = vstv %s238
        %v2038 = vmul.f32 %v2037, %v1826
        %v2039 = vmul.f32 %v2037, %v1827
        %v2042 = vrot.slane %v2038, 1
        %v2043 = vrot.slane %v2039, 1
        %v2044 = vsel %vm480, %v2042, %v2043
        %2045 = vrot.lane.b32.xlu0 %v2044, 126
        %v2046 = vpop.permute.xlu0 %2045
        %v2048 = vadd.f32 %v2036, %v2046
        %v2049 = vstv %s239
        %v2050 = vmul.f32 %v2049, %v1826
        %v2051 = vmul.f32 %v2049, %v1827
        %v2054 = vrot.slane %v2050, 2
        %v2055 = vrot.slane %v2051, 2
        %v2056 = vsel %vm515, %v2054, %v2055
        %v2058 = vadd.f32 %v2048, %v2056
        %v2059 = vstv %s240
        %v2060 = vmul.f32 %v2059, %v1826
        %v2061 = vmul.f32 %v2059, %v1827
        %v2064 = vrot.slane %v2060, 2
        %v2065 = vrot.slane %v2061, 2
        %v2066 = vsel %vm515, %v2064, %v2065
        %2067 = vrot.lane.b32.xlu0 %v2066, 127
        %v2068 = vpop.permute.xlu0 %2067
        %v2070 = vadd.f32 %v2058, %v2068
        %v2071 = vstv %s241
        %v2072 = vmul.f32 %v2071, %v1826
        %v2073 = vmul.f32 %v2071, %v1827
        %v2076 = vrot.slane %v2072, 2
        %v2077 = vrot.slane %v2073, 2
        %v2078 = vsel %vm515, %v2076, %v2077
        %2079 = vrot.lane.b32.xlu0 %v2078, 126
        %v2080 = vpop.permute.xlu0 %2079
        %v2082 = vadd.f32 %v2070, %v2080
        %v2083 = vstv %s269
        %v2084 = vmul.f32 %v2083, %v1826
        %v2085 = vadd.f32 %v1483, %v2084
        %v2086 = vstv %s270
        %v2087 = vmul.f32 %v2086, %v1826
        %2089 = vrot.lane.b32.xlu0 %v2087, 127
        %v2090 = vpop.permute.xlu0 %2089
        %v2092 = vadd.f32 %v2085, %v2090
        %v2093 = vstv %s271
        %v2094 = vmul.f32 %v2093, %v1826
        %2096 = vrot.lane.b32.xlu0 %v2094, 126
        %v2097 = vpop.permute.xlu0 %2096
        %v2099 = vadd.f32 %v2092, %v2097
        %v2100 = vstv %s272
        %v2101 = vmul.f32 %v2100, %v1826
        %v2102 = vmul.f32 %v2100, %v1827
        %v2105 = vrot.slane %v2101, 1
        %v2106 = vrot.slane %v2102, 1
        %v2107 = vsel %vm480, %v2105, %v2106
        %v2109 = vadd.f32 %v2099, %v2107
        %v2110 = vstv %s273
        %v2111 = vmul.f32 %v2110, %v1826
        %v2112 = vmul.f32 %v2110, %v1827
        %v2115 = vrot.slane %v2111, 1
        %v2116 = vrot.slane %v2112, 1
        %v2117 = vsel %vm480, %v2115, %v2116
        %2118 = vrot.lane.b32.xlu0 %v2117, 127
        %v2119 = vpop.permute.xlu0 %2118
        %v2121 = vadd.f32 %v2109, %v2119
        %v2122 = vstv %s274
        %v2123 = vmul.f32 %v2122, %v1826
        %v2124 = vmul.f32 %v2122, %v1827
        %v2127 = vrot.slane %v2123, 1
        %v2128 = vrot.slane %v2124, 1
        %v2129 = vsel %vm480, %v2127, %v2128
        %2130 = vrot.lane.b32.xlu0 %v2129, 126
        %v2131 = vpop.permute.xlu0 %2130
        %v2133 = vadd.f32 %v2121, %v2131
        %v2134 = vstv %s275
        %v2135 = vmul.f32 %v2134, %v1826
        %v2136 = vmul.f32 %v2134, %v1827
        %v2139 = vrot.slane %v2135, 2
        %v2140 = vrot.slane %v2136, 2
        %v2141 = vsel %vm515, %v2139, %v2140
        %v2143 = vadd.f32 %v2133, %v2141
        %v2144 = vstv %s276
        %v2145 = vmul.f32 %v2144, %v1826
        %v2146 = vmul.f32 %v2144, %v1827
        %v2149 = vrot.slane %v2145, 2
        %v2150 = vrot.slane %v2146, 2
        %v2151 = vsel %vm515, %v2149, %v2150
        %2152 = vrot.lane.b32.xlu0 %v2151, 127
        %v2153 = vpop.permute.xlu0 %2152
        %v2155 = vadd.f32 %v2143, %v2153
        %v2156 = vstv %s277
        %v2157 = vmul.f32 %v2156, %v1826
        %v2158 = vmul.f32 %v2156, %v1827
        %v2161 = vrot.slane %v2157, 2
        %v2162 = vrot.slane %v2158, 2
        %v2163 = vsel %vm515, %v2161, %v2162
        %2164 = vrot.lane.b32.xlu0 %v2163, 126
        %v2165 = vpop.permute.xlu0 %2164
        %v2167 = vadd.f32 %v2155, %v2165
        %v2168 = vstv %s305
        %v2169 = vmul.f32 %v2168, %v1826
        %v2170 = vadd.f32 %v1568, %v2169
        %v2171 = vstv %s306
        %v2172 = vmul.f32 %v2171, %v1826
        %2174 = vrot.lane.b32.xlu0 %v2172, 127
        %v2175 = vpop.permute.xlu0 %2174
        %v2177 = vadd.f32 %v2170, %v2175
        %v2178 = vstv %s307
        %v2179 = vmul.f32 %v2178, %v1826
        %2181 = vrot.lane.b32.xlu0 %v2179, 126
        %v2182 = vpop.permute.xlu0 %2181
        %v2184 = vadd.f32 %v2177, %v2182
        %v2185 = vstv %s308
        %v2186 = vmul.f32 %v2185, %v1826
        %v2187 = vmul.f32 %v2185, %v1827
        %v2190 = vrot.slane %v2186, 1
        %v2191 = vrot.slane %v2187, 1
        %v2192 = vsel %vm480, %v2190, %v2191
        %v2194 = vadd.f32 %v2184, %v2192
        %v2195 = vstv %s309
        %v2196 = vmul.f32 %v2195, %v1826
        %v2197 = vmul.f32 %v2195, %v1827
        %v2200 = vrot.slane %v2196, 1
        %v2201 = vrot.slane %v2197, 1
        %v2202 = vsel %vm480, %v2200, %v2201
        %2203 = vrot.lane.b32.xlu0 %v2202, 127
        %v2204 = vpop.permute.xlu0 %2203
        %v2206 = vadd.f32 %v2194, %v2204
        %v2207 = vstv %s310
        %v2208 = vmul.f32 %v2207, %v1826
        %v2209 = vmul.f32 %v2207, %v1827
        %v2212 = vrot.slane %v2208, 1
        %v2213 = vrot.slane %v2209, 1
        %v2214 = vsel %vm480, %v2212, %v2213
        %2215 = vrot.lane.b32.xlu0 %v2214, 126
        %v2216 = vpop.permute.xlu0 %2215
        %v2218 = vadd.f32 %v2206, %v2216
        %v2219 = vstv %s311
        %v2220 = vmul.f32 %v2219, %v1826
        %v2221 = vmul.f32 %v2219, %v1827
        %v2224 = vrot.slane %v2220, 2
        %v2225 = vrot.slane %v2221, 2
        %v2226 = vsel %vm515, %v2224, %v2225
        %v2228 = vadd.f32 %v2218, %v2226
        %v2229 = vstv %s312
        %v2230 = vmul.f32 %v2229, %v1826
        %v2231 = vmul.f32 %v2229, %v1827
        %v2234 = vrot.slane %v2230, 2
        %v2235 = vrot.slane %v2231, 2
        %v2236 = vsel %vm515, %v2234, %v2235
        %2237 = vrot.lane.b32.xlu0 %v2236, 127
        %v2238 = vpop.permute.xlu0 %2237
        %v2240 = vadd.f32 %v2228, %v2238
        %v2241 = vstv %s313
        %v2242 = vmul.f32 %v2241, %v1826
        %v2243 = vmul.f32 %v2241, %v1827
        %v2246 = vrot.slane %v2242, 2
        %v2247 = vrot.slane %v2243, 2
        %v2248 = vsel %vm515, %v2246, %v2247
        %2249 = vrot.lane.b32.xlu0 %v2248, 126
        %v2250 = vpop.permute.xlu0 %2249
        %v2252 = vadd.f32 %v2240, %v2250
        %v2253 = vstv %s341
        %v2254 = vmul.f32 %v2253, %v1826
        %v2255 = vadd.f32 %v1653, %v2254
        %v2256 = vstv %s342
        %v2257 = vmul.f32 %v2256, %v1826
        %2259 = vrot.lane.b32.xlu0 %v2257, 127
        %v2260 = vpop.permute.xlu0 %2259
        %v2262 = vadd.f32 %v2255, %v2260
        %v2263 = vstv %s343
        %v2264 = vmul.f32 %v2263, %v1826
        %2266 = vrot.lane.b32.xlu0 %v2264, 126
        %v2267 = vpop.permute.xlu0 %2266
        %v2269 = vadd.f32 %v2262, %v2267
        %v2270 = vstv %s344
        %v2271 = vmul.f32 %v2270, %v1826
        %v2272 = vmul.f32 %v2270, %v1827
        %v2275 = vrot.slane %v2271, 1
        %v2276 = vrot.slane %v2272, 1
        %v2277 = vsel %vm480, %v2275, %v2276
        %v2279 = vadd.f32 %v2269, %v2277
        %v2280 = vstv %s345
        %v2281 = vmul.f32 %v2280, %v1826
        %v2282 = vmul.f32 %v2280, %v1827
        %v2285 = vrot.slane %v2281, 1
        %v2286 = vrot.slane %v2282, 1
        %v2287 = vsel %vm480, %v2285, %v2286
        %2288 = vrot.lane.b32.xlu0 %v2287, 127
        %v2289 = vpop.permute.xlu0 %2288
        %v2291 = vadd.f32 %v2279, %v2289
        %v2292 = vstv %s346
        %v2293 = vmul.f32 %v2292, %v1826
        %v2294 = vmul.f32 %v2292, %v1827
        %v2297 = vrot.slane %v2293, 1
        %v2298 = vrot.slane %v2294, 1
        %v2299 = vsel %vm480, %v2297, %v2298
        %2300 = vrot.lane.b32.xlu0 %v2299, 126
        %v2301 = vpop.permute.xlu0 %2300
        %v2303 = vadd.f32 %v2291, %v2301
        %v2304 = vstv %s347
        %v2305 = vmul.f32 %v2304, %v1826
        %v2306 = vmul.f32 %v2304, %v1827
        %v2309 = vrot.slane %v2305, 2
        %v2310 = vrot.slane %v2306, 2
        %v2311 = vsel %vm515, %v2309, %v2310
        %v2313 = vadd.f32 %v2303, %v2311
        %v2314 = vstv %s348
        %v2315 = vmul.f32 %v2314, %v1826
        %v2316 = vmul.f32 %v2314, %v1827
        %v2319 = vrot.slane %v2315, 2
        %v2320 = vrot.slane %v2316, 2
        %v2321 = vsel %vm515, %v2319, %v2320
        %2322 = vrot.lane.b32.xlu0 %v2321, 127
        %v2323 = vpop.permute.xlu0 %2322
        %v2325 = vadd.f32 %v2313, %v2323
        %v2326 = vstv %s349
        %v2327 = vmul.f32 %v2326, %v1826
        %v2328 = vmul.f32 %v2326, %v1827
        %v2331 = vrot.slane %v2327, 2
        %v2332 = vrot.slane %v2328, 2
        %v2333 = vsel %vm515, %v2331, %v2332
        %2334 = vrot.lane.b32.xlu0 %v2333, 126
        %v2335 = vpop.permute.xlu0 %2334
        %v2337 = vadd.f32 %v2325, %v2335
        %v2338 = vstv %s377
        %v2339 = vmul.f32 %v2338, %v1826
        %v2340 = vadd.f32 %v1738, %v2339
        %v2341 = vstv %s378
        %v2342 = vmul.f32 %v2341, %v1826
        %2344 = vrot.lane.b32.xlu0 %v2342, 127
        %v2345 = vpop.permute.xlu0 %2344
        %v2347 = vadd.f32 %v2340, %v2345
        %v2348 = vstv %s379
        %v2349 = vmul.f32 %v2348, %v1826
        %2351 = vrot.lane.b32.xlu0 %v2349, 126
        %v2352 = vpop.permute.xlu0 %2351
        %v2354 = vadd.f32 %v2347, %v2352
        %v2355 = vstv %s380
        %v2356 = vmul.f32 %v2355, %v1826
        %v2357 = vmul.f32 %v2355, %v1827
        %v2360 = vrot.slane %v2356, 1
        %v2361 = vrot.slane %v2357, 1
        %v2362 = vsel %vm480, %v2360, %v2361
        %v2364 = vadd.f32 %v2354, %v2362
        %v2365 = vstv %s381
        %v2366 = vmul.f32 %v2365, %v1826
        %v2367 = vmul.f32 %v2365, %v1827
        %v2370 = vrot.slane %v2366, 1
        %v2371 = vrot.slane %v2367, 1
        %v2372 = vsel %vm480, %v2370, %v2371
        %2373 = vrot.lane.b32.xlu0 %v2372, 127
        %v2374 = vpop.permute.xlu0 %2373
        %v2376 = vadd.f32 %v2364, %v2374
        %v2377 = vstv %s382
        %v2378 = vmul.f32 %v2377, %v1826
        %v2379 = vmul.f32 %v2377, %v1827
        %v2382 = vrot.slane %v2378, 1
        %v2383 = vrot.slane %v2379, 1
        %v2384 = vsel %vm480, %v2382, %v2383
        %2385 = vrot.lane.b32.xlu0 %v2384, 126
        %v2386 = vpop.permute.xlu0 %2385
        %v2388 = vadd.f32 %v2376, %v2386
        %v2389 = vstv %s383
        %v2390 = vmul.f32 %v2389, %v1826
        %v2391 = vmul.f32 %v2389, %v1827
        %v2394 = vrot.slane %v2390, 2
        %v2395 = vrot.slane %v2391, 2
        %v2396 = vsel %vm515, %v2394, %v2395
        %v2398 = vadd.f32 %v2388, %v2396
        %v2399 = vstv %s384
        %v2400 = vmul.f32 %v2399, %v1826
        %v2401 = vmul.f32 %v2399, %v1827
        %v2404 = vrot.slane %v2400, 2
        %v2405 = vrot.slane %v2401, 2
        %v2406 = vsel %vm515, %v2404, %v2405
        %2407 = vrot.lane.b32.xlu0 %v2406, 127
        %v2408 = vpop.permute.xlu0 %2407
        %v2410 = vadd.f32 %v2398, %v2408
        %v2411 = vstv %s385
        %v2412 = vmul.f32 %v2411, %v1826
        %v2413 = vmul.f32 %v2411, %v1827
        %v2416 = vrot.slane %v2412, 2
        %v2417 = vrot.slane %v2413, 2
        %v2418 = vsel %vm515, %v2416, %v2417
        %2419 = vrot.lane.b32.xlu0 %v2418, 126
        %v2420 = vpop.permute.xlu0 %2419
        %v2422 = vadd.f32 %v2410, %v2420
        %v2423 = vstv %s413
        %v2424 = vmul.f32 %v2423, %v1826
        %v2425 = vadd.f32 %v1823, %v2424
        %v2426 = vstv %s414
        %v2427 = vmul.f32 %v2426, %v1826
        %2429 = vrot.lane.b32.xlu0 %v2427, 127
        %v2430 = vpop.permute.xlu0 %2429
        %v2432 = vadd.f32 %v2425, %v2430
        %v2433 = vstv %s415
        %v2434 = vmul.f32 %v2433, %v1826
        %2436 = vrot.lane.b32.xlu0 %v2434, 126
        %v2437 = vpop.permute.xlu0 %2436
        %v2439 = vadd.f32 %v2432, %v2437
        %v2440 = vstv %s416
        %v2441 = vmul.f32 %v2440, %v1826
        %v2442 = vmul.f32 %v2440, %v1827
        %v2445 = vrot.slane %v2441, 1
        %v2446 = vrot.slane %v2442, 1
        %v2447 = vsel %vm480, %v2445, %v2446
        %v2449 = vadd.f32 %v2439, %v2447
        %v2450 = vstv %s417
        %v2451 = vmul.f32 %v2450, %v1826
        %v2452 = vmul.f32 %v2450, %v1827
        %v2455 = vrot.slane %v2451, 1
        %v2456 = vrot.slane %v2452, 1
        %v2457 = vsel %vm480, %v2455, %v2456
        %2458 = vrot.lane.b32.xlu0 %v2457, 127
        %v2459 = vpop.permute.xlu0 %2458
        %v2461 = vadd.f32 %v2449, %v2459
        %v2462 = vstv %s418
        %v2463 = vmul.f32 %v2462, %v1826
        %v2464 = vmul.f32 %v2462, %v1827
        %v2467 = vrot.slane %v2463, 1
        %v2468 = vrot.slane %v2464, 1
        %v2469 = vsel %vm480, %v2467, %v2468
        %2470 = vrot.lane.b32.xlu0 %v2469, 126
        %v2471 = vpop.permute.xlu0 %2470
        %v2473 = vadd.f32 %v2461, %v2471
        %v2474 = vstv %s419
        %v2475 = vmul.f32 %v2474, %v1826
        %v2476 = vmul.f32 %v2474, %v1827
        %v2479 = vrot.slane %v2475, 2
        %v2480 = vrot.slane %v2476, 2
        %v2481 = vsel %vm515, %v2479, %v2480
        %v2483 = vadd.f32 %v2473, %v2481
        %v2484 = vstv %s420
        %v2485 = vmul.f32 %v2484, %v1826
        %v2486 = vmul.f32 %v2484, %v1827
        %v2489 = vrot.slane %v2485, 2
        %v2490 = vrot.slane %v2486, 2
        %v2491 = vsel %vm515, %v2489, %v2490
        %2492 = vrot.lane.b32.xlu0 %v2491, 127
        %v2493 = vpop.permute.xlu0 %2492
        %v2495 = vadd.f32 %v2483, %v2493
        %v2496 = vstv %s421
        %v2497 = vmul.f32 %v2496, %v1826
        %v2498 = vmul.f32 %v2496, %v1827
        %v2501 = vrot.slane %v2497, 2
        %v2502 = vrot.slane %v2498, 2
        %v2503 = vsel %vm515, %v2501, %v2502
        %2504 = vrot.lane.b32.xlu0 %v2503, 126
        %v2505 = vpop.permute.xlu0 %2504
        %v2507 = vadd.f32 %v2495, %v2505
        %s2508 = sadd.s32 %s142, 72
        %s2509 = scalar_lea.vmem %s140, %s2508
        %v2510 = vld [vmem:[%s2509] sm:$0xff]
        %v2511 = vld [vmem:[%s2509 + $0x8] sm:$0x3]
        %v2512 = vstv %s170
        %v2513 = vmul.f32 %v2512, %v2510
        %v2514 = vadd.f32 %v1912, %v2513
        %v2515 = vstv %s171
        %v2516 = vmul.f32 %v2515, %v2510
        %2518 = vrot.lane.b32.xlu0 %v2516, 127
        %v2519 = vpop.permute.xlu0 %2518
        %v2521 = vadd.f32 %v2514, %v2519
        %v2522 = vstv %s172
        %v2523 = vmul.f32 %v2522, %v2510
        %2525 = vrot.lane.b32.xlu0 %v2523, 126
        %v2526 = vpop.permute.xlu0 %2525
        %v2528 = vadd.f32 %v2521, %v2526
        %v2529 = vstv %s173
        %v2530 = vmul.f32 %v2529, %v2510
        %v2531 = vmul.f32 %v2529, %v2511
        %v2534 = vrot.slane %v2530, 1
        %v2535 = vrot.slane %v2531, 1
        %v2536 = vsel %vm480, %v2534, %v2535
        %v2538 = vadd.f32 %v2528, %v2536
        %v2539 = vstv %s174
        %v2540 = vmul.f32 %v2539, %v2510
        %v2541 = vmul.f32 %v2539, %v2511
        %v2544 = vrot.slane %v2540, 1
        %v2545 = vrot.slane %v2541, 1
        %v2546 = vsel %vm480, %v2544, %v2545
        %2547 = vrot.lane.b32.xlu0 %v2546, 127
        %v2548 = vpop.permute.xlu0 %2547
        %v2550 = vadd.f32 %v2538, %v2548
        %v2551 = vstv %s175
        %v2552 = vmul.f32 %v2551, %v2510
        %v2553 = vmul.f32 %v2551, %v2511
        %v2556 = vrot.slane %v2552, 1
        %v2557 = vrot.slane %v2553, 1
        %v2558 = vsel %vm480, %v2556, %v2557
        %2559 = vrot.lane.b32.xlu0 %v2558, 126
        %v2560 = vpop.permute.xlu0 %2559
        %v2562 = vadd.f32 %v2550, %v2560
        %v2563 = vstv %s176
        %v2564 = vmul.f32 %v2563, %v2510
        %v2565 = vmul.f32 %v2563, %v2511
        %v2568 = vrot.slane %v2564, 2
        %v2569 = vrot.slane %v2565, 2
        %v2570 = vsel %vm515, %v2568, %v2569
        %v2572 = vadd.f32 %v2562, %v2570
        %v2573 = vstv %s177
        %v2574 = vmul.f32 %v2573, %v2510
        %v2575 = vmul.f32 %v2573, %v2511
        %v2578 = vrot.slane %v2574, 2
        %v2579 = vrot.slane %v2575, 2
        %v2580 = vsel %vm515, %v2578, %v2579
        %2581 = vrot.lane.b32.xlu0 %v2580, 127
        %v2582 = vpop.permute.xlu0 %2581
        %v2584 = vadd.f32 %v2572, %v2582
        %v2585 = vstv %s178
        %v2586 = vmul.f32 %v2585, %v2510
        %v2587 = vmul.f32 %v2585, %v2511
        %v2590 = vrot.slane %v2586, 2
        %v2591 = vrot.slane %v2587, 2
        %v2592 = vsel %vm515, %v2590, %v2591
        %2593 = vrot.lane.b32.xlu0 %v2592, 126
        %v2594 = vpop.permute.xlu0 %2593
        %v2596 = vadd.f32 %v2584, %v2594
        %v2597 = vstv %s206
        %v2598 = vmul.f32 %v2597, %v2510
        %v2599 = vadd.f32 %v1997, %v2598
        %v2600 = vstv %s207
        %v2601 = vmul.f32 %v2600, %v2510
        %2603 = vrot.lane.b32.xlu0 %v2601, 127
        %v2604 = vpop.permute.xlu0 %2603
        %v2606 = vadd.f32 %v2599, %v2604
        %v2607 = vstv %s208
        %v2608 = vmul.f32 %v2607, %v2510
        %2610 = vrot.lane.b32.xlu0 %v2608, 126
        %v2611 = vpop.permute.xlu0 %2610
        %v2613 = vadd.f32 %v2606, %v2611
        %v2614 = vstv %s209
        %v2615 = vmul.f32 %v2614, %v2510
        %v2616 = vmul.f32 %v2614, %v2511
        %v2619 = vrot.slane %v2615, 1
        %v2620 = vrot.slane %v2616, 1
        %v2621 = vsel %vm480, %v2619, %v2620
        %v2623 = vadd.f32 %v2613, %v2621
        %v2624 = vstv %s210
        %v2625 = vmul.f32 %v2624, %v2510
        %v2626 = vmul.f32 %v2624, %v2511
        %v2629 = vrot.slane %v2625, 1
        %v2630 = vrot.slane %v2626, 1
        %v2631 = vsel %vm480, %v2629, %v2630
        %2632 = vrot.lane.b32.xlu0 %v2631, 127
        %v2633 = vpop.permute.xlu0 %2632
        %v2635 = vadd.f32 %v2623, %v2633
        %v2636 = vstv %s211
        %v2637 = vmul.f32 %v2636, %v2510
        %v2638 = vmul.f32 %v2636, %v2511
        %v2641 = vrot.slane %v2637, 1
        %v2642 = vrot.slane %v2638, 1
        %v2643 = vsel %vm480, %v2641, %v2642
        %2644 = vrot.lane.b32.xlu0 %v2643, 126
        %v2645 = vpop.permute.xlu0 %2644
        %v2647 = vadd.f32 %v2635, %v2645
        %v2648 = vstv %s212
        %v2649 = vmul.f32 %v2648, %v2510
        %v2650 = vmul.f32 %v2648, %v2511
        %v2653 = vrot.slane %v2649, 2
        %v2654 = vrot.slane %v2650, 2
        %v2655 = vsel %vm515, %v2653, %v2654
        %v2657 = vadd.f32 %v2647, %v2655
        %v2658 = vstv %s213
        %v2659 = vmul.f32 %v2658, %v2510
        %v2660 = vmul.f32 %v2658, %v2511
        %v2663 = vrot.slane %v2659, 2
        %v2664 = vrot.slane %v2660, 2
        %v2665 = vsel %vm515, %v2663, %v2664
        %2666 = vrot.lane.b32.xlu0 %v2665, 127
        %v2667 = vpop.permute.xlu0 %2666
        %v2669 = vadd.f32 %v2657, %v2667
        %v2670 = vstv %s214
        %v2671 = vmul.f32 %v2670, %v2510
        %v2672 = vmul.f32 %v2670, %v2511
        %v2675 = vrot.slane %v2671, 2
        %v2676 = vrot.slane %v2672, 2
        %v2677 = vsel %vm515, %v2675, %v2676
        %2678 = vrot.lane.b32.xlu0 %v2677, 126
        %v2679 = vpop.permute.xlu0 %2678
        %v2681 = vadd.f32 %v2669, %v2679
        %v2682 = vstv %s242
        %v2683 = vmul.f32 %v2682, %v2510
        %v2684 = vadd.f32 %v2082, %v2683
        %v2685 = vstv %s243
        %v2686 = vmul.f32 %v2685, %v2510
        %2688 = vrot.lane.b32.xlu0 %v2686, 127
        %v2689 = vpop.permute.xlu0 %2688
        %v2691 = vadd.f32 %v2684, %v2689
        %v2692 = vstv %s244
        %v2693 = vmul.f32 %v2692, %v2510
        %2695 = vrot.lane.b32.xlu0 %v2693, 126
        %v2696 = vpop.permute.xlu0 %2695
        %v2698 = vadd.f32 %v2691, %v2696
        %v2699 = vstv %s245
        %v2700 = vmul.f32 %v2699, %v2510
        %v2701 = vmul.f32 %v2699, %v2511
        %v2704 = vrot.slane %v2700, 1
        %v2705 = vrot.slane %v2701, 1
        %v2706 = vsel %vm480, %v2704, %v2705
        %v2708 = vadd.f32 %v2698, %v2706
        %v2709 = vstv %s246
        %v2710 = vmul.f32 %v2709, %v2510
        %v2711 = vmul.f32 %v2709, %v2511
        %v2714 = vrot.slane %v2710, 1
        %v2715 = vrot.slane %v2711, 1
        %v2716 = vsel %vm480, %v2714, %v2715
        %2717 = vrot.lane.b32.xlu0 %v2716, 127
        %v2718 = vpop.permute.xlu0 %2717
        %v2720 = vadd.f32 %v2708, %v2718
        %v2721 = vstv %s247
        %v2722 = vmul.f32 %v2721, %v2510
        %v2723 = vmul.f32 %v2721, %v2511
        %v2726 = vrot.slane %v2722, 1
        %v2727 = vrot.slane %v2723, 1
        %v2728 = vsel %vm480, %v2726, %v2727
        %2729 = vrot.lane.b32.xlu0 %v2728, 126
        %v2730 = vpop.permute.xlu0 %2729
        %v2732 = vadd.f32 %v2720, %v2730
        %v2733 = vstv %s248
        %v2734 = vmul.f32 %v2733, %v2510
        %v2735 = vmul.f32 %v2733, %v2511
        %v2738 = vrot.slane %v2734, 2
        %v2739 = vrot.slane %v2735, 2
        %v2740 = vsel %vm515, %v2738, %v2739
        %v2742 = vadd.f32 %v2732, %v2740
        %v2743 = vstv %s249
        %v2744 = vmul.f32 %v2743, %v2510
        %v2745 = vmul.f32 %v2743, %v2511
        %v2748 = vrot.slane %v2744, 2
        %v2749 = vrot.slane %v2745, 2
        %v2750 = vsel %vm515, %v2748, %v2749
        %2751 = vrot.lane.b32.xlu0 %v2750, 127
        %v2752 = vpop.permute.xlu0 %2751
        %v2754 = vadd.f32 %v2742, %v2752
        %v2755 = vstv %s250
        %v2756 = vmul.f32 %v2755, %v2510
        %v2757 = vmul.f32 %v2755, %v2511
        %v2760 = vrot.slane %v2756, 2
        %v2761 = vrot.slane %v2757, 2
        %v2762 = vsel %vm515, %v2760, %v2761
        %2763 = vrot.lane.b32.xlu0 %v2762, 126
        %v2764 = vpop.permute.xlu0 %2763
        %v2766 = vadd.f32 %v2754, %v2764
        %v2767 = vstv %s278
        %v2768 = vmul.f32 %v2767, %v2510
        %v2769 = vadd.f32 %v2167, %v2768
        %v2770 = vstv %s279
        %v2771 = vmul.f32 %v2770, %v2510
        %2773 = vrot.lane.b32.xlu0 %v2771, 127
        %v2774 = vpop.permute.xlu0 %2773
        %v2776 = vadd.f32 %v2769, %v2774
        %v2777 = vstv %s280
        %v2778 = vmul.f32 %v2777, %v2510
        %2780 = vrot.lane.b32.xlu0 %v2778, 126
        %v2781 = vpop.permute.xlu0 %2780
        %v2783 = vadd.f32 %v2776, %v2781
        %v2784 = vstv %s281
        %v2785 = vmul.f32 %v2784, %v2510
        %v2786 = vmul.f32 %v2784, %v2511
        %v2789 = vrot.slane %v2785, 1
        %v2790 = vrot.slane %v2786, 1
        %v2791 = vsel %vm480, %v2789, %v2790
        %v2793 = vadd.f32 %v2783, %v2791
        %v2794 = vstv %s282
        %v2795 = vmul.f32 %v2794, %v2510
        %v2796 = vmul.f32 %v2794, %v2511
        %v2799 = vrot.slane %v2795, 1
        %v2800 = vrot.slane %v2796, 1
        %v2801 = vsel %vm480, %v2799, %v2800
        %2802 = vrot.lane.b32.xlu0 %v2801, 127
        %v2803 = vpop.permute.xlu0 %2802
        %v2805 = vadd.f32 %v2793, %v2803
        %v2806 = vstv %s283
        %v2807 = vmul.f32 %v2806, %v2510
        %v2808 = vmul.f32 %v2806, %v2511
        %v2811 = vrot.slane %v2807, 1
        %v2812 = vrot.slane %v2808, 1
        %v2813 = vsel %vm480, %v2811, %v2812
        %2814 = vrot.lane.b32.xlu0 %v2813, 126
        %v2815 = vpop.permute.xlu0 %2814
        %v2817 = vadd.f32 %v2805, %v2815
        %v2818 = vstv %s284
        %v2819 = vmul.f32 %v2818, %v2510
        %v2820 = vmul.f32 %v2818, %v2511
        %v2823 = vrot.slane %v2819, 2
        %v2824 = vrot.slane %v2820, 2
        %v2825 = vsel %vm515, %v2823, %v2824
        %v2827 = vadd.f32 %v2817, %v2825
        %v2828 = vstv %s285
        %v2829 = vmul.f32 %v2828, %v2510
        %v2830 = vmul.f32 %v2828, %v2511
        %v2833 = vrot.slane %v2829, 2
        %v2834 = vrot.slane %v2830, 2
        %v2835 = vsel %vm515, %v2833, %v2834
        %2836 = vrot.lane.b32.xlu0 %v2835, 127
        %v2837 = vpop.permute.xlu0 %2836
        %v2839 = vadd.f32 %v2827, %v2837
        %v2840 = vstv %s286
        %v2841 = vmul.f32 %v2840, %v2510
        %v2842 = vmul.f32 %v2840, %v2511
        %v2845 = vrot.slane %v2841, 2
        %v2846 = vrot.slane %v2842, 2
        %v2847 = vsel %vm515, %v2845, %v2846
        %2848 = vrot.lane.b32.xlu0 %v2847, 126
        %v2849 = vpop.permute.xlu0 %2848
        %v2851 = vadd.f32 %v2839, %v2849
        %v2852 = vstv %s314
        %v2853 = vmul.f32 %v2852, %v2510
        %v2854 = vadd.f32 %v2252, %v2853
        %v2855 = vstv %s315
        %v2856 = vmul.f32 %v2855, %v2510
        %2858 = vrot.lane.b32.xlu0 %v2856, 127
        %v2859 = vpop.permute.xlu0 %2858
        %v2861 = vadd.f32 %v2854, %v2859
        %v2862 = vstv %s316
        %v2863 = vmul.f32 %v2862, %v2510
        %2865 = vrot.lane.b32.xlu0 %v2863, 126
        %v2866 = vpop.permute.xlu0 %2865
        %v2868 = vadd.f32 %v2861, %v2866
        %v2869 = vstv %s317
        %v2870 = vmul.f32 %v2869, %v2510
        %v2871 = vmul.f32 %v2869, %v2511
        %v2874 = vrot.slane %v2870, 1
        %v2875 = vrot.slane %v2871, 1
        %v2876 = vsel %vm480, %v2874, %v2875
        %v2878 = vadd.f32 %v2868, %v2876
        %v2879 = vstv %s318
        %v2880 = vmul.f32 %v2879, %v2510
        %v2881 = vmul.f32 %v2879, %v2511
        %v2884 = vrot.slane %v2880, 1
        %v2885 = vrot.slane %v2881, 1
        %v2886 = vsel %vm480, %v2884, %v2885
        %2887 = vrot.lane.b32.xlu0 %v2886, 127
        %v2888 = vpop.permute.xlu0 %2887
        %v2890 = vadd.f32 %v2878, %v2888
        %v2891 = vstv %s319
        %v2892 = vmul.f32 %v2891, %v2510
        %v2893 = vmul.f32 %v2891, %v2511
        %v2896 = vrot.slane %v2892, 1
        %v2897 = vrot.slane %v2893, 1
        %v2898 = vsel %vm480, %v2896, %v2897
        %2899 = vrot.lane.b32.xlu0 %v2898, 126
        %v2900 = vpop.permute.xlu0 %2899
        %v2902 = vadd.f32 %v2890, %v2900
        %v2903 = vstv %s320
        %v2904 = vmul.f32 %v2903, %v2510
        %v2905 = vmul.f32 %v2903, %v2511
        %v2908 = vrot.slane %v2904, 2
        %v2909 = vrot.slane %v2905, 2
        %v2910 = vsel %vm515, %v2908, %v2909
        %v2912 = vadd.f32 %v2902, %v2910
        %v2913 = vstv %s321
        %v2914 = vmul.f32 %v2913, %v2510
        %v2915 = vmul.f32 %v2913, %v2511
        %v2918 = vrot.slane %v2914, 2
        %v2919 = vrot.slane %v2915, 2
        %v2920 = vsel %vm515, %v2918, %v2919
        %2921 = vrot.lane.b32.xlu0 %v2920, 127
        %v2922 = vpop.permute.xlu0 %2921
        %v2924 = vadd.f32 %v2912, %v2922
        %v2925 = vstv %s322
        %v2926 = vmul.f32 %v2925, %v2510
        %v2927 = vmul.f32 %v2925, %v2511
        %v2930 = vrot.slane %v2926, 2
        %v2931 = vrot.slane %v2927, 2
        %v2932 = vsel %vm515, %v2930, %v2931
        %2933 = vrot.lane.b32.xlu0 %v2932, 126
        %v2934 = vpop.permute.xlu0 %2933
        %v2936 = vadd.f32 %v2924, %v2934
        %v2937 = vstv %s350
        %v2938 = vmul.f32 %v2937, %v2510
        %v2939 = vadd.f32 %v2337, %v2938
        %v2940 = vstv %s351
        %v2941 = vmul.f32 %v2940, %v2510
        %2943 = vrot.lane.b32.xlu0 %v2941, 127
        %v2944 = vpop.permute.xlu0 %2943
        %v2946 = vadd.f32 %v2939, %v2944
        %v2947 = vstv %s352
        %v2948 = vmul.f32 %v2947, %v2510
        %2950 = vrot.lane.b32.xlu0 %v2948, 126
        %v2951 = vpop.permute.xlu0 %2950
        %v2953 = vadd.f32 %v2946, %v2951
        %v2954 = vstv %s353
        %v2955 = vmul.f32 %v2954, %v2510
        %v2956 = vmul.f32 %v2954, %v2511
        %v2959 = vrot.slane %v2955, 1
        %v2960 = vrot.slane %v2956, 1
        %v2961 = vsel %vm480, %v2959, %v2960
        %v2963 = vadd.f32 %v2953, %v2961
        %v2964 = vstv %s354
        %v2965 = vmul.f32 %v2964, %v2510
        %v2966 = vmul.f32 %v2964, %v2511
        %v2969 = vrot.slane %v2965, 1
        %v2970 = vrot.slane %v2966, 1
        %v2971 = vsel %vm480, %v2969, %v2970
        %2972 = vrot.lane.b32.xlu0 %v2971, 127
        %v2973 = vpop.permute.xlu0 %2972
        %v2975 = vadd.f32 %v2963, %v2973
        %v2976 = vstv %s355
        %v2977 = vmul.f32 %v2976, %v2510
        %v2978 = vmul.f32 %v2976, %v2511
        %v2981 = vrot.slane %v2977, 1
        %v2982 = vrot.slane %v2978, 1
        %v2983 = vsel %vm480, %v2981, %v2982
        %2984 = vrot.lane.b32.xlu0 %v2983, 126
        %v2985 = vpop.permute.xlu0 %2984
        %v2987 = vadd.f32 %v2975, %v2985
        %v2988 = vstv %s356
        %v2989 = vmul.f32 %v2988, %v2510
        %v2990 = vmul.f32 %v2988, %v2511
        %v2993 = vrot.slane %v2989, 2
        %v2994 = vrot.slane %v2990, 2
        %v2995 = vsel %vm515, %v2993, %v2994
        %v2997 = vadd.f32 %v2987, %v2995
        %v2998 = vstv %s357
        %v2999 = vmul.f32 %v2998, %v2510
        %v3000 = vmul.f32 %v2998, %v2511
        %v3003 = vrot.slane %v2999, 2
        %v3004 = vrot.slane %v3000, 2
        %v3005 = vsel %vm515, %v3003, %v3004
        %3006 = vrot.lane.b32.xlu0 %v3005, 127
        %v3007 = vpop.permute.xlu0 %3006
        %v3009 = vadd.f32 %v2997, %v3007
        %v3010 = vstv %s358
        %v3011 = vmul.f32 %v3010, %v2510
        %v3012 = vmul.f32 %v3010, %v2511
        %v3015 = vrot.slane %v3011, 2
        %v3016 = vrot.slane %v3012, 2
        %v3017 = vsel %vm515, %v3015, %v3016
        %3018 = vrot.lane.b32.xlu0 %v3017, 126
        %v3019 = vpop.permute.xlu0 %3018
        %v3021 = vadd.f32 %v3009, %v3019
        %v3022 = vstv %s386
        %v3023 = vmul.f32 %v3022, %v2510
        %v3024 = vadd.f32 %v2422, %v3023
        %v3025 = vstv %s387
        %v3026 = vmul.f32 %v3025, %v2510
        %3028 = vrot.lane.b32.xlu0 %v3026, 127
        %v3029 = vpop.permute.xlu0 %3028
        %v3031 = vadd.f32 %v3024, %v3029
        %v3032 = vstv %s388
        %v3033 = vmul.f32 %v3032, %v2510
        %3035 = vrot.lane.b32.xlu0 %v3033, 126
        %v3036 = vpop.permute.xlu0 %3035
        %v3038 = vadd.f32 %v3031, %v3036
        %v3039 = vstv %s389
        %v3040 = vmul.f32 %v3039, %v2510
        %v3041 = vmul.f32 %v3039, %v2511
        %v3044 = vrot.slane %v3040, 1
        %v3045 = vrot.slane %v3041, 1
        %v3046 = vsel %vm480, %v3044, %v3045
        %v3048 = vadd.f32 %v3038, %v3046
        %v3049 = vstv %s390
        %v3050 = vmul.f32 %v3049, %v2510
        %v3051 = vmul.f32 %v3049, %v2511
        %v3054 = vrot.slane %v3050, 1
        %v3055 = vrot.slane %v3051, 1
        %v3056 = vsel %vm480, %v3054, %v3055
        %3057 = vrot.lane.b32.xlu0 %v3056, 127
        %v3058 = vpop.permute.xlu0 %3057
        %v3060 = vadd.f32 %v3048, %v3058
        %v3061 = vstv %s391
        %v3062 = vmul.f32 %v3061, %v2510
        %v3063 = vmul.f32 %v3061, %v2511
        %v3066 = vrot.slane %v3062, 1
        %v3067 = vrot.slane %v3063, 1
        %v3068 = vsel %vm480, %v3066, %v3067
        %3069 = vrot.lane.b32.xlu0 %v3068, 126
        %v3070 = vpop.permute.xlu0 %3069
        %v3072 = vadd.f32 %v3060, %v3070
        %v3073 = vstv %s392
        %v3074 = vmul.f32 %v3073, %v2510
        %v3075 = vmul.f32 %v3073, %v2511
        %v3078 = vrot.slane %v3074, 2
        %v3079 = vrot.slane %v3075, 2
        %v3080 = vsel %vm515, %v3078, %v3079
        %v3082 = vadd.f32 %v3072, %v3080
        %v3083 = vstv %s393
        %v3084 = vmul.f32 %v3083, %v2510
        %v3085 = vmul.f32 %v3083, %v2511
        %v3088 = vrot.slane %v3084, 2
        %v3089 = vrot.slane %v3085, 2
        %v3090 = vsel %vm515, %v3088, %v3089
        %3091 = vrot.lane.b32.xlu0 %v3090, 127
        %v3092 = vpop.permute.xlu0 %3091
        %v3094 = vadd.f32 %v3082, %v3092
        %v3095 = vstv %s394
        %v3096 = vmul.f32 %v3095, %v2510
        %v3097 = vmul.f32 %v3095, %v2511
        %v3100 = vrot.slane %v3096, 2
        %v3101 = vrot.slane %v3097, 2
        %v3102 = vsel %vm515, %v3100, %v3101
        %3103 = vrot.lane.b32.xlu0 %v3102, 126
        %v3104 = vpop.permute.xlu0 %3103
        %v3106 = vadd.f32 %v3094, %v3104
        %v3107 = vstv %s422
        %v3108 = vmul.f32 %v3107, %v2510
        %v3109 = vadd.f32 %v2507, %v3108
        %v3110 = vstv %s423
        %v3111 = vmul.f32 %v3110, %v2510
        %3113 = vrot.lane.b32.xlu0 %v3111, 127
        %v3114 = vpop.permute.xlu0 %3113
        %v3116 = vadd.f32 %v3109, %v3114
        %v3117 = vstv %s424
        %v3118 = vmul.f32 %v3117, %v2510
        %3120 = vrot.lane.b32.xlu0 %v3118, 126
        %v3121 = vpop.permute.xlu0 %3120
        %v3123 = vadd.f32 %v3116, %v3121
        %v3124 = vstv %s425
        %v3125 = vmul.f32 %v3124, %v2510
        %v3126 = vmul.f32 %v3124, %v2511
        %v3129 = vrot.slane %v3125, 1
        %v3130 = vrot.slane %v3126, 1
        %v3131 = vsel %vm480, %v3129, %v3130
        %v3133 = vadd.f32 %v3123, %v3131
        %v3134 = vstv %s426
        %v3135 = vmul.f32 %v3134, %v2510
        %v3136 = vmul.f32 %v3134, %v2511
        %v3139 = vrot.slane %v3135, 1
        %v3140 = vrot.slane %v3136, 1
        %v3141 = vsel %vm480, %v3139, %v3140
        %3142 = vrot.lane.b32.xlu0 %v3141, 127
        %v3143 = vpop.permute.xlu0 %3142
        %v3145 = vadd.f32 %v3133, %v3143
        %v3146 = vstv %s427
        %v3147 = vmul.f32 %v3146, %v2510
        %v3148 = vmul.f32 %v3146, %v2511
        %v3151 = vrot.slane %v3147, 1
        %v3152 = vrot.slane %v3148, 1
        %v3153 = vsel %vm480, %v3151, %v3152
        %3154 = vrot.lane.b32.xlu0 %v3153, 126
        %v3155 = vpop.permute.xlu0 %3154
        %v3157 = vadd.f32 %v3145, %v3155
        %v3158 = vstv %s428
        %v3159 = vmul.f32 %v3158, %v2510
        %v3160 = vmul.f32 %v3158, %v2511
        %v3163 = vrot.slane %v3159, 2
        %v3164 = vrot.slane %v3160, 2
        %v3165 = vsel %vm515, %v3163, %v3164
        %v3167 = vadd.f32 %v3157, %v3165
        %v3168 = vstv %s429
        %v3169 = vmul.f32 %v3168, %v2510
        %v3170 = vmul.f32 %v3168, %v2511
        %v3173 = vrot.slane %v3169, 2
        %v3174 = vrot.slane %v3170, 2
        %v3175 = vsel %vm515, %v3173, %v3174
        %3176 = vrot.lane.b32.xlu0 %v3175, 127
        %v3177 = vpop.permute.xlu0 %3176
        %v3179 = vadd.f32 %v3167, %v3177
        %v3180 = vstv %s430
        %v3181 = vmul.f32 %v3180, %v2510
        %v3182 = vmul.f32 %v3180, %v2511
        %v3185 = vrot.slane %v3181, 2
        %v3186 = vrot.slane %v3182, 2
        %v3187 = vsel %vm515, %v3185, %v3186
        %3188 = vrot.lane.b32.xlu0 %v3187, 126
        %v3189 = vpop.permute.xlu0 %3188
        %v3191 = vadd.f32 %v3179, %v3189
        %v3192 = vmin.f32 %v2596, 20.0
        %v3193 = vmul.f32 %v3192, 1.442695
        %v3194 = vpow.pop %v3193
        %v3195 = vadd.f32 %v3194, 2.0
        %v3196 = vmul.f32 %v3194, %v3195
        %v3197 = vadd.f32 %v3196, 2.0
        %v3198 = vrcp.pop %v3197
        %v3199 = vmul.f32 %v3197, %v3198
        %v3200 = vsub.f32 2.0, %v3199
        %v3201 = vmul.f32 %v3198, %v3200
        %v3202 = vmul.f32 %v3196, %v3201
        %v3203 = vmul.f32 %v2596, %v3202
        %vm3204 = vcmask 130048
        %3205 = vst.msk [vmem:[%s135] sm:$0xff] %vm3204, %v3203
        %v3206 = vmin.f32 %v2681, 20.0
        %v3207 = vmul.f32 %v3206, 1.442695
        %v3208 = vpow.pop %v3207
        %v3209 = vadd.f32 %v3208, 2.0
        %v3210 = vmul.f32 %v3208, %v3209
        %v3211 = vadd.f32 %v3210, 2.0
        %v3212 = vrcp.pop %v3211
        %v3213 = vmul.f32 %v3211, %v3212
        %v3214 = vsub.f32 2.0, %v3213
        %v3215 = vmul.f32 %v3212, %v3214
        %v3216 = vmul.f32 %v3210, %v3215
        %v3217 = vmul.f32 %v2681, %v3216
        %s3218 = sadd.s32 0, 16
        %s3219 = scalar_lea.vmem %s135, %s3218 [#allocation5]
        %3220 = vst.msk [vmem:[%s3219] sm:$0xff] %vm3204, %v3217
        %v3221 = vmin.f32 %v2766, 20.0
        %v3222 = vmul.f32 %v3221, 1.442695
        %v3223 = vpow.pop %v3222
        %v3224 = vadd.f32 %v3223, 2.0
        %v3225 = vmul.f32 %v3223, %v3224
        %v3226 = vadd.f32 %v3225, 2.0
        %v3227 = vrcp.pop %v3226
        %v3228 = vmul.f32 %v3226, %v3227
        %v3229 = vsub.f32 2.0, %v3228
        %v3230 = vmul.f32 %v3227, %v3229
        %v3231 = vmul.f32 %v3225, %v3230
        %v3232 = vmul.f32 %v2766, %v3231
        %s3233 = sadd.s32 0, 32
        %s3234 = scalar_lea.vmem %s135, %s3233 [#allocation5]
        %3235 = vst.msk [vmem:[%s3234] sm:$0xff] %vm3204, %v3232
        %v3236 = vmin.f32 %v2851, 20.0
        %v3237 = vmul.f32 %v3236, 1.442695
        %v3238 = vpow.pop %v3237
        %v3239 = vadd.f32 %v3238, 2.0
        %v3240 = vmul.f32 %v3238, %v3239
        %v3241 = vadd.f32 %v3240, 2.0
        %v3242 = vrcp.pop %v3241
        %v3243 = vmul.f32 %v3241, %v3242
        %v3244 = vsub.f32 2.0, %v3243
        %v3245 = vmul.f32 %v3242, %v3244
        %v3246 = vmul.f32 %v3240, %v3245
        %v3247 = vmul.f32 %v2851, %v3246
        %s3248 = sadd.s32 0, 48
        %s3249 = scalar_lea.vmem %s135, %s3248 [#allocation5]
        %3250 = vst.msk [vmem:[%s3249] sm:$0xff] %vm3204, %v3247
        %v3251 = vmin.f32 %v2936, 20.0
        %v3252 = vmul.f32 %v3251, 1.442695
        %v3253 = vpow.pop %v3252
        %v3254 = vadd.f32 %v3253, 2.0
        %v3255 = vmul.f32 %v3253, %v3254
        %v3256 = vadd.f32 %v3255, 2.0
        %v3257 = vrcp.pop %v3256
        %v3258 = vmul.f32 %v3256, %v3257
        %v3259 = vsub.f32 2.0, %v3258
        %v3260 = vmul.f32 %v3257, %v3259
        %v3261 = vmul.f32 %v3255, %v3260
        %v3262 = vmul.f32 %v2936, %v3261
        %s3263 = sadd.s32 0, 64
        %s3264 = scalar_lea.vmem %s135, %s3263 [#allocation5]
        %3265 = vst.msk [vmem:[%s3264] sm:$0xff] %vm3204, %v3262
        %v3266 = vmin.f32 %v3021, 20.0
        %v3267 = vmul.f32 %v3266, 1.442695
        %v3268 = vpow.pop %v3267
        %v3269 = vadd.f32 %v3268, 2.0
        %v3270 = vmul.f32 %v3268, %v3269
        %v3271 = vadd.f32 %v3270, 2.0
        %v3272 = vrcp.pop %v3271
        %v3273 = vmul.f32 %v3271, %v3272
        %v3274 = vsub.f32 2.0, %v3273
        %v3275 = vmul.f32 %v3272, %v3274
        %v3276 = vmul.f32 %v3270, %v3275
        %v3277 = vmul.f32 %v3021, %v3276
        %s3278 = sadd.s32 0, 80
        %s3279 = scalar_lea.vmem %s135, %s3278 [#allocation5]
        %3280 = vst.msk [vmem:[%s3279] sm:$0xff] %vm3204, %v3277
        %v3281 = vmin.f32 %v3106, 20.0
        %v3282 = vmul.f32 %v3281, 1.442695
        %v3283 = vpow.pop %v3282
        %v3284 = vadd.f32 %v3283, 2.0
        %v3285 = vmul.f32 %v3283, %v3284
        %v3286 = vadd.f32 %v3285, 2.0
        %v3287 = vrcp.pop %v3286
        %v3288 = vmul.f32 %v3286, %v3287
        %v3289 = vsub.f32 2.0, %v3288
        %v3290 = vmul.f32 %v3287, %v3289
        %v3291 = vmul.f32 %v3285, %v3290
        %v3292 = vmul.f32 %v3106, %v3291
        %s3293 = sadd.s32 0, 96
        %s3294 = scalar_lea.vmem %s135, %s3293 [#allocation5]
        %3295 = vst.msk [vmem:[%s3294] sm:$0xff] %vm3204, %v3292
        %v3296 = vmin.f32 %v3191, 20.0
        %v3297 = vmul.f32 %v3296, 1.442695
        %v3298 = vpow.pop %v3297
        %v3299 = vadd.f32 %v3298, 2.0
        %v3300 = vmul.f32 %v3298, %v3299
        %v3301 = vadd.f32 %v3300, 2.0
        %v3302 = vrcp.pop %v3301
        %v3303 = vmul.f32 %v3301, %v3302
        %v3304 = vsub.f32 2.0, %v3303
        %v3305 = vmul.f32 %v3302, %v3304
        %v3306 = vmul.f32 %v3300, %v3305
        %v3307 = vmul.f32 %v3191, %v3306
        %s3308 = sadd.s32 0, 112
        %s3309 = scalar_lea.vmem %s135, %s3308 [#allocation5]
        %3310 = vst.msk [vmem:[%s3309] sm:$0xff] %vm3204, %v3307
        %s3311 = sadd.s32 %s142, 8
        %s3312 = scalar_lea.vmem %s140, %s3311
        %v3313 = vld [vmem:[%s3312] sm:$0xff]
        %v3314 = vld [vmem:[%s3312 + $0x8] sm:$0x3]
        %v3315 = vmul.f32 %v458, %v3313
        %v3316 = vadd.f32 %v440, %v3315
        %v3317 = vmul.f32 %v461, %v3313
        %3319 = vrot.lane.b32.xlu0 %v3317, 127
        %v3320 = vpop.permute.xlu0 %3319
        %v3322 = vadd.f32 %v3316, %v3320
        %v3323 = vmul.f32 %v468, %v3313
        %3325 = vrot.lane.b32.xlu0 %v3323, 126
        %v3326 = vpop.permute.xlu0 %3325
        %v3328 = vadd.f32 %v3322, %v3326
        %v3329 = vmul.f32 %v475, %v3313
        %v3330 = vmul.f32 %v475, %v3314
        %v3333 = vrot.slane %v3329, 1
        %v3334 = vrot.slane %v3330, 1
        %v3335 = vsel %vm480, %v3333, %v3334
        %v3337 = vadd.f32 %v3328, %v3335
        %v3338 = vmul.f32 %v486, %v3313
        %v3339 = vmul.f32 %v486, %v3314
        %v3342 = vrot.slane %v3338, 1
        %v3343 = vrot.slane %v3339, 1
        %v3344 = vsel %vm480, %v3342, %v3343
        %3345 = vrot.lane.b32.xlu0 %v3344, 127
        %v3346 = vpop.permute.xlu0 %3345
        %v3348 = vadd.f32 %v3337, %v3346
        %v3349 = vmul.f32 %v498, %v3313
        %v3350 = vmul.f32 %v498, %v3314
        %v3353 = vrot.slane %v3349, 1
        %v3354 = vrot.slane %v3350, 1
        %v3355 = vsel %vm480, %v3353, %v3354
        %3356 = vrot.lane.b32.xlu0 %v3355, 126
        %v3357 = vpop.permute.xlu0 %3356
        %v3359 = vadd.f32 %v3348, %v3357
        %v3360 = vmul.f32 %v510, %v3313
        %v3361 = vmul.f32 %v510, %v3314
        %v3364 = vrot.slane %v3360, 2
        %v3365 = vrot.slane %v3361, 2
        %v3366 = vsel %vm515, %v3364, %v3365
        %v3368 = vadd.f32 %v3359, %v3366
        %v3369 = vmul.f32 %v521, %v3313
        %v3370 = vmul.f32 %v521, %v3314
        %v3373 = vrot.slane %v3369, 2
        %v3374 = vrot.slane %v3370, 2
        %v3375 = vsel %vm515, %v3373, %v3374
        %3376 = vrot.lane.b32.xlu0 %v3375, 127
        %v3377 = vpop.permute.xlu0 %3376
        %v3379 = vadd.f32 %v3368, %v3377
        %v3380 = vmul.f32 %v533, %v3313
        %v3381 = vmul.f32 %v533, %v3314
        %v3384 = vrot.slane %v3380, 2
        %v3385 = vrot.slane %v3381, 2
        %v3386 = vsel %vm515, %v3384, %v3385
        %3387 = vrot.lane.b32.xlu0 %v3386, 126
        %v3388 = vpop.permute.xlu0 %3387
        %v3390 = vadd.f32 %v3379, %v3388
        %v3391 = vmul.f32 %v545, %v3313
        %v3392 = vadd.f32 %v442, %v3391
        %v3393 = vmul.f32 %v548, %v3313
        %3395 = vrot.lane.b32.xlu0 %v3393, 127
        %v3396 = vpop.permute.xlu0 %3395
        %v3398 = vadd.f32 %v3392, %v3396
        %v3399 = vmul.f32 %v555, %v3313
        %3401 = vrot.lane.b32.xlu0 %v3399, 126
        %v3402 = vpop.permute.xlu0 %3401
        %v3404 = vadd.f32 %v3398, %v3402
        %v3405 = vmul.f32 %v562, %v3313
        %v3406 = vmul.f32 %v562, %v3314
        %v3409 = vrot.slane %v3405, 1
        %v3410 = vrot.slane %v3406, 1
        %v3411 = vsel %vm480, %v3409, %v3410
        %v3413 = vadd.f32 %v3404, %v3411
        %v3414 = vmul.f32 %v572, %v3313
        %v3415 = vmul.f32 %v572, %v3314
        %v3418 = vrot.slane %v3414, 1
        %v3419 = vrot.slane %v3415, 1
        %v3420 = vsel %vm480, %v3418, %v3419
        %3421 = vrot.lane.b32.xlu0 %v3420, 127
        %v3422 = vpop.permute.xlu0 %3421
        %v3424 = vadd.f32 %v3413, %v3422
        %v3425 = vmul.f32 %v584, %v3313
        %v3426 = vmul.f32 %v584, %v3314
        %v3429 = vrot.slane %v3425, 1
        %v3430 = vrot.slane %v3426, 1
        %v3431 = vsel %vm480, %v3429, %v3430
        %3432 = vrot.lane.b32.xlu0 %v3431, 126
        %v3433 = vpop.permute.xlu0 %3432
        %v3435 = vadd.f32 %v3424, %v3433
        %v3436 = vmul.f32 %v596, %v3313
        %v3437 = vmul.f32 %v596, %v3314
        %v3440 = vrot.slane %v3436, 2
        %v3441 = vrot.slane %v3437, 2
        %v3442 = vsel %vm515, %v3440, %v3441
        %v3444 = vadd.f32 %v3435, %v3442
        %v3445 = vmul.f32 %v606, %v3313
        %v3446 = vmul.f32 %v606, %v3314
        %v3449 = vrot.slane %v3445, 2
        %v3450 = vrot.slane %v3446, 2
        %v3451 = vsel %vm515, %v3449, %v3450
        %3452 = vrot.lane.b32.xlu0 %v3451, 127
        %v3453 = vpop.permute.xlu0 %3452
        %v3455 = vadd.f32 %v3444, %v3453
        %v3456 = vmul.f32 %v618, %v3313
        %v3457 = vmul.f32 %v618, %v3314
        %v3460 = vrot.slane %v3456, 2
        %v3461 = vrot.slane %v3457, 2
        %v3462 = vsel %vm515, %v3460, %v3461
        %3463 = vrot.lane.b32.xlu0 %v3462, 126
        %v3464 = vpop.permute.xlu0 %3463
        %v3466 = vadd.f32 %v3455, %v3464
        %v3467 = vmul.f32 %v630, %v3313
        %v3468 = vadd.f32 %v444, %v3467
        %v3469 = vmul.f32 %v633, %v3313
        %3471 = vrot.lane.b32.xlu0 %v3469, 127
        %v3472 = vpop.permute.xlu0 %3471
        %v3474 = vadd.f32 %v3468, %v3472
        %v3475 = vmul.f32 %v640, %v3313
        %3477 = vrot.lane.b32.xlu0 %v3475, 126
        %v3478 = vpop.permute.xlu0 %3477
        %v3480 = vadd.f32 %v3474, %v3478
        %v3481 = vmul.f32 %v647, %v3313
        %v3482 = vmul.f32 %v647, %v3314
        %v3485 = vrot.slane %v3481, 1
        %v3486 = vrot.slane %v3482, 1
        %v3487 = vsel %vm480, %v3485, %v3486
        %v3489 = vadd.f32 %v3480, %v3487
        %v3490 = vmul.f32 %v657, %v3313
        %v3491 = vmul.f32 %v657, %v3314
        %v3494 = vrot.slane %v3490, 1
        %v3495 = vrot.slane %v3491, 1
        %v3496 = vsel %vm480, %v3494, %v3495
        %3497 = vrot.lane.b32.xlu0 %v3496, 127
        %v3498 = vpop.permute.xlu0 %3497
        %v3500 = vadd.f32 %v3489, %v3498
        %v3501 = vmul.f32 %v669, %v3313
        %v3502 = vmul.f32 %v669, %v3314
        %v3505 = vrot.slane %v3501, 1
        %v3506 = vrot.slane %v3502, 1
        %v3507 = vsel %vm480, %v3505, %v3506
        %3508 = vrot.lane.b32.xlu0 %v3507, 126
        %v3509 = vpop.permute.xlu0 %3508
        %v3511 = vadd.f32 %v3500, %v3509
        %v3512 = vmul.f32 %v681, %v3313
        %v3513 = vmul.f32 %v681, %v3314
        %v3516 = vrot.slane %v3512, 2
        %v3517 = vrot.slane %v3513, 2
        %v3518 = vsel %vm515, %v3516, %v3517
        %v3520 = vadd.f32 %v3511, %v3518
        %v3521 = vmul.f32 %v691, %v3313
        %v3522 = vmul.f32 %v691, %v3314
        %v3525 = vrot.slane %v3521, 2
        %v3526 = vrot.slane %v3522, 2
        %v3527 = vsel %vm515, %v3525, %v3526
        %3528 = vrot.lane.b32.xlu0 %v3527, 127
        %v3529 = vpop.permute.xlu0 %3528
        %v3531 = vadd.f32 %v3520, %v3529
        %v3532 = vmul.f32 %v703, %v3313
        %v3533 = vmul.f32 %v703, %v3314
        %v3536 = vrot.slane %v3532, 2
        %v3537 = vrot.slane %v3533, 2
        %v3538 = vsel %vm515, %v3536, %v3537
        %3539 = vrot.lane.b32.xlu0 %v3538, 126
        %v3540 = vpop.permute.xlu0 %3539
        %v3542 = vadd.f32 %v3531, %v3540
        %v3543 = vmul.f32 %v715, %v3313
        %v3544 = vadd.f32 %v446, %v3543
        %v3545 = vmul.f32 %v718, %v3313
        %3547 = vrot.lane.b32.xlu0 %v3545, 127
        %v3548 = vpop.permute.xlu0 %3547
        %v3550 = vadd.f32 %v3544, %v3548
        %v3551 = vmul.f32 %v725, %v3313
        %3553 = vrot.lane.b32.xlu0 %v3551, 126
        %v3554 = vpop.permute.xlu0 %3553
        %v3556 = vadd.f32 %v3550, %v3554
        %v3557 = vmul.f32 %v732, %v3313
        %v3558 = vmul.f32 %v732, %v3314
        %v3561 = vrot.slane %v3557, 1
        %v3562 = vrot.slane %v3558, 1
        %v3563 = vsel %vm480, %v3561, %v3562
        %v3565 = vadd.f32 %v3556, %v3563
        %v3566 = vmul.f32 %v742, %v3313
        %v3567 = vmul.f32 %v742, %v3314
        %v3570 = vrot.slane %v3566, 1
        %v3571 = vrot.slane %v3567, 1
        %v3572 = vsel %vm480, %v3570, %v3571
        %3573 = vrot.lane.b32.xlu0 %v3572, 127
        %v3574 = vpop.permute.xlu0 %3573
        %v3576 = vadd.f32 %v3565, %v3574
        %v3577 = vmul.f32 %v754, %v3313
        %v3578 = vmul.f32 %v754, %v3314
        %v3581 = vrot.slane %v3577, 1
        %v3582 = vrot.slane %v3578, 1
        %v3583 = vsel %vm480, %v3581, %v3582
        %3584 = vrot.lane.b32.xlu0 %v3583, 126
        %v3585 = vpop.permute.xlu0 %3584
        %v3587 = vadd.f32 %v3576, %v3585
        %v3588 = vmul.f32 %v766, %v3313
        %v3589 = vmul.f32 %v766, %v3314
        %v3592 = vrot.slane %v3588, 2
        %v3593 = vrot.slane %v3589, 2
        %v3594 = vsel %vm515, %v3592, %v3593
        %v3596 = vadd.f32 %v3587, %v3594
        %v3597 = vmul.f32 %v776, %v3313
        %v3598 = vmul.f32 %v776, %v3314
        %v3601 = vrot.slane %v3597, 2
        %v3602 = vrot.slane %v3598, 2
        %v3603 = vsel %vm515, %v3601, %v3602
        %3604 = vrot.lane.b32.xlu0 %v3603, 127
        %v3605 = vpop.permute.xlu0 %3604
        %v3607 = vadd.f32 %v3596, %v3605
        %v3608 = vmul.f32 %v788, %v3313
        %v3609 = vmul.f32 %v788, %v3314
        %v3612 = vrot.slane %v3608, 2
        %v3613 = vrot.slane %v3609, 2
        %v3614 = vsel %vm515, %v3612, %v3613
        %3615 = vrot.lane.b32.xlu0 %v3614, 126
        %v3616 = vpop.permute.xlu0 %3615
        %v3618 = vadd.f32 %v3607, %v3616
        %v3619 = vmul.f32 %v800, %v3313
        %v3620 = vadd.f32 %v448, %v3619
        %v3621 = vmul.f32 %v803, %v3313
        %3623 = vrot.lane.b32.xlu0 %v3621, 127
        %v3624 = vpop.permute.xlu0 %3623
        %v3626 = vadd.f32 %v3620, %v3624
        %v3627 = vmul.f32 %v810, %v3313
        %3629 = vrot.lane.b32.xlu0 %v3627, 126
        %v3630 = vpop.permute.xlu0 %3629
        %v3632 = vadd.f32 %v3626, %v3630
        %v3633 = vmul.f32 %v817, %v3313
        %v3634 = vmul.f32 %v817, %v3314
        %v3637 = vrot.slane %v3633, 1
        %v3638 = vrot.slane %v3634, 1
        %v3639 = vsel %vm480, %v3637, %v3638
        %v3641 = vadd.f32 %v3632, %v3639
        %v3642 = vmul.f32 %v827, %v3313
        %v3643 = vmul.f32 %v827, %v3314
        %v3646 = vrot.slane %v3642, 1
        %v3647 = vrot.slane %v3643, 1
        %v3648 = vsel %vm480, %v3646, %v3647
        %3649 = vrot.lane.b32.xlu0 %v3648, 127
        %v3650 = vpop.permute.xlu0 %3649
        %v3652 = vadd.f32 %v3641, %v3650
        %v3653 = vmul.f32 %v839, %v3313
        %v3654 = vmul.f32 %v839, %v3314
        %v3657 = vrot.slane %v3653, 1
        %v3658 = vrot.slane %v3654, 1
        %v3659 = vsel %vm480, %v3657, %v3658
        %3660 = vrot.lane.b32.xlu0 %v3659, 126
        %v3661 = vpop.permute.xlu0 %3660
        %v3663 = vadd.f32 %v3652, %v3661
        %v3664 = vmul.f32 %v851, %v3313
        %v3665 = vmul.f32 %v851, %v3314
        %v3668 = vrot.slane %v3664, 2
        %v3669 = vrot.slane %v3665, 2
        %v3670 = vsel %vm515, %v3668, %v3669
        %v3672 = vadd.f32 %v3663, %v3670
        %v3673 = vmul.f32 %v861, %v3313
        %v3674 = vmul.f32 %v861, %v3314
        %v3677 = vrot.slane %v3673, 2
        %v3678 = vrot.slane %v3674, 2
        %v3679 = vsel %vm515, %v3677, %v3678
        %3680 = vrot.lane.b32.xlu0 %v3679, 127
        %v3681 = vpop.permute.xlu0 %3680
        %v3683 = vadd.f32 %v3672, %v3681
        %v3684 = vmul.f32 %v873, %v3313
        %v3685 = vmul.f32 %v873, %v3314
        %v3688 = vrot.slane %v3684, 2
        %v3689 = vrot.slane %v3685, 2
        %v3690 = vsel %vm515, %v3688, %v3689
        %3691 = vrot.lane.b32.xlu0 %v3690, 126
        %v3692 = vpop.permute.xlu0 %3691
        %v3694 = vadd.f32 %v3683, %v3692
        %v3695 = vmul.f32 %v885, %v3313
        %v3696 = vadd.f32 %v450, %v3695
        %v3697 = vmul.f32 %v888, %v3313
        %3699 = vrot.lane.b32.xlu0 %v3697, 127
        %v3700 = vpop.permute.xlu0 %3699
        %v3702 = vadd.f32 %v3696, %v3700
        %v3703 = vmul.f32 %v895, %v3313
        %3705 = vrot.lane.b32.xlu0 %v3703, 126
        %v3706 = vpop.permute.xlu0 %3705
        %v3708 = vadd.f32 %v3702, %v3706
        %v3709 = vmul.f32 %v902, %v3313
        %v3710 = vmul.f32 %v902, %v3314
        %v3713 = vrot.slane %v3709, 1
        %v3714 = vrot.slane %v3710, 1
        %v3715 = vsel %vm480, %v3713, %v3714
        %v3717 = vadd.f32 %v3708, %v3715
        %v3718 = vmul.f32 %v912, %v3313
        %v3719 = vmul.f32 %v912, %v3314
        %v3722 = vrot.slane %v3718, 1
        %v3723 = vrot.slane %v3719, 1
        %v3724 = vsel %vm480, %v3722, %v3723
        %3725 = vrot.lane.b32.xlu0 %v3724, 127
        %v3726 = vpop.permute.xlu0 %3725
        %v3728 = vadd.f32 %v3717, %v3726
        %v3729 = vmul.f32 %v924, %v3313
        %v3730 = vmul.f32 %v924, %v3314
        %v3733 = vrot.slane %v3729, 1
        %v3734 = vrot.slane %v3730, 1
        %v3735 = vsel %vm480, %v3733, %v3734
        %3736 = vrot.lane.b32.xlu0 %v3735, 126
        %v3737 = vpop.permute.xlu0 %3736
        %v3739 = vadd.f32 %v3728, %v3737
        %v3740 = vmul.f32 %v936, %v3313
        %v3741 = vmul.f32 %v936, %v3314
        %v3744 = vrot.slane %v3740, 2
        %v3745 = vrot.slane %v3741, 2
        %v3746 = vsel %vm515, %v3744, %v3745
        %v3748 = vadd.f32 %v3739, %v3746
        %v3749 = vmul.f32 %v946, %v3313
        %v3750 = vmul.f32 %v946, %v3314
        %v3753 = vrot.slane %v3749, 2
        %v3754 = vrot.slane %v3750, 2
        %v3755 = vsel %vm515, %v3753, %v3754
        %3756 = vrot.lane.b32.xlu0 %v3755, 127
        %v3757 = vpop.permute.xlu0 %3756
        %v3759 = vadd.f32 %v3748, %v3757
        %v3760 = vmul.f32 %v958, %v3313
        %v3761 = vmul.f32 %v958, %v3314
        %v3764 = vrot.slane %v3760, 2
        %v3765 = vrot.slane %v3761, 2
        %v3766 = vsel %vm515, %v3764, %v3765
        %3767 = vrot.lane.b32.xlu0 %v3766, 126
        %v3768 = vpop.permute.xlu0 %3767
        %v3770 = vadd.f32 %v3759, %v3768
        %v3771 = vmul.f32 %v970, %v3313
        %v3772 = vadd.f32 %v452, %v3771
        %v3773 = vmul.f32 %v973, %v3313
        %3775 = vrot.lane.b32.xlu0 %v3773, 127
        %v3776 = vpop.permute.xlu0 %3775
        %v3778 = vadd.f32 %v3772, %v3776
        %v3779 = vmul.f32 %v980, %v3313
        %3781 = vrot.lane.b32.xlu0 %v3779, 126
        %v3782 = vpop.permute.xlu0 %3781
        %v3784 = vadd.f32 %v3778, %v3782
        %v3785 = vmul.f32 %v987, %v3313
        %v3786 = vmul.f32 %v987, %v3314
        %v3789 = vrot.slane %v3785, 1
        %v3790 = vrot.slane %v3786, 1
        %v3791 = vsel %vm480, %v3789, %v3790
        %v3793 = vadd.f32 %v3784, %v3791
        %v3794 = vmul.f32 %v997, %v3313
        %v3795 = vmul.f32 %v997, %v3314
        %v3798 = vrot.slane %v3794, 1
        %v3799 = vrot.slane %v3795, 1
        %v3800 = vsel %vm480, %v3798, %v3799
        %3801 = vrot.lane.b32.xlu0 %v3800, 127
        %v3802 = vpop.permute.xlu0 %3801
        %v3804 = vadd.f32 %v3793, %v3802
        %v3805 = vmul.f32 %v1009, %v3313
        %v3806 = vmul.f32 %v1009, %v3314
        %v3809 = vrot.slane %v3805, 1
        %v3810 = vrot.slane %v3806, 1
        %v3811 = vsel %vm480, %v3809, %v3810
        %3812 = vrot.lane.b32.xlu0 %v3811, 126
        %v3813 = vpop.permute.xlu0 %3812
        %v3815 = vadd.f32 %v3804, %v3813
        %v3816 = vmul.f32 %v1021, %v3313
        %v3817 = vmul.f32 %v1021, %v3314
        %v3820 = vrot.slane %v3816, 2
        %v3821 = vrot.slane %v3817, 2
        %v3822 = vsel %vm515, %v3820, %v3821
        %v3824 = vadd.f32 %v3815, %v3822
        %v3825 = vmul.f32 %v1031, %v3313
        %v3826 = vmul.f32 %v1031, %v3314
        %v3829 = vrot.slane %v3825, 2
        %v3830 = vrot.slane %v3826, 2
        %v3831 = vsel %vm515, %v3829, %v3830
        %3832 = vrot.lane.b32.xlu0 %v3831, 127
        %v3833 = vpop.permute.xlu0 %3832
        %v3835 = vadd.f32 %v3824, %v3833
        %v3836 = vmul.f32 %v1043, %v3313
        %v3837 = vmul.f32 %v1043, %v3314
        %v3840 = vrot.slane %v3836, 2
        %v3841 = vrot.slane %v3837, 2
        %v3842 = vsel %vm515, %v3840, %v3841
        %3843 = vrot.lane.b32.xlu0 %v3842, 126
        %v3844 = vpop.permute.xlu0 %3843
        %v3846 = vadd.f32 %v3835, %v3844
        %v3847 = vmul.f32 %v1055, %v3313
        %v3848 = vadd.f32 %v454, %v3847
        %v3849 = vmul.f32 %v1058, %v3313
        %3851 = vrot.lane.b32.xlu0 %v3849, 127
        %v3852 = vpop.permute.xlu0 %3851
        %v3854 = vadd.f32 %v3848, %v3852
        %v3855 = vmul.f32 %v1065, %v3313
        %3857 = vrot.lane.b32.xlu0 %v3855, 126
        %v3858 = vpop.permute.xlu0 %3857
        %v3860 = vadd.f32 %v3854, %v3858
        %v3861 = vmul.f32 %v1072, %v3313
        %v3862 = vmul.f32 %v1072, %v3314
        %v3865 = vrot.slane %v3861, 1
        %v3866 = vrot.slane %v3862, 1
        %v3867 = vsel %vm480, %v3865, %v3866
        %v3869 = vadd.f32 %v3860, %v3867
        %v3870 = vmul.f32 %v1082, %v3313
        %v3871 = vmul.f32 %v1082, %v3314
        %v3874 = vrot.slane %v3870, 1
        %v3875 = vrot.slane %v3871, 1
        %v3876 = vsel %vm480, %v3874, %v3875
        %3877 = vrot.lane.b32.xlu0 %v3876, 127
        %v3878 = vpop.permute.xlu0 %3877
        %v3880 = vadd.f32 %v3869, %v3878
        %v3881 = vmul.f32 %v1094, %v3313
        %v3882 = vmul.f32 %v1094, %v3314
        %v3885 = vrot.slane %v3881, 1
        %v3886 = vrot.slane %v3882, 1
        %v3887 = vsel %vm480, %v3885, %v3886
        %3888 = vrot.lane.b32.xlu0 %v3887, 126
        %v3889 = vpop.permute.xlu0 %3888
        %v3891 = vadd.f32 %v3880, %v3889
        %v3892 = vmul.f32 %v1106, %v3313
        %v3893 = vmul.f32 %v1106, %v3314
        %v3896 = vrot.slane %v3892, 2
        %v3897 = vrot.slane %v3893, 2
        %v3898 = vsel %vm515, %v3896, %v3897
        %v3900 = vadd.f32 %v3891, %v3898
        %v3901 = vmul.f32 %v1116, %v3313
        %v3902 = vmul.f32 %v1116, %v3314
        %v3905 = vrot.slane %v3901, 2
        %v3906 = vrot.slane %v3902, 2
        %v3907 = vsel %vm515, %v3905, %v3906
        %3908 = vrot.lane.b32.xlu0 %v3907, 127
        %v3909 = vpop.permute.xlu0 %3908
        %v3911 = vadd.f32 %v3900, %v3909
        %v3912 = vmul.f32 %v1128, %v3313
        %v3913 = vmul.f32 %v1128, %v3314
        %v3916 = vrot.slane %v3912, 2
        %v3917 = vrot.slane %v3913, 2
        %v3918 = vsel %vm515, %v3916, %v3917
        %3919 = vrot.lane.b32.xlu0 %v3918, 126
        %v3920 = vpop.permute.xlu0 %3919
        %v3922 = vadd.f32 %v3911, %v3920
        %s3923 = sadd.s32 %s3311, 24
        %s3924 = scalar_lea.vmem %s140, %s3923
        %v3925 = vld [vmem:[%s3924] sm:$0xff]
        %v3926 = vld [vmem:[%s3924 + $0x8] sm:$0x3]
        %v3927 = vmul.f32 %v1144, %v3925
        %v3928 = vadd.f32 %v3390, %v3927
        %v3929 = vmul.f32 %v1147, %v3925
        %3931 = vrot.lane.b32.xlu0 %v3929, 127
        %v3932 = vpop.permute.xlu0 %3931
        %v3934 = vadd.f32 %v3928, %v3932
        %v3935 = vmul.f32 %v1154, %v3925
        %3937 = vrot.lane.b32.xlu0 %v3935, 126
        %v3938 = vpop.permute.xlu0 %3937
        %v3940 = vadd.f32 %v3934, %v3938
        %v3941 = vmul.f32 %v1161, %v3925
        %v3942 = vmul.f32 %v1161, %v3926
        %v3945 = vrot.slane %v3941, 1
        %v3946 = vrot.slane %v3942, 1
        %v3947 = vsel %vm480, %v3945, %v3946
        %v3949 = vadd.f32 %v3940, %v3947
        %v3950 = vmul.f32 %v1171, %v3925
        %v3951 = vmul.f32 %v1171, %v3926
        %v3954 = vrot.slane %v3950, 1
        %v3955 = vrot.slane %v3951, 1
        %v3956 = vsel %vm480, %v3954, %v3955
        %3957 = vrot.lane.b32.xlu0 %v3956, 127
        %v3958 = vpop.permute.xlu0 %3957
        %v3960 = vadd.f32 %v3949, %v3958
        %v3961 = vmul.f32 %v1183, %v3925
        %v3962 = vmul.f32 %v1183, %v3926
        %v3965 = vrot.slane %v3961, 1
        %v3966 = vrot.slane %v3962, 1
        %v3967 = vsel %vm480, %v3965, %v3966
        %3968 = vrot.lane.b32.xlu0 %v3967, 126
        %v3969 = vpop.permute.xlu0 %3968
        %v3971 = vadd.f32 %v3960, %v3969
        %v3972 = vmul.f32 %v1195, %v3925
        %v3973 = vmul.f32 %v1195, %v3926
        %v3976 = vrot.slane %v3972, 2
        %v3977 = vrot.slane %v3973, 2
        %v3978 = vsel %vm515, %v3976, %v3977
        %v3980 = vadd.f32 %v3971, %v3978
        %v3981 = vmul.f32 %v1205, %v3925
        %v3982 = vmul.f32 %v1205, %v3926
        %v3985 = vrot.slane %v3981, 2
        %v3986 = vrot.slane %v3982, 2
        %v3987 = vsel %vm515, %v3985, %v3986
        %3988 = vrot.lane.b32.xlu0 %v3987, 127
        %v3989 = vpop.permute.xlu0 %3988
        %v3991 = vadd.f32 %v3980, %v3989
        %v3992 = vmul.f32 %v1217, %v3925
        %v3993 = vmul.f32 %v1217, %v3926
        %v3996 = vrot.slane %v3992, 2
        %v3997 = vrot.slane %v3993, 2
        %v3998 = vsel %vm515, %v3996, %v3997
        %3999 = vrot.lane.b32.xlu0 %v3998, 126
        %v4000 = vpop.permute.xlu0 %3999
        %v4002 = vadd.f32 %v3991, %v4000
        %v4003 = vmul.f32 %v1229, %v3925
        %v4004 = vadd.f32 %v3466, %v4003
        %v4005 = vmul.f32 %v1232, %v3925
        %4007 = vrot.lane.b32.xlu0 %v4005, 127
        %v4008 = vpop.permute.xlu0 %4007
        %v4010 = vadd.f32 %v4004, %v4008
        %v4011 = vmul.f32 %v1239, %v3925
        %4013 = vrot.lane.b32.xlu0 %v4011, 126
        %v4014 = vpop.permute.xlu0 %4013
        %v4016 = vadd.f32 %v4010, %v4014
        %v4017 = vmul.f32 %v1246, %v3925
        %v4018 = vmul.f32 %v1246, %v3926
        %v4021 = vrot.slane %v4017, 1
        %v4022 = vrot.slane %v4018, 1
        %v4023 = vsel %vm480, %v4021, %v4022
        %v4025 = vadd.f32 %v4016, %v4023
        %v4026 = vmul.f32 %v1256, %v3925
        %v4027 = vmul.f32 %v1256, %v3926
        %v4030 = vrot.slane %v4026, 1
        %v4031 = vrot.slane %v4027, 1
        %v4032 = vsel %vm480, %v4030, %v4031
        %4033 = vrot.lane.b32.xlu0 %v4032, 127
        %v4034 = vpop.permute.xlu0 %4033
        %v4036 = vadd.f32 %v4025, %v4034
        %v4037 = vmul.f32 %v1268, %v3925
        %v4038 = vmul.f32 %v1268, %v3926
        %v4041 = vrot.slane %v4037, 1
        %v4042 = vrot.slane %v4038, 1
        %v4043 = vsel %vm480, %v4041, %v4042
        %4044 = vrot.lane.b32.xlu0 %v4043, 126
        %v4045 = vpop.permute.xlu0 %4044
        %v4047 = vadd.f32 %v4036, %v4045
        %v4048 = vmul.f32 %v1280, %v3925
        %v4049 = vmul.f32 %v1280, %v3926
        %v4052 = vrot.slane %v4048, 2
        %v4053 = vrot.slane %v4049, 2
        %v4054 = vsel %vm515, %v4052, %v4053
        %v4056 = vadd.f32 %v4047, %v4054
        %v4057 = vmul.f32 %v1290, %v3925
        %v4058 = vmul.f32 %v1290, %v3926
        %v4061 = vrot.slane %v4057, 2
        %v4062 = vrot.slane %v4058, 2
        %v4063 = vsel %vm515, %v4061, %v4062
        %4064 = vrot.lane.b32.xlu0 %v4063, 127
        %v4065 = vpop.permute.xlu0 %4064
        %v4067 = vadd.f32 %v4056, %v4065
        %v4068 = vmul.f32 %v1302, %v3925
        %v4069 = vmul.f32 %v1302, %v3926
        %v4072 = vrot.slane %v4068, 2
        %v4073 = vrot.slane %v4069, 2
        %v4074 = vsel %vm515, %v4072, %v4073
        %4075 = vrot.lane.b32.xlu0 %v4074, 126
        %v4076 = vpop.permute.xlu0 %4075
        %v4078 = vadd.f32 %v4067, %v4076
        %v4079 = vmul.f32 %v1314, %v3925
        %v4080 = vadd.f32 %v3542, %v4079
        %v4081 = vmul.f32 %v1317, %v3925
        %4083 = vrot.lane.b32.xlu0 %v4081, 127
        %v4084 = vpop.permute.xlu0 %4083
        %v4086 = vadd.f32 %v4080, %v4084
        %v4087 = vmul.f32 %v1324, %v3925
        %4089 = vrot.lane.b32.xlu0 %v4087, 126
        %v4090 = vpop.permute.xlu0 %4089
        %v4092 = vadd.f32 %v4086, %v4090
        %v4093 = vmul.f32 %v1331, %v3925
        %v4094 = vmul.f32 %v1331, %v3926
        %v4097 = vrot.slane %v4093, 1
        %v4098 = vrot.slane %v4094, 1
        %v4099 = vsel %vm480, %v4097, %v4098
        %v4101 = vadd.f32 %v4092, %v4099
        %v4102 = vmul.f32 %v1341, %v3925
        %v4103 = vmul.f32 %v1341, %v3926
        %v4106 = vrot.slane %v4102, 1
        %v4107 = vrot.slane %v4103, 1
        %v4108 = vsel %vm480, %v4106, %v4107
        %4109 = vrot.lane.b32.xlu0 %v4108, 127
        %v4110 = vpop.permute.xlu0 %4109
        %v4112 = vadd.f32 %v4101, %v4110
        %v4113 = vmul.f32 %v1353, %v3925
        %v4114 = vmul.f32 %v1353, %v3926
        %v4117 = vrot.slane %v4113, 1
        %v4118 = vrot.slane %v4114, 1
        %v4119 = vsel %vm480, %v4117, %v4118
        %4120 = vrot.lane.b32.xlu0 %v4119, 126
        %v4121 = vpop.permute.xlu0 %4120
        %v4123 = vadd.f32 %v4112, %v4121
        %v4124 = vmul.f32 %v1365, %v3925
        %v4125 = vmul.f32 %v1365, %v3926
        %v4128 = vrot.slane %v4124, 2
        %v4129 = vrot.slane %v4125, 2
        %v4130 = vsel %vm515, %v4128, %v4129
        %v4132 = vadd.f32 %v4123, %v4130
        %v4133 = vmul.f32 %v1375, %v3925
        %v4134 = vmul.f32 %v1375, %v3926
        %v4137 = vrot.slane %v4133, 2
        %v4138 = vrot.slane %v4134, 2
        %v4139 = vsel %vm515, %v4137, %v4138
        %4140 = vrot.lane.b32.xlu0 %v4139, 127
        %v4141 = vpop.permute.xlu0 %4140
        %v4143 = vadd.f32 %v4132, %v4141
        %v4144 = vmul.f32 %v1387, %v3925
        %v4145 = vmul.f32 %v1387, %v3926
        %v4148 = vrot.slane %v4144, 2
        %v4149 = vrot.slane %v4145, 2
        %v4150 = vsel %vm515, %v4148, %v4149
        %4151 = vrot.lane.b32.xlu0 %v4150, 126
        %v4152 = vpop.permute.xlu0 %4151
        %v4154 = vadd.f32 %v4143, %v4152
        %v4155 = vmul.f32 %v1399, %v3925
        %v4156 = vadd.f32 %v3618, %v4155
        %v4157 = vmul.f32 %v1402, %v3925
        %4159 = vrot.lane.b32.xlu0 %v4157, 127
        %v4160 = vpop.permute.xlu0 %4159
        %v4162 = vadd.f32 %v4156, %v4160
        %v4163 = vmul.f32 %v1409, %v3925
        %4165 = vrot.lane.b32.xlu0 %v4163, 126
        %v4166 = vpop.permute.xlu0 %4165
        %v4168 = vadd.f32 %v4162, %v4166
        %v4169 = vmul.f32 %v1416, %v3925
        %v4170 = vmul.f32 %v1416, %v3926
        %v4173 = vrot.slane %v4169, 1
        %v4174 = vrot.slane %v4170, 1
        %v4175 = vsel %vm480, %v4173, %v4174
        %v4177 = vadd.f32 %v4168, %v4175
        %v4178 = vmul.f32 %v1426, %v3925
        %v4179 = vmul.f32 %v1426, %v3926
        %v4182 = vrot.slane %v4178, 1
        %v4183 = vrot.slane %v4179, 1
        %v4184 = vsel %vm480, %v4182, %v4183
        %4185 = vrot.lane.b32.xlu0 %v4184, 127
        %v4186 = vpop.permute.xlu0 %4185
        %v4188 = vadd.f32 %v4177, %v4186
        %v4189 = vmul.f32 %v1438, %v3925
        %v4190 = vmul.f32 %v1438, %v3926
        %v4193 = vrot.slane %v4189, 1
        %v4194 = vrot.slane %v4190, 1
        %v4195 = vsel %vm480, %v4193, %v4194
        %4196 = vrot.lane.b32.xlu0 %v4195, 126
        %v4197 = vpop.permute.xlu0 %4196
        %v4199 = vadd.f32 %v4188, %v4197
        %v4200 = vmul.f32 %v1450, %v3925
        %v4201 = vmul.f32 %v1450, %v3926
        %v4204 = vrot.slane %v4200, 2
        %v4205 = vrot.slane %v4201, 2
        %v4206 = vsel %vm515, %v4204, %v4205
        %v4208 = vadd.f32 %v4199, %v4206
        %v4209 = vmul.f32 %v1460, %v3925
        %v4210 = vmul.f32 %v1460, %v3926
        %v4213 = vrot.slane %v4209, 2
        %v4214 = vrot.slane %v4210, 2
        %v4215 = vsel %vm515, %v4213, %v4214
        %4216 = vrot.lane.b32.xlu0 %v4215, 127
        %v4217 = vpop.permute.xlu0 %4216
        %v4219 = vadd.f32 %v4208, %v4217
        %v4220 = vmul.f32 %v1472, %v3925
        %v4221 = vmul.f32 %v1472, %v3926
        %v4224 = vrot.slane %v4220, 2
        %v4225 = vrot.slane %v4221, 2
        %v4226 = vsel %vm515, %v4224, %v4225
        %4227 = vrot.lane.b32.xlu0 %v4226, 126
        %v4228 = vpop.permute.xlu0 %4227
        %v4230 = vadd.f32 %v4219, %v4228
        %v4231 = vmul.f32 %v1484, %v3925
        %v4232 = vadd.f32 %v3694, %v4231
        %v4233 = vmul.f32 %v1487, %v3925
        %4235 = vrot.lane.b32.xlu0 %v4233, 127
        %v4236 = vpop.permute.xlu0 %4235
        %v4238 = vadd.f32 %v4232, %v4236
        %v4239 = vmul.f32 %v1494, %v3925
        %4241 = vrot.lane.b32.xlu0 %v4239, 126
        %v4242 = vpop.permute.xlu0 %4241
        %v4244 = vadd.f32 %v4238, %v4242
        %v4245 = vmul.f32 %v1501, %v3925
        %v4246 = vmul.f32 %v1501, %v3926
        %v4249 = vrot.slane %v4245, 1
        %v4250 = vrot.slane %v4246, 1
        %v4251 = vsel %vm480, %v4249, %v4250
        %v4253 = vadd.f32 %v4244, %v4251
        %v4254 = vmul.f32 %v1511, %v3925
        %v4255 = vmul.f32 %v1511, %v3926
        %v4258 = vrot.slane %v4254, 1
        %v4259 = vrot.slane %v4255, 1
        %v4260 = vsel %vm480, %v4258, %v4259
        %4261 = vrot.lane.b32.xlu0 %v4260, 127
        %v4262 = vpop.permute.xlu0 %4261
        %v4264 = vadd.f32 %v4253, %v4262
        %v4265 = vmul.f32 %v1523, %v3925
        %v4266 = vmul.f32 %v1523, %v3926
        %v4269 = vrot.slane %v4265, 1
        %v4270 = vrot.slane %v4266, 1
        %v4271 = vsel %vm480, %v4269, %v4270
        %4272 = vrot.lane.b32.xlu0 %v4271, 126
        %v4273 = vpop.permute.xlu0 %4272
        %v4275 = vadd.f32 %v4264, %v4273
        %v4276 = vmul.f32 %v1535, %v3925
        %v4277 = vmul.f32 %v1535, %v3926
        %v4280 = vrot.slane %v4276, 2
        %v4281 = vrot.slane %v4277, 2
        %v4282 = vsel %vm515, %v4280, %v4281
        %v4284 = vadd.f32 %v4275, %v4282
        %v4285 = vmul.f32 %v1545, %v3925
        %v4286 = vmul.f32 %v1545, %v3926
        %v4289 = vrot.slane %v4285, 2
        %v4290 = vrot.slane %v4286, 2
        %v4291 = vsel %vm515, %v4289, %v4290
        %4292 = vrot.lane.b32.xlu0 %v4291, 127
        %v4293 = vpop.permute.xlu0 %4292
        %v4295 = vadd.f32 %v4284, %v4293
        %v4296 = vmul.f32 %v1557, %v3925
        %v4297 = vmul.f32 %v1557, %v3926
        %v4300 = vrot.slane %v4296, 2
        %v4301 = vrot.slane %v4297, 2
        %v4302 = vsel %vm515, %v4300, %v4301
        %4303 = vrot.lane.b32.xlu0 %v4302, 126
        %v4304 = vpop.permute.xlu0 %4303
        %v4306 = vadd.f32 %v4295, %v4304
        %v4307 = vmul.f32 %v1569, %v3925
        %v4308 = vadd.f32 %v3770, %v4307
        %v4309 = vmul.f32 %v1572, %v3925
        %4311 = vrot.lane.b32.xlu0 %v4309, 127
        %v4312 = vpop.permute.xlu0 %4311
        %v4314 = vadd.f32 %v4308, %v4312
        %v4315 = vmul.f32 %v1579, %v3925
        %4317 = vrot.lane.b32.xlu0 %v4315, 126
        %v4318 = vpop.permute.xlu0 %4317
        %v4320 = vadd.f32 %v4314, %v4318
        %v4321 = vmul.f32 %v1586, %v3925
        %v4322 = vmul.f32 %v1586, %v3926
        %v4325 = vrot.slane %v4321, 1
        %v4326 = vrot.slane %v4322, 1
        %v4327 = vsel %vm480, %v4325, %v4326
        %v4329 = vadd.f32 %v4320, %v4327
        %v4330 = vmul.f32 %v1596, %v3925
        %v4331 = vmul.f32 %v1596, %v3926
        %v4334 = vrot.slane %v4330, 1
        %v4335 = vrot.slane %v4331, 1
        %v4336 = vsel %vm480, %v4334, %v4335
        %4337 = vrot.lane.b32.xlu0 %v4336, 127
        %v4338 = vpop.permute.xlu0 %4337
        %v4340 = vadd.f32 %v4329, %v4338
        %v4341 = vmul.f32 %v1608, %v3925
        %v4342 = vmul.f32 %v1608, %v3926
        %v4345 = vrot.slane %v4341, 1
        %v4346 = vrot.slane %v4342, 1
        %v4347 = vsel %vm480, %v4345, %v4346
        %4348 = vrot.lane.b32.xlu0 %v4347, 126
        %v4349 = vpop.permute.xlu0 %4348
        %v4351 = vadd.f32 %v4340, %v4349
        %v4352 = vmul.f32 %v1620, %v3925
        %v4353 = vmul.f32 %v1620, %v3926
        %v4356 = vrot.slane %v4352, 2
        %v4357 = vrot.slane %v4353, 2
        %v4358 = vsel %vm515, %v4356, %v4357
        %v4360 = vadd.f32 %v4351, %v4358
        %v4361 = vmul.f32 %v1630, %v3925
        %v4362 = vmul.f32 %v1630, %v3926
        %v4365 = vrot.slane %v4361, 2
        %v4366 = vrot.slane %v4362, 2
        %v4367 = vsel %vm515, %v4365, %v4366
        %4368 = vrot.lane.b32.xlu0 %v4367, 127
        %v4369 = vpop.permute.xlu0 %4368
        %v4371 = vadd.f32 %v4360, %v4369
        %v4372 = vmul.f32 %v1642, %v3925
        %v4373 = vmul.f32 %v1642, %v3926
        %v4376 = vrot.slane %v4372, 2
        %v4377 = vrot.slane %v4373, 2
        %v4378 = vsel %vm515, %v4376, %v4377
        %4379 = vrot.lane.b32.xlu0 %v4378, 126
        %v4380 = vpop.permute.xlu0 %4379
        %v4382 = vadd.f32 %v4371, %v4380
        %v4383 = vmul.f32 %v1654, %v3925
        %v4384 = vadd.f32 %v3846, %v4383
        %v4385 = vmul.f32 %v1657, %v3925
        %4387 = vrot.lane.b32.xlu0 %v4385, 127
        %v4388 = vpop.permute.xlu0 %4387
        %v4390 = vadd.f32 %v4384, %v4388
        %v4391 = vmul.f32 %v1664, %v3925
        %4393 = vrot.lane.b32.xlu0 %v4391, 126
        %v4394 = vpop.permute.xlu0 %4393
        %v4396 = vadd.f32 %v4390, %v4394
        %v4397 = vmul.f32 %v1671, %v3925
        %v4398 = vmul.f32 %v1671, %v3926
        %v4401 = vrot.slane %v4397, 1
        %v4402 = vrot.slane %v4398, 1
        %v4403 = vsel %vm480, %v4401, %v4402
        %v4405 = vadd.f32 %v4396, %v4403
        %v4406 = vmul.f32 %v1681, %v3925
        %v4407 = vmul.f32 %v1681, %v3926
        %v4410 = vrot.slane %v4406, 1
        %v4411 = vrot.slane %v4407, 1
        %v4412 = vsel %vm480, %v4410, %v4411
        %4413 = vrot.lane.b32.xlu0 %v4412, 127
        %v4414 = vpop.permute.xlu0 %4413
        %v4416 = vadd.f32 %v4405, %v4414
        %v4417 = vmul.f32 %v1693, %v3925
        %v4418 = vmul.f32 %v1693, %v3926
        %v4421 = vrot.slane %v4417, 1
        %v4422 = vrot.slane %v4418, 1
        %v4423 = vsel %vm480, %v4421, %v4422
        %4424 = vrot.lane.b32.xlu0 %v4423, 126
        %v4425 = vpop.permute.xlu0 %4424
        %v4427 = vadd.f32 %v4416, %v4425
        %v4428 = vmul.f32 %v1705, %v3925
        %v4429 = vmul.f32 %v1705, %v3926
        %v4432 = vrot.slane %v4428, 2
        %v4433 = vrot.slane %v4429, 2
        %v4434 = vsel %vm515, %v4432, %v4433
        %v4436 = vadd.f32 %v4427, %v4434
        %v4437 = vmul.f32 %v1715, %v3925
        %v4438 = vmul.f32 %v1715, %v3926
        %v4441 = vrot.slane %v4437, 2
        %v4442 = vrot.slane %v4438, 2
        %v4443 = vsel %vm515, %v4441, %v4442
        %4444 = vrot.lane.b32.xlu0 %v4443, 127
        %v4445 = vpop.permute.xlu0 %4444
        %v4447 = vadd.f32 %v4436, %v4445
        %v4448 = vmul.f32 %v1727, %v3925
        %v4449 = vmul.f32 %v1727, %v3926
        %v4452 = vrot.slane %v4448, 2
        %v4453 = vrot.slane %v4449, 2
        %v4454 = vsel %vm515, %v4452, %v4453
        %4455 = vrot.lane.b32.xlu0 %v4454, 126
        %v4456 = vpop.permute.xlu0 %4455
        %v4458 = vadd.f32 %v4447, %v4456
        %v4459 = vmul.f32 %v1739, %v3925
        %v4460 = vadd.f32 %v3922, %v4459
        %v4461 = vmul.f32 %v1742, %v3925
        %4463 = vrot.lane.b32.xlu0 %v4461, 127
        %v4464 = vpop.permute.xlu0 %4463
        %v4466 = vadd.f32 %v4460, %v4464
        %v4467 = vmul.f32 %v1749, %v3925
        %4469 = vrot.lane.b32.xlu0 %v4467, 126
        %v4470 = vpop.permute.xlu0 %4469
        %v4472 = vadd.f32 %v4466, %v4470
        %v4473 = vmul.f32 %v1756, %v3925
        %v4474 = vmul.f32 %v1756, %v3926
        %v4477 = vrot.slane %v4473, 1
        %v4478 = vrot.slane %v4474, 1
        %v4479 = vsel %vm480, %v4477, %v4478
        %v4481 = vadd.f32 %v4472, %v4479
        %v4482 = vmul.f32 %v1766, %v3925
        %v4483 = vmul.f32 %v1766, %v3926
        %v4486 = vrot.slane %v4482, 1
        %v4487 = vrot.slane %v4483, 1
        %v4488 = vsel %vm480, %v4486, %v4487
        %4489 = vrot.lane.b32.xlu0 %v4488, 127
        %v4490 = vpop.permute.xlu0 %4489
        %v4492 = vadd.f32 %v4481, %v4490
        %v4493 = vmul.f32 %v1778, %v3925
        %v4494 = vmul.f32 %v1778, %v3926
        %v4497 = vrot.slane %v4493, 1
        %v4498 = vrot.slane %v4494, 1
        %v4499 = vsel %vm480, %v4497, %v4498
        %4500 = vrot.lane.b32.xlu0 %v4499, 126
        %v4501 = vpop.permute.xlu0 %4500
        %v4503 = vadd.f32 %v4492, %v4501
        %v4504 = vmul.f32 %v1790, %v3925
        %v4505 = vmul.f32 %v1790, %v3926
        %v4508 = vrot.slane %v4504, 2
        %v4509 = vrot.slane %v4505, 2
        %v4510 = vsel %vm515, %v4508, %v4509
        %v4512 = vadd.f32 %v4503, %v4510
        %v4513 = vmul.f32 %v1800, %v3925
        %v4514 = vmul.f32 %v1800, %v3926
        %v4517 = vrot.slane %v4513, 2
        %v4518 = vrot.slane %v4514, 2
        %v4519 = vsel %vm515, %v4517, %v4518
        %4520 = vrot.lane.b32.xlu0 %v4519, 127
        %v4521 = vpop.permute.xlu0 %4520
        %v4523 = vadd.f32 %v4512, %v4521
        %v4524 = vmul.f32 %v1812, %v3925
        %v4525 = vmul.f32 %v1812, %v3926
        %v4528 = vrot.slane %v4524, 2
        %v4529 = vrot.slane %v4525, 2
        %v4530 = vsel %vm515, %v4528, %v4529
        %4531 = vrot.lane.b32.xlu0 %v4530, 126
        %v4532 = vpop.permute.xlu0 %4531
        %v4534 = vadd.f32 %v4523, %v4532
        %s4535 = sadd.s32 %s3311, 48
        %s4536 = scalar_lea.vmem %s140, %s4535
        %v4537 = vld [vmem:[%s4536] sm:$0xff]
        %v4538 = vld [vmem:[%s4536 + $0x8] sm:$0x3]
        %v4539 = vmul.f32 %v1828, %v4537
        %v4540 = vadd.f32 %v4002, %v4539
        %v4541 = vmul.f32 %v1831, %v4537
        %4543 = vrot.lane.b32.xlu0 %v4541, 127
        %v4544 = vpop.permute.xlu0 %4543
        %v4546 = vadd.f32 %v4540, %v4544
        %v4547 = vmul.f32 %v1838, %v4537
        %4549 = vrot.lane.b32.xlu0 %v4547, 126
        %v4550 = vpop.permute.xlu0 %4549
        %v4552 = vadd.f32 %v4546, %v4550
        %v4553 = vmul.f32 %v1845, %v4537
        %v4554 = vmul.f32 %v1845, %v4538
        %v4557 = vrot.slane %v4553, 1
        %v4558 = vrot.slane %v4554, 1
        %v4559 = vsel %vm480, %v4557, %v4558
        %v4561 = vadd.f32 %v4552, %v4559
        %v4562 = vmul.f32 %v1855, %v4537
        %v4563 = vmul.f32 %v1855, %v4538
        %v4566 = vrot.slane %v4562, 1
        %v4567 = vrot.slane %v4563, 1
        %v4568 = vsel %vm480, %v4566, %v4567
        %4569 = vrot.lane.b32.xlu0 %v4568, 127
        %v4570 = vpop.permute.xlu0 %4569
        %v4572 = vadd.f32 %v4561, %v4570
        %v4573 = vmul.f32 %v1867, %v4537
        %v4574 = vmul.f32 %v1867, %v4538
        %v4577 = vrot.slane %v4573, 1
        %v4578 = vrot.slane %v4574, 1
        %v4579 = vsel %vm480, %v4577, %v4578
        %4580 = vrot.lane.b32.xlu0 %v4579, 126
        %v4581 = vpop.permute.xlu0 %4580
        %v4583 = vadd.f32 %v4572, %v4581
        %v4584 = vmul.f32 %v1879, %v4537
        %v4585 = vmul.f32 %v1879, %v4538
        %v4588 = vrot.slane %v4584, 2
        %v4589 = vrot.slane %v4585, 2
        %v4590 = vsel %vm515, %v4588, %v4589
        %v4592 = vadd.f32 %v4583, %v4590
        %v4593 = vmul.f32 %v1889, %v4537
        %v4594 = vmul.f32 %v1889, %v4538
        %v4597 = vrot.slane %v4593, 2
        %v4598 = vrot.slane %v4594, 2
        %v4599 = vsel %vm515, %v4597, %v4598
        %4600 = vrot.lane.b32.xlu0 %v4599, 127
        %v4601 = vpop.permute.xlu0 %4600
        %v4603 = vadd.f32 %v4592, %v4601
        %v4604 = vmul.f32 %v1901, %v4537
        %v4605 = vmul.f32 %v1901, %v4538
        %v4608 = vrot.slane %v4604, 2
        %v4609 = vrot.slane %v4605, 2
        %v4610 = vsel %vm515, %v4608, %v4609
        %4611 = vrot.lane.b32.xlu0 %v4610, 126
        %v4612 = vpop.permute.xlu0 %4611
        %v4614 = vadd.f32 %v4603, %v4612
        %v4615 = vmul.f32 %v1913, %v4537
        %v4616 = vadd.f32 %v4078, %v4615
        %v4617 = vmul.f32 %v1916, %v4537
        %4619 = vrot.lane.b32.xlu0 %v4617, 127
        %v4620 = vpop.permute.xlu0 %4619
        %v4622 = vadd.f32 %v4616, %v4620
        %v4623 = vmul.f32 %v1923, %v4537
        %4625 = vrot.lane.b32.xlu0 %v4623, 126
        %v4626 = vpop.permute.xlu0 %4625
        %v4628 = vadd.f32 %v4622, %v4626
        %v4629 = vmul.f32 %v1930, %v4537
        %v4630 = vmul.f32 %v1930, %v4538
        %v4633 = vrot.slane %v4629, 1
        %v4634 = vrot.slane %v4630, 1
        %v4635 = vsel %vm480, %v4633, %v4634
        %v4637 = vadd.f32 %v4628, %v4635
        %v4638 = vmul.f32 %v1940, %v4537
        %v4639 = vmul.f32 %v1940, %v4538
        %v4642 = vrot.slane %v4638, 1
        %v4643 = vrot.slane %v4639, 1
        %v4644 = vsel %vm480, %v4642, %v4643
        %4645 = vrot.lane.b32.xlu0 %v4644, 127
        %v4646 = vpop.permute.xlu0 %4645
        %v4648 = vadd.f32 %v4637, %v4646
        %v4649 = vmul.f32 %v1952, %v4537
        %v4650 = vmul.f32 %v1952, %v4538
        %v4653 = vrot.slane %v4649, 1
        %v4654 = vrot.slane %v4650, 1
        %v4655 = vsel %vm480, %v4653, %v4654
        %4656 = vrot.lane.b32.xlu0 %v4655, 126
        %v4657 = vpop.permute.xlu0 %4656
        %v4659 = vadd.f32 %v4648, %v4657
        %v4660 = vmul.f32 %v1964, %v4537
        %v4661 = vmul.f32 %v1964, %v4538
        %v4664 = vrot.slane %v4660, 2
        %v4665 = vrot.slane %v4661, 2
        %v4666 = vsel %vm515, %v4664, %v4665
        %v4668 = vadd.f32 %v4659, %v4666
        %v4669 = vmul.f32 %v1974, %v4537
        %v4670 = vmul.f32 %v1974, %v4538
        %v4673 = vrot.slane %v4669, 2
        %v4674 = vrot.slane %v4670, 2
        %v4675 = vsel %vm515, %v4673, %v4674
        %4676 = vrot.lane.b32.xlu0 %v4675, 127
        %v4677 = vpop.permute.xlu0 %4676
        %v4679 = vadd.f32 %v4668, %v4677
        %v4680 = vmul.f32 %v1986, %v4537
        %v4681 = vmul.f32 %v1986, %v4538
        %v4684 = vrot.slane %v4680, 2
        %v4685 = vrot.slane %v4681, 2
        %v4686 = vsel %vm515, %v4684, %v4685
        %4687 = vrot.lane.b32.xlu0 %v4686, 126
        %v4688 = vpop.permute.xlu0 %4687
        %v4690 = vadd.f32 %v4679, %v4688
        %v4691 = vmul.f32 %v1998, %v4537
        %v4692 = vadd.f32 %v4154, %v4691
        %v4693 = vmul.f32 %v2001, %v4537
        %4695 = vrot.lane.b32.xlu0 %v4693, 127
        %v4696 = vpop.permute.xlu0 %4695
        %v4698 = vadd.f32 %v4692, %v4696
        %v4699 = vmul.f32 %v2008, %v4537
        %4701 = vrot.lane.b32.xlu0 %v4699, 126
        %v4702 = vpop.permute.xlu0 %4701
        %v4704 = vadd.f32 %v4698, %v4702
        %v4705 = vmul.f32 %v2015, %v4537
        %v4706 = vmul.f32 %v2015, %v4538
        %v4709 = vrot.slane %v4705, 1
        %v4710 = vrot.slane %v4706, 1
        %v4711 = vsel %vm480, %v4709, %v4710
        %v4713 = vadd.f32 %v4704, %v4711
        %v4714 = vmul.f32 %v2025, %v4537
        %v4715 = vmul.f32 %v2025, %v4538
        %v4718 = vrot.slane %v4714, 1
        %v4719 = vrot.slane %v4715, 1
        %v4720 = vsel %vm480, %v4718, %v4719
        %4721 = vrot.lane.b32.xlu0 %v4720, 127
        %v4722 = vpop.permute.xlu0 %4721
        %v4724 = vadd.f32 %v4713, %v4722
        %v4725 = vmul.f32 %v2037, %v4537
        %v4726 = vmul.f32 %v2037, %v4538
        %v4729 = vrot.slane %v4725, 1
        %v4730 = vrot.slane %v4726, 1
        %v4731 = vsel %vm480, %v4729, %v4730
        %4732 = vrot.lane.b32.xlu0 %v4731, 126
        %v4733 = vpop.permute.xlu0 %4732
        %v4735 = vadd.f32 %v4724, %v4733
        %v4736 = vmul.f32 %v2049, %v4537
        %v4737 = vmul.f32 %v2049, %v4538
        %v4740 = vrot.slane %v4736, 2
        %v4741 = vrot.slane %v4737, 2
        %v4742 = vsel %vm515, %v4740, %v4741
        %v4744 = vadd.f32 %v4735, %v4742
        %v4745 = vmul.f32 %v2059, %v4537
        %v4746 = vmul.f32 %v2059, %v4538
        %v4749 = vrot.slane %v4745, 2
        %v4750 = vrot.slane %v4746, 2
        %v4751 = vsel %vm515, %v4749, %v4750
        %4752 = vrot.lane.b32.xlu0 %v4751, 127
        %v4753 = vpop.permute.xlu0 %4752
        %v4755 = vadd.f32 %v4744, %v4753
        %v4756 = vmul.f32 %v2071, %v4537
        %v4757 = vmul.f32 %v2071, %v4538
        %v4760 = vrot.slane %v4756, 2
        %v4761 = vrot.slane %v4757, 2
        %v4762 = vsel %vm515, %v4760, %v4761
        %4763 = vrot.lane.b32.xlu0 %v4762, 126
        %v4764 = vpop.permute.xlu0 %4763
        %v4766 = vadd.f32 %v4755, %v4764
        %v4767 = vmul.f32 %v2083, %v4537
        %v4768 = vadd.f32 %v4230, %v4767
        %v4769 = vmul.f32 %v2086, %v4537
        %4771 = vrot.lane.b32.xlu0 %v4769, 127
        %v4772 = vpop.permute.xlu0 %4771
        %v4774 = vadd.f32 %v4768, %v4772
        %v4775 = vmul.f32 %v2093, %v4537
        %4777 = vrot.lane.b32.xlu0 %v4775, 126
        %v4778 = vpop.permute.xlu0 %4777
        %v4780 = vadd.f32 %v4774, %v4778
        %v4781 = vmul.f32 %v2100, %v4537
        %v4782 = vmul.f32 %v2100, %v4538
        %v4785 = vrot.slane %v4781, 1
        %v4786 = vrot.slane %v4782, 1
        %v4787 = vsel %vm480, %v4785, %v4786
        %v4789 = vadd.f32 %v4780, %v4787
        %v4790 = vmul.f32 %v2110, %v4537
        %v4791 = vmul.f32 %v2110, %v4538
        %v4794 = vrot.slane %v4790, 1
        %v4795 = vrot.slane %v4791, 1
        %v4796 = vsel %vm480, %v4794, %v4795
        %4797 = vrot.lane.b32.xlu0 %v4796, 127
        %v4798 = vpop.permute.xlu0 %4797
        %v4800 = vadd.f32 %v4789, %v4798
        %v4801 = vmul.f32 %v2122, %v4537
        %v4802 = vmul.f32 %v2122, %v4538
        %v4805 = vrot.slane %v4801, 1
        %v4806 = vrot.slane %v4802, 1
        %v4807 = vsel %vm480, %v4805, %v4806
        %4808 = vrot.lane.b32.xlu0 %v4807, 126
        %v4809 = vpop.permute.xlu0 %4808
        %v4811 = vadd.f32 %v4800, %v4809
        %v4812 = vmul.f32 %v2134, %v4537
        %v4813 = vmul.f32 %v2134, %v4538
        %v4816 = vrot.slane %v4812, 2
        %v4817 = vrot.slane %v4813, 2
        %v4818 = vsel %vm515, %v4816, %v4817
        %v4820 = vadd.f32 %v4811, %v4818
        %v4821 = vmul.f32 %v2144, %v4537
        %v4822 = vmul.f32 %v2144, %v4538
        %v4825 = vrot.slane %v4821, 2
        %v4826 = vrot.slane %v4822, 2
        %v4827 = vsel %vm515, %v4825, %v4826
        %4828 = vrot.lane.b32.xlu0 %v4827, 127
        %v4829 = vpop.permute.xlu0 %4828
        %v4831 = vadd.f32 %v4820, %v4829
        %v4832 = vmul.f32 %v2156, %v4537
        %v4833 = vmul.f32 %v2156, %v4538
        %v4836 = vrot.slane %v4832, 2
        %v4837 = vrot.slane %v4833, 2
        %v4838 = vsel %vm515, %v4836, %v4837
        %4839 = vrot.lane.b32.xlu0 %v4838, 126
        %v4840 = vpop.permute.xlu0 %4839
        %v4842 = vadd.f32 %v4831, %v4840
        %v4843 = vmul.f32 %v2168, %v4537
        %v4844 = vadd.f32 %v4306, %v4843
        %v4845 = vmul.f32 %v2171, %v4537
        %4847 = vrot.lane.b32.xlu0 %v4845, 127
        %v4848 = vpop.permute.xlu0 %4847
        %v4850 = vadd.f32 %v4844, %v4848
        %v4851 = vmul.f32 %v2178, %v4537
        %4853 = vrot.lane.b32.xlu0 %v4851, 126
        %v4854 = vpop.permute.xlu0 %4853
        %v4856 = vadd.f32 %v4850, %v4854
        %v4857 = vmul.f32 %v2185, %v4537
        %v4858 = vmul.f32 %v2185, %v4538
        %v4861 = vrot.slane %v4857, 1
        %v4862 = vrot.slane %v4858, 1
        %v4863 = vsel %vm480, %v4861, %v4862
        %v4865 = vadd.f32 %v4856, %v4863
        %v4866 = vmul.f32 %v2195, %v4537
        %v4867 = vmul.f32 %v2195, %v4538
        %v4870 = vrot.slane %v4866, 1
        %v4871 = vrot.slane %v4867, 1
        %v4872 = vsel %vm480, %v4870, %v4871
        %4873 = vrot.lane.b32.xlu0 %v4872, 127
        %v4874 = vpop.permute.xlu0 %4873
        %v4876 = vadd.f32 %v4865, %v4874
        %v4877 = vmul.f32 %v2207, %v4537
        %v4878 = vmul.f32 %v2207, %v4538
        %v4881 = vrot.slane %v4877, 1
        %v4882 = vrot.slane %v4878, 1
        %v4883 = vsel %vm480, %v4881, %v4882
        %4884 = vrot.lane.b32.xlu0 %v4883, 126
        %v4885 = vpop.permute.xlu0 %4884
        %v4887 = vadd.f32 %v4876, %v4885
        %v4888 = vmul.f32 %v2219, %v4537
        %v4889 = vmul.f32 %v2219, %v4538
        %v4892 = vrot.slane %v4888, 2
        %v4893 = vrot.slane %v4889, 2
        %v4894 = vsel %vm515, %v4892, %v4893
        %v4896 = vadd.f32 %v4887, %v4894
        %v4897 = vmul.f32 %v2229, %v4537
        %v4898 = vmul.f32 %v2229, %v4538
        %v4901 = vrot.slane %v4897, 2
        %v4902 = vrot.slane %v4898, 2
        %v4903 = vsel %vm515, %v4901, %v4902
        %4904 = vrot.lane.b32.xlu0 %v4903, 127
        %v4905 = vpop.permute.xlu0 %4904
        %v4907 = vadd.f32 %v4896, %v4905
        %v4908 = vmul.f32 %v2241, %v4537
        %v4909 = vmul.f32 %v2241, %v4538
        %v4912 = vrot.slane %v4908, 2
        %v4913 = vrot.slane %v4909, 2
        %v4914 = vsel %vm515, %v4912, %v4913
        %4915 = vrot.lane.b32.xlu0 %v4914, 126
        %v4916 = vpop.permute.xlu0 %4915
        %v4918 = vadd.f32 %v4907, %v4916
        %v4919 = vmul.f32 %v2253, %v4537
        %v4920 = vadd.f32 %v4382, %v4919
        %v4921 = vmul.f32 %v2256, %v4537
        %4923 = vrot.lane.b32.xlu0 %v4921, 127
        %v4924 = vpop.permute.xlu0 %4923
        %v4926 = vadd.f32 %v4920, %v4924
        %v4927 = vmul.f32 %v2263, %v4537
        %4929 = vrot.lane.b32.xlu0 %v4927, 126
        %v4930 = vpop.permute.xlu0 %4929
        %v4932 = vadd.f32 %v4926, %v4930
        %v4933 = vmul.f32 %v2270, %v4537
        %v4934 = vmul.f32 %v2270, %v4538
        %v4937 = vrot.slane %v4933, 1
        %v4938 = vrot.slane %v4934, 1
        %v4939 = vsel %vm480, %v4937, %v4938
        %v4941 = vadd.f32 %v4932, %v4939
        %v4942 = vmul.f32 %v2280, %v4537
        %v4943 = vmul.f32 %v2280, %v4538
        %v4946 = vrot.slane %v4942, 1
        %v4947 = vrot.slane %v4943, 1
        %v4948 = vsel %vm480, %v4946, %v4947
        %4949 = vrot.lane.b32.xlu0 %v4948, 127
        %v4950 = vpop.permute.xlu0 %4949
        %v4952 = vadd.f32 %v4941, %v4950
        %v4953 = vmul.f32 %v2292, %v4537
        %v4954 = vmul.f32 %v2292, %v4538
        %v4957 = vrot.slane %v4953, 1
        %v4958 = vrot.slane %v4954, 1
        %v4959 = vsel %vm480, %v4957, %v4958
        %4960 = vrot.lane.b32.xlu0 %v4959, 126
        %v4961 = vpop.permute.xlu0 %4960
        %v4963 = vadd.f32 %v4952, %v4961
        %v4964 = vmul.f32 %v2304, %v4537
        %v4965 = vmul.f32 %v2304, %v4538
        %v4968 = vrot.slane %v4964, 2
        %v4969 = vrot.slane %v4965, 2
        %v4970 = vsel %vm515, %v4968, %v4969
        %v4972 = vadd.f32 %v4963, %v4970
        %v4973 = vmul.f32 %v2314, %v4537
        %v4974 = vmul.f32 %v2314, %v4538
        %v4977 = vrot.slane %v4973, 2
        %v4978 = vrot.slane %v4974, 2
        %v4979 = vsel %vm515, %v4977, %v4978
        %4980 = vrot.lane.b32.xlu0 %v4979, 127
        %v4981 = vpop.permute.xlu0 %4980
        %v4983 = vadd.f32 %v4972, %v4981
        %v4984 = vmul.f32 %v2326, %v4537
        %v4985 = vmul.f32 %v2326, %v4538
        %v4988 = vrot.slane %v4984, 2
        %v4989 = vrot.slane %v4985, 2
        %v4990 = vsel %vm515, %v4988, %v4989
        %4991 = vrot.lane.b32.xlu0 %v4990, 126
        %v4992 = vpop.permute.xlu0 %4991
        %v4994 = vadd.f32 %v4983, %v4992
        %v4995 = vmul.f32 %v2338, %v4537
        %v4996 = vadd.f32 %v4458, %v4995
        %v4997 = vmul.f32 %v2341, %v4537
        %4999 = vrot.lane.b32.xlu0 %v4997, 127
        %v5000 = vpop.permute.xlu0 %4999
        %v5002 = vadd.f32 %v4996, %v5000
        %v5003 = vmul.f32 %v2348, %v4537
        %5005 = vrot.lane.b32.xlu0 %v5003, 126
        %v5006 = vpop.permute.xlu0 %5005
        %v5008 = vadd.f32 %v5002, %v5006
        %v5009 = vmul.f32 %v2355, %v4537
        %v5010 = vmul.f32 %v2355, %v4538
        %v5013 = vrot.slane %v5009, 1
        %v5014 = vrot.slane %v5010, 1
        %v5015 = vsel %vm480, %v5013, %v5014
        %v5017 = vadd.f32 %v5008, %v5015
        %v5018 = vmul.f32 %v2365, %v4537
        %v5019 = vmul.f32 %v2365, %v4538
        %v5022 = vrot.slane %v5018, 1
        %v5023 = vrot.slane %v5019, 1
        %v5024 = vsel %vm480, %v5022, %v5023
        %5025 = vrot.lane.b32.xlu0 %v5024, 127
        %v5026 = vpop.permute.xlu0 %5025
        %v5028 = vadd.f32 %v5017, %v5026
        %v5029 = vmul.f32 %v2377, %v4537
        %v5030 = vmul.f32 %v2377, %v4538
        %v5033 = vrot.slane %v5029, 1
        %v5034 = vrot.slane %v5030, 1
        %v5035 = vsel %vm480, %v5033, %v5034
        %5036 = vrot.lane.b32.xlu0 %v5035, 126
        %v5037 = vpop.permute.xlu0 %5036
        %v5039 = vadd.f32 %v5028, %v5037
        %v5040 = vmul.f32 %v2389, %v4537
        %v5041 = vmul.f32 %v2389, %v4538
        %v5044 = vrot.slane %v5040, 2
        %v5045 = vrot.slane %v5041, 2
        %v5046 = vsel %vm515, %v5044, %v5045
        %v5048 = vadd.f32 %v5039, %v5046
        %v5049 = vmul.f32 %v2399, %v4537
        %v5050 = vmul.f32 %v2399, %v4538
        %v5053 = vrot.slane %v5049, 2
        %v5054 = vrot.slane %v5050, 2
        %v5055 = vsel %vm515, %v5053, %v5054
        %5056 = vrot.lane.b32.xlu0 %v5055, 127
        %v5057 = vpop.permute.xlu0 %5056
        %v5059 = vadd.f32 %v5048, %v5057
        %v5060 = vmul.f32 %v2411, %v4537
        %v5061 = vmul.f32 %v2411, %v4538
        %v5064 = vrot.slane %v5060, 2
        %v5065 = vrot.slane %v5061, 2
        %v5066 = vsel %vm515, %v5064, %v5065
        %5067 = vrot.lane.b32.xlu0 %v5066, 126
        %v5068 = vpop.permute.xlu0 %5067
        %v5070 = vadd.f32 %v5059, %v5068
        %v5071 = vmul.f32 %v2423, %v4537
        %v5072 = vadd.f32 %v4534, %v5071
        %v5073 = vmul.f32 %v2426, %v4537
        %5075 = vrot.lane.b32.xlu0 %v5073, 127
        %v5076 = vpop.permute.xlu0 %5075
        %v5078 = vadd.f32 %v5072, %v5076
        %v5079 = vmul.f32 %v2433, %v4537
        %5081 = vrot.lane.b32.xlu0 %v5079, 126
        %v5082 = vpop.permute.xlu0 %5081
        %v5084 = vadd.f32 %v5078, %v5082
        %v5085 = vmul.f32 %v2440, %v4537
        %v5086 = vmul.f32 %v2440, %v4538
        %v5089 = vrot.slane %v5085, 1
        %v5090 = vrot.slane %v5086, 1
        %v5091 = vsel %vm480, %v5089, %v5090
        %v5093 = vadd.f32 %v5084, %v5091
        %v5094 = vmul.f32 %v2450, %v4537
        %v5095 = vmul.f32 %v2450, %v4538
        %v5098 = vrot.slane %v5094, 1
        %v5099 = vrot.slane %v5095, 1
        %v5100 = vsel %vm480, %v5098, %v5099
        %5101 = vrot.lane.b32.xlu0 %v5100, 127
        %v5102 = vpop.permute.xlu0 %5101
        %v5104 = vadd.f32 %v5093, %v5102
        %v5105 = vmul.f32 %v2462, %v4537
        %v5106 = vmul.f32 %v2462, %v4538
        %v5109 = vrot.slane %v5105, 1
        %v5110 = vrot.slane %v5106, 1
        %v5111 = vsel %vm480, %v5109, %v5110
        %5112 = vrot.lane.b32.xlu0 %v5111, 126
        %v5113 = vpop.permute.xlu0 %5112
        %v5115 = vadd.f32 %v5104, %v5113
        %v5116 = vmul.f32 %v2474, %v4537
        %v5117 = vmul.f32 %v2474, %v4538
        %v5120 = vrot.slane %v5116, 2
        %v5121 = vrot.slane %v5117, 2
        %v5122 = vsel %vm515, %v5120, %v5121
        %v5124 = vadd.f32 %v5115, %v5122
        %v5125 = vmul.f32 %v2484, %v4537
        %v5126 = vmul.f32 %v2484, %v4538
        %v5129 = vrot.slane %v5125, 2
        %v5130 = vrot.slane %v5126, 2
        %v5131 = vsel %vm515, %v5129, %v5130
        %5132 = vrot.lane.b32.xlu0 %v5131, 127
        %v5133 = vpop.permute.xlu0 %5132
        %v5135 = vadd.f32 %v5124, %v5133
        %v5136 = vmul.f32 %v2496, %v4537
        %v5137 = vmul.f32 %v2496, %v4538
        %v5140 = vrot.slane %v5136, 2
        %v5141 = vrot.slane %v5137, 2
        %v5142 = vsel %vm515, %v5140, %v5141
        %5143 = vrot.lane.b32.xlu0 %v5142, 126
        %v5144 = vpop.permute.xlu0 %5143
        %v5146 = vadd.f32 %v5135, %v5144
        %s5147 = sadd.s32 %s3311, 72
        %s5148 = scalar_lea.vmem %s140, %s5147
        %v5149 = vld [vmem:[%s5148] sm:$0xff]
        %v5150 = vld [vmem:[%s5148 + $0x8] sm:$0x3]
        %v5151 = vmul.f32 %v2512, %v5149
        %v5152 = vadd.f32 %v4614, %v5151
        %v5153 = vmul.f32 %v2515, %v5149
        %5155 = vrot.lane.b32.xlu0 %v5153, 127
        %v5156 = vpop.permute.xlu0 %5155
        %v5158 = vadd.f32 %v5152, %v5156
        %v5159 = vmul.f32 %v2522, %v5149
        %5161 = vrot.lane.b32.xlu0 %v5159, 126
        %v5162 = vpop.permute.xlu0 %5161
        %v5164 = vadd.f32 %v5158, %v5162
        %v5165 = vmul.f32 %v2529, %v5149
        %v5166 = vmul.f32 %v2529, %v5150
        %v5169 = vrot.slane %v5165, 1
        %v5170 = vrot.slane %v5166, 1
        %v5171 = vsel %vm480, %v5169, %v5170
        %v5173 = vadd.f32 %v5164, %v5171
        %v5174 = vmul.f32 %v2539, %v5149
        %v5175 = vmul.f32 %v2539, %v5150
        %v5178 = vrot.slane %v5174, 1
        %v5179 = vrot.slane %v5175, 1
        %v5180 = vsel %vm480, %v5178, %v5179
        %5181 = vrot.lane.b32.xlu0 %v5180, 127
        %v5182 = vpop.permute.xlu0 %5181
        %v5184 = vadd.f32 %v5173, %v5182
        %v5185 = vmul.f32 %v2551, %v5149
        %v5186 = vmul.f32 %v2551, %v5150
        %v5189 = vrot.slane %v5185, 1
        %v5190 = vrot.slane %v5186, 1
        %v5191 = vsel %vm480, %v5189, %v5190
        %5192 = vrot.lane.b32.xlu0 %v5191, 126
        %v5193 = vpop.permute.xlu0 %5192
        %v5195 = vadd.f32 %v5184, %v5193
        %v5196 = vmul.f32 %v2563, %v5149
        %v5197 = vmul.f32 %v2563, %v5150
        %v5200 = vrot.slane %v5196, 2
        %v5201 = vrot.slane %v5197, 2
        %v5202 = vsel %vm515, %v5200, %v5201
        %v5204 = vadd.f32 %v5195, %v5202
        %v5205 = vmul.f32 %v2573, %v5149
        %v5206 = vmul.f32 %v2573, %v5150
        %v5209 = vrot.slane %v5205, 2
        %v5210 = vrot.slane %v5206, 2
        %v5211 = vsel %vm515, %v5209, %v5210
        %5212 = vrot.lane.b32.xlu0 %v5211, 127
        %v5213 = vpop.permute.xlu0 %5212
        %v5215 = vadd.f32 %v5204, %v5213
        %v5216 = vmul.f32 %v2585, %v5149
        %v5217 = vmul.f32 %v2585, %v5150
        %v5220 = vrot.slane %v5216, 2
        %v5221 = vrot.slane %v5217, 2
        %v5222 = vsel %vm515, %v5220, %v5221
        %5223 = vrot.lane.b32.xlu0 %v5222, 126
        %v5224 = vpop.permute.xlu0 %5223
        %v5226 = vadd.f32 %v5215, %v5224
        %v5227 = vmul.f32 %v2597, %v5149
        %v5228 = vadd.f32 %v4690, %v5227
        %v5229 = vmul.f32 %v2600, %v5149
        %5231 = vrot.lane.b32.xlu0 %v5229, 127
        %v5232 = vpop.permute.xlu0 %5231
        %v5234 = vadd.f32 %v5228, %v5232
        %v5235 = vmul.f32 %v2607, %v5149
        %5237 = vrot.lane.b32.xlu0 %v5235, 126
        %v5238 = vpop.permute.xlu0 %5237
        %v5240 = vadd.f32 %v5234, %v5238
        %v5241 = vmul.f32 %v2614, %v5149
        %v5242 = vmul.f32 %v2614, %v5150
        %v5245 = vrot.slane %v5241, 1
        %v5246 = vrot.slane %v5242, 1
        %v5247 = vsel %vm480, %v5245, %v5246
        %v5249 = vadd.f32 %v5240, %v5247
        %v5250 = vmul.f32 %v2624, %v5149
        %v5251 = vmul.f32 %v2624, %v5150
        %v5254 = vrot.slane %v5250, 1
        %v5255 = vrot.slane %v5251, 1
        %v5256 = vsel %vm480, %v5254, %v5255
        %5257 = vrot.lane.b32.xlu0 %v5256, 127
        %v5258 = vpop.permute.xlu0 %5257
        %v5260 = vadd.f32 %v5249, %v5258
        %v5261 = vmul.f32 %v2636, %v5149
        %v5262 = vmul.f32 %v2636, %v5150
        %v5265 = vrot.slane %v5261, 1
        %v5266 = vrot.slane %v5262, 1
        %v5267 = vsel %vm480, %v5265, %v5266
        %5268 = vrot.lane.b32.xlu0 %v5267, 126
        %v5269 = vpop.permute.xlu0 %5268
        %v5271 = vadd.f32 %v5260, %v5269
        %v5272 = vmul.f32 %v2648, %v5149
        %v5273 = vmul.f32 %v2648, %v5150
        %v5276 = vrot.slane %v5272, 2
        %v5277 = vrot.slane %v5273, 2
        %v5278 = vsel %vm515, %v5276, %v5277
        %v5280 = vadd.f32 %v5271, %v5278
        %v5281 = vmul.f32 %v2658, %v5149
        %v5282 = vmul.f32 %v2658, %v5150
        %v5285 = vrot.slane %v5281, 2
        %v5286 = vrot.slane %v5282, 2
        %v5287 = vsel %vm515, %v5285, %v5286
        %5288 = vrot.lane.b32.xlu0 %v5287, 127
        %v5289 = vpop.permute.xlu0 %5288
        %v5291 = vadd.f32 %v5280, %v5289
        %v5292 = vmul.f32 %v2670, %v5149
        %v5293 = vmul.f32 %v2670, %v5150
        %v5296 = vrot.slane %v5292, 2
        %v5297 = vrot.slane %v5293, 2
        %v5298 = vsel %vm515, %v5296, %v5297
        %5299 = vrot.lane.b32.xlu0 %v5298, 126
        %v5300 = vpop.permute.xlu0 %5299
        %v5302 = vadd.f32 %v5291, %v5300
        %v5303 = vmul.f32 %v2682, %v5149
        %v5304 = vadd.f32 %v4766, %v5303
        %v5305 = vmul.f32 %v2685, %v5149
        %5307 = vrot.lane.b32.xlu0 %v5305, 127
        %v5308 = vpop.permute.xlu0 %5307
        %v5310 = vadd.f32 %v5304, %v5308
        %v5311 = vmul.f32 %v2692, %v5149
        %5313 = vrot.lane.b32.xlu0 %v5311, 126
        %v5314 = vpop.permute.xlu0 %5313
        %v5316 = vadd.f32 %v5310, %v5314
        %v5317 = vmul.f32 %v2699, %v5149
        %v5318 = vmul.f32 %v2699, %v5150
        %v5321 = vrot.slane %v5317, 1
        %v5322 = vrot.slane %v5318, 1
        %v5323 = vsel %vm480, %v5321, %v5322
        %v5325 = vadd.f32 %v5316, %v5323
        %v5326 = vmul.f32 %v2709, %v5149
        %v5327 = vmul.f32 %v2709, %v5150
        %v5330 = vrot.slane %v5326, 1
        %v5331 = vrot.slane %v5327, 1
        %v5332 = vsel %vm480, %v5330, %v5331
        %5333 = vrot.lane.b32.xlu0 %v5332, 127
        %v5334 = vpop.permute.xlu0 %5333
        %v5336 = vadd.f32 %v5325, %v5334
        %v5337 = vmul.f32 %v2721, %v5149
        %v5338 = vmul.f32 %v2721, %v5150
        %v5341 = vrot.slane %v5337, 1
        %v5342 = vrot.slane %v5338, 1
        %v5343 = vsel %vm480, %v5341, %v5342
        %5344 = vrot.lane.b32.xlu0 %v5343, 126
        %v5345 = vpop.permute.xlu0 %5344
        %v5347 = vadd.f32 %v5336, %v5345
        %v5348 = vmul.f32 %v2733, %v5149
        %v5349 = vmul.f32 %v2733, %v5150
        %v5352 = vrot.slane %v5348, 2
        %v5353 = vrot.slane %v5349, 2
        %v5354 = vsel %vm515, %v5352, %v5353
        %v5356 = vadd.f32 %v5347, %v5354
        %v5357 = vmul.f32 %v2743, %v5149
        %v5358 = vmul.f32 %v2743, %v5150
        %v5361 = vrot.slane %v5357, 2
        %v5362 = vrot.slane %v5358, 2
        %v5363 = vsel %vm515, %v5361, %v5362
        %5364 = vrot.lane.b32.xlu0 %v5363, 127
        %v5365 = vpop.permute.xlu0 %5364
        %v5367 = vadd.f32 %v5356, %v5365
        %v5368 = vmul.f32 %v2755, %v5149
        %v5369 = vmul.f32 %v2755, %v5150
        %v5372 = vrot.slane %v5368, 2
        %v5373 = vrot.slane %v5369, 2
        %v5374 = vsel %vm515, %v5372, %v5373
        %5375 = vrot.lane.b32.xlu0 %v5374, 126
        %v5376 = vpop.permute.xlu0 %5375
        %v5378 = vadd.f32 %v5367, %v5376
        %v5379 = vmul.f32 %v2767, %v5149
        %v5380 = vadd.f32 %v4842, %v5379
        %v5381 = vmul.f32 %v2770, %v5149
        %5383 = vrot.lane.b32.xlu0 %v5381, 127
        %v5384 = vpop.permute.xlu0 %5383
        %v5386 = vadd.f32 %v5380, %v5384
        %v5387 = vmul.f32 %v2777, %v5149
        %5389 = vrot.lane.b32.xlu0 %v5387, 126
        %v5390 = vpop.permute.xlu0 %5389
        %v5392 = vadd.f32 %v5386, %v5390
        %v5393 = vmul.f32 %v2784, %v5149
        %v5394 = vmul.f32 %v2784, %v5150
        %v5397 = vrot.slane %v5393, 1
        %v5398 = vrot.slane %v5394, 1
        %v5399 = vsel %vm480, %v5397, %v5398
        %v5401 = vadd.f32 %v5392, %v5399
        %v5402 = vmul.f32 %v2794, %v5149
        %v5403 = vmul.f32 %v2794, %v5150
        %v5406 = vrot.slane %v5402, 1
        %v5407 = vrot.slane %v5403, 1
        %v5408 = vsel %vm480, %v5406, %v5407
        %5409 = vrot.lane.b32.xlu0 %v5408, 127
        %v5410 = vpop.permute.xlu0 %5409
        %v5412 = vadd.f32 %v5401, %v5410
        %v5413 = vmul.f32 %v2806, %v5149
        %v5414 = vmul.f32 %v2806, %v5150
        %v5417 = vrot.slane %v5413, 1
        %v5418 = vrot.slane %v5414, 1
        %v5419 = vsel %vm480, %v5417, %v5418
        %5420 = vrot.lane.b32.xlu0 %v5419, 126
        %v5421 = vpop.permute.xlu0 %5420
        %v5423 = vadd.f32 %v5412, %v5421
        %v5424 = vmul.f32 %v2818, %v5149
        %v5425 = vmul.f32 %v2818, %v5150
        %v5428 = vrot.slane %v5424, 2
        %v5429 = vrot.slane %v5425, 2
        %v5430 = vsel %vm515, %v5428, %v5429
        %v5432 = vadd.f32 %v5423, %v5430
        %v5433 = vmul.f32 %v2828, %v5149
        %v5434 = vmul.f32 %v2828, %v5150
        %v5437 = vrot.slane %v5433, 2
        %v5438 = vrot.slane %v5434, 2
        %v5439 = vsel %vm515, %v5437, %v5438
        %5440 = vrot.lane.b32.xlu0 %v5439, 127
        %v5441 = vpop.permute.xlu0 %5440
        %v5443 = vadd.f32 %v5432, %v5441
        %v5444 = vmul.f32 %v2840, %v5149
        %v5445 = vmul.f32 %v2840, %v5150
        %v5448 = vrot.slane %v5444, 2
        %v5449 = vrot.slane %v5445, 2
        %v5450 = vsel %vm515, %v5448, %v5449
        %5451 = vrot.lane.b32.xlu0 %v5450, 126
        %v5452 = vpop.permute.xlu0 %5451
        %v5454 = vadd.f32 %v5443, %v5452
        %v5455 = vmul.f32 %v2852, %v5149
        %v5456 = vadd.f32 %v4918, %v5455
        %v5457 = vmul.f32 %v2855, %v5149
        %5459 = vrot.lane.b32.xlu0 %v5457, 127
        %v5460 = vpop.permute.xlu0 %5459
        %v5462 = vadd.f32 %v5456, %v5460
        %v5463 = vmul.f32 %v2862, %v5149
        %5465 = vrot.lane.b32.xlu0 %v5463, 126
        %v5466 = vpop.permute.xlu0 %5465
        %v5468 = vadd.f32 %v5462, %v5466
        %v5469 = vmul.f32 %v2869, %v5149
        %v5470 = vmul.f32 %v2869, %v5150
        %v5473 = vrot.slane %v5469, 1
        %v5474 = vrot.slane %v5470, 1
        %v5475 = vsel %vm480, %v5473, %v5474
        %v5477 = vadd.f32 %v5468, %v5475
        %v5478 = vmul.f32 %v2879, %v5149
        %v5479 = vmul.f32 %v2879, %v5150
        %v5482 = vrot.slane %v5478, 1
        %v5483 = vrot.slane %v5479, 1
        %v5484 = vsel %vm480, %v5482, %v5483
        %5485 = vrot.lane.b32.xlu0 %v5484, 127
        %v5486 = vpop.permute.xlu0 %5485
        %v5488 = vadd.f32 %v5477, %v5486
        %v5489 = vmul.f32 %v2891, %v5149
        %v5490 = vmul.f32 %v2891, %v5150
        %v5493 = vrot.slane %v5489, 1
        %v5494 = vrot.slane %v5490, 1
        %v5495 = vsel %vm480, %v5493, %v5494
        %5496 = vrot.lane.b32.xlu0 %v5495, 126
        %v5497 = vpop.permute.xlu0 %5496
        %v5499 = vadd.f32 %v5488, %v5497
        %v5500 = vmul.f32 %v2903, %v5149
        %v5501 = vmul.f32 %v2903, %v5150
        %v5504 = vrot.slane %v5500, 2
        %v5505 = vrot.slane %v5501, 2
        %v5506 = vsel %vm515, %v5504, %v5505
        %v5508 = vadd.f32 %v5499, %v5506
        %v5509 = vmul.f32 %v2913, %v5149
        %v5510 = vmul.f32 %v2913, %v5150
        %v5513 = vrot.slane %v5509, 2
        %v5514 = vrot.slane %v5510, 2
        %v5515 = vsel %vm515, %v5513, %v5514
        %5516 = vrot.lane.b32.xlu0 %v5515, 127
        %v5517 = vpop.permute.xlu0 %5516
        %v5519 = vadd.f32 %v5508, %v5517
        %v5520 = vmul.f32 %v2925, %v5149
        %v5521 = vmul.f32 %v2925, %v5150
        %v5524 = vrot.slane %v5520, 2
        %v5525 = vrot.slane %v5521, 2
        %v5526 = vsel %vm515, %v5524, %v5525
        %5527 = vrot.lane.b32.xlu0 %v5526, 126
        %v5528 = vpop.permute.xlu0 %5527
        %v5530 = vadd.f32 %v5519, %v5528
        %v5531 = vmul.f32 %v2937, %v5149
        %v5532 = vadd.f32 %v4994, %v5531
        %v5533 = vmul.f32 %v2940, %v5149
        %5535 = vrot.lane.b32.xlu0 %v5533, 127
        %v5536 = vpop.permute.xlu0 %5535
        %v5538 = vadd.f32 %v5532, %v5536
        %v5539 = vmul.f32 %v2947, %v5149
        %5541 = vrot.lane.b32.xlu0 %v5539, 126
        %v5542 = vpop.permute.xlu0 %5541
        %v5544 = vadd.f32 %v5538, %v5542
        %v5545 = vmul.f32 %v2954, %v5149
        %v5546 = vmul.f32 %v2954, %v5150
        %v5549 = vrot.slane %v5545, 1
        %v5550 = vrot.slane %v5546, 1
        %v5551 = vsel %vm480, %v5549, %v5550
        %v5553 = vadd.f32 %v5544, %v5551
        %v5554 = vmul.f32 %v2964, %v5149
        %v5555 = vmul.f32 %v2964, %v5150
        %v5558 = vrot.slane %v5554, 1
        %v5559 = vrot.slane %v5555, 1
        %v5560 = vsel %vm480, %v5558, %v5559
        %5561 = vrot.lane.b32.xlu0 %v5560, 127
        %v5562 = vpop.permute.xlu0 %5561
        %v5564 = vadd.f32 %v5553, %v5562
        %v5565 = vmul.f32 %v2976, %v5149
        %v5566 = vmul.f32 %v2976, %v5150
        %v5569 = vrot.slane %v5565, 1
        %v5570 = vrot.slane %v5566, 1
        %v5571 = vsel %vm480, %v5569, %v5570
        %5572 = vrot.lane.b32.xlu0 %v5571, 126
        %v5573 = vpop.permute.xlu0 %5572
        %v5575 = vadd.f32 %v5564, %v5573
        %v5576 = vmul.f32 %v2988, %v5149
        %v5577 = vmul.f32 %v2988, %v5150
        %v5580 = vrot.slane %v5576, 2
        %v5581 = vrot.slane %v5577, 2
        %v5582 = vsel %vm515, %v5580, %v5581
        %v5584 = vadd.f32 %v5575, %v5582
        %v5585 = vmul.f32 %v2998, %v5149
        %v5586 = vmul.f32 %v2998, %v5150
        %v5589 = vrot.slane %v5585, 2
        %v5590 = vrot.slane %v5586, 2
        %v5591 = vsel %vm515, %v5589, %v5590
        %5592 = vrot.lane.b32.xlu0 %v5591, 127
        %v5593 = vpop.permute.xlu0 %5592
        %v5595 = vadd.f32 %v5584, %v5593
        %v5596 = vmul.f32 %v3010, %v5149
        %v5597 = vmul.f32 %v3010, %v5150
        %v5600 = vrot.slane %v5596, 2
        %v5601 = vrot.slane %v5597, 2
        %v5602 = vsel %vm515, %v5600, %v5601
        %5603 = vrot.lane.b32.xlu0 %v5602, 126
        %v5604 = vpop.permute.xlu0 %5603
        %v5606 = vadd.f32 %v5595, %v5604
        %v5607 = vmul.f32 %v3022, %v5149
        %v5608 = vadd.f32 %v5070, %v5607
        %v5609 = vmul.f32 %v3025, %v5149
        %5611 = vrot.lane.b32.xlu0 %v5609, 127
        %v5612 = vpop.permute.xlu0 %5611
        %v5614 = vadd.f32 %v5608, %v5612
        %v5615 = vmul.f32 %v3032, %v5149
        %5617 = vrot.lane.b32.xlu0 %v5615, 126
        %v5618 = vpop.permute.xlu0 %5617
        %v5620 = vadd.f32 %v5614, %v5618
        %v5621 = vmul.f32 %v3039, %v5149
        %v5622 = vmul.f32 %v3039, %v5150
        %v5625 = vrot.slane %v5621, 1
        %v5626 = vrot.slane %v5622, 1
        %v5627 = vsel %vm480, %v5625, %v5626
        %v5629 = vadd.f32 %v5620, %v5627
        %v5630 = vmul.f32 %v3049, %v5149
        %v5631 = vmul.f32 %v3049, %v5150
        %v5634 = vrot.slane %v5630, 1
        %v5635 = vrot.slane %v5631, 1
        %v5636 = vsel %vm480, %v5634, %v5635
        %5637 = vrot.lane.b32.xlu0 %v5636, 127
        %v5638 = vpop.permute.xlu0 %5637
        %v5640 = vadd.f32 %v5629, %v5638
        %v5641 = vmul.f32 %v3061, %v5149
        %v5642 = vmul.f32 %v3061, %v5150
        %v5645 = vrot.slane %v5641, 1
        %v5646 = vrot.slane %v5642, 1
        %v5647 = vsel %vm480, %v5645, %v5646
        %5648 = vrot.lane.b32.xlu0 %v5647, 126
        %v5649 = vpop.permute.xlu0 %5648
        %v5651 = vadd.f32 %v5640, %v5649
        %v5652 = vmul.f32 %v3073, %v5149
        %v5653 = vmul.f32 %v3073, %v5150
        %v5656 = vrot.slane %v5652, 2
        %v5657 = vrot.slane %v5653, 2
        %v5658 = vsel %vm515, %v5656, %v5657
        %v5660 = vadd.f32 %v5651, %v5658
        %v5661 = vmul.f32 %v3083, %v5149
        %v5662 = vmul.f32 %v3083, %v5150
        %v5665 = vrot.slane %v5661, 2
        %v5666 = vrot.slane %v5662, 2
        %v5667 = vsel %vm515, %v5665, %v5666
        %5668 = vrot.lane.b32.xlu0 %v5667, 127
        %v5669 = vpop.permute.xlu0 %5668
        %v5671 = vadd.f32 %v5660, %v5669
        %v5672 = vmul.f32 %v3095, %v5149
        %v5673 = vmul.f32 %v3095, %v5150
        %v5676 = vrot.slane %v5672, 2
        %v5677 = vrot.slane %v5673, 2
        %v5678 = vsel %vm515, %v5676, %v5677
        %5679 = vrot.lane.b32.xlu0 %v5678, 126
        %v5680 = vpop.permute.xlu0 %5679
        %v5682 = vadd.f32 %v5671, %v5680
        %v5683 = vmul.f32 %v3107, %v5149
        %v5684 = vadd.f32 %v5146, %v5683
        %v5685 = vmul.f32 %v3110, %v5149
        %5687 = vrot.lane.b32.xlu0 %v5685, 127
        %v5688 = vpop.permute.xlu0 %5687
        %v5690 = vadd.f32 %v5684, %v5688
        %v5691 = vmul.f32 %v3117, %v5149
        %5693 = vrot.lane.b32.xlu0 %v5691, 126
        %v5694 = vpop.permute.xlu0 %5693
        %v5696 = vadd.f32 %v5690, %v5694
        %v5697 = vmul.f32 %v3124, %v5149
        %v5698 = vmul.f32 %v3124, %v5150
        %v5701 = vrot.slane %v5697, 1
        %v5702 = vrot.slane %v5698, 1
        %v5703 = vsel %vm480, %v5701, %v5702
        %v5705 = vadd.f32 %v5696, %v5703
        %v5706 = vmul.f32 %v3134, %v5149
        %v5707 = vmul.f32 %v3134, %v5150
        %v5710 = vrot.slane %v5706, 1
        %v5711 = vrot.slane %v5707, 1
        %v5712 = vsel %vm480, %v5710, %v5711
        %5713 = vrot.lane.b32.xlu0 %v5712, 127
        %v5714 = vpop.permute.xlu0 %5713
        %v5716 = vadd.f32 %v5705, %v5714
        %v5717 = vmul.f32 %v3146, %v5149
        %v5718 = vmul.f32 %v3146, %v5150
        %v5721 = vrot.slane %v5717, 1
        %v5722 = vrot.slane %v5718, 1
        %v5723 = vsel %vm480, %v5721, %v5722
        %5724 = vrot.lane.b32.xlu0 %v5723, 126
        %v5725 = vpop.permute.xlu0 %5724
        %v5727 = vadd.f32 %v5716, %v5725
        %v5728 = vmul.f32 %v3158, %v5149
        %v5729 = vmul.f32 %v3158, %v5150
        %v5732 = vrot.slane %v5728, 2
        %v5733 = vrot.slane %v5729, 2
        %v5734 = vsel %vm515, %v5732, %v5733
        %v5736 = vadd.f32 %v5727, %v5734
        %v5737 = vmul.f32 %v3168, %v5149
        %v5738 = vmul.f32 %v3168, %v5150
        %v5741 = vrot.slane %v5737, 2
        %v5742 = vrot.slane %v5738, 2
        %v5743 = vsel %vm515, %v5741, %v5742
        %5744 = vrot.lane.b32.xlu0 %v5743, 127
        %v5745 = vpop.permute.xlu0 %5744
        %v5747 = vadd.f32 %v5736, %v5745
        %v5748 = vmul.f32 %v3180, %v5149
        %v5749 = vmul.f32 %v3180, %v5150
        %v5752 = vrot.slane %v5748, 2
        %v5753 = vrot.slane %v5749, 2
        %v5754 = vsel %vm515, %v5752, %v5753
        %5755 = vrot.lane.b32.xlu0 %v5754, 126
        %v5756 = vpop.permute.xlu0 %5755
        %v5758 = vadd.f32 %v5747, %v5756
        %v5759 = vmin.f32 %v5226, 20.0
        %v5760 = vmul.f32 %v5759, 1.442695
        %v5761 = vpow.pop %v5760
        %v5762 = vadd.f32 %v5761, 2.0
        %v5763 = vmul.f32 %v5761, %v5762
        %v5764 = vadd.f32 %v5763, 2.0
        %v5765 = vrcp.pop %v5764
        %v5766 = vmul.f32 %v5764, %v5765
        %v5767 = vsub.f32 2.0, %v5766
        %v5768 = vmul.f32 %v5765, %v5767
        %v5769 = vmul.f32 %v5763, %v5768
        %v5770 = vmul.f32 %v5226, %v5769
        %s5771 = scalar_lea.vmem %s135, 8 [#allocation5]
        %5772 = vst.msk [vmem:[%s5771] sm:$0xff] %vm3204, %v5770
        %v5773 = vmin.f32 %v5302, 20.0
        %v5774 = vmul.f32 %v5773, 1.442695
        %v5775 = vpow.pop %v5774
        %v5776 = vadd.f32 %v5775, 2.0
        %v5777 = vmul.f32 %v5775, %v5776
        %v5778 = vadd.f32 %v5777, 2.0
        %v5779 = vrcp.pop %v5778
        %v5780 = vmul.f32 %v5778, %v5779
        %v5781 = vsub.f32 2.0, %v5780
        %v5782 = vmul.f32 %v5779, %v5781
        %v5783 = vmul.f32 %v5777, %v5782
        %v5784 = vmul.f32 %v5302, %v5783
        %s5785 = sadd.s32 8, 16
        %s5786 = scalar_lea.vmem %s135, %s5785 [#allocation5]
        %5787 = vst.msk [vmem:[%s5786] sm:$0xff] %vm3204, %v5784
        %v5788 = vmin.f32 %v5378, 20.0
        %v5789 = vmul.f32 %v5788, 1.442695
        %v5790 = vpow.pop %v5789
        %v5791 = vadd.f32 %v5790, 2.0
        %v5792 = vmul.f32 %v5790, %v5791
        %v5793 = vadd.f32 %v5792, 2.0
        %v5794 = vrcp.pop %v5793
        %v5795 = vmul.f32 %v5793, %v5794
        %v5796 = vsub.f32 2.0, %v5795
        %v5797 = vmul.f32 %v5794, %v5796
        %v5798 = vmul.f32 %v5792, %v5797
        %v5799 = vmul.f32 %v5378, %v5798
        %s5800 = sadd.s32 8, 32
        %s5801 = scalar_lea.vmem %s135, %s5800 [#allocation5]
        %5802 = vst.msk [vmem:[%s5801] sm:$0xff] %vm3204, %v5799
        %v5803 = vmin.f32 %v5454, 20.0
        %v5804 = vmul.f32 %v5803, 1.442695
        %v5805 = vpow.pop %v5804
        %v5806 = vadd.f32 %v5805, 2.0
        %v5807 = vmul.f32 %v5805, %v5806
        %v5808 = vadd.f32 %v5807, 2.0
        %v5809 = vrcp.pop %v5808
        %v5810 = vmul.f32 %v5808, %v5809
        %v5811 = vsub.f32 2.0, %v5810
        %v5812 = vmul.f32 %v5809, %v5811
        %v5813 = vmul.f32 %v5807, %v5812
        %v5814 = vmul.f32 %v5454, %v5813
        %s5815 = sadd.s32 8, 48
        %s5816 = scalar_lea.vmem %s135, %s5815 [#allocation5]
        %5817 = vst.msk [vmem:[%s5816] sm:$0xff] %vm3204, %v5814
        %v5818 = vmin.f32 %v5530, 20.0
        %v5819 = vmul.f32 %v5818, 1.442695
        %v5820 = vpow.pop %v5819
        %v5821 = vadd.f32 %v5820, 2.0
        %v5822 = vmul.f32 %v5820, %v5821
        %v5823 = vadd.f32 %v5822, 2.0
        %v5824 = vrcp.pop %v5823
        %v5825 = vmul.f32 %v5823, %v5824
        %v5826 = vsub.f32 2.0, %v5825
        %v5827 = vmul.f32 %v5824, %v5826
        %v5828 = vmul.f32 %v5822, %v5827
        %v5829 = vmul.f32 %v5530, %v5828
        %s5830 = sadd.s32 8, 64
        %s5831 = scalar_lea.vmem %s135, %s5830 [#allocation5]
        %5832 = vst.msk [vmem:[%s5831] sm:$0xff] %vm3204, %v5829
        %v5833 = vmin.f32 %v5606, 20.0
        %v5834 = vmul.f32 %v5833, 1.442695
        %v5835 = vpow.pop %v5834
        %v5836 = vadd.f32 %v5835, 2.0
        %v5837 = vmul.f32 %v5835, %v5836
        %v5838 = vadd.f32 %v5837, 2.0
        %v5839 = vrcp.pop %v5838
        %v5840 = vmul.f32 %v5838, %v5839
        %v5841 = vsub.f32 2.0, %v5840
        %v5842 = vmul.f32 %v5839, %v5841
        %v5843 = vmul.f32 %v5837, %v5842
        %v5844 = vmul.f32 %v5606, %v5843
        %s5845 = sadd.s32 8, 80
        %s5846 = scalar_lea.vmem %s135, %s5845 [#allocation5]
        %5847 = vst.msk [vmem:[%s5846] sm:$0xff] %vm3204, %v5844
        %v5848 = vmin.f32 %v5682, 20.0
        %v5849 = vmul.f32 %v5848, 1.442695
        %v5850 = vpow.pop %v5849
        %v5851 = vadd.f32 %v5850, 2.0
        %v5852 = vmul.f32 %v5850, %v5851
        %v5853 = vadd.f32 %v5852, 2.0
        %v5854 = vrcp.pop %v5853
        %v5855 = vmul.f32 %v5853, %v5854
        %v5856 = vsub.f32 2.0, %v5855
        %v5857 = vmul.f32 %v5854, %v5856
        %v5858 = vmul.f32 %v5852, %v5857
        %v5859 = vmul.f32 %v5682, %v5858
        %s5860 = sadd.s32 8, 96
        %s5861 = scalar_lea.vmem %s135, %s5860 [#allocation5]
        %5862 = vst.msk [vmem:[%s5861] sm:$0xff] %vm3204, %v5859
        %v5863 = vmin.f32 %v5758, 20.0
        %v5864 = vmul.f32 %v5863, 1.442695
        %v5865 = vpow.pop %v5864
        %v5866 = vadd.f32 %v5865, 2.0
        %v5867 = vmul.f32 %v5865, %v5866
        %v5868 = vadd.f32 %v5867, 2.0
        %v5869 = vrcp.pop %v5868
        %v5870 = vmul.f32 %v5868, %v5869
        %v5871 = vsub.f32 2.0, %v5870
        %v5872 = vmul.f32 %v5869, %v5871
        %v5873 = vmul.f32 %v5867, %v5872
        %v5874 = vmul.f32 %v5758, %v5873
        %s5875 = sadd.s32 8, 112
        %s5876 = scalar_lea.vmem %s135, %s5875 [#allocation5]
        %5877 = vst.msk [vmem:[%s5876] sm:$0xff] %vm3204, %v5874
        %s5878 = sand.u32 %s75, 1
        %s5879 = scalar_lea.sflag [#allocation6], %s5878
        %s5880 = sand.u32 %s75, 1
        %s5881 = smul.addr %s5880, 128
        %s5882 = scalar_lea.vmem [#allocation5], %s5881
        // Predicated region
        $region25: #{tpu_custom_call.1} parent=23 // pred_check
          %p5883 = pneg %p85
        $region26: #{tpu_custom_call.1} parent=23 // pred_check_branch
          %5885 = sbr.rel (%p5883) target = $region28
        $region27: #{tpu_custom_call.1} parent=23 // pred_region
          %s5886 = smul.u32 2, %s32
          %s5888 = ssub.s32 2048, 2048
          %5889 = vsyncadd %s5879, %s5888
          %s5890 = smul.addr %s31, 16
          %s5891 = sadd.s32 %s5886, %s5890
          %s5892 = smul.addr %s5891, 128
          %s5893 = scalar_lea.hbm %s3, %s5892
          %s5894 = sshll.u32 %s5882, 4
          %s5895 = int_to_ptr.vmem [resolvable:$true] %s5894
          %5900 = dma.vmem_to_hbm [thread:$0]  %s5895, 2048, %s5893, %s5879, 128, 128, 8
        $region28: #{tpu_custom_call.1} parent=23 // pred_fallthru
          _
      $region24: #{tpu_custom_call.1} parent=5 // pred_fallthru
        _
      %p5901 = scmp.le.s32.totalorder 2, %s22
      // Predicated region
      $region29: #{tpu_custom_call.1} parent=5 // pred_check
        %p5902 = pneg %p5901
      $region30: #{tpu_custom_call.1} parent=5 // pred_check_branch
        %5904 = sbr.rel (%p5902) target = $region32
      $region31: #{tpu_custom_call.1} parent=5 // pred_region
        %s5905 = ssub.s32 %s22, 2
        // Predicated region
        $region33: #{tpu_custom_call.1} parent=31 // pred_check
          %p5906 = pneg %p91
        $region34: #{tpu_custom_call.1} parent=31 // pred_check_branch
          %5908 = sbr.rel (%p5906) target = $region36
        $region35: #{tpu_custom_call.1} parent=31 // pred_region
          %s5909 = sand.u32 %s76, 1
          %s5910 = scalar_lea.sflag [#allocation6], %s5909
          %s5911 = sand.u32 %s76, 1
          %s5912 = smul.addr %s5911, 128
          %s5913 = scalar_lea.vmem [#allocation5], %s5912
          %5914 = dma.done %s5910, 2048
        $region36: #{tpu_custom_call.1} parent=31 // pred_fallthru
          _
      $region32: #{tpu_custom_call.1} parent=5 // pred_fallthru
        _
    $region6: #{tpu_custom_call.1} parent=1 // loop_footer
      %s26 = sadd.s32 1, %s22
    $region7: #{tpu_custom_call.1} parent=1 // loop_footer_branch
      %21 = sbr.rel target = $region3
    $region8: #{tpu_custom_call.1} parent=1 // loop_exit
      _
    %5915 = vsyncpa [#allocation6], 1
    %s5916 = scalar_lea.sflag [#allocation6], 1
    %5917 = vsyncpa %s5916, 1

</llo_original>
